<compile_context>
chip_gen: v6e
topology: v6e:2x2x1
jax: 0.10.0
libtpu: 0.0.40
codegen_flags: <defaults>
</compile_context>

<pallas_src>
import functools

import jax
import jax.numpy as jnp
from jax import lax
from jax.experimental import pallas as pl
from jax.experimental.pallas import tpu as pltpu


# --------------------------- tile-size helper ------------------------------ #
def _pick_tile(dim, desired, unit=128):
    """Largest multiple of `unit` <= desired that divides `dim`; else `dim` itself
    (a full-extent block is always a legal BlockSpec dimension)."""
    if dim <= desired:
        return dim
    t = (desired // unit) * unit
    while t >= unit:
        if dim % t == 0:
            return t
        t -= unit
    return dim


# ------------------------------ Linear (2D) -------------------------------- #
def _linear_kernel_acc(x_ref, w_ref, b_ref, o_ref, acc_ref):
    k = pl.program_id(2)

    @pl.when(k == 0)
    def _():
        acc_ref[...] = jnp.zeros_like(acc_ref)

    acc_ref[...] += jnp.dot(x_ref[...], w_ref[...],
                            preferred_element_type=jnp.float32)

    @pl.when(k == pl.num_programs(2) - 1)
    def _():
        o_ref[...] = (acc_ref[...] + b_ref[...].astype(jnp.float32)).astype(o_ref.dtype)


def _linear_kernel_single(x_ref, w_ref, b_ref, o_ref):
    # Single K step: no accumulator scratch / predicates needed.
    o_ref[...] = (jnp.dot(x_ref[...], w_ref[...], preferred_element_type=jnp.float32)
                  + b_ref[...].astype(jnp.float32)).astype(o_ref.dtype)


def pallas_linear(x, w, b, *, out_dtype=None, tm=256, tn=256, tk=256):
    """x: (M, K) @ w: (K, N) + b: (N,) -> (M, N), f32 accumulation on the MXU."""
    M, K = x.shape
    Kw, Nout = w.shape
    assert K == Kw
    out_dtype = out_dtype or x.dtype
    tm, tn, tk = _pick_tile(M, tm), _pick_tile(Nout, tn), _pick_tile(K, tk)
    nk = K // tk

    kernel = _linear_kernel_single if nk == 1 else _linear_kernel_acc
    scratch = [] if nk == 1 else [pltpu.VMEM((tm, tn), jnp.float32)]
    itemsize = x.dtype.itemsize
    cost = pl.CostEstimate(
        flops=2 * M * K * Nout, transcendentals=0,
        bytes_accessed=(M * K + K * Nout + Nout) * itemsize
        + M * Nout * jnp.dtype(out_dtype).itemsize)

    return pl.pallas_call(
        kernel,
        out_shape=jax.ShapeDtypeStruct((M, Nout), out_dtype),
        grid=(M // tm, Nout // tn, nk),
        in_specs=[
            pl.BlockSpec((tm, tk), lambda i, j, k: (i, k)),
            pl.BlockSpec((tk, tn), lambda i, j, k: (k, j)),
            pl.BlockSpec((1, tn), lambda i, j, k: (0, j)),
        ],
        out_specs=pl.BlockSpec((tm, tn), lambda i, j, k: (i, j)),
        scratch_shapes=scratch,
        compiler_params=pltpu.CompilerParams(
            dimension_semantics=("parallel", "parallel", "arbitrary")),
        cost_estimate=cost,
    )(x, w, b.reshape(1, Nout))


# ----------------------- Fused QKV projection -> (3, M, C) ----------------- #
def _qkv_kernel_acc(x_ref, w_ref, b_ref, o_ref, acc_ref):
    k = pl.program_id(3)

    @pl.when(k == 0)
    def _():
        acc_ref[...] = jnp.zeros_like(acc_ref)

    acc_ref[...] += jnp.dot(x_ref[...], w_ref[0],
                            preferred_element_type=jnp.float32)

    @pl.when(k == pl.num_programs(3) - 1)
    def _():
        o_ref[0] = (acc_ref[...] + b_ref[0].astype(jnp.float32)).astype(o_ref.dtype)


def _qkv_kernel_single(x_ref, w_ref, b_ref, o_ref):
    o_ref[0] = (jnp.dot(x_ref[...], w_ref[0], preferred_element_type=jnp.float32)
                + b_ref[0].astype(jnp.float32)).astype(o_ref.dtype)


def pallas_qkv_proj(x, w3, b3, *, out_dtype, tm=256, tn=256, tk=256):
    """x: (M, C) @ w3: (3, C, C) + b3: (3, C) -> (3, M, C).
    The leading axis keeps q / k / v each contiguous -> contiguous attention DMAs."""
    M, K = x.shape
    S, Kw, Nout = w3.shape
    assert S == 3 and Kw == K
    tm, tn, tk = _pick_tile(M, tm), _pick_tile(Nout, tn), _pick_tile(K, tk)
    nk = K // tk

    kernel = _qkv_kernel_single if nk == 1 else _qkv_kernel_acc
    scratch = [] if nk == 1 else [pltpu.VMEM((tm, tn), jnp.float32)]
    itemsize = x.dtype.itemsize
    cost = pl.CostEstimate(
        flops=2 * 3 * M * K * Nout, transcendentals=0,
        bytes_accessed=(3 * M * K + 3 * K * Nout + 3 * Nout) * itemsize
        + 3 * M * Nout * jnp.dtype(out_dtype).itemsize)

    return pl.pallas_call(
        kernel,
        out_shape=jax.ShapeDtypeStruct((3, M, Nout), out_dtype),
        grid=(3, M // tm, Nout // tn, nk),
        in_specs=[
            pl.BlockSpec((tm, tk), lambda s, i, j, k: (i, k)),
            pl.BlockSpec((1, tk, tn), lambda s, i, j, k: (s, k, j)),
            pl.BlockSpec((1, 1, tn), lambda s, i, j, k: (s, 0, j)),
        ],
        out_specs=pl.BlockSpec((1, tm, tn), lambda s, i, j, k: (s, i, j)),
        scratch_shapes=scratch,
        compiler_params=pltpu.CompilerParams(
            dimension_semantics=("parallel", "parallel", "parallel", "arbitrary")),
        cost_estimate=cost,
    )(x, w3, b3.reshape(3, 1, Nout))


# --------------------- Flash-attention core (online softmax) ---------------- #
def _flash_attn_kernel(mbias_ref, q_ref, k_ref, v_ref, o_ref,
                       m_sc, l_sc, acc_sc, *, num_heads, head_dim):
    ki = pl.program_id(2)

    @pl.when(ki == 0)
    def _():
        m_sc[...] = jnp.full_like(m_sc, -jnp.inf)
        l_sc[...] = jnp.zeros_like(l_sc)
        acc_sc[...] = jnp.zeros_like(acc_sc)

    # Additive key-mask bias (0 / -1e12), computed in the wrapper; loaded once per
    # kv block and broadcast inside the add (mask work hoisted out of the head loop).
    mbias = mbias_ref[0]                                   # (1, tkv) f32

    tq = q_ref.shape[2]
    alphas, pvs = [], []
    for h in range(num_heads):                             # static slices: free addressing
        lo, hi = h * head_dim, (h + 1) * head_dim
        q_h = q_ref[0, 0, :, lo:hi]                        # (tq,  D) bf16
        k_h = k_ref[0, 0, :, lo:hi]                        # (tkv, D) bf16
        v_h = v_ref[0, 0, :, lo:hi]                        # (tkv, D) bf16

        # q @ k^T on the MXU (bf16 operands, f32 acc); no transposed copy of k.
        # Softmax scale is already folded into the q weights/bias.
        s = lax.dot_general(q_h, k_h, (((1,), (1,)), ((), ())),
                            preferred_element_type=jnp.float32)
        s = s + mbias                                      # masked_fill(~mask, -1e12)

        m_prev = m_sc[h]                                   # (tq, 1) f32
        m_new = jnp.maximum(m_prev, jnp.max(s, axis=-1, keepdims=True))
        alpha = jnp.exp(m_prev - m_new)
        p = jnp.exp(s - m_new)
        l_sc[h] = alpha * l_sc[h] + jnp.sum(p, axis=-1, keepdims=True)
        m_sc[h] = m_new

        pvs.append(lax.dot_general(p.astype(v_h.dtype), v_h, (((1,), (0,)), ((), ())),
                                   preferred_element_type=jnp.float32))
        alphas.append(jnp.broadcast_to(alpha, (tq, head_dim)))

    # One full-lane (tq, C) accumulator update per kv step (unmasked vst) instead
    # of per-head 32-lane read-modify-writes.
    acc_sc[...] = (jnp.concatenate(alphas, axis=-1) * acc_sc[...]
                   + jnp.concatenate(pvs, axis=-1))

    @pl.when(ki == pl.num_programs(2) - 1)
    def _():
        inv_l = jnp.concatenate(
            [jnp.broadcast_to(pl.reciprocal(l_sc[h], approx=True), (tq, head_dim))
             for h in range(num_heads)], axis=-1)          # EUP, nearly free
        o_ref[0] = (acc_sc[...] * inv_l).astype(o_ref.dtype)


def pallas_flash_attention(qkv3, mbias, num_heads, *, tq=256, tkv=256):
    """qkv3: (3, B, N, C) (q/k/v contiguous per (b, n) slab, heads contiguous inside C).
    mbias: (B, 1, N) f32 additive key-mask bias.  Returns (B, N, C), heads merged
    (lane-dense, no post-attention transpose)."""
    _, B, N, C = qkv3.shape
    D = C // num_heads
    assert D * num_heads == C
    # TODO(synk): add a padded fallback for model dims that are not 128-multiples.
    assert C % 128 == 0, "attention kernel expects the model dim to be a multiple of 128"
    tq, tkv = _pick_tile(N, tq), _pick_tile(N, tkv)

    kern = functools.partial(_flash_attn_kernel, num_heads=num_heads, head_dim=D)
    itemsize = qkv3.dtype.itemsize
    n_qblk = N // tq
    cost = pl.CostEstimate(
        flops=4 * B * num_heads * N * N * D,
        transcendentals=2 * B * num_heads * N * N,
        bytes_accessed=((1 + 2 * n_qblk) * B * N * C + B * N * C) * itemsize + B * N * 4)

    # VMEM budget: double-buffered q/k/v/out blocks + f32 accumulator scratch,
    # with headroom (matters on v7x: 64 MiB physical, 32 MiB scoped default).
    blk_bytes = (tq * C + 2 * tkv * C + tq * C) * itemsize + tkv * 4
    scratch_bytes = tq * C * 4 + 2 * num_heads * tq * 128 * 4
    vmem_limit = int(min(max(2 * (2 * blk_bytes + scratch_bytes) + (4 << 20), 32 << 20),
                         64 << 20))

    return pl.pallas_call(
        kern,
        out_shape=jax.ShapeDtypeStruct((B, N, C), qkv3.dtype),
        grid=(B, N // tq, N // tkv),
        in_specs=[
            pl.BlockSpec((1, 1, tkv), lambda b, qi, ki: (b, 0, ki)),       # mask bias
            pl.BlockSpec((1, 1, tq, C), lambda b, qi, ki: (0, b, qi, 0)),  # q (contiguous)
            pl.BlockSpec((1, 1, tkv, C), lambda b, qi, ki: (1, b, ki, 0)), # k (contiguous)
            pl.BlockSpec((1, 1, tkv, C), lambda b, qi, ki: (2, b, ki, 0)), # v (contiguous)
        ],
        out_specs=pl.BlockSpec((1, tq, C), lambda b, qi, ki: (b, qi, 0)),
        scratch_shapes=[
            pltpu.VMEM((num_heads, tq, 1), jnp.float32),   # running max (per head)
            pltpu.VMEM((num_heads, tq, 1), jnp.float32),   # running sum (per head)
            pltpu.VMEM((tq, C), jnp.float32),              # output accumulator (heads merged)
        ],
        compiler_params=pltpu.CompilerParams(
            dimension_semantics=("parallel", "parallel", "arbitrary"),
            vmem_limit_bytes=vmem_limit),
        cost_estimate=cost,
    )(mbias, qkv3, qkv3, qkv3)


# ------------------------------ Module wrapper ------------------------------ #
def init_attention_params(key, dim, qkv_bias=False):
    k1, k2, k3, k4 = jax.random.split(key, 4)
    std = 0.02
    return {
        # stored transposed relative to torch.nn.Linear: (in, out)
        "w_qkv": jax.random.normal(k1, (dim, dim * 3), jnp.float32) * std,
        "b_qkv": (jax.random.normal(k3, (dim * 3,), jnp.float32) * std
                  if qkv_bias else jnp.zeros((dim * 3,), jnp.float32)),
        "w_proj": jax.random.normal(k2, (dim, dim), jnp.float32) * std,
        "b_proj": jax.random.normal(k4, (dim,), jnp.float32) * std,
    }


def attention_forward(params, x, num_heads, mask=None, qk_scale=None):
    """x: (B, N, C); mask: optional (B, N) {0,1} key mask."""
    B, N, C = x.shape
    D = C // num_heads
    scale = float(qk_scale) if qk_scale is not None else float(D) ** (-0.5)
    compute_dtype = jnp.bfloat16

    # (C, 3C) -> (3, C, C) per-operand weight blocks, and fold the softmax scale
    # into the q columns (weights AND bias) so the kernel never multiplies by it.
    w3 = params["w_qkv"].reshape(C, 3, C).transpose(1, 0, 2)
    b3 = params["b_qkv"].reshape(3, C)
    qscale = jnp.array([scale, 1.0, 1.0], jnp.float32).reshape(3, 1, 1)
    w3 = (w3 * qscale).astype(compute_dtype)
    b3 = (b3 * qscale.reshape(3, 1)).astype(jnp.float32)

    # Fused QKV projection: bf16 operands / f32 accumulate, bf16 (3, B*N, C) output.
    x2 = x.reshape(B * N, C).astype(compute_dtype)
    qkv3 = pallas_qkv_proj(x2, w3, b3, out_dtype=compute_dtype).reshape(3, B, N, C)

    # Additive key-mask bias (0 / -1e12), precomputed once outside the kernel.
    if mask is None:
        mbias = jnp.zeros((B, 1, N), jnp.float32)
    else:
        mbias = jnp.where(mask.reshape(B, 1, N) > 0, 0.0, -1e12).astype(jnp.float32)

    # Flash-style attention -> (B, N, C) bf16 (heads merged, lane-dense).
    o = pallas_flash_attention(qkv3, mbias, num_heads)

    # Output projection (bf16 MXU, f32 output).
    out = pallas_linear(o.reshape(B * N, C),
                        params["w_proj"].astype(compute_dtype),
                        params["b_proj"].astype(jnp.float32),
                        out_dtype=x.dtype)
    # attn_drop / proj_drop have p=0.0 -> identity in the forward pass.
    return out.reshape(B, N, C)


# ---------------------------------- Main ------------------------------------ #
if __name__ == "__main__":
    B, N, C, H = 2, 256, 128, 4   # D = 32

    key = jax.random.PRNGKey(0)
    kx, kp = jax.random.split(key)
    x = jax.random.normal(kx, (B, N, C), jnp.float32)
    params = init_attention_params(kp, C, qkv_bias=True)

    # Key-padding mask: last 5 keys of the second batch element are masked out.
    mask = jnp.ones((B, N), dtype=jnp.int32).at[1, -5:].set(0)

    fwd = jax.jit(functools.partial(attention_forward, num_heads=H))
    out = jax.block_until_ready(fwd(params, x, mask=mask))

    # Pure-JAX f32 reference (same math as the PyTorch module).
    D = C // H
    scale = D ** (-0.5)
    qkv_ref = x.reshape(B * N, C) @ params["w_qkv"] + params["b_qkv"]
    qkv_ref = qkv_ref.reshape(B, N, 3, H, D).transpose(2, 0, 3, 1, 4)
    q_r, k_r, v_r = qkv_ref[0], qkv_ref[1], qkv_ref[2]
    s_r = jnp.einsum("bhnd,bhmd->bhnm", q_r, k_r) * scale
    s_r = jnp.where(mask[:, None, None, :] > 0, s_r, -1e12)
    p_r = jax.nn.softmax(s_r, axis=-1)
    o_r = jnp.einsum("bhnm,bhmd->bhnd", p_r, v_r).transpose(0, 2, 1, 3).reshape(B * N, C)
    ref = (o_r @ params["w_proj"] + params["b_proj"]).reshape(B, N, C)

    err = float(jnp.max(jnp.abs(out - ref)))
    assert out.shape == (B, N, C)
    # bf16 MXU operands -> slightly looser tolerance than a pure-f32 kernel.
    assert jnp.allclose(out, ref, atol=2e-2, rtol=2e-2), f"mismatch: max abs err {err}"
    print("KERNEL_OK")
</pallas_src>

<mosaic_0001>
module attributes {stable_mosaic.version = 11 : i64} {
  func.func @_qkv_kernel_single(%arg0: i32, %arg1: i32, %arg2: i32, %arg3: i32, %arg4: memref<256x128xbf16, #tpu.memory_space<vmem>>, %arg5: memref<1x128x128xbf16, #tpu.memory_space<vmem>>, %arg6: memref<1x1x128xf32, #tpu.memory_space<vmem>>, %arg7: memref<1x256x128xbf16, #tpu.memory_space<vmem>>) attributes {dimension_semantics = [#tpu.dimension_semantics<parallel>, #tpu.dimension_semantics<parallel>, #tpu.dimension_semantics<parallel>, #tpu.dimension_semantics<arbitrary>], iteration_bounds = array<i64: 3, 2, 1, 1>, scalar_prefetch = 0 : i64, scratch_operands = 0 : i64, tpu.core_type = #tpu.core_type<tc>, window_params = [{transform_indices = @transform_0, window_bounds = array<i64: 256, 128>}, {transform_indices = @transform_1, window_bounds = array<i64: 1, 128, 128>}, {transform_indices = @transform_2, window_bounds = array<i64: 1, 1, 128>}, {transform_indices = @transform_3, window_bounds = array<i64: 1, 256, 128>}]} {
    %c0 = arith.constant 0 : index
    %c0_0 = arith.constant 0 : index
    %0 = vector.load %arg4[%c0, %c0_0] : memref<256x128xbf16, #tpu.memory_space<vmem>>, vector<256x128xbf16>
    %c0_1 = arith.constant 0 : index
    %c0_2 = arith.constant 0 : index
    %c0_3 = arith.constant 0 : index
    %1 = vector.load %arg5[%c0_1, %c0_2, %c0_3] : memref<1x128x128xbf16, #tpu.memory_space<vmem>>, vector<1x128x128xbf16>
    %2 = vector.shape_cast %1 : vector<1x128x128xbf16> to vector<128x128xbf16>
    %cst = arith.constant dense<0.000000e+00> : vector<256x128xf32>
    %3 = tpu.matmul %0, %2, %cst {dimension_numbers = #tpu.dot_dimension_numbers<[1], [0], [0], [1], [0, 0, 1, 1], [], []>} : vector<256x128xbf16>, vector<128x128xbf16>, vector<256x128xf32> -> vector<256x128xf32>
    %c0_4 = arith.constant 0 : index
    %c0_5 = arith.constant 0 : index
    %c0_6 = arith.constant 0 : index
    %4 = vector.load %arg6[%c0_4, %c0_5, %c0_6] : memref<1x1x128xf32, #tpu.memory_space<vmem>>, vector<1x1x128xf32>
    %5 = vector.shape_cast %4 : vector<1x1x128xf32> to vector<1x128xf32>
    %6 = vector.broadcast %5 : vector<1x128xf32> to vector<256x128xf32>
    %7 = arith.addf %3, %6 : vector<256x128xf32>
    %8 = arith.truncf %7 : vector<256x128xf32> to vector<256x128xbf16>
    %c0_7 = arith.constant 0 : index
    %c0_8 = arith.constant 0 : index
    %c0_9 = arith.constant 0 : index
    %9 = vector.load %arg7[%c0_7, %c0_8, %c0_9] : memref<1x256x128xbf16, #tpu.memory_space<vmem>>, vector<1x256x128xbf16>
    %10 = vector.shape_cast %9 : vector<1x256x128xbf16> to vector<256x128xbf16>
    %11 = vector.shape_cast %8 : vector<256x128xbf16> to vector<1x256x128xbf16>
    tpu.vector_store %arg7[%c0_7, %c0_8, %c0_9], %11 {strides = array<i32>} : memref<1x256x128xbf16, #tpu.memory_space<vmem>>, vector<1x256x128xbf16>,
    return
  }
  func.func @transform_0(%arg0: i32, %arg1: i32, %arg2: i32, %arg3: i32) -> (i32, i32) {
    %c0_i32 = arith.constant 0 : i32
    return %arg1, %arg3 : i32, i32
  }
  func.func @transform_1(%arg0: i32, %arg1: i32, %arg2: i32, %arg3: i32) -> (i32, i32, i32) {
    %c0_i32 = arith.constant 0 : i32
    return %arg0, %arg3, %arg2 : i32, i32, i32
  }
  func.func @transform_2(%arg0: i32, %arg1: i32, %arg2: i32, %arg3: i32) -> (i32, i32, i32) {
    %c0_i32 = arith.constant 0 : i32
    %c0_i32_0 = arith.constant 0 : i32
    return %arg0, %c0_i32, %arg2 : i32, i32, i32
  }
  func.func @transform_3(%arg0: i32, %arg1: i32, %arg2: i32, %arg3: i32) -> (i32, i32, i32) {
    %c0_i32 = arith.constant 0 : i32
    return %arg0, %arg1, %arg2 : i32, i32, i32
  }
}

module attributes {stable_mosaic.version = 11 : i64} {
  func.func @_linear_kernel_single(%arg0: i32, %arg1: i32, %arg2: i32, %arg3: memref<256x128xbf16, #tpu.memory_space<vmem>>, %arg4: memref<128x128xbf16, #tpu.memory_space<vmem>>, %arg5: memref<1x128xf32, #tpu.memory_space<vmem>>, %arg6: memref<256x128xf32, #tpu.memory_space<vmem>>) attributes {dimension_semantics = [#tpu.dimension_semantics<parallel>, #tpu.dimension_semantics<parallel>, #tpu.dimension_semantics<arbitrary>], iteration_bounds = array<i64: 2, 1, 1>, scalar_prefetch = 0 : i64, scratch_operands = 0 : i64, tpu.core_type = #tpu.core_type<tc>, window_params = [{transform_indices = @transform_0, window_bounds = array<i64: 256, 128>}, {transform_indices = @transform_1, window_bounds = array<i64: 128, 128>}, {transform_indices = @transform_2, window_bounds = array<i64: 1, 128>}, {transform_indices = @transform_3, window_bounds = array<i64: 256, 128>}]} {
    %c0 = arith.constant 0 : index
    %c0_0 = arith.constant 0 : index
    %0 = vector.load %arg3[%c0, %c0_0] : memref<256x128xbf16, #tpu.memory_space<vmem>>, vector<256x128xbf16>
    %c0_1 = arith.constant 0 : index
    %c0_2 = arith.constant 0 : index
    %1 = vector.load %arg4[%c0_1, %c0_2] : memref<128x128xbf16, #tpu.memory_space<vmem>>, vector<128x128xbf16>
    %cst = arith.constant dense<0.000000e+00> : vector<256x128xf32>
    %2 = tpu.matmul %0, %1, %cst {dimension_numbers = #tpu.dot_dimension_numbers<[1], [0], [0], [1], [0, 0, 1, 1], [], []>} : vector<256x128xbf16>, vector<128x128xbf16>, vector<256x128xf32> -> vector<256x128xf32>
    %c0_3 = arith.constant 0 : index
    %c0_4 = arith.constant 0 : index
    %3 = vector.load %arg5[%c0_3, %c0_4] : memref<1x128xf32, #tpu.memory_space<vmem>>, vector<1x128xf32>
    %4 = vector.broadcast %3 : vector<1x128xf32> to vector<256x128xf32>
    %5 = arith.addf %2, %4 : vector<256x128xf32>
    %c0_5 = arith.constant 0 : index
    %c0_6 = arith.constant 0 : index
    %6 = vector.load %arg6[%c0_5, %c0_6] : memref<256x128xf32, #tpu.memory_space<vmem>>, vector<256x128xf32>
    tpu.vector_store %arg6[%c0_5, %c0_6], %5 {strides = array<i32>} : memref<256x128xf32, #tpu.memory_space<vmem>>, vector<256x128xf32>,
    return
  }
  func.func @transform_0(%arg0: i32, %arg1: i32, %arg2: i32) -> (i32, i32) {
    %c0_i32 = arith.constant 0 : i32
    return %arg0, %arg2 : i32, i32
  }
  func.func @transform_1(%arg0: i32, %arg1: i32, %arg2: i32) -> (i32, i32) {
    %c0_i32 = arith.constant 0 : i32
    return %arg2, %arg1 : i32, i32
  }
  func.func @transform_2(%arg0: i32, %arg1: i32, %arg2: i32) -> (i32, i32) {
    %c0_i32 = arith.constant 0 : i32
    %c0_i32_0 = arith.constant 0 : i32
    return %c0_i32, %arg1 : i32, i32
  }
  func.func @transform_3(%arg0: i32, %arg1: i32, %arg2: i32) -> (i32, i32) {
    %c0_i32 = arith.constant 0 : i32
    return %arg0, %arg1 : i32, i32
  }
}

module attributes {stable_mosaic.version = 11 : i64} {
  func.func @_flash_attn_kernel(%arg0: i32, %arg1: i32, %arg2: i32, %arg3: memref<1x1x256xf32, #tpu.memory_space<vmem>>, %arg4: memref<1x1x256x128xbf16, #tpu.memory_space<vmem>>, %arg5: memref<1x1x256x128xbf16, #tpu.memory_space<vmem>>, %arg6: memref<1x1x256x128xbf16, #tpu.memory_space<vmem>>, %arg7: memref<1x256x128xbf16, #tpu.memory_space<vmem>>, %arg8: memref<4x256x1xf32, #tpu.memory_space<vmem>>, %arg9: memref<4x256x1xf32, #tpu.memory_space<vmem>>, %arg10: memref<256x128xf32, #tpu.memory_space<vmem>>) attributes {dimension_semantics = [#tpu.dimension_semantics<parallel>, #tpu.dimension_semantics<parallel>, #tpu.dimension_semantics<arbitrary>], iteration_bounds = array<i64: 2, 1, 1>, scalar_prefetch = 0 : i64, scratch_operands = 3 : i64, tpu.core_type = #tpu.core_type<tc>, window_params = [{transform_indices = @transform_0, window_bounds = array<i64: 1, 1, 256>}, {transform_indices = @transform_1, window_bounds = array<i64: 1, 1, 256, 128>}, {transform_indices = @transform_2, window_bounds = array<i64: 1, 1, 256, 128>}, {transform_indices = @transform_3, window_bounds = array<i64: 1, 1, 256, 128>}, {transform_indices = @transform_4, window_bounds = array<i64: 1, 256, 128>}]} {
    %c0_i32 = arith.constant 0 : i32
    %0 = arith.cmpi eq, %arg2, %c0_i32 : i32
    %1 = arith.extui %0 : i1 to i32
    %c0_i32_0 = arith.constant 0 : i32
    %2 = arith.cmpi ne, %1, %c0_i32_0 : i32
    scf.if %2 {
      %cst_114 = arith.constant 0xFF800000 : f32
      %154 = vector.broadcast %cst_114 : f32 to vector<4x256x1xf32>
      %c0_115 = arith.constant 0 : index
      %c0_116 = arith.constant 0 : index
      %c0_117 = arith.constant 0 : index
      %155 = vector.load %arg8[%c0_115, %c0_116, %c0_117] : memref<4x256x1xf32, #tpu.memory_space<vmem>>, vector<4x256x1xf32>
      tpu.vector_store %arg8[%c0_115, %c0_116, %c0_117], %154 {strides = array<i32>} : memref<4x256x1xf32, #tpu.memory_space<vmem>>, vector<4x256x1xf32>,
      %cst_118 = arith.constant 0.000000e+00 : f32
      %156 = vector.broadcast %cst_118 : f32 to vector<4x256x1xf32>
      %c0_119 = arith.constant 0 : index
      %c0_120 = arith.constant 0 : index
      %c0_121 = arith.constant 0 : index
      %157 = vector.load %arg9[%c0_119, %c0_120, %c0_121] : memref<4x256x1xf32, #tpu.memory_space<vmem>>, vector<4x256x1xf32>
      tpu.vector_store %arg9[%c0_119, %c0_120, %c0_121], %156 {strides = array<i32>} : memref<4x256x1xf32, #tpu.memory_space<vmem>>, vector<4x256x1xf32>,
      %cst_122 = arith.constant 0.000000e+00 : f32
      %158 = vector.broadcast %cst_122 : f32 to vector<256x128xf32>
      %c0_123 = arith.constant 0 : index
      %c0_124 = arith.constant 0 : index
      %159 = vector.load %arg10[%c0_123, %c0_124] : memref<256x128xf32, #tpu.memory_space<vmem>>, vector<256x128xf32>
      tpu.vector_store %arg10[%c0_123, %c0_124], %158 {strides = array<i32>} : memref<256x128xf32, #tpu.memory_space<vmem>>, vector<256x128xf32>,
    } else {
    }
    %c0 = arith.constant 0 : index
    %c0_1 = arith.constant 0 : index
    %c0_2 = arith.constant 0 : index
    %3 = vector.load %arg3[%c0, %c0_1, %c0_2] : memref<1x1x256xf32, #tpu.memory_space<vmem>>, vector<1x1x256xf32>
    %4 = vector.shape_cast %3 : vector<1x1x256xf32> to vector<1x256xf32>
    %c0_3 = arith.constant 0 : index
    %c0_4 = arith.constant 0 : index
    %c0_5 = arith.constant 0 : index
    %c0_6 = arith.constant 0 : index
    %5 = vector.load %arg4[%c0_3, %c0_4, %c0_5, %c0_6] : memref<1x1x256x128xbf16, #tpu.memory_space<vmem>>, vector<1x1x256x32xbf16>
    %6 = vector.shape_cast %5 : vector<1x1x256x32xbf16> to vector<256x32xbf16>
    %c0_7 = arith.constant 0 : index
    %c0_8 = arith.constant 0 : index
    %c0_9 = arith.constant 0 : index
    %c0_10 = arith.constant 0 : index
    %7 = vector.load %arg5[%c0_7, %c0_8, %c0_9, %c0_10] : memref<1x1x256x128xbf16, #tpu.memory_space<vmem>>, vector<1x1x256x32xbf16>
    %8 = vector.shape_cast %7 : vector<1x1x256x32xbf16> to vector<256x32xbf16>
    %c0_11 = arith.constant 0 : index
    %c0_12 = arith.constant 0 : index
    %c0_13 = arith.constant 0 : index
    %c0_14 = arith.constant 0 : index
    %9 = vector.load %arg6[%c0_11, %c0_12, %c0_13, %c0_14] : memref<1x1x256x128xbf16, #tpu.memory_space<vmem>>, vector<1x1x256x32xbf16>
    %10 = vector.shape_cast %9 : vector<1x1x256x32xbf16> to vector<256x32xbf16>
    %cst = arith.constant dense<0.000000e+00> : vector<256x256xf32>
    %11 = tpu.matmul %6, %8, %cst {dimension_numbers = #tpu.dot_dimension_numbers<[1], [1], [0], [0], [0, 0, 1, 0], [], []>} : vector<256x32xbf16>, vector<256x32xbf16>, vector<256x256xf32> -> vector<256x256xf32>
    %12 = vector.broadcast %4 : vector<1x256xf32> to vector<256x256xf32>
    %13 = arith.addf %11, %12 : vector<256x256xf32>
    %c0_15 = arith.constant 0 : index
    %c0_16 = arith.constant 0 : index
    %c0_17 = arith.constant 0 : index
    %14 = vector.load %arg8[%c0_15, %c0_16, %c0_17] : memref<4x256x1xf32, #tpu.memory_space<vmem>>, vector<1x256x1xf32>
    %15 = vector.shape_cast %14 : vector<1x256x1xf32> to vector<256x1xf32>
    %cst_18 = arith.constant dense<0xFF800000> : vector<256xf32>
    %16 = vector.multi_reduction <maximumf>, %13, %cst_18 [1] : vector<256x256xf32> to vector<256xf32>
    %17 = vector.shape_cast %16 : vector<256xf32> to vector<256x1xf32>
    %18 = arith.maximumf %15, %17 : vector<256x1xf32>
    %19 = arith.subf %15, %18 : vector<256x1xf32>
    %20 = math.exp %19 : vector<256x1xf32>
    %21 = vector.broadcast %18 : vector<256x1xf32> to vector<256x256xf32>
    %22 = arith.subf %13, %21 : vector<256x256xf32>
    %23 = math.exp %22 : vector<256x256xf32>
    %c0_19 = arith.constant 0 : index
    %c0_20 = arith.constant 0 : index
    %c0_21 = arith.constant 0 : index
    %24 = vector.load %arg9[%c0_19, %c0_20, %c0_21] : memref<4x256x1xf32, #tpu.memory_space<vmem>>, vector<1x256x1xf32>
    %25 = vector.shape_cast %24 : vector<1x256x1xf32> to vector<256x1xf32>
    %26 = arith.mulf %20, %25 : vector<256x1xf32>
    %cst_22 = arith.constant dense<0.000000e+00> : vector<256xf32>
    %27 = vector.multi_reduction <add>, %23, %cst_22 [1] : vector<256x256xf32> to vector<256xf32>
    %28 = vector.shape_cast %27 : vector<256xf32> to vector<256x1xf32>
    %29 = arith.addf %26, %28 : vector<256x1xf32>
    %c0_23 = arith.constant 0 : index
    %c0_24 = arith.constant 0 : index
    %c0_25 = arith.constant 0 : index
    %30 = vector.load %arg9[%c0_23, %c0_24, %c0_25] : memref<4x256x1xf32, #tpu.memory_space<vmem>>, vector<1x256x1xf32>
    %31 = vector.shape_cast %30 : vector<1x256x1xf32> to vector<256x1xf32>
    %32 = vector.shape_cast %29 : vector<256x1xf32> to vector<1x256x1xf32>
    tpu.vector_store %arg9[%c0_23, %c0_24, %c0_25], %32 {strides = array<i32>} : memref<4x256x1xf32, #tpu.memory_space<vmem>>, vector<1x256x1xf32>,
    %c0_26 = arith.constant 0 : index
    %c0_27 = arith.constant 0 : index
    %c0_28 = arith.constant 0 : index
    %33 = vector.load %arg8[%c0_26, %c0_27, %c0_28] : memref<4x256x1xf32, #tpu.memory_space<vmem>>, vector<1x256x1xf32>
    %34 = vector.shape_cast %33 : vector<1x256x1xf32> to vector<256x1xf32>
    %35 = vector.shape_cast %18 : vector<256x1xf32> to vector<1x256x1xf32>
    tpu.vector_store %arg8[%c0_26, %c0_27, %c0_28], %35 {strides = array<i32>} : memref<4x256x1xf32, #tpu.memory_space<vmem>>, vector<1x256x1xf32>,
    %36 = arith.truncf %23 : vector<256x256xf32> to vector<256x256xbf16>
    %cst_29 = arith.constant dense<0.000000e+00> : vector<256x32xf32>
    %37 = tpu.matmul %36, %10, %cst_29 {dimension_numbers = #tpu.dot_dimension_numbers<[1], [0], [0], [1], [0, 0, 1, 1], [], []>} : vector<256x256xbf16>, vector<256x32xbf16>, vector<256x32xf32> -> vector<256x32xf32>
    %38 = vector.shape_cast %20 : vector<256x1xf32> to vector<256x1xf32>
    %39 = vector.broadcast %38 : vector<256x1xf32> to vector<256x32xf32>
    %c0_30 = arith.constant 0 : index
    %c0_31 = arith.constant 0 : index
    %c0_32 = arith.constant 0 : index
    %c32 = arith.constant 32 : index
    %40 = vector.load %arg4[%c0_30, %c0_31, %c0_32, %c32] : memref<1x1x256x128xbf16, #tpu.memory_space<vmem>>, vector<1x1x256x32xbf16>
    %41 = vector.shape_cast %40 : vector<1x1x256x32xbf16> to vector<256x32xbf16>
    %c0_33 = arith.constant 0 : index
    %c0_34 = arith.constant 0 : index
    %c0_35 = arith.constant 0 : index
    %c32_36 = arith.constant 32 : index
    %42 = vector.load %arg5[%c0_33, %c0_34, %c0_35, %c32_36] : memref<1x1x256x128xbf16, #tpu.memory_space<vmem>>, vector<1x1x256x32xbf16>
    %43 = vector.shape_cast %42 : vector<1x1x256x32xbf16> to vector<256x32xbf16>
    %c0_37 = arith.constant 0 : index
    %c0_38 = arith.constant 0 : index
    %c0_39 = arith.constant 0 : index
    %c32_40 = arith.constant 32 : index
    %44 = vector.load %arg6[%c0_37, %c0_38, %c0_39, %c32_40] : memref<1x1x256x128xbf16, #tpu.memory_space<vmem>>, vector<1x1x256x32xbf16>
    %45 = vector.shape_cast %44 : vector<1x1x256x32xbf16> to vector<256x32xbf16>
    %cst_41 = arith.constant dense<0.000000e+00> : vector<256x256xf32>
    %46 = tpu.matmul %41, %43, %cst_41 {dimension_numbers = #tpu.dot_dimension_numbers<[1], [1], [0], [0], [0, 0, 1, 0], [], []>} : vector<256x32xbf16>, vector<256x32xbf16>, vector<256x256xf32> -> vector<256x256xf32>
    %47 = vector.broadcast %4 : vector<1x256xf32> to vector<256x256xf32>
    %48 = arith.addf %46, %47 : vector<256x256xf32>
    %c1 = arith.constant 1 : index
    %c0_42 = arith.constant 0 : index
    %c0_43 = arith.constant 0 : index
    %49 = vector.load %arg8[%c1, %c0_42, %c0_43] : memref<4x256x1xf32, #tpu.memory_space<vmem>>, vector<1x256x1xf32>
    %50 = vector.shape_cast %49 : vector<1x256x1xf32> to vector<256x1xf32>
    %cst_44 = arith.constant dense<0xFF800000> : vector<256xf32>
    %51 = vector.multi_reduction <maximumf>, %48, %cst_44 [1] : vector<256x256xf32> to vector<256xf32>
    %52 = vector.shape_cast %51 : vector<256xf32> to vector<256x1xf32>
    %53 = arith.maximumf %50, %52 : vector<256x1xf32>
    %54 = arith.subf %50, %53 : vector<256x1xf32>
    %55 = math.exp %54 : vector<256x1xf32>
    %56 = vector.broadcast %53 : vector<256x1xf32> to vector<256x256xf32>
    %57 = arith.subf %48, %56 : vector<256x256xf32>
    %58 = math.exp %57 : vector<256x256xf32>
    %c1_45 = arith.constant 1 : index
    %c0_46 = arith.constant 0 : index
    %c0_47 = arith.constant 0 : index
    %59 = vector.load %arg9[%c1_45, %c0_46, %c0_47] : memref<4x256x1xf32, #tpu.memory_space<vmem>>, vector<1x256x1xf32>
    %60 = vector.shape_cast %59 : vector<1x256x1xf32> to vector<256x1xf32>
    %61 = arith.mulf %55, %60 : vector<256x1xf32>
    %cst_48 = arith.constant dense<0.000000e+00> : vector<256xf32>
    %62 = vector.multi_reduction <add>, %58, %cst_48 [1] : vector<256x256xf32> to vector<256xf32>
    %63 = vector.shape_cast %62 : vector<256xf32> to vector<256x1xf32>
    %64 = arith.addf %61, %63 : vector<256x1xf32>
    %c1_49 = arith.constant 1 : index
    %c0_50 = arith.constant 0 : index
    %c0_51 = arith.constant 0 : index
    %65 = vector.load %arg9[%c1_49, %c0_50, %c0_51] : memref<4x256x1xf32, #tpu.memory_space<vmem>>, vector<1x256x1xf32>
    %66 = vector.shape_cast %65 : vector<1x256x1xf32> to vector<256x1xf32>
    %67 = vector.shape_cast %64 : vector<256x1xf32> to vector<1x256x1xf32>
    tpu.vector_store %arg9[%c1_49, %c0_50, %c0_51], %67 {strides = array<i32>} : memref<4x256x1xf32, #tpu.memory_space<vmem>>, vector<1x256x1xf32>,
    %c1_52 = arith.constant 1 : index
    %c0_53 = arith.constant 0 : index
    %c0_54 = arith.constant 0 : index
    %68 = vector.load %arg8[%c1_52, %c0_53, %c0_54] : memref<4x256x1xf32, #tpu.memory_space<vmem>>, vector<1x256x1xf32>
    %69 = vector.shape_cast %68 : vector<1x256x1xf32> to vector<256x1xf32>
    %70 = vector.shape_cast %53 : vector<256x1xf32> to vector<1x256x1xf32>
    tpu.vector_store %arg8[%c1_52, %c0_53, %c0_54], %70 {strides = array<i32>} : memref<4x256x1xf32, #tpu.memory_space<vmem>>, vector<1x256x1xf32>,
    %71 = arith.truncf %58 : vector<256x256xf32> to vector<256x256xbf16>
    %cst_55 = arith.constant dense<0.000000e+00> : vector<256x32xf32>
    %72 = tpu.matmul %71, %45, %cst_55 {dimension_numbers = #tpu.dot_dimension_numbers<[1], [0], [0], [1], [0, 0, 1, 1], [], []>} : vector<256x256xbf16>, vector<256x32xbf16>, vector<256x32xf32> -> vector<256x32xf32>
    %73 = vector.shape_cast %55 : vector<256x1xf32> to vector<256x1xf32>
    %74 = vector.broadcast %73 : vector<256x1xf32> to vector<256x32xf32>
    %c0_56 = arith.constant 0 : index
    %c0_57 = arith.constant 0 : index
    %c0_58 = arith.constant 0 : index
    %c64 = arith.constant 64 : index
    %75 = vector.load %arg4[%c0_56, %c0_57, %c0_58, %c64] : memref<1x1x256x128xbf16, #tpu.memory_space<vmem>>, vector<1x1x256x32xbf16>
    %76 = vector.shape_cast %75 : vector<1x1x256x32xbf16> to vector<256x32xbf16>
    %c0_59 = arith.constant 0 : index
    %c0_60 = arith.constant 0 : index
    %c0_61 = arith.constant 0 : index
    %c64_62 = arith.constant 64 : index
    %77 = vector.load %arg5[%c0_59, %c0_60, %c0_61, %c64_62] : memref<1x1x256x128xbf16, #tpu.memory_space<vmem>>, vector<1x1x256x32xbf16>
    %78 = vector.shape_cast %77 : vector<1x1x256x32xbf16> to vector<256x32xbf16>
    %c0_63 = arith.constant 0 : index
    %c0_64 = arith.constant 0 : index
    %c0_65 = arith.constant 0 : index
    %c64_66 = arith.constant 64 : index
    %79 = vector.load %arg6[%c0_63, %c0_64, %c0_65, %c64_66] : memref<1x1x256x128xbf16, #tpu.memory_space<vmem>>, vector<1x1x256x32xbf16>
    %80 = vector.shape_cast %79 : vector<1x1x256x32xbf16> to vector<256x32xbf16>
    %cst_67 = arith.constant dense<0.000000e+00> : vector<256x256xf32>
    %81 = tpu.matmul %76, %78, %cst_67 {dimension_numbers = #tpu.dot_dimension_numbers<[1], [1], [0], [0], [0, 0, 1, 0], [], []>} : vector<256x32xbf16>, vector<256x32xbf16>, vector<256x256xf32> -> vector<256x256xf32>
    %82 = vector.broadcast %4 : vector<1x256xf32> to vector<256x256xf32>
    %83 = arith.addf %81, %82 : vector<256x256xf32>
    %c2 = arith.constant 2 : index
    %c0_68 = arith.constant 0 : index
    %c0_69 = arith.constant 0 : index
    %84 = vector.load %arg8[%c2, %c0_68, %c0_69] : memref<4x256x1xf32, #tpu.memory_space<vmem>>, vector<1x256x1xf32>
    %85 = vector.shape_cast %84 : vector<1x256x1xf32> to vector<256x1xf32>
    %cst_70 = arith.constant dense<0xFF800000> : vector<256xf32>
    %86 = vector.multi_reduction <maximumf>, %83, %cst_70 [1] : vector<256x256xf32> to vector<256xf32>
    %87 = vector.shape_cast %86 : vector<256xf32> to vector<256x1xf32>
    %88 = arith.maximumf %85, %87 : vector<256x1xf32>
    %89 = arith.subf %85, %88 : vector<256x1xf32>
    %90 = math.exp %89 : vector<256x1xf32>
    %91 = vector.broadcast %88 : vector<256x1xf32> to vector<256x256xf32>
    %92 = arith.subf %83, %91 : vector<256x256xf32>
    %93 = math.exp %92 : vector<256x256xf32>
    %c2_71 = arith.constant 2 : index
    %c0_72 = arith.constant 0 : index
    %c0_73 = arith.constant 0 : index
    %94 = vector.load %arg9[%c2_71, %c0_72, %c0_73] : memref<4x256x1xf32, #tpu.memory_space<vmem>>, vector<1x256x1xf32>
    %95 = vector.shape_cast %94 : vector<1x256x1xf32> to vector<256x1xf32>
    %96 = arith.mulf %90, %95 : vector<256x1xf32>
    %cst_74 = arith.constant dense<0.000000e+00> : vector<256xf32>
    %97 = vector.multi_reduction <add>, %93, %cst_74 [1] : vector<256x256xf32> to vector<256xf32>
    %98 = vector.shape_cast %97 : vector<256xf32> to vector<256x1xf32>
    %99 = arith.addf %96, %98 : vector<256x1xf32>
    %c2_75 = arith.constant 2 : index
    %c0_76 = arith.constant 0 : index
    %c0_77 = arith.constant 0 : index
    %100 = vector.load %arg9[%c2_75, %c0_76, %c0_77] : memref<4x256x1xf32, #tpu.memory_space<vmem>>, vector<1x256x1xf32>
    %101 = vector.shape_cast %100 : vector<1x256x1xf32> to vector<256x1xf32>
    %102 = vector.shape_cast %99 : vector<256x1xf32> to vector<1x256x1xf32>
    tpu.vector_store %arg9[%c2_75, %c0_76, %c0_77], %102 {strides = array<i32>} : memref<4x256x1xf32, #tpu.memory_space<vmem>>, vector<1x256x1xf32>,
    %c2_78 = arith.constant 2 : index
    %c0_79 = arith.constant 0 : index
    %c0_80 = arith.constant 0 : index
    %103 = vector.load %arg8[%c2_78, %c0_79, %c0_80] : memref<4x256x1xf32, #tpu.memory_space<vmem>>, vector<1x256x1xf32>
    %104 = vector.shape_cast %103 : vector<1x256x1xf32> to vector<256x1xf32>
    %105 = vector.shape_cast %88 : vector<256x1xf32> to vector<1x256x1xf32>
    tpu.vector_store %arg8[%c2_78, %c0_79, %c0_80], %105 {strides = array<i32>} : memref<4x256x1xf32, #tpu.memory_space<vmem>>, vector<1x256x1xf32>,
    %106 = arith.truncf %93 : vector<256x256xf32> to vector<256x256xbf16>
    %cst_81 = arith.constant dense<0.000000e+00> : vector<256x32xf32>
    %107 = tpu.matmul %106, %80, %cst_81 {dimension_numbers = #tpu.dot_dimension_numbers<[1], [0], [0], [1], [0, 0, 1, 1], [], []>} : vector<256x256xbf16>, vector<256x32xbf16>, vector<256x32xf32> -> vector<256x32xf32>
    %108 = vector.shape_cast %90 : vector<256x1xf32> to vector<256x1xf32>
    %109 = vector.broadcast %108 : vector<256x1xf32> to vector<256x32xf32>
    %c0_82 = arith.constant 0 : index
    %c0_83 = arith.constant 0 : index
    %c0_84 = arith.constant 0 : index
    %c96 = arith.constant 96 : index
    %110 = vector.load %arg4[%c0_82, %c0_83, %c0_84, %c96] : memref<1x1x256x128xbf16, #tpu.memory_space<vmem>>, vector<1x1x256x32xbf16>
    %111 = vector.shape_cast %110 : vector<1x1x256x32xbf16> to vector<256x32xbf16>
    %c0_85 = arith.constant 0 : index
    %c0_86 = arith.constant 0 : index
    %c0_87 = arith.constant 0 : index
    %c96_88 = arith.constant 96 : index
    %112 = vector.load %arg5[%c0_85, %c0_86, %c0_87, %c96_88] : memref<1x1x256x128xbf16, #tpu.memory_space<vmem>>, vector<1x1x256x32xbf16>
    %113 = vector.shape_cast %112 : vector<1x1x256x32xbf16> to vector<256x32xbf16>
    %c0_89 = arith.constant 0 : index
    %c0_90 = arith.constant 0 : index
    %c0_91 = arith.constant 0 : index
    %c96_92 = arith.constant 96 : index
    %114 = vector.load %arg6[%c0_89, %c0_90, %c0_91, %c96_92] : memref<1x1x256x128xbf16, #tpu.memory_space<vmem>>, vector<1x1x256x32xbf16>
    %115 = vector.shape_cast %114 : vector<1x1x256x32xbf16> to vector<256x32xbf16>
    %cst_93 = arith.constant dense<0.000000e+00> : vector<256x256xf32>
    %116 = tpu.matmul %111, %113, %cst_93 {dimension_numbers = #tpu.dot_dimension_numbers<[1], [1], [0], [0], [0, 0, 1, 0], [], []>} : vector<256x32xbf16>, vector<256x32xbf16>, vector<256x256xf32> -> vector<256x256xf32>
    %117 = vector.broadcast %4 : vector<1x256xf32> to vector<256x256xf32>
    %118 = arith.addf %116, %117 : vector<256x256xf32>
    %c3 = arith.constant 3 : index
    %c0_94 = arith.constant 0 : index
    %c0_95 = arith.constant 0 : index
    %119 = vector.load %arg8[%c3, %c0_94, %c0_95] : memref<4x256x1xf32, #tpu.memory_space<vmem>>, vector<1x256x1xf32>
    %120 = vector.shape_cast %119 : vector<1x256x1xf32> to vector<256x1xf32>
    %cst_96 = arith.constant dense<0xFF800000> : vector<256xf32>
    %121 = vector.multi_reduction <maximumf>, %118, %cst_96 [1] : vector<256x256xf32> to vector<256xf32>
    %122 = vector.shape_cast %121 : vector<256xf32> to vector<256x1xf32>
    %123 = arith.maximumf %120, %122 : vector<256x1xf32>
    %124 = arith.subf %120, %123 : vector<256x1xf32>
    %125 = math.exp %124 : vector<256x1xf32>
    %126 = vector.broadcast %123 : vector<256x1xf32> to vector<256x256xf32>
    %127 = arith.subf %118, %126 : vector<256x256xf32>
    %128 = math.exp %127 : vector<256x256xf32>
    %c3_97 = arith.constant 3 : index
    %c0_98 = arith.constant 0 : index
    %c0_99 = arith.constant 0 : index
    %129 = vector.load %arg9[%c3_97, %c0_98, %c0_99] : memref<4x256x1xf32, #tpu.memory_space<vmem>>, vector<1x256x1xf32>
    %130 = vector.shape_cast %129 : vector<1x256x1xf32> to vector<256x1xf32>
    %131 = arith.mulf %125, %130 : vector<256x1xf32>
    %cst_100 = arith.constant dense<0.000000e+00> : vector<256xf32>
    %132 = vector.multi_reduction <add>, %128, %cst_100 [1] : vector<256x256xf32> to vector<256xf32>
    %133 = vector.shape_cast %132 : vector<256xf32> to vector<256x1xf32>
    %134 = arith.addf %131, %133 : vector<256x1xf32>
    %c3_101 = arith.constant 3 : index
    %c0_102 = arith.constant 0 : index
    %c0_103 = arith.constant 0 : index
    %135 = vector.load %arg9[%c3_101, %c0_102, %c0_103] : memref<4x256x1xf32, #tpu.memory_space<vmem>>, vector<1x256x1xf32>
    %136 = vector.shape_cast %135 : vector<1x256x1xf32> to vector<256x1xf32>
    %137 = vector.shape_cast %134 : vector<256x1xf32> to vector<1x256x1xf32>
    tpu.vector_store %arg9[%c3_101, %c0_102, %c0_103], %137 {strides = array<i32>} : memref<4x256x1xf32, #tpu.memory_space<vmem>>, vector<1x256x1xf32>,
    %c3_104 = arith.constant 3 : index
    %c0_105 = arith.constant 0 : index
    %c0_106 = arith.constant 0 : index
    %138 = vector.load %arg8[%c3_104, %c0_105, %c0_106] : memref<4x256x1xf32, #tpu.memory_space<vmem>>, vector<1x256x1xf32>
    %139 = vector.shape_cast %138 : vector<1x256x1xf32> to vector<256x1xf32>
    %140 = vector.shape_cast %123 : vector<256x1xf32> to vector<1x256x1xf32>
    tpu.vector_store %arg8[%c3_104, %c0_105, %c0_106], %140 {strides = array<i32>} : memref<4x256x1xf32, #tpu.memory_space<vmem>>, vector<1x256x1xf32>,
    %141 = arith.truncf %128 : vector<256x256xf32> to vector<256x256xbf16>
    %cst_107 = arith.constant dense<0.000000e+00> : vector<256x32xf32>
    %142 = tpu.matmul %141, %115, %cst_107 {dimension_numbers = #tpu.dot_dimension_numbers<[1], [0], [0], [1], [0, 0, 1, 1], [], []>} : vector<256x256xbf16>, vector<256x32xbf16>, vector<256x32xf32> -> vector<256x32xf32>
    %143 = vector.shape_cast %125 : vector<256x1xf32> to vector<256x1xf32>
    %144 = vector.broadcast %143 : vector<256x1xf32> to vector<256x32xf32>
    %145 = tpu.concatenate %39, %74, %109, %144 in 1 : vector<256x32xf32>, vector<256x32xf32>, vector<256x32xf32>, vector<256x32xf32> -> vector<256x128xf32>
    %c0_108 = arith.constant 0 : index
    %c0_109 = arith.constant 0 : index
    %146 = vector.load %arg10[%c0_108, %c0_109] : memref<256x128xf32, #tpu.memory_space<vmem>>, vector<256x128xf32>
    %147 = arith.mulf %145, %146 : vector<256x128xf32>
    %148 = tpu.concatenate %37, %72, %107, %142 in 1 : vector<256x32xf32>, vector<256x32xf32>, vector<256x32xf32>, vector<256x32xf32> -> vector<256x128xf32>
    %149 = arith.addf %147, %148 : vector<256x128xf32>
    %c0_110 = arith.constant 0 : index
    %c0_111 = arith.constant 0 : index
    %150 = vector.load %arg10[%c0_110, %c0_111] : memref<256x128xf32, #tpu.memory_space<vmem>>, vector<256x128xf32>
    tpu.vector_store %arg10[%c0_110, %c0_111], %149 {strides = array<i32>} : memref<256x128xf32, #tpu.memory_space<vmem>>, vector<256x128xf32>,
    %c0_i32_112 = arith.constant 0 : i32
    %151 = arith.cmpi eq, %arg2, %c0_i32_112 : i32
    %152 = arith.extui %151 : i1 to i32
    %c0_i32_113 = arith.constant 0 : i32
    %153 = arith.cmpi ne, %152, %c0_i32_113 : i32
    scf.if %153 {
      %c0_114 = arith.constant 0 : index
      %c0_115 = arith.constant 0 : index
      %c0_116 = arith.constant 0 : index
      %154 = vector.load %arg9[%c0_114, %c0_115, %c0_116] : memref<4x256x1xf32, #tpu.memory_space<vmem>>, vector<1x256x1xf32>
      %155 = vector.shape_cast %154 : vector<1x256x1xf32> to vector<256x1xf32>
      %156 = tpu.reciprocal %155 {approx = true} : vector<256x1xf32> -> vector<256x1xf32>
      %157 = vector.shape_cast %156 : vector<256x1xf32> to vector<256x1xf32>
      %158 = vector.broadcast %157 : vector<256x1xf32> to vector<256x32xf32>
      %c1_117 = arith.constant 1 : index
      %c0_118 = arith.constant 0 : index
      %c0_119 = arith.constant 0 : index
      %159 = vector.load %arg9[%c1_117, %c0_118, %c0_119] : memref<4x256x1xf32, #tpu.memory_space<vmem>>, vector<1x256x1xf32>
      %160 = vector.shape_cast %159 : vector<1x256x1xf32> to vector<256x1xf32>
      %161 = tpu.reciprocal %160 {approx = true} : vector<256x1xf32> -> vector<256x1xf32>
      %162 = vector.shape_cast %161 : vector<256x1xf32> to vector<256x1xf32>
      %163 = vector.broadcast %162 : vector<256x1xf32> to vector<256x32xf32>
      %c2_120 = arith.constant 2 : index
      %c0_121 = arith.constant 0 : index
      %c0_122 = arith.constant 0 : index
      %164 = vector.load %arg9[%c2_120, %c0_121, %c0_122] : memref<4x256x1xf32, #tpu.memory_space<vmem>>, vector<1x256x1xf32>
      %165 = vector.shape_cast %164 : vector<1x256x1xf32> to vector<256x1xf32>
      %166 = tpu.reciprocal %165 {approx = true} : vector<256x1xf32> -> vector<256x1xf32>
      %167 = vector.shape_cast %166 : vector<256x1xf32> to vector<256x1xf32>
      %168 = vector.broadcast %167 : vector<256x1xf32> to vector<256x32xf32>
      %c3_123 = arith.constant 3 : index
      %c0_124 = arith.constant 0 : index
      %c0_125 = arith.constant 0 : index
      %169 = vector.load %arg9[%c3_123, %c0_124, %c0_125] : memref<4x256x1xf32, #tpu.memory_space<vmem>>, vector<1x256x1xf32>
      %170 = vector.shape_cast %169 : vector<1x256x1xf32> to vector<256x1xf32>
      %171 = tpu.reciprocal %170 {approx = true} : vector<256x1xf32> -> vector<256x1xf32>
      %172 = vector.shape_cast %171 : vector<256x1xf32> to vector<256x1xf32>
      %173 = vector.broadcast %172 : vector<256x1xf32> to vector<256x32xf32>
      %174 = tpu.concatenate %158, %163, %168, %173 in 1 : vector<256x32xf32>, vector<256x32xf32>, vector<256x32xf32>, vector<256x32xf32> -> vector<256x128xf32>
      %c0_126 = arith.constant 0 : index
      %c0_127 = arith.constant 0 : index
      %175 = vector.load %arg10[%c0_126, %c0_127] : memref<256x128xf32, #tpu.memory_space<vmem>>, vector<256x128xf32>
      %176 = arith.mulf %175, %174 : vector<256x128xf32>
      %177 = arith.truncf %176 : vector<256x128xf32> to vector<256x128xbf16>
      %c0_128 = arith.constant 0 : index
      %c0_129 = arith.constant 0 : index
      %c0_130 = arith.constant 0 : index
      %178 = vector.load %arg7[%c0_128, %c0_129, %c0_130] : memref<1x256x128xbf16, #tpu.memory_space<vmem>>, vector<1x256x128xbf16>
      %179 = vector.shape_cast %178 : vector<1x256x128xbf16> to vector<256x128xbf16>
      %180 = vector.shape_cast %177 : vector<256x128xbf16> to vector<1x256x128xbf16>
      tpu.vector_store %arg7[%c0_128, %c0_129, %c0_130], %180 {strides = array<i32>} : memref<1x256x128xbf16, #tpu.memory_space<vmem>>, vector<1x256x128xbf16>,
    } else {
    }
    return
  }
  func.func @transform_0(%arg0: i32, %arg1: i32, %arg2: i32) -> (i32, i32, i32) {
    %c0_i32 = arith.constant 0 : i32
    %c0_i32_0 = arith.constant 0 : i32
    return %arg0, %c0_i32, %arg2 : i32, i32, i32
  }
  func.func @transform_1(%arg0: i32, %arg1: i32, %arg2: i32) -> (i32, i32, i32, i32) {
    %c0_i32 = arith.constant 0 : i32
    %c0_i32_0 = arith.constant 0 : i32
    %c0_i32_1 = arith.constant 0 : i32
    return %c0_i32, %arg0, %arg1, %c0_i32_0 : i32, i32, i32, i32
  }
  func.func @transform_2(%arg0: i32, %arg1: i32, %arg2: i32) -> (i32, i32, i32, i32) {
    %c1_i32 = arith.constant 1 : i32
    %c0_i32 = arith.constant 0 : i32
    %c0_i32_0 = arith.constant 0 : i32
    return %c1_i32, %arg0, %arg2, %c0_i32 : i32, i32, i32, i32
  }
  func.func @transform_3(%arg0: i32, %arg1: i32, %arg2: i32) -> (i32, i32, i32, i32) {
    %c2_i32 = arith.constant 2 : i32
    %c0_i32 = arith.constant 0 : i32
    %c0_i32_0 = arith.constant 0 : i32
    return %c2_i32, %arg0, %arg2, %c0_i32 : i32, i32, i32, i32
  }
  func.func @transform_4(%arg0: i32, %arg1: i32, %arg2: i32) -> (i32, i32, i32) {
    %c0_i32 = arith.constant 0 : i32
    %c0_i32_0 = arith.constant 0 : i32
    return %arg0, %arg1, %c0_i32 : i32, i32, i32
  }
}

</mosaic_0001>

<llo_original>
// kernel: attention_forward.5
$region0: #{attention_forward.5}
  #allocation0 [shape = 'u32[]', space=smem, size = 0x4, offset = 0x4, fixed_abs, tag = 'smem constant byte address 0x4 - core index']
  #allocation1 [shape = 'u32[144,128]{1,0:T(1,128)}', space=vmem, size = 0x12000, scoped, tag = 'internal scratch']
  %s0 = inlined_call_operand.vmem [shape: bf16[512,128], index: 0, kind: input, shape index: {}]
  %s1 = inlined_call_operand.vmem [shape: bf16[128,128], index: 1, kind: input, shape index: {}]
  %s2 = inlined_call_operand.vmem [shape: f32[1,128], index: 2, kind: input, shape index: {}]
  %s3 = inlined_call_operand.hbm [shape: f32[512,128], index: 3, kind: output, shape index: {}]
  %s4 = sld [smem:[#allocation0]]
  $region45: #{attention_forward.5} parent=0
    _
  %s6 = ssub.s32 1, %s4
  %s7 = scalar_select 0, %s6, %s4
  $region1: #{attention_forward.5} parent=0
    #allocation2 [shape = 'u8[262144]{0}', space=vmem, size = 0x40000, scoped, tag = 'output window, operand 0']
    #allocation3 [shape = 's32[2]{0}', space=sflag, size = 0x8, scoped, tag = 'scoped memory for attention_forward.5']
    %8 = vsyncpa [#allocation3], 0
    %s9 = scalar_lea.sflag [#allocation3], 1
    %10 = vsyncpa %s9, 0
    loop: start=0, step=1, limit=4
    $region2: #{attention_forward.5} parent=1 // loop_pre_header
      _
    $region3: #{attention_forward.5} parent=1 // loop_header
      %s12 = sphi 0, %s16
      %p13 = scmp.ge.s32.totalorder %s12, 4
      %s19 = sphi 0, %s38
      %s20 = sphi 0, %s34
      %s21 = sphi 0, %s30
      %s22 = sphi 0, %s19
      %s23 = sphi 0, %s20
      %s24 = sphi 0, %s21
      %s25 = sphi 0, %s22
      %s26 = sphi 0, %s23
      %s27 = sphi 0, %s24
      %s43 = sphi 0, %s45
      %s46 = sphi 0, %s43
      %s47 = sphi 0, %s46
      %s63 = sphi 0, %s47
      %s71 = sphi 0, %s73
      %s74 = sphi 0, %s71
      %s75 = sphi 0, %s74
      %s91 = sphi 0, %s75
      %s97 = sphi 0, %s99
      %s100 = sphi 0, %s97
      %s101 = sphi 0, %s100
      %s117 = sphi 0, %s101
      %s125 = sphi 0, %s127
      %s128 = sphi 0, %s125
      %s129 = sphi 0, %s128
      %s145 = sphi 0, %s129
    $region4: #{attention_forward.5} parent=1 // loop_header_branch
      %15 = sbr.rel (%p13) target = $region8
    $region5: #{attention_forward.5} parent=1 // loop_body
      %s17 = ssub.s32 %s12, 1
      %s18 = ssub.s32 %s12, 2
      %s28 = sadd.s32 1, %s21
      %p29 = scmp.ge.s32.totalorder %s28, 1
      %s30 = scalar_select %p29, 0, %s28
      %s31 = sadd.s32 1, %s20
      %s32 = scalar_select %p29, %s31, %s20
      %p33 = scmp.ge.s32.totalorder %s32, 1
      %s34 = scalar_select %p33, 0, %s32
      %s35 = sadd.s32 1, %s19
      %s36 = scalar_select %p33, %s35, %s19
      %p37 = scmp.ge.s32.totalorder %s36, 2
      %s38 = scalar_select %p37, 0, %s36
      %s39 = ssub.s32 %s19, %s38
      %s40 = ssub.s32 %s21, %s30
      %s41 = sor.u32 %s39, %s40
      %p42 = scmp.eq.s32.totalorder %s41, 0
      %s44 = sadd.s32 %s43, 1
      %s45 = scalar_select %p42, %s43, %s44
      %p48 = pneg %p42
      %p49 = scmp.eq.s32.totalorder %s12, 1
      %p50 = por %p48, %p49
      %p51 = scmp.ne.s32.totalorder %s43, %s46
      %p52 = scmp.eq.s32.totalorder %s12, 0
      %p53 = por %p51, %p52
      %p54 = scmp.ne.s32.totalorder %s43, %s46
      %p55 = scmp.eq.s32.totalorder %s17, 1
      %p56 = por %p54, %p55
      %p57 = scmp.ne.s32.totalorder %s46, %s47
      %p58 = scmp.eq.s32.totalorder %s17, 0
      %p59 = por %p57, %p58
      %p60 = scmp.ne.s32.totalorder %s46, %s47
      %p61 = scmp.eq.s32.totalorder %s18, 1
      %p62 = por %p60, %p61
      %p64 = scmp.ne.s32.totalorder %s47, %s63
      %p65 = scmp.eq.s32.totalorder %s18, 0
      %p66 = por %p64, %p65
      %s67 = ssub.s32 %s21, %s30
      %s68 = ssub.s32 %s20, %s34
      %s69 = sor.u32 %s67, %s68
      %p70 = scmp.eq.s32.totalorder %s69, 0
      %s72 = sadd.s32 %s71, 1
      %s73 = scalar_select %p70, %s71, %s72
      %p76 = pneg %p70
      %p77 = scmp.eq.s32.totalorder %s12, 1
      %p78 = por %p76, %p77
      %p79 = scmp.ne.s32.totalorder %s71, %s74
      %p80 = scmp.eq.s32.totalorder %s12, 0
      %p81 = por %p79, %p80
      %p82 = scmp.ne.s32.totalorder %s71, %s74
      %p83 = scmp.eq.s32.totalorder %s17, 1
      %p84 = por %p82, %p83
      %p85 = scmp.ne.s32.totalorder %s74, %s75
      %p86 = scmp.eq.s32.totalorder %s17, 0
      %p87 = por %p85, %p86
      %p88 = scmp.ne.s32.totalorder %s74, %s75
      %p89 = scmp.eq.s32.totalorder %s18, 1
      %p90 = por %p88, %p89
      %p92 = scmp.ne.s32.totalorder %s75, %s91
      %p93 = scmp.eq.s32.totalorder %s18, 0
      %p94 = por %p92, %p93
      %s95 = ssub.s32 %s20, %s34
      %p96 = scmp.eq.s32.totalorder %s95, 0
      %s98 = sadd.s32 %s97, 1
      %s99 = scalar_select %p96, %s97, %s98
      %p102 = pneg %p96
      %p103 = scmp.eq.s32.totalorder %s12, 1
      %p104 = por %p102, %p103
      %p105 = scmp.ne.s32.totalorder %s97, %s100
      %p106 = scmp.eq.s32.totalorder %s12, 0
      %p107 = por %p105, %p106
      %p108 = scmp.ne.s32.totalorder %s97, %s100
      %p109 = scmp.eq.s32.totalorder %s17, 1
      %p110 = por %p108, %p109
      %p111 = scmp.ne.s32.totalorder %s100, %s101
      %p112 = scmp.eq.s32.totalorder %s17, 0
      %p113 = por %p111, %p112
      %p114 = scmp.ne.s32.totalorder %s100, %s101
      %p115 = scmp.eq.s32.totalorder %s18, 1
      %p116 = por %p114, %p115
      %p118 = scmp.ne.s32.totalorder %s101, %s117
      %p119 = scmp.eq.s32.totalorder %s18, 0
      %p120 = por %p118, %p119
      %s121 = ssub.s32 %s19, %s38
      %s122 = ssub.s32 %s20, %s34
      %s123 = sor.u32 %s121, %s122
      %p124 = scmp.eq.s32.totalorder %s123, 0
      %s126 = sadd.s32 %s125, 1
      %s127 = scalar_select %p124, %s125, %s126
      %p130 = pneg %p124
      %p131 = scmp.eq.s32.totalorder %s12, 1
      %p132 = por %p130, %p131
      %p133 = scmp.ne.s32.totalorder %s125, %s128
      %p134 = scmp.eq.s32.totalorder %s12, 0
      %p135 = por %p133, %p134
      %p136 = scmp.ne.s32.totalorder %s125, %s128
      %p137 = scmp.eq.s32.totalorder %s17, 1
      %p138 = por %p136, %p137
      %p139 = scmp.ne.s32.totalorder %s128, %s129
      %p140 = scmp.eq.s32.totalorder %s17, 0
      %p141 = por %p139, %p140
      %p142 = scmp.ne.s32.totalorder %s128, %s129
      %p143 = scmp.eq.s32.totalorder %s18, 1
      %p144 = por %p142, %p143
      %p146 = scmp.ne.s32.totalorder %s129, %s145
      %p147 = scmp.eq.s32.totalorder %s18, 0
      %p148 = por %p146, %p147
      %p149 = scmp.le.s32.totalorder 1, %s12
      %p150 = scmp.lt.s32.totalorder %s12, 3
      %p151 = pnand %p149, %p150
      %p152 = pneg %p151
      // Predicated region
      $region9: #{attention_forward.5} parent=5 // pred_check
        _
      $region10: #{attention_forward.5} parent=5 // pred_check_branch
        %154 = sbr.rel (%p151) target = $region12
      $region11: #{attention_forward.5} parent=5 // pred_region
        %s155 = ssub.s32 %s12, 1
        // Predicated region
        $region13: #{attention_forward.5} parent=11 // pred_check
          %p156 = pneg %p87
        $region14: #{attention_forward.5} parent=11 // pred_check_branch
          %158 = sbr.rel (%p156) target = $region16
        $region15: #{attention_forward.5} parent=11 // pred_region
          %s159 = smul.u32 16, %s24
          %p160 = scmp.lt.s32.totalorder %s159, 15
          %s161 = scalar_select %p160, %s159, 15
          %p162 = scmp.lt.s32.totalorder %s23, 0
          %s163 = scalar_select %p162, %s23, 0
          %s164 = sadd.s32 %s163, %s161
          %s165 = smul.addr %s164, 4
          %s166 = scalar_lea.vmem %s1, %s165
          %s167 = smul.u32 16, %s24
        $region16: #{attention_forward.5} parent=11 // pred_fallthru
          _
        // Predicated region
        $region17: #{attention_forward.5} parent=11 // pred_check
          %p168 = pneg %p113
        $region18: #{attention_forward.5} parent=11 // pred_check_branch
          %170 = sbr.rel (%p168) target = $region20
        $region19: #{attention_forward.5} parent=11 // pred_region
          %p171 = scmp.lt.s32.totalorder %s23, 0
          %s172 = scalar_select %p171, %s23, 0
          %s173 = scalar_lea.vmem %s2, %s172
        $region20: #{attention_forward.5} parent=11 // pred_fallthru
          _
      $region12: #{attention_forward.5} parent=5 // pred_fallthru
        _
      %p174 = scmp.lt.s32.totalorder %s12, 2
      // Predicated region
      $region21: #{attention_forward.5} parent=5 // pred_check
        %p175 = pneg %p174
      $region22: #{attention_forward.5} parent=5 // pred_check_branch
        %177 = sbr.rel (%p175) target = $region24
      $region23: #{attention_forward.5} parent=5 // pred_region
        // Predicated region
        $region25: #{attention_forward.5} parent=23 // pred_check
          %p178 = pneg %p53
        $region26: #{attention_forward.5} parent=23 // pred_check_branch
          %180 = sbr.rel (%p178) target = $region28
        $region27: #{attention_forward.5} parent=23 // pred_region
          %s181 = smul.u32 32, %s19
          %p182 = scmp.lt.s32.totalorder %s181, 63
          %s183 = scalar_select %p182, %s181, 63
          %p184 = scmp.lt.s32.totalorder %s21, 0
          %s185 = scalar_select %p184, %s21, 0
          %s186 = sadd.s32 %s185, %s183
          %s187 = smul.addr %s186, 4
          %s188 = scalar_lea.vmem %s0, %s187
          %s189 = smul.u32 32, %s19
        $region28: #{attention_forward.5} parent=23 // pred_fallthru
          _
      $region24: #{attention_forward.5} parent=5 // pred_fallthru
        _
      %p190 = scmp.le.s32.totalorder 1, %s12
      %p191 = scmp.lt.s32.totalorder %s12, 3
      %p192 = pnand %p190, %p191
      %p193 = pneg %p192
      // Predicated region
      $region29: #{attention_forward.5} parent=5 // pred_check
        _
      $region30: #{attention_forward.5} parent=5 // pred_check_branch
        %195 = sbr.rel (%p192) target = $region32
      $region31: #{attention_forward.5} parent=5 // pred_region
        %s196 = ssub.s32 %s12, 1
        %s197 = smul.u32 32, %s22
        %p198 = scmp.lt.s32.totalorder %s197, 63
        %s199 = scalar_select %p198, %s197, 63
        %p200 = scmp.lt.s32.totalorder %s24, 0
        %s201 = scalar_select %p200, %s24, 0
        %s202 = sadd.s32 %s201, %s199
        %s203 = smul.addr %s202, 4
        %s204 = scalar_lea.vmem %s0, %s203
        %p205 = pneg %p59
        %p206 = pneg %p56
        %s207 = smul.u32 16, %s24
        %p208 = scmp.lt.s32.totalorder %s207, 15
        %s209 = scalar_select %p208, %s207, 15
        %p210 = scmp.lt.s32.totalorder %s23, 0
        %s211 = scalar_select %p210, %s23, 0
        %s212 = sadd.s32 %s211, %s209
        %s213 = smul.addr %s212, 4
        %s214 = scalar_lea.vmem %s1, %s213
        %p215 = pneg %p87
        %p216 = pneg %p84
        %p217 = scmp.lt.s32.totalorder %s23, 0
        %s218 = scalar_select %p217, %s23, 0
        %s219 = scalar_lea.vmem %s2, %s218
        %p220 = pneg %p113
        %p221 = pneg %p110
        %p222 = pneg %p141
        %p223 = pneg %p138
        %s224 = sand.u32 %s128, 1
        %s225 = scalar_lea.sflag [#allocation3], %s224
        %s226 = sand.u32 %s128, 1
        %s227 = smul.addr %s226, 256
        %s228 = scalar_lea.vmem [#allocation2], %s227
        %s229 = smul.u32 32, %s22
        %p230 = scmp.lt.s32.totalorder %s229, 63
        %s231 = scalar_select %p230, %s229, 63
        %p232 = scmp.lt.s32.totalorder %s24, 0
        %s233 = scalar_select %p232, %s24, 0
        %s234 = sadd.s32 %s233, %s231
        %s235 = smul.addr %s234, 4
        %s236 = scalar_lea.vmem %s0, %s235
        %s237 = smul.u32 32, %s22
        %s238 = smul.u32 16, %s24
        %p239 = scmp.lt.s32.totalorder %s238, 15
        %s240 = scalar_select %p239, %s238, 15
        %p241 = scmp.lt.s32.totalorder %s23, 0
        %s242 = scalar_select %p241, %s23, 0
        %s243 = sadd.s32 %s242, %s240
        %s244 = smul.addr %s243, 4
        %s245 = scalar_lea.vmem %s1, %s244
        %s246 = smul.u32 16, %s24
        %p247 = scmp.lt.s32.totalorder %s23, 0
        %s248 = scalar_select %p247, %s23, 0
        %s249 = scalar_lea.vmem %s2, %s248
        %s250 = smul.u32 32, %s22
        %v252 = vld [vmem:[%s236] sm:$0xf]
        %v253 = vld [vmem:[%s236 + $0x4] sm:$0xf]
        %v254 = vld [vmem:[%s236 + $0x8] sm:$0xf]
        %v255 = vld [vmem:[%s236 + $0xc] sm:$0xf]
        %v256 = vld [vmem:[%s236 + $0x10] sm:$0xf]
        %v257 = vld [vmem:[%s236 + $0x14] sm:$0xf]
        %v258 = vld [vmem:[%s236 + $0x18] sm:$0xf]
        %v259 = vld [vmem:[%s236 + $0x1c] sm:$0xf]
        %v260 = vld [vmem:[%s236 + $0x20] sm:$0xf]
        %v261 = vld [vmem:[%s236 + $0x24] sm:$0xf]
        %v262 = vld [vmem:[%s236 + $0x28] sm:$0xf]
        %v263 = vld [vmem:[%s236 + $0x2c] sm:$0xf]
        %v264 = vld [vmem:[%s236 + $0x30] sm:$0xf]
        %v265 = vld [vmem:[%s236 + $0x34] sm:$0xf]
        %v266 = vld [vmem:[%s236 + $0x38] sm:$0xf]
        %v267 = vld [vmem:[%s236 + $0x3c] sm:$0xf]
        %v268 = vld [vmem:[%s236 + $0x40] sm:$0xf]
        %v269 = vld [vmem:[%s236 + $0x44] sm:$0xf]
        %v270 = vld [vmem:[%s236 + $0x48] sm:$0xf]
        %v271 = vld [vmem:[%s236 + $0x4c] sm:$0xf]
        %v272 = vld [vmem:[%s236 + $0x50] sm:$0xf]
        %v273 = vld [vmem:[%s236 + $0x54] sm:$0xf]
        %v274 = vld [vmem:[%s236 + $0x58] sm:$0xf]
        %v275 = vld [vmem:[%s236 + $0x5c] sm:$0xf]
        %v276 = vld [vmem:[%s236 + $0x60] sm:$0xf]
        %v277 = vld [vmem:[%s236 + $0x64] sm:$0xf]
        %v278 = vld [vmem:[%s236 + $0x68] sm:$0xf]
        %v279 = vld [vmem:[%s236 + $0x6c] sm:$0xf]
        %v280 = vld [vmem:[%s236 + $0x70] sm:$0xf]
        %v281 = vld [vmem:[%s236 + $0x74] sm:$0xf]
        %v282 = vld [vmem:[%s236 + $0x78] sm:$0xf]
        %v283 = vld [vmem:[%s236 + $0x7c] sm:$0xf]
        %v284 = vld [vmem:[%s245] sm:$0xf]
        %v285 = vld [vmem:[%s245 + $0x4] sm:$0xf]
        %v286 = vld [vmem:[%s245 + $0x8] sm:$0xf]
        %v287 = vld [vmem:[%s245 + $0xc] sm:$0xf]
        %v288 = vld [vmem:[%s245 + $0x10] sm:$0xf]
        %v289 = vld [vmem:[%s245 + $0x14] sm:$0xf]
        %v290 = vld [vmem:[%s245 + $0x18] sm:$0xf]
        %v291 = vld [vmem:[%s245 + $0x1c] sm:$0xf]
        %v292 = vld [vmem:[%s245 + $0x20] sm:$0xf]
        %v293 = vld [vmem:[%s245 + $0x24] sm:$0xf]
        %v294 = vld [vmem:[%s245 + $0x28] sm:$0xf]
        %v295 = vld [vmem:[%s245 + $0x2c] sm:$0xf]
        %v296 = vld [vmem:[%s245 + $0x30] sm:$0xf]
        %v297 = vld [vmem:[%s245 + $0x34] sm:$0xf]
        %v298 = vld [vmem:[%s245 + $0x38] sm:$0xf]
        %v299 = vld [vmem:[%s245 + $0x3c] sm:$0xf]
        %v300 = vld [vmem:[%s249] sm:$0x1]
        %v302 = vlaneseq
        %v303 = vshrl.u32 %v302, 7
        %v304 = vsub.s32 0, %v303
        %v305 = vrot.slane %v300, %v304
        %v339 = vunpack.c.l.b16 %v252
        %v340 = vunpack.c.l.b16 %v253
        %v341 = vunpack.c.l.b16 %v254
        %v342 = vunpack.c.l.b16 %v255
        %v343 = vunpack.c.l.b16 %v256
        %v344 = vunpack.c.l.b16 %v257
        %v345 = vunpack.c.l.b16 %v258
        %v346 = vunpack.c.l.b16 %v259
        %v347 = vunpack.c.l.b16 %v260
        %v348 = vunpack.c.l.b16 %v261
        %v349 = vunpack.c.l.b16 %v262
        %v350 = vunpack.c.l.b16 %v263
        %v351 = vunpack.c.l.b16 %v264
        %v352 = vunpack.c.l.b16 %v265
        %v353 = vunpack.c.l.b16 %v266
        %v354 = vunpack.c.l.b16 %v267
        %v355 = vunpack.c.l.b16 %v268
        %v356 = vunpack.c.l.b16 %v269
        %v357 = vunpack.c.l.b16 %v270
        %v358 = vunpack.c.l.b16 %v271
        %v359 = vunpack.c.l.b16 %v272
        %v360 = vunpack.c.l.b16 %v273
        %v361 = vunpack.c.l.b16 %v274
        %v362 = vunpack.c.l.b16 %v275
        %v363 = vunpack.c.l.b16 %v276
        %v364 = vunpack.c.l.b16 %v277
        %v365 = vunpack.c.l.b16 %v278
        %v366 = vunpack.c.l.b16 %v279
        %v367 = vunpack.c.l.b16 %v280
        %v368 = vunpack.c.l.b16 %v281
        %v369 = vunpack.c.l.b16 %v282
        %v370 = vunpack.c.l.b16 %v283
        %v371 = vpack.c.b16 %v340, %v339
        %v372 = vpack.c.b16 %v342, %v341
        %v373 = vpack.c.b16 %v344, %v343
        %v374 = vpack.c.b16 %v346, %v345
        %v375 = vpack.c.b16 %v348, %v347
        %v376 = vpack.c.b16 %v350, %v349
        %v377 = vpack.c.b16 %v352, %v351
        %v378 = vpack.c.b16 %v354, %v353
        %v379 = vpack.c.b16 %v356, %v355
        %v380 = vpack.c.b16 %v358, %v357
        %v381 = vpack.c.b16 %v360, %v359
        %v382 = vpack.c.b16 %v362, %v361
        %v383 = vpack.c.b16 %v364, %v363
        %v384 = vpack.c.b16 %v366, %v365
        %v385 = vpack.c.b16 %v368, %v367
        %v386 = vpack.c.b16 %v370, %v369
        %v419 = vunpack.c.l.b16 %v284
        %v420 = vunpack.c.l.b16 %v285
        %v421 = vunpack.c.l.b16 %v286
        %v422 = vunpack.c.l.b16 %v287
        %v423 = vunpack.c.l.b16 %v288
        %v424 = vunpack.c.l.b16 %v289
        %v425 = vunpack.c.l.b16 %v290
        %v426 = vunpack.c.l.b16 %v291
        %v427 = vunpack.c.l.b16 %v292
        %v428 = vunpack.c.l.b16 %v293
        %v429 = vunpack.c.l.b16 %v294
        %v430 = vunpack.c.l.b16 %v295
        %v431 = vunpack.c.l.b16 %v296
        %v432 = vunpack.c.l.b16 %v297
        %v433 = vunpack.c.l.b16 %v298
        %v434 = vunpack.c.l.b16 %v299
        %v435 = vpack.c.b16 %v420, %v419
        %v436 = vpack.c.b16 %v422, %v421
        %v437 = vpack.c.b16 %v424, %v423
        %v438 = vpack.c.b16 %v426, %v425
        %v439 = vpack.c.b16 %v428, %v427
        %v440 = vpack.c.b16 %v430, %v429
        %v441 = vpack.c.b16 %v432, %v431
        %v442 = vpack.c.b16 %v434, %v433
        %451 = vmatprep.subr.bf16.mxu0 0
        %452 = vmatpush1.bf16.msra.mxu0 %v442
        %453 = vmatprep.subr.bf16.mxu0 0
        %454 = vmatpush1.bf16.msra.mxu0 %v441
        %455 = vmatprep.subr.bf16.mxu0 0
        %456 = vmatpush1.bf16.msra.mxu0 %v440
        %457 = vmatprep.subr.bf16.mxu0 0
        %458 = vmatpush1.bf16.msra.mxu0 %v439
        %459 = vmatprep.subr.bf16.mxu0 0
        %460 = vmatpush1.bf16.msra.mxu0 %v438
        %461 = vmatprep.subr.bf16.mxu0 0
        %462 = vmatpush1.bf16.msra.mxu0 %v437
        %463 = vmatprep.subr.bf16.mxu0 0
        %464 = vmatpush1.bf16.msra.mxu0 %v436
        %465 = vmatprep.subr.bf16.mxu0 0
        %466 = vmatpush1.bf16.msra.mxu0 %v435
        %467 = vmatprep.subr.bf16.mxu0 0
        %468 = vmatpush2.bf16.msra.mxu0 0
        %469 = vmatprep.subr.bf16.mxu0 0
        %470 = vmatpush2.bf16.msra.mxu0 0
        %471 = vmatprep.subr.bf16.mxu0 0
        %472 = vmatpush2.bf16.msra.mxu0 0
        %473 = vmatprep.subr.bf16.mxu0 0
        %474 = vmatpush2.bf16.msra.mxu0 0
        %475 = vmatprep.subr.bf16.mxu0 0
        %476 = vmatpush2.bf16.msra.mxu0 0
        %477 = vmatprep.subr.bf16.mxu0 0
        %478 = vmatpush2.bf16.msra.mxu0 0
        %479 = vmatprep.subr.bf16.mxu0 0
        %480 = vmatpush2.bf16.msra.mxu0 0
        %481 = vmatprep.subr.bf16.mxu0 0
        %482 = vmatpush2.bf16.msra.mxu0 0
        %483 = vmatprep.mubr.bf16.mxu0 0
        %484 = vmatmul.mubr.bf16.gmra.mxu0 %v371
        %v485 = vpop.f32.mrf.mxu0
        %v486 = vadd.f32 %v305, %v485
        %v487 = vpop.f32.mrf.mxu0
        %v488 = vpop.f32.mrf.mxu0
        %v489 = vadd.f32 %v305, %v488
        %v490 = vpop.f32.mrf.mxu0
        %491 = vmatprep.mubr.bf16.mxu0 0
        %492 = vmatmul.mubr.bf16.gmra.mxu0 %v372
        %v493 = vpop.f32.mrf.mxu0
        %v494 = vadd.f32 %v305, %v493
        %v495 = vpop.f32.mrf.mxu0
        %v496 = vpop.f32.mrf.mxu0
        %v497 = vadd.f32 %v305, %v496
        %v498 = vpop.f32.mrf.mxu0
        %499 = vmatprep.mubr.bf16.mxu0 0
        %500 = vmatmul.mubr.bf16.gmra.mxu0 %v373
        %v501 = vpop.f32.mrf.mxu0
        %v502 = vadd.f32 %v305, %v501
        %v503 = vpop.f32.mrf.mxu0
        %v504 = vpop.f32.mrf.mxu0
        %v505 = vadd.f32 %v305, %v504
        %v506 = vpop.f32.mrf.mxu0
        %507 = vmatprep.mubr.bf16.mxu0 0
        %508 = vmatmul.mubr.bf16.gmra.mxu0 %v374
        %v509 = vpop.f32.mrf.mxu0
        %v510 = vadd.f32 %v305, %v509
        %v511 = vpop.f32.mrf.mxu0
        %v512 = vpop.f32.mrf.mxu0
        %v513 = vadd.f32 %v305, %v512
        %v514 = vpop.f32.mrf.mxu0
        %515 = vmatprep.mubr.bf16.mxu0 0
        %516 = vmatmul.mubr.bf16.gmra.mxu0 %v375
        %v517 = vpop.f32.mrf.mxu0
        %v518 = vadd.f32 %v305, %v517
        %v519 = vpop.f32.mrf.mxu0
        %v520 = vpop.f32.mrf.mxu0
        %v521 = vadd.f32 %v305, %v520
        %v522 = vpop.f32.mrf.mxu0
        %523 = vmatprep.mubr.bf16.mxu0 0
        %524 = vmatmul.mubr.bf16.gmra.mxu0 %v376
        %v525 = vpop.f32.mrf.mxu0
        %v526 = vadd.f32 %v305, %v525
        %v527 = vpop.f32.mrf.mxu0
        %v528 = vpop.f32.mrf.mxu0
        %v529 = vadd.f32 %v305, %v528
        %v530 = vpop.f32.mrf.mxu0
        %531 = vmatprep.mubr.bf16.mxu0 0
        %532 = vmatmul.mubr.bf16.gmra.mxu0 %v377
        %v533 = vpop.f32.mrf.mxu0
        %v534 = vadd.f32 %v305, %v533
        %v535 = vpop.f32.mrf.mxu0
        %v536 = vpop.f32.mrf.mxu0
        %v537 = vadd.f32 %v305, %v536
        %v538 = vpop.f32.mrf.mxu0
        %539 = vmatprep.mubr.bf16.mxu0 0
        %540 = vmatmul.mubr.bf16.gmra.mxu0 %v378
        %v541 = vpop.f32.mrf.mxu0
        %v542 = vadd.f32 %v305, %v541
        %v543 = vpop.f32.mrf.mxu0
        %v544 = vpop.f32.mrf.mxu0
        %v545 = vadd.f32 %v305, %v544
        %v546 = vpop.f32.mrf.mxu0
        %547 = vmatprep.mubr.bf16.mxu0 0
        %548 = vmatmul.mubr.bf16.gmra.mxu0 %v379
        %v549 = vpop.f32.mrf.mxu0
        %v550 = vadd.f32 %v305, %v549
        %v551 = vpop.f32.mrf.mxu0
        %v552 = vpop.f32.mrf.mxu0
        %v553 = vadd.f32 %v305, %v552
        %v554 = vpop.f32.mrf.mxu0
        %555 = vmatprep.mubr.bf16.mxu0 0
        %556 = vmatmul.mubr.bf16.gmra.mxu0 %v380
        %v557 = vpop.f32.mrf.mxu0
        %v558 = vadd.f32 %v305, %v557
        %v559 = vpop.f32.mrf.mxu0
        %v560 = vpop.f32.mrf.mxu0
        %v561 = vadd.f32 %v305, %v560
        %v562 = vpop.f32.mrf.mxu0
        %563 = vmatprep.mubr.bf16.mxu0 0
        %564 = vmatmul.mubr.bf16.gmra.mxu0 %v381
        %v565 = vpop.f32.mrf.mxu0
        %v566 = vadd.f32 %v305, %v565
        %v567 = vpop.f32.mrf.mxu0
        %v568 = vpop.f32.mrf.mxu0
        %v569 = vadd.f32 %v305, %v568
        %v570 = vpop.f32.mrf.mxu0
        %571 = vmatprep.mubr.bf16.mxu0 0
        %572 = vmatmul.mubr.bf16.gmra.mxu0 %v382
        %v573 = vpop.f32.mrf.mxu0
        %v574 = vadd.f32 %v305, %v573
        %v575 = vpop.f32.mrf.mxu0
        %v576 = vpop.f32.mrf.mxu0
        %v577 = vadd.f32 %v305, %v576
        %v578 = vpop.f32.mrf.mxu0
        %579 = vmatprep.mubr.bf16.mxu0 0
        %580 = vmatmul.mubr.bf16.gmra.mxu0 %v383
        %v581 = vpop.f32.mrf.mxu0
        %v582 = vadd.f32 %v305, %v581
        %v583 = vpop.f32.mrf.mxu0
        %v584 = vpop.f32.mrf.mxu0
        %v585 = vadd.f32 %v305, %v584
        %v586 = vpop.f32.mrf.mxu0
        %587 = vmatprep.mubr.bf16.mxu0 0
        %588 = vmatmul.mubr.bf16.gmra.mxu0 %v384
        %v589 = vpop.f32.mrf.mxu0
        %v590 = vadd.f32 %v305, %v589
        %v591 = vpop.f32.mrf.mxu0
        %v592 = vpop.f32.mrf.mxu0
        %v593 = vadd.f32 %v305, %v592
        %v594 = vpop.f32.mrf.mxu0
        %595 = vmatprep.mubr.bf16.mxu0 0
        %596 = vmatmul.mubr.bf16.gmra.mxu0 %v385
        %v597 = vpop.f32.mrf.mxu0
        %v598 = vadd.f32 %v305, %v597
        %v599 = vpop.f32.mrf.mxu0
        %v600 = vpop.f32.mrf.mxu0
        %v601 = vadd.f32 %v305, %v600
        %v602 = vpop.f32.mrf.mxu0
        %603 = vmatprep.mubr.bf16.mxu0 0
        %604 = vmatmul.mubr.bf16.gmra.mxu0 %v386
        %v605 = vpop.f32.mrf.mxu0
        %v606 = vadd.f32 %v305, %v605
        %v607 = vpop.f32.mrf.mxu0
        %v608 = vpop.f32.mrf.mxu0
        %v609 = vadd.f32 %v305, %v608
        %v610 = vpop.f32.mrf.mxu0
        %611 = vdwg.mxu0
        %612 = vst [vmem:[%s228] sm:$0xff] %v486
        %613 = vst [vmem:[%s228 + $0x8] sm:$0xff] %v489
        %614 = vst [vmem:[%s228 + $0x10] sm:$0xff] %v494
        %615 = vst [vmem:[%s228 + $0x18] sm:$0xff] %v497
        %616 = vst [vmem:[%s228 + $0x20] sm:$0xff] %v502
        %617 = vst [vmem:[%s228 + $0x28] sm:$0xff] %v505
        %618 = vst [vmem:[%s228 + $0x30] sm:$0xff] %v510
        %619 = vst [vmem:[%s228 + $0x38] sm:$0xff] %v513
        %620 = vst [vmem:[%s228 + $0x40] sm:$0xff] %v518
        %621 = vst [vmem:[%s228 + $0x48] sm:$0xff] %v521
        %622 = vst [vmem:[%s228 + $0x50] sm:$0xff] %v526
        %623 = vst [vmem:[%s228 + $0x58] sm:$0xff] %v529
        %624 = vst [vmem:[%s228 + $0x60] sm:$0xff] %v534
        %625 = vst [vmem:[%s228 + $0x68] sm:$0xff] %v537
        %626 = vst [vmem:[%s228 + $0x70] sm:$0xff] %v542
        %627 = vst [vmem:[%s228 + $0x78] sm:$0xff] %v545
        %628 = vst [vmem:[%s228 + $0x80] sm:$0xff] %v550
        %629 = vst [vmem:[%s228 + $0x88] sm:$0xff] %v553
        %630 = vst [vmem:[%s228 + $0x90] sm:$0xff] %v558
        %631 = vst [vmem:[%s228 + $0x98] sm:$0xff] %v561
        %632 = vst [vmem:[%s228 + $0xa0] sm:$0xff] %v566
        %633 = vst [vmem:[%s228 + $0xa8] sm:$0xff] %v569
        %634 = vst [vmem:[%s228 + $0xb0] sm:$0xff] %v574
        %635 = vst [vmem:[%s228 + $0xb8] sm:$0xff] %v577
        %636 = vst [vmem:[%s228 + $0xc0] sm:$0xff] %v582
        %637 = vst [vmem:[%s228 + $0xc8] sm:$0xff] %v585
        %638 = vst [vmem:[%s228 + $0xd0] sm:$0xff] %v590
        %639 = vst [vmem:[%s228 + $0xd8] sm:$0xff] %v593
        %640 = vst [vmem:[%s228 + $0xe0] sm:$0xff] %v598
        %641 = vst [vmem:[%s228 + $0xe8] sm:$0xff] %v601
        %642 = vst [vmem:[%s228 + $0xf0] sm:$0xff] %v606
        %643 = vst [vmem:[%s228 + $0xf8] sm:$0xff] %v609
        %s644 = sand.u32 %s128, 1
        %s645 = scalar_lea.sflag [#allocation3], %s644
        %s646 = sand.u32 %s128, 1
        %s647 = smul.addr %s646, 256
        %s648 = scalar_lea.vmem [#allocation2], %s647
        // Predicated region
        $region33: #{attention_forward.5} parent=31 // pred_check
          %p649 = pneg %p138
        $region34: #{attention_forward.5} parent=31 // pred_check_branch
          %651 = sbr.rel (%p649) target = $region36
        $region35: #{attention_forward.5} parent=31 // pred_region
          %s652 = smul.u32 32, %s22
          %s654 = ssub.s32 4096, 4096
          %655 = vsyncadd %s645, %s654
          %s656 = sadd.s32 %s23, %s652
          %s657 = smul.addr %s656, 128
          %s658 = scalar_lea.hbm %s3, %s657
          %s659 = sshll.u32 %s648, 4
          %s660 = int_to_ptr.vmem [resolvable:$true] %s659
          %665 = dma.vmem_to_hbm [thread:$0]  %s660, 4096, %s658, %s645, 128, 128, 8
        $region36: #{attention_forward.5} parent=31 // pred_fallthru
          _
      $region32: #{attention_forward.5} parent=5 // pred_fallthru
        _
      %p666 = scmp.le.s32.totalorder 2, %s12
      // Predicated region
      $region37: #{attention_forward.5} parent=5 // pred_check
        %p667 = pneg %p666
      $region38: #{attention_forward.5} parent=5 // pred_check_branch
        %669 = sbr.rel (%p667) target = $region40
      $region39: #{attention_forward.5} parent=5 // pred_region
        %s670 = ssub.s32 %s12, 2
        // Predicated region
        $region41: #{attention_forward.5} parent=39 // pred_check
          %p671 = pneg %p144
        $region42: #{attention_forward.5} parent=39 // pred_check_branch
          %673 = sbr.rel (%p671) target = $region44
        $region43: #{attention_forward.5} parent=39 // pred_region
          %s674 = sand.u32 %s129, 1
          %s675 = scalar_lea.sflag [#allocation3], %s674
          %s676 = sand.u32 %s129, 1
          %s677 = smul.addr %s676, 256
          %s678 = scalar_lea.vmem [#allocation2], %s677
          %679 = dma.done %s675, 4096
        $region44: #{attention_forward.5} parent=39 // pred_fallthru
          _
      $region40: #{attention_forward.5} parent=5 // pred_fallthru
        _
    $region6: #{attention_forward.5} parent=1 // loop_footer
      %s16 = sadd.s32 1, %s12
    $region7: #{attention_forward.5} parent=1 // loop_footer_branch
      %11 = sbr.rel target = $region3
    $region8: #{attention_forward.5} parent=1 // loop_exit
      _
    %680 = vsyncpa [#allocation3], 1
    %s681 = scalar_lea.sflag [#allocation3], 1
    %682 = vsyncpa %s681, 1

// kernel: attention_forward.3
$region0: #{attention_forward.3}
  #allocation0 [shape = 'u32[]', space=smem, size = 0x4, offset = 0x4, fixed_abs, tag = 'smem constant byte address 0x4 - core index']
  #allocation1 [shape = 'u32[144,128]{1,0:T(1,128)}', space=vmem, size = 0x12000, scoped, tag = 'internal scratch']
  %s0 = inlined_call_operand.vmem [shape: bf16[512,128], index: 0, kind: input, shape index: {}]
  %s1 = inlined_call_operand.vmem [shape: bf16[3,128,128], index: 1, kind: input, shape index: {}]
  %s2 = inlined_call_operand.vmem [shape: f32[3,1,128], index: 2, kind: input, shape index: {}]
  %s3 = inlined_call_operand.vmem [shape: bf16[3,512,128], index: 3, kind: output, shape index: {}]
  %s4 = sld [smem:[#allocation0]]
  $region45: #{attention_forward.3} parent=0
    _
  %s6 = ssub.s32 1, %s4
  %s7 = scalar_select 0, %s6, %s4
  loop: start=0, step=1, limit=8
  $region2: #{attention_forward.3} parent=0 // loop_pre_header
    _
  $region3: #{attention_forward.3} parent=0 // loop_header
    %s9 = sphi 0, %s13
    %p10 = scmp.ge.s32.totalorder %s9, 8
    %s16 = sphi 0, %s42
    %s17 = sphi 0, %s38
    %s18 = sphi 0, %s34
    %s19 = sphi 0, %s30
    %s20 = sphi 0, %s16
    %s21 = sphi 0, %s17
    %s22 = sphi 0, %s18
    %s23 = sphi 0, %s19
    %s24 = sphi 0, %s20
    %s25 = sphi 0, %s21
    %s26 = sphi 0, %s22
    %s27 = sphi 0, %s23
    %s47 = sphi 0, %s49
    %s50 = sphi 0, %s47
    %s51 = sphi 0, %s50
    %s67 = sphi 0, %s51
    %s77 = sphi 0, %s79
    %s80 = sphi 0, %s77
    %s81 = sphi 0, %s80
    %s97 = sphi 0, %s81
    %s105 = sphi 0, %s107
    %s108 = sphi 0, %s105
    %s109 = sphi 0, %s108
    %s125 = sphi 0, %s109
    %s135 = sphi 0, %s137
    %s138 = sphi 0, %s135
    %s139 = sphi 0, %s138
    %s155 = sphi 0, %s139
  $region4: #{attention_forward.3} parent=0 // loop_header_branch
    %12 = sbr.rel (%p10) target = $region8
  $region5: #{attention_forward.3} parent=0 // loop_body
    %s14 = ssub.s32 %s9, 1
    %s15 = ssub.s32 %s9, 2
    %s28 = sadd.s32 1, %s19
    %p29 = scmp.ge.s32.totalorder %s28, 1
    %s30 = scalar_select %p29, 0, %s28
    %s31 = sadd.s32 1, %s18
    %s32 = scalar_select %p29, %s31, %s18
    %p33 = scmp.ge.s32.totalorder %s32, 1
    %s34 = scalar_select %p33, 0, %s32
    %s35 = sadd.s32 1, %s17
    %s36 = scalar_select %p33, %s35, %s17
    %p37 = scmp.ge.s32.totalorder %s36, 2
    %s38 = scalar_select %p37, 0, %s36
    %s39 = sadd.s32 1, %s16
    %s40 = scalar_select %p37, %s39, %s16
    %p41 = scmp.ge.s32.totalorder %s40, 3
    %s42 = scalar_select %p41, 0, %s40
    %s43 = ssub.s32 %s17, %s38
    %s44 = ssub.s32 %s19, %s30
    %s45 = sor.u32 %s43, %s44
    %p46 = scmp.eq.s32.totalorder %s45, 0
    %s48 = sadd.s32 %s47, 1
    %s49 = scalar_select %p46, %s47, %s48
    %p52 = pneg %p46
    %p53 = scmp.eq.s32.totalorder %s9, 5
    %p54 = por %p52, %p53
    %p55 = scmp.ne.s32.totalorder %s47, %s50
    %p56 = scmp.eq.s32.totalorder %s9, 0
    %p57 = por %p55, %p56
    %p58 = scmp.ne.s32.totalorder %s47, %s50
    %p59 = scmp.eq.s32.totalorder %s14, 5
    %p60 = por %p58, %p59
    %p61 = scmp.ne.s32.totalorder %s50, %s51
    %p62 = scmp.eq.s32.totalorder %s14, 0
    %p63 = por %p61, %p62
    %p64 = scmp.ne.s32.totalorder %s50, %s51
    %p65 = scmp.eq.s32.totalorder %s15, 5
    %p66 = por %p64, %p65
    %p68 = scmp.ne.s32.totalorder %s51, %s67
    %p69 = scmp.eq.s32.totalorder %s15, 0
    %p70 = por %p68, %p69
    %s71 = ssub.s32 %s16, %s42
    %s72 = ssub.s32 %s19, %s30
    %s73 = sor.u32 %s71, %s72
    %s74 = ssub.s32 %s18, %s34
    %s75 = sor.u32 %s73, %s74
    %p76 = scmp.eq.s32.totalorder %s75, 0
    %s78 = sadd.s32 %s77, 1
    %s79 = scalar_select %p76, %s77, %s78
    %p82 = pneg %p76
    %p83 = scmp.eq.s32.totalorder %s9, 5
    %p84 = por %p82, %p83
    %p85 = scmp.ne.s32.totalorder %s77, %s80
    %p86 = scmp.eq.s32.totalorder %s9, 0
    %p87 = por %p85, %p86
    %p88 = scmp.ne.s32.totalorder %s77, %s80
    %p89 = scmp.eq.s32.totalorder %s14, 5
    %p90 = por %p88, %p89
    %p91 = scmp.ne.s32.totalorder %s80, %s81
    %p92 = scmp.eq.s32.totalorder %s14, 0
    %p93 = por %p91, %p92
    %p94 = scmp.ne.s32.totalorder %s80, %s81
    %p95 = scmp.eq.s32.totalorder %s15, 5
    %p96 = por %p94, %p95
    %p98 = scmp.ne.s32.totalorder %s81, %s97
    %p99 = scmp.eq.s32.totalorder %s15, 0
    %p100 = por %p98, %p99
    %s101 = ssub.s32 %s16, %s42
    %s102 = ssub.s32 %s18, %s34
    %s103 = sor.u32 %s101, %s102
    %p104 = scmp.eq.s32.totalorder %s103, 0
    %s106 = sadd.s32 %s105, 1
    %s107 = scalar_select %p104, %s105, %s106
    %p110 = pneg %p104
    %p111 = scmp.eq.s32.totalorder %s9, 5
    %p112 = por %p110, %p111
    %p113 = scmp.ne.s32.totalorder %s105, %s108
    %p114 = scmp.eq.s32.totalorder %s9, 0
    %p115 = por %p113, %p114
    %p116 = scmp.ne.s32.totalorder %s105, %s108
    %p117 = scmp.eq.s32.totalorder %s14, 5
    %p118 = por %p116, %p117
    %p119 = scmp.ne.s32.totalorder %s108, %s109
    %p120 = scmp.eq.s32.totalorder %s14, 0
    %p121 = por %p119, %p120
    %p122 = scmp.ne.s32.totalorder %s108, %s109
    %p123 = scmp.eq.s32.totalorder %s15, 5
    %p124 = por %p122, %p123
    %p126 = scmp.ne.s32.totalorder %s109, %s125
    %p127 = scmp.eq.s32.totalorder %s15, 0
    %p128 = por %p126, %p127
    %s129 = ssub.s32 %s16, %s42
    %s130 = ssub.s32 %s17, %s38
    %s131 = sor.u32 %s129, %s130
    %s132 = ssub.s32 %s18, %s34
    %s133 = sor.u32 %s131, %s132
    %p134 = scmp.eq.s32.totalorder %s133, 0
    %s136 = sadd.s32 %s135, 1
    %s137 = scalar_select %p134, %s135, %s136
    %p140 = pneg %p134
    %p141 = scmp.eq.s32.totalorder %s9, 5
    %p142 = por %p140, %p141
    %p143 = scmp.ne.s32.totalorder %s135, %s138
    %p144 = scmp.eq.s32.totalorder %s9, 0
    %p145 = por %p143, %p144
    %p146 = scmp.ne.s32.totalorder %s135, %s138
    %p147 = scmp.eq.s32.totalorder %s14, 5
    %p148 = por %p146, %p147
    %p149 = scmp.ne.s32.totalorder %s138, %s139
    %p150 = scmp.eq.s32.totalorder %s14, 0
    %p151 = por %p149, %p150
    %p152 = scmp.ne.s32.totalorder %s138, %s139
    %p153 = scmp.eq.s32.totalorder %s15, 5
    %p154 = por %p152, %p153
    %p156 = scmp.ne.s32.totalorder %s139, %s155
    %p157 = scmp.eq.s32.totalorder %s15, 0
    %p158 = por %p156, %p157
    %p159 = scmp.le.s32.totalorder 1, %s9
    %p160 = scmp.lt.s32.totalorder %s9, 7
    %p161 = pnand %p159, %p160
    %p162 = pneg %p161
    // Predicated region
    $region9: #{attention_forward.3} parent=5 // pred_check
      _
    $region10: #{attention_forward.3} parent=5 // pred_check_branch
      %164 = sbr.rel (%p161) target = $region12
    $region11: #{attention_forward.3} parent=5 // pred_region
      %s165 = ssub.s32 %s9, 1
    $region12: #{attention_forward.3} parent=5 // pred_fallthru
      _
    %p166 = scmp.lt.s32.totalorder %s9, 6
    // Predicated region
    $region13: #{attention_forward.3} parent=5 // pred_check
      %p167 = pneg %p166
    $region14: #{attention_forward.3} parent=5 // pred_check_branch
      %169 = sbr.rel (%p167) target = $region16
    $region15: #{attention_forward.3} parent=5 // pred_region
      // Predicated region
      $region17: #{attention_forward.3} parent=15 // pred_check
        %p170 = pneg %p57
      $region18: #{attention_forward.3} parent=15 // pred_check_branch
        %172 = sbr.rel (%p170) target = $region20
      $region19: #{attention_forward.3} parent=15 // pred_region
        %s173 = smul.u32 32, %s17
        %p174 = scmp.lt.s32.totalorder %s173, 63
        %s175 = scalar_select %p174, %s173, 63
        %p176 = scmp.lt.s32.totalorder %s19, 0
        %s177 = scalar_select %p176, %s19, 0
        %s178 = sadd.s32 %s177, %s175
        %s179 = smul.addr %s178, 4
        %s180 = scalar_lea.vmem %s0, %s179
        %s181 = smul.u32 32, %s17
      $region20: #{attention_forward.3} parent=15 // pred_fallthru
        _
      // Predicated region
      $region21: #{attention_forward.3} parent=15 // pred_check
        %p182 = pneg %p87
      $region22: #{attention_forward.3} parent=15 // pred_check_branch
        %184 = sbr.rel (%p182) target = $region24
      $region23: #{attention_forward.3} parent=15 // pred_region
        %s185 = smul.u32 16, %s19
        %p186 = scmp.lt.s32.totalorder %s16, 2
        %s187 = scalar_select %p186, %s16, 2
        %p188 = scmp.lt.s32.totalorder %s185, 15
        %s189 = scalar_select %p188, %s185, 15
        %p190 = scmp.lt.s32.totalorder %s18, 0
        %s191 = scalar_select %p190, %s18, 0
        %s192 = sadd.s32 %s191, %s189
        %s193 = smul.addr %s187, 16
        %s194 = sadd.s32 %s192, %s193
        %s195 = smul.addr %s194, 4
        %s196 = scalar_lea.vmem %s1, %s195
        %s197 = smul.u32 16, %s19
      $region24: #{attention_forward.3} parent=15 // pred_fallthru
        _
      // Predicated region
      $region25: #{attention_forward.3} parent=15 // pred_check
        %p198 = pneg %p115
      $region26: #{attention_forward.3} parent=15 // pred_check_branch
        %200 = sbr.rel (%p198) target = $region28
      $region27: #{attention_forward.3} parent=15 // pred_region
        %p201 = scmp.lt.s32.totalorder %s16, 2
        %s202 = scalar_select %p201, %s16, 2
        %p203 = scmp.lt.s32.totalorder %s18, 0
        %s204 = scalar_select %p203, %s18, 0
        %s205 = sadd.s32 %s204, %s202
        %s206 = scalar_lea.vmem %s2, %s205
      $region28: #{attention_forward.3} parent=15 // pred_fallthru
        _
    $region16: #{attention_forward.3} parent=5 // pred_fallthru
      _
    %p207 = scmp.le.s32.totalorder 1, %s9
    %p208 = scmp.lt.s32.totalorder %s9, 7
    %p209 = pnand %p207, %p208
    %p210 = pneg %p209
    // Predicated region
    $region29: #{attention_forward.3} parent=5 // pred_check
      _
    $region30: #{attention_forward.3} parent=5 // pred_check_branch
      %212 = sbr.rel (%p209) target = $region32
    $region31: #{attention_forward.3} parent=5 // pred_region
      %s213 = ssub.s32 %s9, 1
      %s214 = smul.u32 32, %s21
      %p215 = scmp.lt.s32.totalorder %s214, 63
      %s216 = scalar_select %p215, %s214, 63
      %p217 = scmp.lt.s32.totalorder %s23, 0
      %s218 = scalar_select %p217, %s23, 0
      %s219 = sadd.s32 %s218, %s216
      %s220 = smul.addr %s219, 4
      %s221 = scalar_lea.vmem %s0, %s220
      %p222 = pneg %p63
      %p223 = pneg %p60
      %s224 = smul.u32 16, %s23
      %p225 = scmp.lt.s32.totalorder %s20, 2
      %s226 = scalar_select %p225, %s20, 2
      %p227 = scmp.lt.s32.totalorder %s224, 15
      %s228 = scalar_select %p227, %s224, 15
      %p229 = scmp.lt.s32.totalorder %s22, 0
      %s230 = scalar_select %p229, %s22, 0
      %s231 = sadd.s32 %s230, %s228
      %s232 = smul.addr %s226, 16
      %s233 = sadd.s32 %s231, %s232
      %s234 = smul.addr %s233, 4
      %s235 = scalar_lea.vmem %s1, %s234
      %p236 = pneg %p93
      %p237 = pneg %p90
      %p238 = scmp.lt.s32.totalorder %s20, 2
      %s239 = scalar_select %p238, %s20, 2
      %p240 = scmp.lt.s32.totalorder %s22, 0
      %s241 = scalar_select %p240, %s22, 0
      %s242 = sadd.s32 %s241, %s239
      %s243 = scalar_lea.vmem %s2, %s242
      %p244 = pneg %p121
      %p245 = pneg %p118
      %p246 = pneg %p151
      %p247 = pneg %p148
      %s248 = smul.u32 32, %s21
      %p249 = scmp.lt.s32.totalorder %s20, 2
      %s250 = scalar_select %p249, %s20, 2
      %p251 = scmp.lt.s32.totalorder %s248, 63
      %s252 = scalar_select %p251, %s248, 63
      %p253 = scmp.lt.s32.totalorder %s22, 0
      %s254 = scalar_select %p253, %s22, 0
      %s255 = sadd.s32 %s254, %s252
      %s256 = smul.addr %s250, 64
      %s257 = sadd.s32 %s255, %s256
      %s258 = smul.addr %s257, 4
      %s259 = scalar_lea.vmem %s3, %s258
      %s260 = smul.u32 32, %s21
      %p261 = scmp.lt.s32.totalorder %s260, 63
      %s262 = scalar_select %p261, %s260, 63
      %p263 = scmp.lt.s32.totalorder %s23, 0
      %s264 = scalar_select %p263, %s23, 0
      %s265 = sadd.s32 %s264, %s262
      %s266 = smul.addr %s265, 4
      %s267 = scalar_lea.vmem %s0, %s266
      %s268 = smul.u32 32, %s21
      %s269 = smul.u32 16, %s23
      %p270 = scmp.lt.s32.totalorder %s20, 2
      %s271 = scalar_select %p270, %s20, 2
      %p272 = scmp.lt.s32.totalorder %s269, 15
      %s273 = scalar_select %p272, %s269, 15
      %p274 = scmp.lt.s32.totalorder %s22, 0
      %s275 = scalar_select %p274, %s22, 0
      %s276 = sadd.s32 %s275, %s273
      %s277 = smul.addr %s271, 16
      %s278 = sadd.s32 %s276, %s277
      %s279 = smul.addr %s278, 4
      %s280 = scalar_lea.vmem %s1, %s279
      %s281 = smul.u32 16, %s23
      %p282 = scmp.lt.s32.totalorder %s20, 2
      %s283 = scalar_select %p282, %s20, 2
      %p284 = scmp.lt.s32.totalorder %s22, 0
      %s285 = scalar_select %p284, %s22, 0
      %s286 = sadd.s32 %s285, %s283
      %s287 = scalar_lea.vmem %s2, %s286
      %s288 = smul.u32 32, %s21
      %p289 = scmp.lt.s32.totalorder %s20, 2
      %s290 = scalar_select %p289, %s20, 2
      %p291 = scmp.lt.s32.totalorder %s288, 63
      %s292 = scalar_select %p291, %s288, 63
      %p293 = scmp.lt.s32.totalorder %s22, 0
      %s294 = scalar_select %p293, %s22, 0
      %s295 = sadd.s32 %s294, %s292
      %s296 = smul.addr %s290, 64
      %s297 = sadd.s32 %s295, %s296
      %s298 = smul.addr %s297, 4
      %s299 = scalar_lea.vmem %s3, %s298
      %s300 = smul.u32 32, %s21
      %v302 = vld [vmem:[%s267] sm:$0xf]
      %v303 = vld [vmem:[%s267 + $0x4] sm:$0xf]
      %v304 = vld [vmem:[%s267 + $0x8] sm:$0xf]
      %v305 = vld [vmem:[%s267 + $0xc] sm:$0xf]
      %v306 = vld [vmem:[%s267 + $0x10] sm:$0xf]
      %v307 = vld [vmem:[%s267 + $0x14] sm:$0xf]
      %v308 = vld [vmem:[%s267 + $0x18] sm:$0xf]
      %v309 = vld [vmem:[%s267 + $0x1c] sm:$0xf]
      %v310 = vld [vmem:[%s267 + $0x20] sm:$0xf]
      %v311 = vld [vmem:[%s267 + $0x24] sm:$0xf]
      %v312 = vld [vmem:[%s267 + $0x28] sm:$0xf]
      %v313 = vld [vmem:[%s267 + $0x2c] sm:$0xf]
      %v314 = vld [vmem:[%s267 + $0x30] sm:$0xf]
      %v315 = vld [vmem:[%s267 + $0x34] sm:$0xf]
      %v316 = vld [vmem:[%s267 + $0x38] sm:$0xf]
      %v317 = vld [vmem:[%s267 + $0x3c] sm:$0xf]
      %v318 = vld [vmem:[%s267 + $0x40] sm:$0xf]
      %v319 = vld [vmem:[%s267 + $0x44] sm:$0xf]
      %v320 = vld [vmem:[%s267 + $0x48] sm:$0xf]
      %v321 = vld [vmem:[%s267 + $0x4c] sm:$0xf]
      %v322 = vld [vmem:[%s267 + $0x50] sm:$0xf]
      %v323 = vld [vmem:[%s267 + $0x54] sm:$0xf]
      %v324 = vld [vmem:[%s267 + $0x58] sm:$0xf]
      %v325 = vld [vmem:[%s267 + $0x5c] sm:$0xf]
      %v326 = vld [vmem:[%s267 + $0x60] sm:$0xf]
      %v327 = vld [vmem:[%s267 + $0x64] sm:$0xf]
      %v328 = vld [vmem:[%s267 + $0x68] sm:$0xf]
      %v329 = vld [vmem:[%s267 + $0x6c] sm:$0xf]
      %v330 = vld [vmem:[%s267 + $0x70] sm:$0xf]
      %v331 = vld [vmem:[%s267 + $0x74] sm:$0xf]
      %v332 = vld [vmem:[%s267 + $0x78] sm:$0xf]
      %v333 = vld [vmem:[%s267 + $0x7c] sm:$0xf]
      %v334 = vld [vmem:[%s280] sm:$0xf]
      %v335 = vld [vmem:[%s280 + $0x4] sm:$0xf]
      %v336 = vld [vmem:[%s280 + $0x8] sm:$0xf]
      %v337 = vld [vmem:[%s280 + $0xc] sm:$0xf]
      %v338 = vld [vmem:[%s280 + $0x10] sm:$0xf]
      %v339 = vld [vmem:[%s280 + $0x14] sm:$0xf]
      %v340 = vld [vmem:[%s280 + $0x18] sm:$0xf]
      %v341 = vld [vmem:[%s280 + $0x1c] sm:$0xf]
      %v342 = vld [vmem:[%s280 + $0x20] sm:$0xf]
      %v343 = vld [vmem:[%s280 + $0x24] sm:$0xf]
      %v344 = vld [vmem:[%s280 + $0x28] sm:$0xf]
      %v345 = vld [vmem:[%s280 + $0x2c] sm:$0xf]
      %v346 = vld [vmem:[%s280 + $0x30] sm:$0xf]
      %v347 = vld [vmem:[%s280 + $0x34] sm:$0xf]
      %v348 = vld [vmem:[%s280 + $0x38] sm:$0xf]
      %v349 = vld [vmem:[%s280 + $0x3c] sm:$0xf]
      %v350 = vld [vmem:[%s287] sm:$0x1]
      %v352 = vlaneseq
      %v353 = vshrl.u32 %v352, 7
      %v354 = vsub.s32 0, %v353
      %v355 = vrot.slane %v350, %v354
      %v389 = vunpack.c.l.b16 %v302
      %v390 = vunpack.c.l.b16 %v303
      %v391 = vunpack.c.l.b16 %v304
      %v392 = vunpack.c.l.b16 %v305
      %v393 = vunpack.c.l.b16 %v306
      %v394 = vunpack.c.l.b16 %v307
      %v395 = vunpack.c.l.b16 %v308
      %v396 = vunpack.c.l.b16 %v309
      %v397 = vunpack.c.l.b16 %v310
      %v398 = vunpack.c.l.b16 %v311
      %v399 = vunpack.c.l.b16 %v312
      %v400 = vunpack.c.l.b16 %v313
      %v401 = vunpack.c.l.b16 %v314
      %v402 = vunpack.c.l.b16 %v315
      %v403 = vunpack.c.l.b16 %v316
      %v404 = vunpack.c.l.b16 %v317
      %v405 = vunpack.c.l.b16 %v318
      %v406 = vunpack.c.l.b16 %v319
      %v407 = vunpack.c.l.b16 %v320
      %v408 = vunpack.c.l.b16 %v321
      %v409 = vunpack.c.l.b16 %v322
      %v410 = vunpack.c.l.b16 %v323
      %v411 = vunpack.c.l.b16 %v324
      %v412 = vunpack.c.l.b16 %v325
      %v413 = vunpack.c.l.b16 %v326
      %v414 = vunpack.c.l.b16 %v327
      %v415 = vunpack.c.l.b16 %v328
      %v416 = vunpack.c.l.b16 %v329
      %v417 = vunpack.c.l.b16 %v330
      %v418 = vunpack.c.l.b16 %v331
      %v419 = vunpack.c.l.b16 %v332
      %v420 = vunpack.c.l.b16 %v333
      %v421 = vpack.c.b16 %v390, %v389
      %v422 = vpack.c.b16 %v392, %v391
      %v423 = vpack.c.b16 %v394, %v393
      %v424 = vpack.c.b16 %v396, %v395
      %v425 = vpack.c.b16 %v398, %v397
      %v426 = vpack.c.b16 %v400, %v399
      %v427 = vpack.c.b16 %v402, %v401
      %v428 = vpack.c.b16 %v404, %v403
      %v429 = vpack.c.b16 %v406, %v405
      %v430 = vpack.c.b16 %v408, %v407
      %v431 = vpack.c.b16 %v410, %v409
      %v432 = vpack.c.b16 %v412, %v411
      %v433 = vpack.c.b16 %v414, %v413
      %v434 = vpack.c.b16 %v416, %v415
      %v435 = vpack.c.b16 %v418, %v417
      %v436 = vpack.c.b16 %v420, %v419
      %v469 = vunpack.c.l.b16 %v334
      %v470 = vunpack.c.l.b16 %v335
      %v471 = vunpack.c.l.b16 %v336
      %v472 = vunpack.c.l.b16 %v337
      %v473 = vunpack.c.l.b16 %v338
      %v474 = vunpack.c.l.b16 %v339
      %v475 = vunpack.c.l.b16 %v340
      %v476 = vunpack.c.l.b16 %v341
      %v477 = vunpack.c.l.b16 %v342
      %v478 = vunpack.c.l.b16 %v343
      %v479 = vunpack.c.l.b16 %v344
      %v480 = vunpack.c.l.b16 %v345
      %v481 = vunpack.c.l.b16 %v346
      %v482 = vunpack.c.l.b16 %v347
      %v483 = vunpack.c.l.b16 %v348
      %v484 = vunpack.c.l.b16 %v349
      %v485 = vpack.c.b16 %v470, %v469
      %v486 = vpack.c.b16 %v472, %v471
      %v487 = vpack.c.b16 %v474, %v473
      %v488 = vpack.c.b16 %v476, %v475
      %v489 = vpack.c.b16 %v478, %v477
      %v490 = vpack.c.b16 %v480, %v479
      %v491 = vpack.c.b16 %v482, %v481
      %v492 = vpack.c.b16 %v484, %v483
      %501 = vmatprep.subr.bf16.mxu0 0
      %502 = vmatpush1.bf16.msra.mxu0 %v492
      %503 = vmatprep.subr.bf16.mxu0 0
      %504 = vmatpush1.bf16.msra.mxu0 %v491
      %505 = vmatprep.subr.bf16.mxu0 0
      %506 = vmatpush1.bf16.msra.mxu0 %v490
      %507 = vmatprep.subr.bf16.mxu0 0
      %508 = vmatpush1.bf16.msra.mxu0 %v489
      %509 = vmatprep.subr.bf16.mxu0 0
      %510 = vmatpush1.bf16.msra.mxu0 %v488
      %511 = vmatprep.subr.bf16.mxu0 0
      %512 = vmatpush1.bf16.msra.mxu0 %v487
      %513 = vmatprep.subr.bf16.mxu0 0
      %514 = vmatpush1.bf16.msra.mxu0 %v486
      %515 = vmatprep.subr.bf16.mxu0 0
      %516 = vmatpush1.bf16.msra.mxu0 %v485
      %517 = vmatprep.subr.bf16.mxu0 0
      %518 = vmatpush2.bf16.msra.mxu0 0
      %519 = vmatprep.subr.bf16.mxu0 0
      %520 = vmatpush2.bf16.msra.mxu0 0
      %521 = vmatprep.subr.bf16.mxu0 0
      %522 = vmatpush2.bf16.msra.mxu0 0
      %523 = vmatprep.subr.bf16.mxu0 0
      %524 = vmatpush2.bf16.msra.mxu0 0
      %525 = vmatprep.subr.bf16.mxu0 0
      %526 = vmatpush2.bf16.msra.mxu0 0
      %527 = vmatprep.subr.bf16.mxu0 0
      %528 = vmatpush2.bf16.msra.mxu0 0
      %529 = vmatprep.subr.bf16.mxu0 0
      %530 = vmatpush2.bf16.msra.mxu0 0
      %531 = vmatprep.subr.bf16.mxu0 0
      %532 = vmatpush2.bf16.msra.mxu0 0
      %533 = vmatprep.mubr.bf16.mxu0 0
      %534 = vmatmul.mubr.bf16.gmra.mxu0 %v421
      %v535 = vpop.f32.mrf.mxu0
      %v536 = vadd.f32 %v355, %v535
      %v537 = vpop.f32.mrf.mxu0
      %v538 = vpop.f32.mrf.mxu0
      %v539 = vadd.f32 %v355, %v538
      %v540 = vpop.f32.mrf.mxu0
      %541 = vmatprep.mubr.bf16.mxu0 0
      %542 = vmatmul.mubr.bf16.gmra.mxu0 %v422
      %v543 = vpop.f32.mrf.mxu0
      %v544 = vadd.f32 %v355, %v543
      %v545 = vpop.f32.mrf.mxu0
      %v546 = vpop.f32.mrf.mxu0
      %v547 = vadd.f32 %v355, %v546
      %v548 = vpop.f32.mrf.mxu0
      %549 = vmatprep.mubr.bf16.mxu0 0
      %550 = vmatmul.mubr.bf16.gmra.mxu0 %v423
      %v551 = vpop.f32.mrf.mxu0
      %v552 = vadd.f32 %v355, %v551
      %v553 = vpop.f32.mrf.mxu0
      %v554 = vpop.f32.mrf.mxu0
      %v555 = vadd.f32 %v355, %v554
      %v556 = vpop.f32.mrf.mxu0
      %557 = vmatprep.mubr.bf16.mxu0 0
      %558 = vmatmul.mubr.bf16.gmra.mxu0 %v424
      %v559 = vpop.f32.mrf.mxu0
      %v560 = vadd.f32 %v355, %v559
      %v561 = vpop.f32.mrf.mxu0
      %v562 = vpop.f32.mrf.mxu0
      %v563 = vadd.f32 %v355, %v562
      %v564 = vpop.f32.mrf.mxu0
      %565 = vmatprep.mubr.bf16.mxu0 0
      %566 = vmatmul.mubr.bf16.gmra.mxu0 %v425
      %v567 = vpop.f32.mrf.mxu0
      %v568 = vadd.f32 %v355, %v567
      %v569 = vpop.f32.mrf.mxu0
      %v570 = vpop.f32.mrf.mxu0
      %v571 = vadd.f32 %v355, %v570
      %v572 = vpop.f32.mrf.mxu0
      %573 = vmatprep.mubr.bf16.mxu0 0
      %574 = vmatmul.mubr.bf16.gmra.mxu0 %v426
      %v575 = vpop.f32.mrf.mxu0
      %v576 = vadd.f32 %v355, %v575
      %v577 = vpop.f32.mrf.mxu0
      %v578 = vpop.f32.mrf.mxu0
      %v579 = vadd.f32 %v355, %v578
      %v580 = vpop.f32.mrf.mxu0
      %581 = vmatprep.mubr.bf16.mxu0 0
      %582 = vmatmul.mubr.bf16.gmra.mxu0 %v427
      %v583 = vpop.f32.mrf.mxu0
      %v584 = vadd.f32 %v355, %v583
      %v585 = vpop.f32.mrf.mxu0
      %v586 = vpop.f32.mrf.mxu0
      %v587 = vadd.f32 %v355, %v586
      %v588 = vpop.f32.mrf.mxu0
      %589 = vmatprep.mubr.bf16.mxu0 0
      %590 = vmatmul.mubr.bf16.gmra.mxu0 %v428
      %v591 = vpop.f32.mrf.mxu0
      %v592 = vadd.f32 %v355, %v591
      %v593 = vpop.f32.mrf.mxu0
      %v594 = vpop.f32.mrf.mxu0
      %v595 = vadd.f32 %v355, %v594
      %v596 = vpop.f32.mrf.mxu0
      %597 = vmatprep.mubr.bf16.mxu0 0
      %598 = vmatmul.mubr.bf16.gmra.mxu0 %v429
      %v599 = vpop.f32.mrf.mxu0
      %v600 = vadd.f32 %v355, %v599
      %v601 = vpop.f32.mrf.mxu0
      %v602 = vpop.f32.mrf.mxu0
      %v603 = vadd.f32 %v355, %v602
      %v604 = vpop.f32.mrf.mxu0
      %605 = vmatprep.mubr.bf16.mxu0 0
      %606 = vmatmul.mubr.bf16.gmra.mxu0 %v430
      %v607 = vpop.f32.mrf.mxu0
      %v608 = vadd.f32 %v355, %v607
      %v609 = vpop.f32.mrf.mxu0
      %v610 = vpop.f32.mrf.mxu0
      %v611 = vadd.f32 %v355, %v610
      %v612 = vpop.f32.mrf.mxu0
      %613 = vmatprep.mubr.bf16.mxu0 0
      %614 = vmatmul.mubr.bf16.gmra.mxu0 %v431
      %v615 = vpop.f32.mrf.mxu0
      %v616 = vadd.f32 %v355, %v615
      %v617 = vpop.f32.mrf.mxu0
      %v618 = vpop.f32.mrf.mxu0
      %v619 = vadd.f32 %v355, %v618
      %v620 = vpop.f32.mrf.mxu0
      %621 = vmatprep.mubr.bf16.mxu0 0
      %622 = vmatmul.mubr.bf16.gmra.mxu0 %v432
      %v623 = vpop.f32.mrf.mxu0
      %v624 = vadd.f32 %v355, %v623
      %v625 = vpop.f32.mrf.mxu0
      %v626 = vpop.f32.mrf.mxu0
      %v627 = vadd.f32 %v355, %v626
      %v628 = vpop.f32.mrf.mxu0
      %629 = vmatprep.mubr.bf16.mxu0 0
      %630 = vmatmul.mubr.bf16.gmra.mxu0 %v433
      %v631 = vpop.f32.mrf.mxu0
      %v632 = vadd.f32 %v355, %v631
      %v633 = vpop.f32.mrf.mxu0
      %v634 = vpop.f32.mrf.mxu0
      %v635 = vadd.f32 %v355, %v634
      %v636 = vpop.f32.mrf.mxu0
      %637 = vmatprep.mubr.bf16.mxu0 0
      %638 = vmatmul.mubr.bf16.gmra.mxu0 %v434
      %v639 = vpop.f32.mrf.mxu0
      %v640 = vadd.f32 %v355, %v639
      %v641 = vpop.f32.mrf.mxu0
      %v642 = vpop.f32.mrf.mxu0
      %v643 = vadd.f32 %v355, %v642
      %v644 = vpop.f32.mrf.mxu0
      %645 = vmatprep.mubr.bf16.mxu0 0
      %646 = vmatmul.mubr.bf16.gmra.mxu0 %v435
      %v647 = vpop.f32.mrf.mxu0
      %v648 = vadd.f32 %v355, %v647
      %v649 = vpop.f32.mrf.mxu0
      %v650 = vpop.f32.mrf.mxu0
      %v651 = vadd.f32 %v355, %v650
      %v652 = vpop.f32.mrf.mxu0
      %653 = vmatprep.mubr.bf16.mxu0 0
      %654 = vmatmul.mubr.bf16.gmra.mxu0 %v436
      %v655 = vpop.f32.mrf.mxu0
      %v656 = vadd.f32 %v355, %v655
      %v657 = vpop.f32.mrf.mxu0
      %v658 = vpop.f32.mrf.mxu0
      %v659 = vadd.f32 %v355, %v658
      %v660 = vpop.f32.mrf.mxu0
      %661 = vdwg.mxu0
      %v662 = vpack.c.bf16 %v539, %v536
      %v663 = vpack.c.bf16 %v547, %v544
      %v664 = vpack.c.bf16 %v555, %v552
      %v665 = vpack.c.bf16 %v563, %v560
      %v666 = vpack.c.bf16 %v571, %v568
      %v667 = vpack.c.bf16 %v579, %v576
      %v668 = vpack.c.bf16 %v587, %v584
      %v669 = vpack.c.bf16 %v595, %v592
      %v670 = vpack.c.bf16 %v603, %v600
      %v671 = vpack.c.bf16 %v611, %v608
      %v672 = vpack.c.bf16 %v619, %v616
      %v673 = vpack.c.bf16 %v627, %v624
      %v674 = vpack.c.bf16 %v635, %v632
      %v675 = vpack.c.bf16 %v643, %v640
      %v676 = vpack.c.bf16 %v651, %v648
      %v677 = vpack.c.bf16 %v659, %v656
      %v694 = vunpack.c.l.b16 %v662
      %v695 = vunpack.c.h.b16 %v662
      %v696 = vunpack.c.l.b16 %v663
      %v697 = vunpack.c.h.b16 %v663
      %v698 = vunpack.c.l.b16 %v664
      %v699 = vunpack.c.h.b16 %v664
      %v700 = vunpack.c.l.b16 %v665
      %v701 = vunpack.c.h.b16 %v665
      %v702 = vunpack.c.l.b16 %v666
      %v703 = vunpack.c.h.b16 %v666
      %v704 = vunpack.c.l.b16 %v667
      %v705 = vunpack.c.h.b16 %v667
      %v706 = vunpack.c.l.b16 %v668
      %v707 = vunpack.c.h.b16 %v668
      %v708 = vunpack.c.l.b16 %v669
      %v709 = vunpack.c.h.b16 %v669
      %v710 = vunpack.c.l.b16 %v670
      %v711 = vunpack.c.h.b16 %v670
      %v712 = vunpack.c.l.b16 %v671
      %v713 = vunpack.c.h.b16 %v671
      %v714 = vunpack.c.l.b16 %v672
      %v715 = vunpack.c.h.b16 %v672
      %v716 = vunpack.c.l.b16 %v673
      %v717 = vunpack.c.h.b16 %v673
      %v718 = vunpack.c.l.b16 %v674
      %v719 = vunpack.c.h.b16 %v674
      %v720 = vunpack.c.l.b16 %v675
      %v721 = vunpack.c.h.b16 %v675
      %v722 = vunpack.c.l.b16 %v676
      %v723 = vunpack.c.h.b16 %v676
      %v724 = vunpack.c.l.b16 %v677
      %v725 = vunpack.c.h.b16 %v677
      %v726 = vpack.c.b16 %v694, %v694
      %v727 = vpack.c.b16 %v695, %v695
      %v728 = vpack.c.b16 %v696, %v696
      %v729 = vpack.c.b16 %v697, %v697
      %v730 = vpack.c.b16 %v698, %v698
      %v731 = vpack.c.b16 %v699, %v699
      %v732 = vpack.c.b16 %v700, %v700
      %v733 = vpack.c.b16 %v701, %v701
      %v734 = vpack.c.b16 %v702, %v702
      %v735 = vpack.c.b16 %v703, %v703
      %v736 = vpack.c.b16 %v704, %v704
      %v737 = vpack.c.b16 %v705, %v705
      %v738 = vpack.c.b16 %v706, %v706
      %v739 = vpack.c.b16 %v707, %v707
      %v740 = vpack.c.b16 %v708, %v708
      %v741 = vpack.c.b16 %v709, %v709
      %v742 = vpack.c.b16 %v710, %v710
      %v743 = vpack.c.b16 %v711, %v711
      %v744 = vpack.c.b16 %v712, %v712
      %v745 = vpack.c.b16 %v713, %v713
      %v746 = vpack.c.b16 %v714, %v714
      %v747 = vpack.c.b16 %v715, %v715
      %v748 = vpack.c.b16 %v716, %v716
      %v749 = vpack.c.b16 %v717, %v717
      %v750 = vpack.c.b16 %v718, %v718
      %v751 = vpack.c.b16 %v719, %v719
      %v752 = vpack.c.b16 %v720, %v720
      %v753 = vpack.c.b16 %v721, %v721
      %v754 = vpack.c.b16 %v722, %v722
      %v755 = vpack.c.b16 %v723, %v723
      %v756 = vpack.c.b16 %v724, %v724
      %v757 = vpack.c.b16 %v725, %v725
      %790 = vst [vmem:[%s299] sm:$0xf] %v726
      %791 = vst [vmem:[%s299 + $0x4] sm:$0xf] %v727
      %792 = vst [vmem:[%s299 + $0x8] sm:$0xf] %v728
      %793 = vst [vmem:[%s299 + $0xc] sm:$0xf] %v729
      %794 = vst [vmem:[%s299 + $0x10] sm:$0xf] %v730
      %795 = vst [vmem:[%s299 + $0x14] sm:$0xf] %v731
      %796 = vst [vmem:[%s299 + $0x18] sm:$0xf] %v732
      %797 = vst [vmem:[%s299 + $0x1c] sm:$0xf] %v733
      %798 = vst [vmem:[%s299 + $0x20] sm:$0xf] %v734
      %799 = vst [vmem:[%s299 + $0x24] sm:$0xf] %v735
      %800 = vst [vmem:[%s299 + $0x28] sm:$0xf] %v736
      %801 = vst [vmem:[%s299 + $0x2c] sm:$0xf] %v737
      %802 = vst [vmem:[%s299 + $0x30] sm:$0xf] %v738
      %803 = vst [vmem:[%s299 + $0x34] sm:$0xf] %v739
      %804 = vst [vmem:[%s299 + $0x38] sm:$0xf] %v740
      %805 = vst [vmem:[%s299 + $0x3c] sm:$0xf] %v741
      %806 = vst [vmem:[%s299 + $0x40] sm:$0xf] %v742
      %807 = vst [vmem:[%s299 + $0x44] sm:$0xf] %v743
      %808 = vst [vmem:[%s299 + $0x48] sm:$0xf] %v744
      %809 = vst [vmem:[%s299 + $0x4c] sm:$0xf] %v745
      %810 = vst [vmem:[%s299 + $0x50] sm:$0xf] %v746
      %811 = vst [vmem:[%s299 + $0x54] sm:$0xf] %v747
      %812 = vst [vmem:[%s299 + $0x58] sm:$0xf] %v748
      %813 = vst [vmem:[%s299 + $0x5c] sm:$0xf] %v749
      %814 = vst [vmem:[%s299 + $0x60] sm:$0xf] %v750
      %815 = vst [vmem:[%s299 + $0x64] sm:$0xf] %v751
      %816 = vst [vmem:[%s299 + $0x68] sm:$0xf] %v752
      %817 = vst [vmem:[%s299 + $0x6c] sm:$0xf] %v753
      %818 = vst [vmem:[%s299 + $0x70] sm:$0xf] %v754
      %819 = vst [vmem:[%s299 + $0x74] sm:$0xf] %v755
      %820 = vst [vmem:[%s299 + $0x78] sm:$0xf] %v756
      %821 = vst [vmem:[%s299 + $0x7c] sm:$0xf] %v757
      %s822 = smul.u32 32, %s21
      %p823 = scmp.lt.s32.totalorder %s20, 2
      %s824 = scalar_select %p823, %s20, 2
      %p825 = scmp.lt.s32.totalorder %s822, 63
      %s826 = scalar_select %p825, %s822, 63
      %p827 = scmp.lt.s32.totalorder %s22, 0
      %s828 = scalar_select %p827, %s22, 0
      %s829 = sadd.s32 %s828, %s826
      %s830 = smul.addr %s824, 64
      %s831 = sadd.s32 %s829, %s830
      %s832 = smul.addr %s831, 4
      %s833 = scalar_lea.vmem %s3, %s832
      // Predicated region
      $region33: #{attention_forward.3} parent=31 // pred_check
        %p834 = pneg %p148
      $region34: #{attention_forward.3} parent=31 // pred_check_branch
        %836 = sbr.rel (%p834) target = $region36
      $region35: #{attention_forward.3} parent=31 // pred_region
        %s837 = smul.u32 32, %s21
      $region36: #{attention_forward.3} parent=31 // pred_fallthru
        _
    $region32: #{attention_forward.3} parent=5 // pred_fallthru
      _
    %p838 = scmp.le.s32.totalorder 2, %s9
    // Predicated region
    $region37: #{attention_forward.3} parent=5 // pred_check
      %p839 = pneg %p838
    $region38: #{attention_forward.3} parent=5 // pred_check_branch
      %841 = sbr.rel (%p839) target = $region40
    $region39: #{attention_forward.3} parent=5 // pred_region
      %s842 = ssub.s32 %s9, 2
      // Predicated region
      $region41: #{attention_forward.3} parent=39 // pred_check
        %p843 = pneg %p154
      $region42: #{attention_forward.3} parent=39 // pred_check_branch
        %845 = sbr.rel (%p843) target = $region44
      $region43: #{attention_forward.3} parent=39 // pred_region
        %s846 = smul.u32 32, %s25
        %p847 = scmp.lt.s32.totalorder %s24, 2
        %s848 = scalar_select %p847, %s24, 2
        %p849 = scmp.lt.s32.totalorder %s846, 63
        %s850 = scalar_select %p849, %s846, 63
        %p851 = scmp.lt.s32.totalorder %s26, 0
        %s852 = scalar_select %p851, %s26, 0
        %s853 = sadd.s32 %s852, %s850
        %s854 = smul.addr %s848, 64
        %s855 = sadd.s32 %s853, %s854
        %s856 = smul.addr %s855, 4
        %s857 = scalar_lea.vmem %s3, %s856
      $region44: #{attention_forward.3} parent=39 // pred_fallthru
        _
    $region40: #{attention_forward.3} parent=5 // pred_fallthru
      _
  $region6: #{attention_forward.3} parent=0 // loop_footer
    %s13 = sadd.s32 1, %s9
  $region7: #{attention_forward.3} parent=0 // loop_footer_branch
    %8 = sbr.rel target = $region3
  $region8: #{attention_forward.3} parent=0 // loop_exit
    _

// kernel: attention_forward.4
$region0: #{attention_forward.4}
  #allocation0 [shape = 'u32[]', space=smem, size = 0x4, offset = 0x4, fixed_abs, tag = 'smem constant byte address 0x4 - core index']
  #allocation1 [shape = 'u32[144,128]{1,0:T(1,128)}', space=vmem, size = 0x12000, scoped, tag = 'internal scratch']
  #allocation2 [shape = 'f32[4,256,1]{2,1,0:T(8,128)}', space=vmem, size = 0x80000, scoped, tag = 'scratch operand']
  #allocation3 [shape = 'f32[4,256,1]{2,1,0:T(8,128)}', space=vmem, size = 0x80000, scoped, tag = 'scratch operand']
  #allocation4 [shape = 'f32[256,128]{1,0:T(8,128)}', space=vmem, size = 0x20000, scoped, tag = 'scratch operand']
  %s0 = inlined_call_operand.vmem [shape: f32[2,1,256], index: 0, kind: input, shape index: {}]
  %s1 = inlined_call_operand.vmem [shape: bf16[3,2,256,128], index: 1, kind: input, shape index: {}, may-alias: {1,2,3}]
  %s2 = inlined_call_operand.vmem [shape: bf16[3,2,256,128], index: 2, kind: input, shape index: {}, may-alias: {1,2,3}]
  %s3 = inlined_call_operand.vmem [shape: bf16[3,2,256,128], index: 3, kind: input, shape index: {}, may-alias: {1,2,3}]
  %s4 = inlined_call_operand.vmem [shape: bf16[2,256,128], index: 4, kind: output, shape index: {}]
  %s5 = sld [smem:[#allocation0]]
  $region57: #{attention_forward.4} parent=0
    _
  %s7 = ssub.s32 1, %s5
  %s8 = scalar_select 0, %s7, %s5
  loop: start=0, step=1, limit=4
  $region2: #{attention_forward.4} parent=0 // loop_pre_header
    _
  $region3: #{attention_forward.4} parent=0 // loop_header
    %s10 = sphi 0, %s14
    %p11 = scmp.ge.s32.totalorder %s10, 4
    %s17 = sphi 0, %s36
    %s18 = sphi 0, %s32
    %s19 = sphi 0, %s28
    %s20 = sphi 0, %s17
    %s21 = sphi 0, %s18
    %s22 = sphi 0, %s19
    %s23 = sphi 0, %s20
    %s24 = sphi 0, %s21
    %s25 = sphi 0, %s22
    %s41 = sphi 0, %s43
    %s44 = sphi 0, %s41
    %s45 = sphi 0, %s44
    %s61 = sphi 0, %s45
    %s69 = sphi 0, %s71
    %s72 = sphi 0, %s69
    %s73 = sphi 0, %s72
    %s89 = sphi 0, %s73
    %s97 = sphi 0, %s99
    %s100 = sphi 0, %s97
    %s101 = sphi 0, %s100
    %s117 = sphi 0, %s101
    %s125 = sphi 0, %s127
    %s128 = sphi 0, %s125
    %s129 = sphi 0, %s128
    %s145 = sphi 0, %s129
    %s153 = sphi 0, %s155
    %s156 = sphi 0, %s153
    %s157 = sphi 0, %s156
    %s173 = sphi 0, %s157
  $region4: #{attention_forward.4} parent=0 // loop_header_branch
    %13 = sbr.rel (%p11) target = $region8
  $region5: #{attention_forward.4} parent=0 // loop_body
    %s15 = ssub.s32 %s10, 1
    %s16 = ssub.s32 %s10, 2
    %s26 = sadd.s32 1, %s19
    %p27 = scmp.ge.s32.totalorder %s26, 1
    %s28 = scalar_select %p27, 0, %s26
    %s29 = sadd.s32 1, %s18
    %s30 = scalar_select %p27, %s29, %s18
    %p31 = scmp.ge.s32.totalorder %s30, 1
    %s32 = scalar_select %p31, 0, %s30
    %s33 = sadd.s32 1, %s17
    %s34 = scalar_select %p31, %s33, %s17
    %p35 = scmp.ge.s32.totalorder %s34, 2
    %s36 = scalar_select %p35, 0, %s34
    %s37 = ssub.s32 %s17, %s36
    %s38 = ssub.s32 %s19, %s28
    %s39 = sor.u32 %s37, %s38
    %p40 = scmp.eq.s32.totalorder %s39, 0
    %s42 = sadd.s32 %s41, 1
    %s43 = scalar_select %p40, %s41, %s42
    %p46 = pneg %p40
    %p47 = scmp.eq.s32.totalorder %s10, 1
    %p48 = por %p46, %p47
    %p49 = scmp.ne.s32.totalorder %s41, %s44
    %p50 = scmp.eq.s32.totalorder %s10, 0
    %p51 = por %p49, %p50
    %p52 = scmp.ne.s32.totalorder %s41, %s44
    %p53 = scmp.eq.s32.totalorder %s15, 1
    %p54 = por %p52, %p53
    %p55 = scmp.ne.s32.totalorder %s44, %s45
    %p56 = scmp.eq.s32.totalorder %s15, 0
    %p57 = por %p55, %p56
    %p58 = scmp.ne.s32.totalorder %s44, %s45
    %p59 = scmp.eq.s32.totalorder %s16, 1
    %p60 = por %p58, %p59
    %p62 = scmp.ne.s32.totalorder %s45, %s61
    %p63 = scmp.eq.s32.totalorder %s16, 0
    %p64 = por %p62, %p63
    %s65 = ssub.s32 %s17, %s36
    %s66 = ssub.s32 %s18, %s32
    %s67 = sor.u32 %s65, %s66
    %p68 = scmp.eq.s32.totalorder %s67, 0
    %s70 = sadd.s32 %s69, 1
    %s71 = scalar_select %p68, %s69, %s70
    %p74 = pneg %p68
    %p75 = scmp.eq.s32.totalorder %s10, 1
    %p76 = por %p74, %p75
    %p77 = scmp.ne.s32.totalorder %s69, %s72
    %p78 = scmp.eq.s32.totalorder %s10, 0
    %p79 = por %p77, %p78
    %p80 = scmp.ne.s32.totalorder %s69, %s72
    %p81 = scmp.eq.s32.totalorder %s15, 1
    %p82 = por %p80, %p81
    %p83 = scmp.ne.s32.totalorder %s72, %s73
    %p84 = scmp.eq.s32.totalorder %s15, 0
    %p85 = por %p83, %p84
    %p86 = scmp.ne.s32.totalorder %s72, %s73
    %p87 = scmp.eq.s32.totalorder %s16, 1
    %p88 = por %p86, %p87
    %p90 = scmp.ne.s32.totalorder %s73, %s89
    %p91 = scmp.eq.s32.totalorder %s16, 0
    %p92 = por %p90, %p91
    %s93 = ssub.s32 %s17, %s36
    %s94 = ssub.s32 %s19, %s28
    %s95 = sor.u32 %s93, %s94
    %p96 = scmp.eq.s32.totalorder %s95, 0
    %s98 = sadd.s32 %s97, 1
    %s99 = scalar_select %p96, %s97, %s98
    %p102 = pneg %p96
    %p103 = scmp.eq.s32.totalorder %s10, 1
    %p104 = por %p102, %p103
    %p105 = scmp.ne.s32.totalorder %s97, %s100
    %p106 = scmp.eq.s32.totalorder %s10, 0
    %p107 = por %p105, %p106
    %p108 = scmp.ne.s32.totalorder %s97, %s100
    %p109 = scmp.eq.s32.totalorder %s15, 1
    %p110 = por %p108, %p109
    %p111 = scmp.ne.s32.totalorder %s100, %s101
    %p112 = scmp.eq.s32.totalorder %s15, 0
    %p113 = por %p111, %p112
    %p114 = scmp.ne.s32.totalorder %s100, %s101
    %p115 = scmp.eq.s32.totalorder %s16, 1
    %p116 = por %p114, %p115
    %p118 = scmp.ne.s32.totalorder %s101, %s117
    %p119 = scmp.eq.s32.totalorder %s16, 0
    %p120 = por %p118, %p119
    %s121 = ssub.s32 %s17, %s36
    %s122 = ssub.s32 %s19, %s28
    %s123 = sor.u32 %s121, %s122
    %p124 = scmp.eq.s32.totalorder %s123, 0
    %s126 = sadd.s32 %s125, 1
    %s127 = scalar_select %p124, %s125, %s126
    %p130 = pneg %p124
    %p131 = scmp.eq.s32.totalorder %s10, 1
    %p132 = por %p130, %p131
    %p133 = scmp.ne.s32.totalorder %s125, %s128
    %p134 = scmp.eq.s32.totalorder %s10, 0
    %p135 = por %p133, %p134
    %p136 = scmp.ne.s32.totalorder %s125, %s128
    %p137 = scmp.eq.s32.totalorder %s15, 1
    %p138 = por %p136, %p137
    %p139 = scmp.ne.s32.totalorder %s128, %s129
    %p140 = scmp.eq.s32.totalorder %s15, 0
    %p141 = por %p139, %p140
    %p142 = scmp.ne.s32.totalorder %s128, %s129
    %p143 = scmp.eq.s32.totalorder %s16, 1
    %p144 = por %p142, %p143
    %p146 = scmp.ne.s32.totalorder %s129, %s145
    %p147 = scmp.eq.s32.totalorder %s16, 0
    %p148 = por %p146, %p147
    %s149 = ssub.s32 %s17, %s36
    %s150 = ssub.s32 %s18, %s32
    %s151 = sor.u32 %s149, %s150
    %p152 = scmp.eq.s32.totalorder %s151, 0
    %s154 = sadd.s32 %s153, 1
    %s155 = scalar_select %p152, %s153, %s154
    %p158 = pneg %p152
    %p159 = scmp.eq.s32.totalorder %s10, 1
    %p160 = por %p158, %p159
    %p161 = scmp.ne.s32.totalorder %s153, %s156
    %p162 = scmp.eq.s32.totalorder %s10, 0
    %p163 = por %p161, %p162
    %p164 = scmp.ne.s32.totalorder %s153, %s156
    %p165 = scmp.eq.s32.totalorder %s15, 1
    %p166 = por %p164, %p165
    %p167 = scmp.ne.s32.totalorder %s156, %s157
    %p168 = scmp.eq.s32.totalorder %s15, 0
    %p169 = por %p167, %p168
    %p170 = scmp.ne.s32.totalorder %s156, %s157
    %p171 = scmp.eq.s32.totalorder %s16, 1
    %p172 = por %p170, %p171
    %p174 = scmp.ne.s32.totalorder %s157, %s173
    %p175 = scmp.eq.s32.totalorder %s16, 0
    %p176 = por %p174, %p175
    %p177 = scmp.le.s32.totalorder 1, %s10
    %p178 = scmp.lt.s32.totalorder %s10, 3
    %p179 = pnand %p177, %p178
    %p180 = pneg %p179
    // Predicated region
    $region9: #{attention_forward.4} parent=5 // pred_check
      _
    $region10: #{attention_forward.4} parent=5 // pred_check_branch
      %182 = sbr.rel (%p179) target = $region12
    $region11: #{attention_forward.4} parent=5 // pred_region
      %s183 = ssub.s32 %s10, 1
    $region12: #{attention_forward.4} parent=5 // pred_fallthru
      _
    %p184 = scmp.lt.s32.totalorder %s10, 2
    // Predicated region
    $region13: #{attention_forward.4} parent=5 // pred_check
      %p185 = pneg %p184
    $region14: #{attention_forward.4} parent=5 // pred_check_branch
      %187 = sbr.rel (%p185) target = $region16
    $region15: #{attention_forward.4} parent=5 // pred_region
      // Predicated region
      $region17: #{attention_forward.4} parent=15 // pred_check
        %p188 = pneg %p51
      $region18: #{attention_forward.4} parent=15 // pred_check_branch
        %190 = sbr.rel (%p188) target = $region20
      $region19: #{attention_forward.4} parent=15 // pred_region
        %s191 = smul.u32 2, %s19
        %p192 = scmp.lt.s32.totalorder %s17, 1
        %s193 = scalar_select %p192, %s17, 1
        %p194 = scmp.lt.s32.totalorder %s191, 1
        %s195 = scalar_select %p194, %s191, 1
        %s196 = smul.addr %s193, 2
        %s197 = sadd.s32 %s195, %s196
        %s198 = scalar_lea.vmem %s0, %s197
        %s199 = smul.u32 2, %s19
      $region20: #{attention_forward.4} parent=15 // pred_fallthru
        _
      // Predicated region
      $region21: #{attention_forward.4} parent=15 // pred_check
        %p200 = pneg %p79
      $region22: #{attention_forward.4} parent=15 // pred_check_branch
        %202 = sbr.rel (%p200) target = $region24
      $region23: #{attention_forward.4} parent=15 // pred_region
        %s203 = smul.u32 32, %s18
        %p204 = scmp.lt.s32.totalorder %s17, 1
        %s205 = scalar_select %p204, %s17, 1
        %p206 = scmp.lt.s32.totalorder %s203, 31
        %s207 = scalar_select %p206, %s203, 31
        %s208 = smul.addr %s205, 32
        %s209 = sadd.s32 %s207, %s208
        %s210 = smul.addr %s209, 4
        %s211 = scalar_lea.vmem %s1, %s210
        %s212 = smul.u32 32, %s18
      $region24: #{attention_forward.4} parent=15 // pred_fallthru
        _
      // Predicated region
      $region25: #{attention_forward.4} parent=15 // pred_check
        %p213 = pneg %p107
      $region26: #{attention_forward.4} parent=15 // pred_check_branch
        %215 = sbr.rel (%p213) target = $region28
      $region27: #{attention_forward.4} parent=15 // pred_region
        %s216 = smul.u32 32, %s19
        %p217 = scmp.lt.s32.totalorder %s17, 1
        %s218 = scalar_select %p217, %s17, 1
        %p219 = scmp.lt.s32.totalorder %s216, 31
        %s220 = scalar_select %p219, %s216, 31
        %s221 = smul.addr %s218, 32
        %s222 = sadd.s32 %s220, %s221
        %s223 = sadd.s32 %s222, 64
        %s224 = smul.addr %s223, 4
        %s225 = scalar_lea.vmem %s2, %s224
        %s226 = smul.u32 32, %s19
      $region28: #{attention_forward.4} parent=15 // pred_fallthru
        _
      // Predicated region
      $region29: #{attention_forward.4} parent=15 // pred_check
        %p227 = pneg %p135
      $region30: #{attention_forward.4} parent=15 // pred_check_branch
        %229 = sbr.rel (%p227) target = $region32
      $region31: #{attention_forward.4} parent=15 // pred_region
        %s230 = smul.u32 32, %s19
        %p231 = scmp.lt.s32.totalorder %s17, 1
        %s232 = scalar_select %p231, %s17, 1
        %p233 = scmp.lt.s32.totalorder %s230, 31
        %s234 = scalar_select %p233, %s230, 31
        %s235 = smul.addr %s232, 32
        %s236 = sadd.s32 %s234, %s235
        %s237 = sadd.s32 %s236, 128
        %s238 = smul.addr %s237, 4
        %s239 = scalar_lea.vmem %s3, %s238
        %s240 = smul.u32 32, %s19
      $region32: #{attention_forward.4} parent=15 // pred_fallthru
        _
    $region16: #{attention_forward.4} parent=5 // pred_fallthru
      _
    %p241 = scmp.le.s32.totalorder 1, %s10
    %p242 = scmp.lt.s32.totalorder %s10, 3
    %p243 = pnand %p241, %p242
    %p244 = pneg %p243
    // Predicated region
    $region33: #{attention_forward.4} parent=5 // pred_check
      _
    $region34: #{attention_forward.4} parent=5 // pred_check_branch
      %246 = sbr.rel (%p243) target = $region36
    $region35: #{attention_forward.4} parent=5 // pred_region
      %s247 = ssub.s32 %s10, 1
      %s248 = smul.u32 2, %s22
      %p249 = scmp.lt.s32.totalorder %s20, 1
      %s250 = scalar_select %p249, %s20, 1
      %p251 = scmp.lt.s32.totalorder %s248, 1
      %s252 = scalar_select %p251, %s248, 1
      %s253 = smul.addr %s250, 2
      %s254 = sadd.s32 %s252, %s253
      %s255 = scalar_lea.vmem %s0, %s254
      %p256 = pneg %p57
      %p257 = pneg %p54
      %s258 = smul.u32 32, %s21
      %p259 = scmp.lt.s32.totalorder %s20, 1
      %s260 = scalar_select %p259, %s20, 1
      %p261 = scmp.lt.s32.totalorder %s258, 31
      %s262 = scalar_select %p261, %s258, 31
      %s263 = smul.addr %s260, 32
      %s264 = sadd.s32 %s262, %s263
      %s265 = smul.addr %s264, 4
      %s266 = scalar_lea.vmem %s1, %s265
      %p267 = pneg %p85
      %p268 = pneg %p82
      %s269 = smul.u32 32, %s22
      %p270 = scmp.lt.s32.totalorder %s20, 1
      %s271 = scalar_select %p270, %s20, 1
      %p272 = scmp.lt.s32.totalorder %s269, 31
      %s273 = scalar_select %p272, %s269, 31
      %s274 = smul.addr %s271, 32
      %s275 = sadd.s32 %s273, %s274
      %s276 = sadd.s32 %s275, 64
      %s277 = smul.addr %s276, 4
      %s278 = scalar_lea.vmem %s2, %s277
      %p279 = pneg %p113
      %p280 = pneg %p110
      %s281 = smul.u32 32, %s22
      %p282 = scmp.lt.s32.totalorder %s20, 1
      %s283 = scalar_select %p282, %s20, 1
      %p284 = scmp.lt.s32.totalorder %s281, 31
      %s285 = scalar_select %p284, %s281, 31
      %s286 = smul.addr %s283, 32
      %s287 = sadd.s32 %s285, %s286
      %s288 = sadd.s32 %s287, 128
      %s289 = smul.addr %s288, 4
      %s290 = scalar_lea.vmem %s3, %s289
      %p291 = pneg %p141
      %p292 = pneg %p138
      %p293 = pneg %p169
      %p294 = pneg %p166
      %s295 = smul.u32 32, %s21
      %p296 = scmp.lt.s32.totalorder %s20, 1
      %s297 = scalar_select %p296, %s20, 1
      %p298 = scmp.lt.s32.totalorder %s295, 31
      %s299 = scalar_select %p298, %s295, 31
      %s300 = smul.addr %s297, 32
      %s301 = sadd.s32 %s299, %s300
      %s302 = smul.addr %s301, 4
      %s303 = scalar_lea.vmem %s4, %s302
      %s304 = smul.u32 2, %s22
      %p305 = scmp.lt.s32.totalorder %s20, 1
      %s306 = scalar_select %p305, %s20, 1
      %p307 = scmp.lt.s32.totalorder %s304, 1
      %s308 = scalar_select %p307, %s304, 1
      %s309 = smul.addr %s306, 2
      %s310 = sadd.s32 %s308, %s309
      %s311 = scalar_lea.vmem %s0, %s310
      %s312 = smul.u32 2, %s22
      %s313 = smul.u32 32, %s21
      %p314 = scmp.lt.s32.totalorder %s20, 1
      %s315 = scalar_select %p314, %s20, 1
      %p316 = scmp.lt.s32.totalorder %s313, 31
      %s317 = scalar_select %p316, %s313, 31
      %s318 = smul.addr %s315, 32
      %s319 = sadd.s32 %s317, %s318
      %s320 = smul.addr %s319, 4
      %s321 = scalar_lea.vmem %s1, %s320
      %s322 = smul.u32 32, %s21
      %s323 = smul.u32 32, %s22
      %p324 = scmp.lt.s32.totalorder %s20, 1
      %s325 = scalar_select %p324, %s20, 1
      %p326 = scmp.lt.s32.totalorder %s323, 31
      %s327 = scalar_select %p326, %s323, 31
      %s328 = smul.addr %s325, 32
      %s329 = sadd.s32 %s327, %s328
      %s330 = sadd.s32 %s329, 64
      %s331 = smul.addr %s330, 4
      %s332 = scalar_lea.vmem %s2, %s331
      %s333 = smul.u32 32, %s22
      %s334 = smul.u32 32, %s22
      %p335 = scmp.lt.s32.totalorder %s20, 1
      %s336 = scalar_select %p335, %s20, 1
      %p337 = scmp.lt.s32.totalorder %s334, 31
      %s338 = scalar_select %p337, %s334, 31
      %s339 = smul.addr %s336, 32
      %s340 = sadd.s32 %s338, %s339
      %s341 = sadd.s32 %s340, 128
      %s342 = smul.addr %s341, 4
      %s343 = scalar_lea.vmem %s3, %s342
      %s344 = smul.u32 32, %s22
      %s345 = smul.u32 32, %s21
      %p346 = scmp.lt.s32.totalorder %s20, 1
      %s347 = scalar_select %p346, %s20, 1
      %p348 = scmp.lt.s32.totalorder %s345, 31
      %s349 = scalar_select %p348, %s345, 31
      %s350 = smul.addr %s347, 32
      %s351 = sadd.s32 %s349, %s350
      %s352 = smul.addr %s351, 4
      %s353 = scalar_lea.vmem %s4, %s352
      %s354 = smul.u32 32, %s21
      %p356 = scmp.eq.s32.totalorder %s22, 0
      // Predicated region
      $region37: #{attention_forward.4} parent=35 // pred_check
        %p357 = pneg %p356
      $region38: #{attention_forward.4} parent=35 // pred_check_branch
        %359 = sbr.rel (%p357) target = $region40
      $region39: #{attention_forward.4} parent=35 // pred_region
        %vm360 = vcmask 7168
        %361 = vst.msk [vmem:[#allocation2] sm:$0xff] %vm360, -inf
        %362 = vst.msk [vmem:[#allocation2 + $0x8] sm:$0xff] %vm360, -inf
        %363 = vst.msk [vmem:[#allocation2 + $0x10] sm:$0xff] %vm360, -inf
        %364 = vst.msk [vmem:[#allocation2 + $0x18] sm:$0xff] %vm360, -inf
        %365 = vst.msk [vmem:[#allocation2 + $0x20] sm:$0xff] %vm360, -inf
        %366 = vst.msk [vmem:[#allocation2 + $0x28] sm:$0xff] %vm360, -inf
        %367 = vst.msk [vmem:[#allocation2 + $0x30] sm:$0xff] %vm360, -inf
        %368 = vst.msk [vmem:[#allocation2 + $0x38] sm:$0xff] %vm360, -inf
        %369 = vst.msk [vmem:[#allocation2 + $0x40] sm:$0xff] %vm360, -inf
        %370 = vst.msk [vmem:[#allocation2 + $0x48] sm:$0xff] %vm360, -inf
        %371 = vst.msk [vmem:[#allocation2 + $0x50] sm:$0xff] %vm360, -inf
        %372 = vst.msk [vmem:[#allocation2 + $0x58] sm:$0xff] %vm360, -inf
        %373 = vst.msk [vmem:[#allocation2 + $0x60] sm:$0xff] %vm360, -inf
        %374 = vst.msk [vmem:[#allocation2 + $0x68] sm:$0xff] %vm360, -inf
        %375 = vst.msk [vmem:[#allocation2 + $0x70] sm:$0xff] %vm360, -inf
        %376 = vst.msk [vmem:[#allocation2 + $0x78] sm:$0xff] %vm360, -inf
        %377 = vst.msk [vmem:[#allocation2 + $0x80] sm:$0xff] %vm360, -inf
        %378 = vst.msk [vmem:[#allocation2 + $0x88] sm:$0xff] %vm360, -inf
        %379 = vst.msk [vmem:[#allocation2 + $0x90] sm:$0xff] %vm360, -inf
        %380 = vst.msk [vmem:[#allocation2 + $0x98] sm:$0xff] %vm360, -inf
        %381 = vst.msk [vmem:[#allocation2 + $0xa0] sm:$0xff] %vm360, -inf
        %382 = vst.msk [vmem:[#allocation2 + $0xa8] sm:$0xff] %vm360, -inf
        %383 = vst.msk [vmem:[#allocation2 + $0xb0] sm:$0xff] %vm360, -inf
        %384 = vst.msk [vmem:[#allocation2 + $0xb8] sm:$0xff] %vm360, -inf
        %385 = vst.msk [vmem:[#allocation2 + $0xc0] sm:$0xff] %vm360, -inf
        %386 = vst.msk [vmem:[#allocation2 + $0xc8] sm:$0xff] %vm360, -inf
        %387 = vst.msk [vmem:[#allocation2 + $0xd0] sm:$0xff] %vm360, -inf
        %388 = vst.msk [vmem:[#allocation2 + $0xd8] sm:$0xff] %vm360, -inf
        %389 = vst.msk [vmem:[#allocation2 + $0xe0] sm:$0xff] %vm360, -inf
        %390 = vst.msk [vmem:[#allocation2 + $0xe8] sm:$0xff] %vm360, -inf
        %391 = vst.msk [vmem:[#allocation2 + $0xf0] sm:$0xff] %vm360, -inf
        %392 = vst.msk [vmem:[#allocation2 + $0xf8] sm:$0xff] %vm360, -inf
        %393 = vst.msk [vmem:[#allocation2 + $0x100] sm:$0xff] %vm360, -inf
        %394 = vst.msk [vmem:[#allocation2 + $0x108] sm:$0xff] %vm360, -inf
        %395 = vst.msk [vmem:[#allocation2 + $0x110] sm:$0xff] %vm360, -inf
        %396 = vst.msk [vmem:[#allocation2 + $0x118] sm:$0xff] %vm360, -inf
        %397 = vst.msk [vmem:[#allocation2 + $0x120] sm:$0xff] %vm360, -inf
        %398 = vst.msk [vmem:[#allocation2 + $0x128] sm:$0xff] %vm360, -inf
        %399 = vst.msk [vmem:[#allocation2 + $0x130] sm:$0xff] %vm360, -inf
        %400 = vst.msk [vmem:[#allocation2 + $0x138] sm:$0xff] %vm360, -inf
        %401 = vst.msk [vmem:[#allocation2 + $0x140] sm:$0xff] %vm360, -inf
        %402 = vst.msk [vmem:[#allocation2 + $0x148] sm:$0xff] %vm360, -inf
        %403 = vst.msk [vmem:[#allocation2 + $0x150] sm:$0xff] %vm360, -inf
        %404 = vst.msk [vmem:[#allocation2 + $0x158] sm:$0xff] %vm360, -inf
        %405 = vst.msk [vmem:[#allocation2 + $0x160] sm:$0xff] %vm360, -inf
        %406 = vst.msk [vmem:[#allocation2 + $0x168] sm:$0xff] %vm360, -inf
        %407 = vst.msk [vmem:[#allocation2 + $0x170] sm:$0xff] %vm360, -inf
        %408 = vst.msk [vmem:[#allocation2 + $0x178] sm:$0xff] %vm360, -inf
        %409 = vst.msk [vmem:[#allocation2 + $0x180] sm:$0xff] %vm360, -inf
        %410 = vst.msk [vmem:[#allocation2 + $0x188] sm:$0xff] %vm360, -inf
        %411 = vst.msk [vmem:[#allocation2 + $0x190] sm:$0xff] %vm360, -inf
        %412 = vst.msk [vmem:[#allocation2 + $0x198] sm:$0xff] %vm360, -inf
        %413 = vst.msk [vmem:[#allocation2 + $0x1a0] sm:$0xff] %vm360, -inf
        %414 = vst.msk [vmem:[#allocation2 + $0x1a8] sm:$0xff] %vm360, -inf
        %415 = vst.msk [vmem:[#allocation2 + $0x1b0] sm:$0xff] %vm360, -inf
        %416 = vst.msk [vmem:[#allocation2 + $0x1b8] sm:$0xff] %vm360, -inf
        %417 = vst.msk [vmem:[#allocation2 + $0x1c0] sm:$0xff] %vm360, -inf
        %418 = vst.msk [vmem:[#allocation2 + $0x1c8] sm:$0xff] %vm360, -inf
        %419 = vst.msk [vmem:[#allocation2 + $0x1d0] sm:$0xff] %vm360, -inf
        %420 = vst.msk [vmem:[#allocation2 + $0x1d8] sm:$0xff] %vm360, -inf
        %421 = vst.msk [vmem:[#allocation2 + $0x1e0] sm:$0xff] %vm360, -inf
        %422 = vst.msk [vmem:[#allocation2 + $0x1e8] sm:$0xff] %vm360, -inf
        %423 = vst.msk [vmem:[#allocation2 + $0x1f0] sm:$0xff] %vm360, -inf
        %424 = vst.msk [vmem:[#allocation2 + $0x1f8] sm:$0xff] %vm360, -inf
        %425 = vst.msk [vmem:[#allocation2 + $0x200] sm:$0xff] %vm360, -inf
        %426 = vst.msk [vmem:[#allocation2 + $0x208] sm:$0xff] %vm360, -inf
        %427 = vst.msk [vmem:[#allocation2 + $0x210] sm:$0xff] %vm360, -inf
        %428 = vst.msk [vmem:[#allocation2 + $0x218] sm:$0xff] %vm360, -inf
        %429 = vst.msk [vmem:[#allocation2 + $0x220] sm:$0xff] %vm360, -inf
        %430 = vst.msk [vmem:[#allocation2 + $0x228] sm:$0xff] %vm360, -inf
        %431 = vst.msk [vmem:[#allocation2 + $0x230] sm:$0xff] %vm360, -inf
        %432 = vst.msk [vmem:[#allocation2 + $0x238] sm:$0xff] %vm360, -inf
        %433 = vst.msk [vmem:[#allocation2 + $0x240] sm:$0xff] %vm360, -inf
        %434 = vst.msk [vmem:[#allocation2 + $0x248] sm:$0xff] %vm360, -inf
        %435 = vst.msk [vmem:[#allocation2 + $0x250] sm:$0xff] %vm360, -inf
        %436 = vst.msk [vmem:[#allocation2 + $0x258] sm:$0xff] %vm360, -inf
        %437 = vst.msk [vmem:[#allocation2 + $0x260] sm:$0xff] %vm360, -inf
        %438 = vst.msk [vmem:[#allocation2 + $0x268] sm:$0xff] %vm360, -inf
        %439 = vst.msk [vmem:[#allocation2 + $0x270] sm:$0xff] %vm360, -inf
        %440 = vst.msk [vmem:[#allocation2 + $0x278] sm:$0xff] %vm360, -inf
        %441 = vst.msk [vmem:[#allocation2 + $0x280] sm:$0xff] %vm360, -inf
        %442 = vst.msk [vmem:[#allocation2 + $0x288] sm:$0xff] %vm360, -inf
        %443 = vst.msk [vmem:[#allocation2 + $0x290] sm:$0xff] %vm360, -inf
        %444 = vst.msk [vmem:[#allocation2 + $0x298] sm:$0xff] %vm360, -inf
        %445 = vst.msk [vmem:[#allocation2 + $0x2a0] sm:$0xff] %vm360, -inf
        %446 = vst.msk [vmem:[#allocation2 + $0x2a8] sm:$0xff] %vm360, -inf
        %447 = vst.msk [vmem:[#allocation2 + $0x2b0] sm:$0xff] %vm360, -inf
        %448 = vst.msk [vmem:[#allocation2 + $0x2b8] sm:$0xff] %vm360, -inf
        %449 = vst.msk [vmem:[#allocation2 + $0x2c0] sm:$0xff] %vm360, -inf
        %450 = vst.msk [vmem:[#allocation2 + $0x2c8] sm:$0xff] %vm360, -inf
        %451 = vst.msk [vmem:[#allocation2 + $0x2d0] sm:$0xff] %vm360, -inf
        %452 = vst.msk [vmem:[#allocation2 + $0x2d8] sm:$0xff] %vm360, -inf
        %453 = vst.msk [vmem:[#allocation2 + $0x2e0] sm:$0xff] %vm360, -inf
        %454 = vst.msk [vmem:[#allocation2 + $0x2e8] sm:$0xff] %vm360, -inf
        %455 = vst.msk [vmem:[#allocation2 + $0x2f0] sm:$0xff] %vm360, -inf
        %456 = vst.msk [vmem:[#allocation2 + $0x2f8] sm:$0xff] %vm360, -inf
        %457 = vst.msk [vmem:[#allocation2 + $0x300] sm:$0xff] %vm360, -inf
        %458 = vst.msk [vmem:[#allocation2 + $0x308] sm:$0xff] %vm360, -inf
        %459 = vst.msk [vmem:[#allocation2 + $0x310] sm:$0xff] %vm360, -inf
        %460 = vst.msk [vmem:[#allocation2 + $0x318] sm:$0xff] %vm360, -inf
        %461 = vst.msk [vmem:[#allocation2 + $0x320] sm:$0xff] %vm360, -inf
        %462 = vst.msk [vmem:[#allocation2 + $0x328] sm:$0xff] %vm360, -inf
        %463 = vst.msk [vmem:[#allocation2 + $0x330] sm:$0xff] %vm360, -inf
        %464 = vst.msk [vmem:[#allocation2 + $0x338] sm:$0xff] %vm360, -inf
        %465 = vst.msk [vmem:[#allocation2 + $0x340] sm:$0xff] %vm360, -inf
        %466 = vst.msk [vmem:[#allocation2 + $0x348] sm:$0xff] %vm360, -inf
        %467 = vst.msk [vmem:[#allocation2 + $0x350] sm:$0xff] %vm360, -inf
        %468 = vst.msk [vmem:[#allocation2 + $0x358] sm:$0xff] %vm360, -inf
        %469 = vst.msk [vmem:[#allocation2 + $0x360] sm:$0xff] %vm360, -inf
        %470 = vst.msk [vmem:[#allocation2 + $0x368] sm:$0xff] %vm360, -inf
        %471 = vst.msk [vmem:[#allocation2 + $0x370] sm:$0xff] %vm360, -inf
        %472 = vst.msk [vmem:[#allocation2 + $0x378] sm:$0xff] %vm360, -inf
        %473 = vst.msk [vmem:[#allocation2 + $0x380] sm:$0xff] %vm360, -inf
        %474 = vst.msk [vmem:[#allocation2 + $0x388] sm:$0xff] %vm360, -inf
        %475 = vst.msk [vmem:[#allocation2 + $0x390] sm:$0xff] %vm360, -inf
        %476 = vst.msk [vmem:[#allocation2 + $0x398] sm:$0xff] %vm360, -inf
        %477 = vst.msk [vmem:[#allocation2 + $0x3a0] sm:$0xff] %vm360, -inf
        %478 = vst.msk [vmem:[#allocation2 + $0x3a8] sm:$0xff] %vm360, -inf
        %479 = vst.msk [vmem:[#allocation2 + $0x3b0] sm:$0xff] %vm360, -inf
        %480 = vst.msk [vmem:[#allocation2 + $0x3b8] sm:$0xff] %vm360, -inf
        %481 = vst.msk [vmem:[#allocation2 + $0x3c0] sm:$0xff] %vm360, -inf
        %482 = vst.msk [vmem:[#allocation2 + $0x3c8] sm:$0xff] %vm360, -inf
        %483 = vst.msk [vmem:[#allocation2 + $0x3d0] sm:$0xff] %vm360, -inf
        %484 = vst.msk [vmem:[#allocation2 + $0x3d8] sm:$0xff] %vm360, -inf
        %485 = vst.msk [vmem:[#allocation2 + $0x3e0] sm:$0xff] %vm360, -inf
        %486 = vst.msk [vmem:[#allocation2 + $0x3e8] sm:$0xff] %vm360, -inf
        %487 = vst.msk [vmem:[#allocation2 + $0x3f0] sm:$0xff] %vm360, -inf
        %488 = vst.msk [vmem:[#allocation2 + $0x3f8] sm:$0xff] %vm360, -inf
        %489 = vst.msk [vmem:[#allocation3] sm:$0xff] %vm360, 0.0
        %490 = vst.msk [vmem:[#allocation3 + $0x8] sm:$0xff] %vm360, 0.0
        %491 = vst.msk [vmem:[#allocation3 + $0x10] sm:$0xff] %vm360, 0.0
        %492 = vst.msk [vmem:[#allocation3 + $0x18] sm:$0xff] %vm360, 0.0
        %493 = vst.msk [vmem:[#allocation3 + $0x20] sm:$0xff] %vm360, 0.0
        %494 = vst.msk [vmem:[#allocation3 + $0x28] sm:$0xff] %vm360, 0.0
        %495 = vst.msk [vmem:[#allocation3 + $0x30] sm:$0xff] %vm360, 0.0
        %496 = vst.msk [vmem:[#allocation3 + $0x38] sm:$0xff] %vm360, 0.0
        %497 = vst.msk [vmem:[#allocation3 + $0x40] sm:$0xff] %vm360, 0.0
        %498 = vst.msk [vmem:[#allocation3 + $0x48] sm:$0xff] %vm360, 0.0
        %499 = vst.msk [vmem:[#allocation3 + $0x50] sm:$0xff] %vm360, 0.0
        %500 = vst.msk [vmem:[#allocation3 + $0x58] sm:$0xff] %vm360, 0.0
        %501 = vst.msk [vmem:[#allocation3 + $0x60] sm:$0xff] %vm360, 0.0
        %502 = vst.msk [vmem:[#allocation3 + $0x68] sm:$0xff] %vm360, 0.0
        %503 = vst.msk [vmem:[#allocation3 + $0x70] sm:$0xff] %vm360, 0.0
        %504 = vst.msk [vmem:[#allocation3 + $0x78] sm:$0xff] %vm360, 0.0
        %505 = vst.msk [vmem:[#allocation3 + $0x80] sm:$0xff] %vm360, 0.0
        %506 = vst.msk [vmem:[#allocation3 + $0x88] sm:$0xff] %vm360, 0.0
        %507 = vst.msk [vmem:[#allocation3 + $0x90] sm:$0xff] %vm360, 0.0
        %508 = vst.msk [vmem:[#allocation3 + $0x98] sm:$0xff] %vm360, 0.0
        %509 = vst.msk [vmem:[#allocation3 + $0xa0] sm:$0xff] %vm360, 0.0
        %510 = vst.msk [vmem:[#allocation3 + $0xa8] sm:$0xff] %vm360, 0.0
        %511 = vst.msk [vmem:[#allocation3 + $0xb0] sm:$0xff] %vm360, 0.0
        %512 = vst.msk [vmem:[#allocation3 + $0xb8] sm:$0xff] %vm360, 0.0
        %513 = vst.msk [vmem:[#allocation3 + $0xc0] sm:$0xff] %vm360, 0.0
        %514 = vst.msk [vmem:[#allocation3 + $0xc8] sm:$0xff] %vm360, 0.0
        %515 = vst.msk [vmem:[#allocation3 + $0xd0] sm:$0xff] %vm360, 0.0
        %516 = vst.msk [vmem:[#allocation3 + $0xd8] sm:$0xff] %vm360, 0.0
        %517 = vst.msk [vmem:[#allocation3 + $0xe0] sm:$0xff] %vm360, 0.0
        %518 = vst.msk [vmem:[#allocation3 + $0xe8] sm:$0xff] %vm360, 0.0
        %519 = vst.msk [vmem:[#allocation3 + $0xf0] sm:$0xff] %vm360, 0.0
        %520 = vst.msk [vmem:[#allocation3 + $0xf8] sm:$0xff] %vm360, 0.0
        %521 = vst.msk [vmem:[#allocation3 + $0x100] sm:$0xff] %vm360, 0.0
        %522 = vst.msk [vmem:[#allocation3 + $0x108] sm:$0xff] %vm360, 0.0
        %523 = vst.msk [vmem:[#allocation3 + $0x110] sm:$0xff] %vm360, 0.0
        %524 = vst.msk [vmem:[#allocation3 + $0x118] sm:$0xff] %vm360, 0.0
        %525 = vst.msk [vmem:[#allocation3 + $0x120] sm:$0xff] %vm360, 0.0
        %526 = vst.msk [vmem:[#allocation3 + $0x128] sm:$0xff] %vm360, 0.0
        %527 = vst.msk [vmem:[#allocation3 + $0x130] sm:$0xff] %vm360, 0.0
        %528 = vst.msk [vmem:[#allocation3 + $0x138] sm:$0xff] %vm360, 0.0
        %529 = vst.msk [vmem:[#allocation3 + $0x140] sm:$0xff] %vm360, 0.0
        %530 = vst.msk [vmem:[#allocation3 + $0x148] sm:$0xff] %vm360, 0.0
        %531 = vst.msk [vmem:[#allocation3 + $0x150] sm:$0xff] %vm360, 0.0
        %532 = vst.msk [vmem:[#allocation3 + $0x158] sm:$0xff] %vm360, 0.0
        %533 = vst.msk [vmem:[#allocation3 + $0x160] sm:$0xff] %vm360, 0.0
        %534 = vst.msk [vmem:[#allocation3 + $0x168] sm:$0xff] %vm360, 0.0
        %535 = vst.msk [vmem:[#allocation3 + $0x170] sm:$0xff] %vm360, 0.0
        %536 = vst.msk [vmem:[#allocation3 + $0x178] sm:$0xff] %vm360, 0.0
        %537 = vst.msk [vmem:[#allocation3 + $0x180] sm:$0xff] %vm360, 0.0
        %538 = vst.msk [vmem:[#allocation3 + $0x188] sm:$0xff] %vm360, 0.0
        %539 = vst.msk [vmem:[#allocation3 + $0x190] sm:$0xff] %vm360, 0.0
        %540 = vst.msk [vmem:[#allocation3 + $0x198] sm:$0xff] %vm360, 0.0
        %541 = vst.msk [vmem:[#allocation3 + $0x1a0] sm:$0xff] %vm360, 0.0
        %542 = vst.msk [vmem:[#allocation3 + $0x1a8] sm:$0xff] %vm360, 0.0
        %543 = vst.msk [vmem:[#allocation3 + $0x1b0] sm:$0xff] %vm360, 0.0
        %544 = vst.msk [vmem:[#allocation3 + $0x1b8] sm:$0xff] %vm360, 0.0
        %545 = vst.msk [vmem:[#allocation3 + $0x1c0] sm:$0xff] %vm360, 0.0
        %546 = vst.msk [vmem:[#allocation3 + $0x1c8] sm:$0xff] %vm360, 0.0
        %547 = vst.msk [vmem:[#allocation3 + $0x1d0] sm:$0xff] %vm360, 0.0
        %548 = vst.msk [vmem:[#allocation3 + $0x1d8] sm:$0xff] %vm360, 0.0
        %549 = vst.msk [vmem:[#allocation3 + $0x1e0] sm:$0xff] %vm360, 0.0
        %550 = vst.msk [vmem:[#allocation3 + $0x1e8] sm:$0xff] %vm360, 0.0
        %551 = vst.msk [vmem:[#allocation3 + $0x1f0] sm:$0xff] %vm360, 0.0
        %552 = vst.msk [vmem:[#allocation3 + $0x1f8] sm:$0xff] %vm360, 0.0
        %553 = vst.msk [vmem:[#allocation3 + $0x200] sm:$0xff] %vm360, 0.0
        %554 = vst.msk [vmem:[#allocation3 + $0x208] sm:$0xff] %vm360, 0.0
        %555 = vst.msk [vmem:[#allocation3 + $0x210] sm:$0xff] %vm360, 0.0
        %556 = vst.msk [vmem:[#allocation3 + $0x218] sm:$0xff] %vm360, 0.0
        %557 = vst.msk [vmem:[#allocation3 + $0x220] sm:$0xff] %vm360, 0.0
        %558 = vst.msk [vmem:[#allocation3 + $0x228] sm:$0xff] %vm360, 0.0
        %559 = vst.msk [vmem:[#allocation3 + $0x230] sm:$0xff] %vm360, 0.0
        %560 = vst.msk [vmem:[#allocation3 + $0x238] sm:$0xff] %vm360, 0.0
        %561 = vst.msk [vmem:[#allocation3 + $0x240] sm:$0xff] %vm360, 0.0
        %562 = vst.msk [vmem:[#allocation3 + $0x248] sm:$0xff] %vm360, 0.0
        %563 = vst.msk [vmem:[#allocation3 + $0x250] sm:$0xff] %vm360, 0.0
        %564 = vst.msk [vmem:[#allocation3 + $0x258] sm:$0xff] %vm360, 0.0
        %565 = vst.msk [vmem:[#allocation3 + $0x260] sm:$0xff] %vm360, 0.0
        %566 = vst.msk [vmem:[#allocation3 + $0x268] sm:$0xff] %vm360, 0.0
        %567 = vst.msk [vmem:[#allocation3 + $0x270] sm:$0xff] %vm360, 0.0
        %568 = vst.msk [vmem:[#allocation3 + $0x278] sm:$0xff] %vm360, 0.0
        %569 = vst.msk [vmem:[#allocation3 + $0x280] sm:$0xff] %vm360, 0.0
        %570 = vst.msk [vmem:[#allocation3 + $0x288] sm:$0xff] %vm360, 0.0
        %571 = vst.msk [vmem:[#allocation3 + $0x290] sm:$0xff] %vm360, 0.0
        %572 = vst.msk [vmem:[#allocation3 + $0x298] sm:$0xff] %vm360, 0.0
        %573 = vst.msk [vmem:[#allocation3 + $0x2a0] sm:$0xff] %vm360, 0.0
        %574 = vst.msk [vmem:[#allocation3 + $0x2a8] sm:$0xff] %vm360, 0.0
        %575 = vst.msk [vmem:[#allocation3 + $0x2b0] sm:$0xff] %vm360, 0.0
        %576 = vst.msk [vmem:[#allocation3 + $0x2b8] sm:$0xff] %vm360, 0.0
        %577 = vst.msk [vmem:[#allocation3 + $0x2c0] sm:$0xff] %vm360, 0.0
        %578 = vst.msk [vmem:[#allocation3 + $0x2c8] sm:$0xff] %vm360, 0.0
        %579 = vst.msk [vmem:[#allocation3 + $0x2d0] sm:$0xff] %vm360, 0.0
        %580 = vst.msk [vmem:[#allocation3 + $0x2d8] sm:$0xff] %vm360, 0.0
        %581 = vst.msk [vmem:[#allocation3 + $0x2e0] sm:$0xff] %vm360, 0.0
        %582 = vst.msk [vmem:[#allocation3 + $0x2e8] sm:$0xff] %vm360, 0.0
        %583 = vst.msk [vmem:[#allocation3 + $0x2f0] sm:$0xff] %vm360, 0.0
        %584 = vst.msk [vmem:[#allocation3 + $0x2f8] sm:$0xff] %vm360, 0.0
        %585 = vst.msk [vmem:[#allocation3 + $0x300] sm:$0xff] %vm360, 0.0
        %586 = vst.msk [vmem:[#allocation3 + $0x308] sm:$0xff] %vm360, 0.0
        %587 = vst.msk [vmem:[#allocation3 + $0x310] sm:$0xff] %vm360, 0.0
        %588 = vst.msk [vmem:[#allocation3 + $0x318] sm:$0xff] %vm360, 0.0
        %589 = vst.msk [vmem:[#allocation3 + $0x320] sm:$0xff] %vm360, 0.0
        %590 = vst.msk [vmem:[#allocation3 + $0x328] sm:$0xff] %vm360, 0.0
        %591 = vst.msk [vmem:[#allocation3 + $0x330] sm:$0xff] %vm360, 0.0
        %592 = vst.msk [vmem:[#allocation3 + $0x338] sm:$0xff] %vm360, 0.0
        %593 = vst.msk [vmem:[#allocation3 + $0x340] sm:$0xff] %vm360, 0.0
        %594 = vst.msk [vmem:[#allocation3 + $0x348] sm:$0xff] %vm360, 0.0
        %595 = vst.msk [vmem:[#allocation3 + $0x350] sm:$0xff] %vm360, 0.0
        %596 = vst.msk [vmem:[#allocation3 + $0x358] sm:$0xff] %vm360, 0.0
        %597 = vst.msk [vmem:[#allocation3 + $0x360] sm:$0xff] %vm360, 0.0
        %598 = vst.msk [vmem:[#allocation3 + $0x368] sm:$0xff] %vm360, 0.0
        %599 = vst.msk [vmem:[#allocation3 + $0x370] sm:$0xff] %vm360, 0.0
        %600 = vst.msk [vmem:[#allocation3 + $0x378] sm:$0xff] %vm360, 0.0
        %601 = vst.msk [vmem:[#allocation3 + $0x380] sm:$0xff] %vm360, 0.0
        %602 = vst.msk [vmem:[#allocation3 + $0x388] sm:$0xff] %vm360, 0.0
        %603 = vst.msk [vmem:[#allocation3 + $0x390] sm:$0xff] %vm360, 0.0
        %604 = vst.msk [vmem:[#allocation3 + $0x398] sm:$0xff] %vm360, 0.0
        %605 = vst.msk [vmem:[#allocation3 + $0x3a0] sm:$0xff] %vm360, 0.0
        %606 = vst.msk [vmem:[#allocation3 + $0x3a8] sm:$0xff] %vm360, 0.0
        %607 = vst.msk [vmem:[#allocation3 + $0x3b0] sm:$0xff] %vm360, 0.0
        %608 = vst.msk [vmem:[#allocation3 + $0x3b8] sm:$0xff] %vm360, 0.0
        %609 = vst.msk [vmem:[#allocation3 + $0x3c0] sm:$0xff] %vm360, 0.0
        %610 = vst.msk [vmem:[#allocation3 + $0x3c8] sm:$0xff] %vm360, 0.0
        %611 = vst.msk [vmem:[#allocation3 + $0x3d0] sm:$0xff] %vm360, 0.0
        %612 = vst.msk [vmem:[#allocation3 + $0x3d8] sm:$0xff] %vm360, 0.0
        %613 = vst.msk [vmem:[#allocation3 + $0x3e0] sm:$0xff] %vm360, 0.0
        %614 = vst.msk [vmem:[#allocation3 + $0x3e8] sm:$0xff] %vm360, 0.0
        %615 = vst.msk [vmem:[#allocation3 + $0x3f0] sm:$0xff] %vm360, 0.0
        %616 = vst.msk [vmem:[#allocation3 + $0x3f8] sm:$0xff] %vm360, 0.0
        %617 = vst [vmem:[#allocation4] sm:$0xff] 0.0
        %618 = vst [vmem:[#allocation4 + $0x8] sm:$0xff] 0.0
        %619 = vst [vmem:[#allocation4 + $0x10] sm:$0xff] 0.0
        %620 = vst [vmem:[#allocation4 + $0x18] sm:$0xff] 0.0
        %621 = vst [vmem:[#allocation4 + $0x20] sm:$0xff] 0.0
        %622 = vst [vmem:[#allocation4 + $0x28] sm:$0xff] 0.0
        %623 = vst [vmem:[#allocation4 + $0x30] sm:$0xff] 0.0
        %624 = vst [vmem:[#allocation4 + $0x38] sm:$0xff] 0.0
        %625 = vst [vmem:[#allocation4 + $0x40] sm:$0xff] 0.0
        %626 = vst [vmem:[#allocation4 + $0x48] sm:$0xff] 0.0
        %627 = vst [vmem:[#allocation4 + $0x50] sm:$0xff] 0.0
        %628 = vst [vmem:[#allocation4 + $0x58] sm:$0xff] 0.0
        %629 = vst [vmem:[#allocation4 + $0x60] sm:$0xff] 0.0
        %630 = vst [vmem:[#allocation4 + $0x68] sm:$0xff] 0.0
        %631 = vst [vmem:[#allocation4 + $0x70] sm:$0xff] 0.0
        %632 = vst [vmem:[#allocation4 + $0x78] sm:$0xff] 0.0
        %633 = vst [vmem:[#allocation4 + $0x80] sm:$0xff] 0.0
        %634 = vst [vmem:[#allocation4 + $0x88] sm:$0xff] 0.0
        %635 = vst [vmem:[#allocation4 + $0x90] sm:$0xff] 0.0
        %636 = vst [vmem:[#allocation4 + $0x98] sm:$0xff] 0.0
        %637 = vst [vmem:[#allocation4 + $0xa0] sm:$0xff] 0.0
        %638 = vst [vmem:[#allocation4 + $0xa8] sm:$0xff] 0.0
        %639 = vst [vmem:[#allocation4 + $0xb0] sm:$0xff] 0.0
        %640 = vst [vmem:[#allocation4 + $0xb8] sm:$0xff] 0.0
        %641 = vst [vmem:[#allocation4 + $0xc0] sm:$0xff] 0.0
        %642 = vst [vmem:[#allocation4 + $0xc8] sm:$0xff] 0.0
        %643 = vst [vmem:[#allocation4 + $0xd0] sm:$0xff] 0.0
        %644 = vst [vmem:[#allocation4 + $0xd8] sm:$0xff] 0.0
        %645 = vst [vmem:[#allocation4 + $0xe0] sm:$0xff] 0.0
        %646 = vst [vmem:[#allocation4 + $0xe8] sm:$0xff] 0.0
        %647 = vst [vmem:[#allocation4 + $0xf0] sm:$0xff] 0.0
        %648 = vst [vmem:[#allocation4 + $0xf8] sm:$0xff] 0.0
      $region40: #{attention_forward.4} parent=35 // pred_fallthru
        _
      %v649 = vld [vmem:[%s311] sm:$0x3]
      %v650 = vld [vmem:[%s321] sm:$0xf]
      %v651 = vld [vmem:[%s321 + $0x4] sm:$0xf]
      %v652 = vld [vmem:[%s321 + $0x8] sm:$0xf]
      %v653 = vld [vmem:[%s321 + $0xc] sm:$0xf]
      %v654 = vld [vmem:[%s321 + $0x10] sm:$0xf]
      %v655 = vld [vmem:[%s321 + $0x14] sm:$0xf]
      %v656 = vld [vmem:[%s321 + $0x18] sm:$0xf]
      %v657 = vld [vmem:[%s321 + $0x1c] sm:$0xf]
      %v658 = vld [vmem:[%s321 + $0x20] sm:$0xf]
      %v659 = vld [vmem:[%s321 + $0x24] sm:$0xf]
      %v660 = vld [vmem:[%s321 + $0x28] sm:$0xf]
      %v661 = vld [vmem:[%s321 + $0x2c] sm:$0xf]
      %v662 = vld [vmem:[%s321 + $0x30] sm:$0xf]
      %v663 = vld [vmem:[%s321 + $0x34] sm:$0xf]
      %v664 = vld [vmem:[%s321 + $0x38] sm:$0xf]
      %v665 = vld [vmem:[%s321 + $0x3c] sm:$0xf]
      %v666 = vld [vmem:[%s321 + $0x40] sm:$0xf]
      %v667 = vld [vmem:[%s321 + $0x44] sm:$0xf]
      %v668 = vld [vmem:[%s321 + $0x48] sm:$0xf]
      %v669 = vld [vmem:[%s321 + $0x4c] sm:$0xf]
      %v670 = vld [vmem:[%s321 + $0x50] sm:$0xf]
      %v671 = vld [vmem:[%s321 + $0x54] sm:$0xf]
      %v672 = vld [vmem:[%s321 + $0x58] sm:$0xf]
      %v673 = vld [vmem:[%s321 + $0x5c] sm:$0xf]
      %v674 = vld [vmem:[%s321 + $0x60] sm:$0xf]
      %v675 = vld [vmem:[%s321 + $0x64] sm:$0xf]
      %v676 = vld [vmem:[%s321 + $0x68] sm:$0xf]
      %v677 = vld [vmem:[%s321 + $0x6c] sm:$0xf]
      %v678 = vld [vmem:[%s321 + $0x70] sm:$0xf]
      %v679 = vld [vmem:[%s321 + $0x74] sm:$0xf]
      %v680 = vld [vmem:[%s321 + $0x78] sm:$0xf]
      %v681 = vld [vmem:[%s321 + $0x7c] sm:$0xf]
      %v682 = vld [vmem:[%s332] sm:$0xf]
      %v683 = vld [vmem:[%s332 + $0x4] sm:$0xf]
      %v684 = vld [vmem:[%s332 + $0x8] sm:$0xf]
      %v685 = vld [vmem:[%s332 + $0xc] sm:$0xf]
      %v686 = vld [vmem:[%s332 + $0x10] sm:$0xf]
      %v687 = vld [vmem:[%s332 + $0x14] sm:$0xf]
      %v688 = vld [vmem:[%s332 + $0x18] sm:$0xf]
      %v689 = vld [vmem:[%s332 + $0x1c] sm:$0xf]
      %v690 = vld [vmem:[%s332 + $0x20] sm:$0xf]
      %v691 = vld [vmem:[%s332 + $0x24] sm:$0xf]
      %v692 = vld [vmem:[%s332 + $0x28] sm:$0xf]
      %v693 = vld [vmem:[%s332 + $0x2c] sm:$0xf]
      %v694 = vld [vmem:[%s332 + $0x30] sm:$0xf]
      %v695 = vld [vmem:[%s332 + $0x34] sm:$0xf]
      %v696 = vld [vmem:[%s332 + $0x38] sm:$0xf]
      %v697 = vld [vmem:[%s332 + $0x3c] sm:$0xf]
      %v698 = vld [vmem:[%s332 + $0x40] sm:$0xf]
      %v699 = vld [vmem:[%s332 + $0x44] sm:$0xf]
      %v700 = vld [vmem:[%s332 + $0x48] sm:$0xf]
      %v701 = vld [vmem:[%s332 + $0x4c] sm:$0xf]
      %v702 = vld [vmem:[%s332 + $0x50] sm:$0xf]
      %v703 = vld [vmem:[%s332 + $0x54] sm:$0xf]
      %v704 = vld [vmem:[%s332 + $0x58] sm:$0xf]
      %v705 = vld [vmem:[%s332 + $0x5c] sm:$0xf]
      %v706 = vld [vmem:[%s332 + $0x60] sm:$0xf]
      %v707 = vld [vmem:[%s332 + $0x64] sm:$0xf]
      %v708 = vld [vmem:[%s332 + $0x68] sm:$0xf]
      %v709 = vld [vmem:[%s332 + $0x6c] sm:$0xf]
      %v710 = vld [vmem:[%s332 + $0x70] sm:$0xf]
      %v711 = vld [vmem:[%s332 + $0x74] sm:$0xf]
      %v712 = vld [vmem:[%s332 + $0x78] sm:$0xf]
      %v713 = vld [vmem:[%s332 + $0x7c] sm:$0xf]
      %v714 = vld [vmem:[%s343] sm:$0xf]
      %v715 = vld [vmem:[%s343 + $0x4] sm:$0xf]
      %v716 = vld [vmem:[%s343 + $0x8] sm:$0xf]
      %v717 = vld [vmem:[%s343 + $0xc] sm:$0xf]
      %v718 = vld [vmem:[%s343 + $0x10] sm:$0xf]
      %v719 = vld [vmem:[%s343 + $0x14] sm:$0xf]
      %v720 = vld [vmem:[%s343 + $0x18] sm:$0xf]
      %v721 = vld [vmem:[%s343 + $0x1c] sm:$0xf]
      %v722 = vld [vmem:[%s343 + $0x20] sm:$0xf]
      %v723 = vld [vmem:[%s343 + $0x24] sm:$0xf]
      %v724 = vld [vmem:[%s343 + $0x28] sm:$0xf]
      %v725 = vld [vmem:[%s343 + $0x2c] sm:$0xf]
      %v726 = vld [vmem:[%s343 + $0x30] sm:$0xf]
      %v727 = vld [vmem:[%s343 + $0x34] sm:$0xf]
      %v728 = vld [vmem:[%s343 + $0x38] sm:$0xf]
      %v729 = vld [vmem:[%s343 + $0x3c] sm:$0xf]
      %v730 = vld [vmem:[%s343 + $0x40] sm:$0xf]
      %v731 = vld [vmem:[%s343 + $0x44] sm:$0xf]
      %v732 = vld [vmem:[%s343 + $0x48] sm:$0xf]
      %v733 = vld [vmem:[%s343 + $0x4c] sm:$0xf]
      %v734 = vld [vmem:[%s343 + $0x50] sm:$0xf]
      %v735 = vld [vmem:[%s343 + $0x54] sm:$0xf]
      %v736 = vld [vmem:[%s343 + $0x58] sm:$0xf]
      %v737 = vld [vmem:[%s343 + $0x5c] sm:$0xf]
      %v738 = vld [vmem:[%s343 + $0x60] sm:$0xf]
      %v739 = vld [vmem:[%s343 + $0x64] sm:$0xf]
      %v740 = vld [vmem:[%s343 + $0x68] sm:$0xf]
      %v741 = vld [vmem:[%s343 + $0x6c] sm:$0xf]
      %v742 = vld [vmem:[%s343 + $0x70] sm:$0xf]
      %v743 = vld [vmem:[%s343 + $0x74] sm:$0xf]
      %v744 = vld [vmem:[%s343 + $0x78] sm:$0xf]
      %v745 = vld [vmem:[%s343 + $0x7c] sm:$0xf]
      %v747 = vlaneseq
      %v748 = vshrl.u32 %v747, 7
      %v749 = vsub.s32 0, %v748
      %v750 = vrot.slane %v649, %v749
      %v751 = vlaneseq
      %v752 = vshrl.u32 %v751, 7
      %v753 = vsub.s32 1, %v752
      %v754 = vrot.slane %v649, %v753
      %v789 = vunpack.c.l.b16 %v650
      %v790 = vunpack.c.l.b16 %v651
      %v791 = vunpack.c.l.b16 %v652
      %v792 = vunpack.c.l.b16 %v653
      %v793 = vunpack.c.l.b16 %v654
      %v794 = vunpack.c.l.b16 %v655
      %v795 = vunpack.c.l.b16 %v656
      %v796 = vunpack.c.l.b16 %v657
      %v797 = vunpack.c.l.b16 %v658
      %v798 = vunpack.c.l.b16 %v659
      %v799 = vunpack.c.l.b16 %v660
      %v800 = vunpack.c.l.b16 %v661
      %v801 = vunpack.c.l.b16 %v662
      %v802 = vunpack.c.l.b16 %v663
      %v803 = vunpack.c.l.b16 %v664
      %v804 = vunpack.c.l.b16 %v665
      %v805 = vunpack.c.l.b16 %v666
      %v806 = vunpack.c.l.b16 %v667
      %v807 = vunpack.c.l.b16 %v668
      %v808 = vunpack.c.l.b16 %v669
      %v809 = vunpack.c.l.b16 %v670
      %v810 = vunpack.c.l.b16 %v671
      %v811 = vunpack.c.l.b16 %v672
      %v812 = vunpack.c.l.b16 %v673
      %v813 = vunpack.c.l.b16 %v674
      %v814 = vunpack.c.l.b16 %v675
      %v815 = vunpack.c.l.b16 %v676
      %v816 = vunpack.c.l.b16 %v677
      %v817 = vunpack.c.l.b16 %v678
      %v818 = vunpack.c.l.b16 %v679
      %v819 = vunpack.c.l.b16 %v680
      %v820 = vunpack.c.l.b16 %v681
      %v821 = vpack.c.b16 %v790, %v789
      %v822 = vpack.c.b16 %v792, %v791
      %v823 = vpack.c.b16 %v794, %v793
      %v824 = vpack.c.b16 %v796, %v795
      %v825 = vpack.c.b16 %v798, %v797
      %v826 = vpack.c.b16 %v800, %v799
      %v827 = vpack.c.b16 %v802, %v801
      %v828 = vpack.c.b16 %v804, %v803
      %v829 = vpack.c.b16 %v806, %v805
      %v830 = vpack.c.b16 %v808, %v807
      %v831 = vpack.c.b16 %v810, %v809
      %v832 = vpack.c.b16 %v812, %v811
      %v833 = vpack.c.b16 %v814, %v813
      %v834 = vpack.c.b16 %v816, %v815
      %v835 = vpack.c.b16 %v818, %v817
      %v836 = vpack.c.b16 %v820, %v819
      %v869 = vunpack.c.l.b16 %v682
      %v870 = vunpack.c.l.b16 %v683
      %v871 = vunpack.c.l.b16 %v684
      %v872 = vunpack.c.l.b16 %v685
      %v873 = vunpack.c.l.b16 %v686
      %v874 = vunpack.c.l.b16 %v687
      %v875 = vunpack.c.l.b16 %v688
      %v876 = vunpack.c.l.b16 %v689
      %v877 = vunpack.c.l.b16 %v690
      %v878 = vunpack.c.l.b16 %v691
      %v879 = vunpack.c.l.b16 %v692
      %v880 = vunpack.c.l.b16 %v693
      %v881 = vunpack.c.l.b16 %v694
      %v882 = vunpack.c.l.b16 %v695
      %v883 = vunpack.c.l.b16 %v696
      %v884 = vunpack.c.l.b16 %v697
      %v885 = vunpack.c.l.b16 %v698
      %v886 = vunpack.c.l.b16 %v699
      %v887 = vunpack.c.l.b16 %v700
      %v888 = vunpack.c.l.b16 %v701
      %v889 = vunpack.c.l.b16 %v702
      %v890 = vunpack.c.l.b16 %v703
      %v891 = vunpack.c.l.b16 %v704
      %v892 = vunpack.c.l.b16 %v705
      %v893 = vunpack.c.l.b16 %v706
      %v894 = vunpack.c.l.b16 %v707
      %v895 = vunpack.c.l.b16 %v708
      %v896 = vunpack.c.l.b16 %v709
      %v897 = vunpack.c.l.b16 %v710
      %v898 = vunpack.c.l.b16 %v711
      %v899 = vunpack.c.l.b16 %v712
      %v900 = vunpack.c.l.b16 %v713
      %v901 = vpack.c.b16 %v870, %v869
      %v902 = vpack.c.b16 %v872, %v871
      %v903 = vpack.c.b16 %v874, %v873
      %v904 = vpack.c.b16 %v876, %v875
      %v905 = vpack.c.b16 %v878, %v877
      %v906 = vpack.c.b16 %v880, %v879
      %v907 = vpack.c.b16 %v882, %v881
      %v908 = vpack.c.b16 %v884, %v883
      %v909 = vpack.c.b16 %v886, %v885
      %v910 = vpack.c.b16 %v888, %v887
      %v911 = vpack.c.b16 %v890, %v889
      %v912 = vpack.c.b16 %v892, %v891
      %v913 = vpack.c.b16 %v894, %v893
      %v914 = vpack.c.b16 %v896, %v895
      %v915 = vpack.c.b16 %v898, %v897
      %v916 = vpack.c.b16 %v900, %v899
      %vm917 = vcmask 261120
      %v919 = vsel %vm917, %v821, 0
      %v922 = vsel %vm917, %v822, 0
      %v925 = vsel %vm917, %v823, 0
      %v928 = vsel %vm917, %v824, 0
      %v931 = vsel %vm917, %v825, 0
      %v934 = vsel %vm917, %v826, 0
      %v937 = vsel %vm917, %v827, 0
      %v940 = vsel %vm917, %v828, 0
      %v943 = vsel %vm917, %v829, 0
      %v946 = vsel %vm917, %v830, 0
      %v949 = vsel %vm917, %v831, 0
      %v952 = vsel %vm917, %v832, 0
      %v955 = vsel %vm917, %v833, 0
      %v958 = vsel %vm917, %v834, 0
      %v961 = vsel %vm917, %v835, 0
      %v964 = vsel %vm917, %v836, 0
      %v967 = vsel %vm917, %v901, 0
      %v970 = vsel %vm917, %v902, 0
      %v973 = vsel %vm917, %v903, 0
      %v976 = vsel %vm917, %v904, 0
      %v979 = vsel %vm917, %v905, 0
      %v982 = vsel %vm917, %v906, 0
      %v985 = vsel %vm917, %v907, 0
      %v988 = vsel %vm917, %v908, 0
      %v991 = vsel %vm917, %v909, 0
      %v994 = vsel %vm917, %v910, 0
      %v997 = vsel %vm917, %v911, 0
      %v1000 = vsel %vm917, %v912, 0
      %v1003 = vsel %vm917, %v913, 0
      %v1006 = vsel %vm917, %v914, 0
      %v1009 = vsel %vm917, %v915, 0
      %v1012 = vsel %vm917, %v916, 0
      %1014 = vmatprep.subr.bf16.mxu0 0
      %1015 = vmatpush1.bf16.xpose.msra.mxu0 %v988
      %1016 = vmatprep.subr.bf16.mxu0 0
      %1017 = vmatpush1.bf16.xpose.msra.mxu0 %v985
      %1018 = vmatprep.subr.bf16.mxu0 0
      %1019 = vmatpush1.bf16.xpose.msra.mxu0 %v982
      %1020 = vmatprep.subr.bf16.mxu0 0
      %1021 = vmatpush1.bf16.xpose.msra.mxu0 %v979
      %1022 = vmatprep.subr.bf16.mxu0 0
      %1023 = vmatpush1.bf16.xpose.msra.mxu0 %v976
      %1024 = vmatprep.subr.bf16.mxu0 0
      %1025 = vmatpush1.bf16.xpose.msra.mxu0 %v973
      %1026 = vmatprep.subr.bf16.mxu0 0
      %1027 = vmatpush1.bf16.xpose.msra.mxu0 %v970
      %1028 = vmatprep.subr.bf16.mxu0 0
      %1029 = vmatpush1.bf16.xpose.msra.mxu0 %v967
      %1030 = vmatprep.subr.bf16.mxu0 0
      %1031 = vmatpush2.bf16.xpose.msra.mxu0 %v1012
      %1032 = vmatprep.subr.bf16.mxu0 0
      %1033 = vmatpush2.bf16.xpose.msra.mxu0 %v1009
      %1034 = vmatprep.subr.bf16.mxu0 0
      %1035 = vmatpush2.bf16.xpose.msra.mxu0 %v1006
      %1036 = vmatprep.subr.bf16.mxu0 0
      %1037 = vmatpush2.bf16.xpose.msra.mxu0 %v1003
      %1038 = vmatprep.subr.bf16.mxu0 0
      %1039 = vmatpush2.bf16.xpose.msra.mxu0 %v1000
      %1040 = vmatprep.subr.bf16.mxu0 0
      %1041 = vmatpush2.bf16.xpose.msra.mxu0 %v997
      %1042 = vmatprep.subr.bf16.mxu0 0
      %1043 = vmatpush2.bf16.xpose.msra.mxu0 %v994
      %1044 = vmatprep.subr.bf16.mxu0 0
      %1045 = vmatpush2.bf16.xpose.msra.mxu0 %v991
      %1046 = vmatprep.mubr.bf16.mxu0 0
      %1047 = vmatmul.mubr.bf16.gmra.mxu0 %v919
      %v1048 = vpop.f32.mrf.mxu0
      %v1049 = vadd.f32 %v750, %v1048
      %v1050 = vpop.f32.mrf.mxu0
      %v1051 = vadd.f32 %v754, %v1050
      %v1052 = vpop.f32.mrf.mxu0
      %v1053 = vadd.f32 %v750, %v1052
      %v1054 = vpop.f32.mrf.mxu0
      %v1055 = vadd.f32 %v754, %v1054
      %1056 = vmatprep.mubr.bf16.mxu0 0
      %1057 = vmatmul.mubr.bf16.gmra.mxu0 %v922
      %v1058 = vpop.f32.mrf.mxu0
      %v1059 = vadd.f32 %v750, %v1058
      %v1060 = vpop.f32.mrf.mxu0
      %v1061 = vadd.f32 %v754, %v1060
      %v1062 = vpop.f32.mrf.mxu0
      %v1063 = vadd.f32 %v750, %v1062
      %v1064 = vpop.f32.mrf.mxu0
      %v1065 = vadd.f32 %v754, %v1064
      %1066 = vmatprep.mubr.bf16.mxu0 0
      %1067 = vmatmul.mubr.bf16.gmra.mxu0 %v925
      %v1068 = vpop.f32.mrf.mxu0
      %v1069 = vadd.f32 %v750, %v1068
      %v1070 = vpop.f32.mrf.mxu0
      %v1071 = vadd.f32 %v754, %v1070
      %v1072 = vpop.f32.mrf.mxu0
      %v1073 = vadd.f32 %v750, %v1072
      %v1074 = vpop.f32.mrf.mxu0
      %v1075 = vadd.f32 %v754, %v1074
      %1076 = vmatprep.mubr.bf16.mxu0 0
      %1077 = vmatmul.mubr.bf16.gmra.mxu0 %v928
      %v1078 = vpop.f32.mrf.mxu0
      %v1079 = vadd.f32 %v750, %v1078
      %v1080 = vpop.f32.mrf.mxu0
      %v1081 = vadd.f32 %v754, %v1080
      %v1082 = vpop.f32.mrf.mxu0
      %v1083 = vadd.f32 %v750, %v1082
      %v1084 = vpop.f32.mrf.mxu0
      %v1085 = vadd.f32 %v754, %v1084
      %1086 = vmatprep.mubr.bf16.mxu0 0
      %1087 = vmatmul.mubr.bf16.gmra.mxu0 %v931
      %v1088 = vpop.f32.mrf.mxu0
      %v1089 = vadd.f32 %v750, %v1088
      %v1090 = vpop.f32.mrf.mxu0
      %v1091 = vadd.f32 %v754, %v1090
      %v1092 = vpop.f32.mrf.mxu0
      %v1093 = vadd.f32 %v750, %v1092
      %v1094 = vpop.f32.mrf.mxu0
      %v1095 = vadd.f32 %v754, %v1094
      %1096 = vmatprep.mubr.bf16.mxu0 0
      %1097 = vmatmul.mubr.bf16.gmra.mxu0 %v934
      %v1098 = vpop.f32.mrf.mxu0
      %v1099 = vadd.f32 %v750, %v1098
      %v1100 = vpop.f32.mrf.mxu0
      %v1101 = vadd.f32 %v754, %v1100
      %v1102 = vpop.f32.mrf.mxu0
      %v1103 = vadd.f32 %v750, %v1102
      %v1104 = vpop.f32.mrf.mxu0
      %v1105 = vadd.f32 %v754, %v1104
      %1106 = vmatprep.mubr.bf16.mxu0 0
      %1107 = vmatmul.mubr.bf16.gmra.mxu0 %v937
      %v1108 = vpop.f32.mrf.mxu0
      %v1109 = vadd.f32 %v750, %v1108
      %v1110 = vpop.f32.mrf.mxu0
      %v1111 = vadd.f32 %v754, %v1110
      %v1112 = vpop.f32.mrf.mxu0
      %v1113 = vadd.f32 %v750, %v1112
      %v1114 = vpop.f32.mrf.mxu0
      %v1115 = vadd.f32 %v754, %v1114
      %1116 = vmatprep.mubr.bf16.mxu0 0
      %1117 = vmatmul.mubr.bf16.gmra.mxu0 %v940
      %v1118 = vpop.f32.mrf.mxu0
      %v1119 = vadd.f32 %v750, %v1118
      %v1120 = vpop.f32.mrf.mxu0
      %v1121 = vadd.f32 %v754, %v1120
      %v1122 = vpop.f32.mrf.mxu0
      %v1123 = vadd.f32 %v750, %v1122
      %v1124 = vpop.f32.mrf.mxu0
      %v1125 = vadd.f32 %v754, %v1124
      %1126 = vmatprep.mubr.bf16.mxu0 0
      %1127 = vmatmul.mubr.bf16.gmra.mxu0 %v943
      %v1128 = vpop.f32.mrf.mxu0
      %v1129 = vadd.f32 %v750, %v1128
      %v1130 = vpop.f32.mrf.mxu0
      %v1131 = vadd.f32 %v754, %v1130
      %v1132 = vpop.f32.mrf.mxu0
      %v1133 = vadd.f32 %v750, %v1132
      %v1134 = vpop.f32.mrf.mxu0
      %v1135 = vadd.f32 %v754, %v1134
      %1136 = vmatprep.mubr.bf16.mxu0 0
      %1137 = vmatmul.mubr.bf16.gmra.mxu0 %v946
      %v1138 = vpop.f32.mrf.mxu0
      %v1139 = vadd.f32 %v750, %v1138
      %v1140 = vpop.f32.mrf.mxu0
      %v1141 = vadd.f32 %v754, %v1140
      %v1142 = vpop.f32.mrf.mxu0
      %v1143 = vadd.f32 %v750, %v1142
      %v1144 = vpop.f32.mrf.mxu0
      %v1145 = vadd.f32 %v754, %v1144
      %1146 = vmatprep.mubr.bf16.mxu0 0
      %1147 = vmatmul.mubr.bf16.gmra.mxu0 %v949
      %v1148 = vpop.f32.mrf.mxu0
      %v1149 = vadd.f32 %v750, %v1148
      %v1150 = vpop.f32.mrf.mxu0
      %v1151 = vadd.f32 %v754, %v1150
      %v1152 = vpop.f32.mrf.mxu0
      %v1153 = vadd.f32 %v750, %v1152
      %v1154 = vpop.f32.mrf.mxu0
      %v1155 = vadd.f32 %v754, %v1154
      %1156 = vmatprep.mubr.bf16.mxu0 0
      %1157 = vmatmul.mubr.bf16.gmra.mxu0 %v952
      %v1158 = vpop.f32.mrf.mxu0
      %v1159 = vadd.f32 %v750, %v1158
      %v1160 = vpop.f32.mrf.mxu0
      %v1161 = vadd.f32 %v754, %v1160
      %v1162 = vpop.f32.mrf.mxu0
      %v1163 = vadd.f32 %v750, %v1162
      %v1164 = vpop.f32.mrf.mxu0
      %v1165 = vadd.f32 %v754, %v1164
      %1166 = vmatprep.mubr.bf16.mxu0 0
      %1167 = vmatmul.mubr.bf16.gmra.mxu0 %v955
      %v1168 = vpop.f32.mrf.mxu0
      %v1169 = vadd.f32 %v750, %v1168
      %v1170 = vpop.f32.mrf.mxu0
      %v1171 = vadd.f32 %v754, %v1170
      %v1172 = vpop.f32.mrf.mxu0
      %v1173 = vadd.f32 %v750, %v1172
      %v1174 = vpop.f32.mrf.mxu0
      %v1175 = vadd.f32 %v754, %v1174
      %1176 = vmatprep.mubr.bf16.mxu0 0
      %1177 = vmatmul.mubr.bf16.gmra.mxu0 %v958
      %v1178 = vpop.f32.mrf.mxu0
      %v1179 = vadd.f32 %v750, %v1178
      %v1180 = vpop.f32.mrf.mxu0
      %v1181 = vadd.f32 %v754, %v1180
      %v1182 = vpop.f32.mrf.mxu0
      %v1183 = vadd.f32 %v750, %v1182
      %v1184 = vpop.f32.mrf.mxu0
      %v1185 = vadd.f32 %v754, %v1184
      %1186 = vmatprep.mubr.bf16.mxu0 0
      %1187 = vmatmul.mubr.bf16.gmra.mxu0 %v961
      %v1188 = vpop.f32.mrf.mxu0
      %v1189 = vadd.f32 %v750, %v1188
      %v1190 = vpop.f32.mrf.mxu0
      %v1191 = vadd.f32 %v754, %v1190
      %v1192 = vpop.f32.mrf.mxu0
      %v1193 = vadd.f32 %v750, %v1192
      %v1194 = vpop.f32.mrf.mxu0
      %v1195 = vadd.f32 %v754, %v1194
      %1196 = vmatprep.mubr.bf16.mxu0 0
      %1197 = vmatmul.mubr.bf16.gmra.mxu0 %v964
      %v1198 = vpop.f32.mrf.mxu0
      %v1199 = vadd.f32 %v750, %v1198
      %v1200 = vpop.f32.mrf.mxu0
      %v1201 = vadd.f32 %v754, %v1200
      %v1202 = vpop.f32.mrf.mxu0
      %v1203 = vadd.f32 %v750, %v1202
      %v1204 = vpop.f32.mrf.mxu0
      %v1205 = vadd.f32 %v754, %v1204
      %1206 = vdwg.mxu0
      %v1207 = vld [vmem:[#allocation2] sm:$0xff]
      %v1208 = vld [vmem:[#allocation2 + $0x8] sm:$0xff]
      %v1209 = vld [vmem:[#allocation2 + $0x10] sm:$0xff]
      %v1210 = vld [vmem:[#allocation2 + $0x18] sm:$0xff]
      %v1211 = vld [vmem:[#allocation2 + $0x20] sm:$0xff]
      %v1212 = vld [vmem:[#allocation2 + $0x28] sm:$0xff]
      %v1213 = vld [vmem:[#allocation2 + $0x30] sm:$0xff]
      %v1214 = vld [vmem:[#allocation2 + $0x38] sm:$0xff]
      %v1215 = vld [vmem:[#allocation2 + $0x40] sm:$0xff]
      %v1216 = vld [vmem:[#allocation2 + $0x48] sm:$0xff]
      %v1217 = vld [vmem:[#allocation2 + $0x50] sm:$0xff]
      %v1218 = vld [vmem:[#allocation2 + $0x58] sm:$0xff]
      %v1219 = vld [vmem:[#allocation2 + $0x60] sm:$0xff]
      %v1220 = vld [vmem:[#allocation2 + $0x68] sm:$0xff]
      %v1221 = vld [vmem:[#allocation2 + $0x70] sm:$0xff]
      %v1222 = vld [vmem:[#allocation2 + $0x78] sm:$0xff]
      %v1223 = vld [vmem:[#allocation2 + $0x80] sm:$0xff]
      %v1224 = vld [vmem:[#allocation2 + $0x88] sm:$0xff]
      %v1225 = vld [vmem:[#allocation2 + $0x90] sm:$0xff]
      %v1226 = vld [vmem:[#allocation2 + $0x98] sm:$0xff]
      %v1227 = vld [vmem:[#allocation2 + $0xa0] sm:$0xff]
      %v1228 = vld [vmem:[#allocation2 + $0xa8] sm:$0xff]
      %v1229 = vld [vmem:[#allocation2 + $0xb0] sm:$0xff]
      %v1230 = vld [vmem:[#allocation2 + $0xb8] sm:$0xff]
      %v1231 = vld [vmem:[#allocation2 + $0xc0] sm:$0xff]
      %v1232 = vld [vmem:[#allocation2 + $0xc8] sm:$0xff]
      %v1233 = vld [vmem:[#allocation2 + $0xd0] sm:$0xff]
      %v1234 = vld [vmem:[#allocation2 + $0xd8] sm:$0xff]
      %v1235 = vld [vmem:[#allocation2 + $0xe0] sm:$0xff]
      %v1236 = vld [vmem:[#allocation2 + $0xe8] sm:$0xff]
      %v1237 = vld [vmem:[#allocation2 + $0xf0] sm:$0xff]
      %v1238 = vld [vmem:[#allocation2 + $0xf8] sm:$0xff]
      %v1239 = vmax.f32 %v1049, %v1051
      %1240 = vmax.xlane.f32.xlu0 %v1239
      %v1241 = vpop.xlane.xlu0 %1240
      %v1242 = vmax.f32 %v1053, %v1055
      %1243 = vmax.xlane.f32.xlu0 %v1242
      %v1244 = vpop.xlane.xlu0 %1243
      %v1245 = vmax.f32 %v1059, %v1061
      %1246 = vmax.xlane.f32.xlu0 %v1245
      %v1247 = vpop.xlane.xlu0 %1246
      %v1248 = vmax.f32 %v1063, %v1065
      %1249 = vmax.xlane.f32.xlu0 %v1248
      %v1250 = vpop.xlane.xlu0 %1249
      %v1251 = vmax.f32 %v1069, %v1071
      %1252 = vmax.xlane.f32.xlu0 %v1251
      %v1253 = vpop.xlane.xlu0 %1252
      %v1254 = vmax.f32 %v1073, %v1075
      %1255 = vmax.xlane.f32.xlu0 %v1254
      %v1256 = vpop.xlane.xlu0 %1255
      %v1257 = vmax.f32 %v1079, %v1081
      %1258 = vmax.xlane.f32.xlu0 %v1257
      %v1259 = vpop.xlane.xlu0 %1258
      %v1260 = vmax.f32 %v1083, %v1085
      %1261 = vmax.xlane.f32.xlu0 %v1260
      %v1262 = vpop.xlane.xlu0 %1261
      %v1263 = vmax.f32 %v1089, %v1091
      %1264 = vmax.xlane.f32.xlu0 %v1263
      %v1265 = vpop.xlane.xlu0 %1264
      %v1266 = vmax.f32 %v1093, %v1095
      %1267 = vmax.xlane.f32.xlu0 %v1266
      %v1268 = vpop.xlane.xlu0 %1267
      %v1269 = vmax.f32 %v1099, %v1101
      %1270 = vmax.xlane.f32.xlu0 %v1269
      %v1271 = vpop.xlane.xlu0 %1270
      %v1272 = vmax.f32 %v1103, %v1105
      %1273 = vmax.xlane.f32.xlu0 %v1272
      %v1274 = vpop.xlane.xlu0 %1273
      %v1275 = vmax.f32 %v1109, %v1111
      %1276 = vmax.xlane.f32.xlu0 %v1275
      %v1277 = vpop.xlane.xlu0 %1276
      %v1278 = vmax.f32 %v1113, %v1115
      %1279 = vmax.xlane.f32.xlu0 %v1278
      %v1280 = vpop.xlane.xlu0 %1279
      %v1281 = vmax.f32 %v1119, %v1121
      %1282 = vmax.xlane.f32.xlu0 %v1281
      %v1283 = vpop.xlane.xlu0 %1282
      %v1284 = vmax.f32 %v1123, %v1125
      %1285 = vmax.xlane.f32.xlu0 %v1284
      %v1286 = vpop.xlane.xlu0 %1285
      %v1287 = vmax.f32 %v1129, %v1131
      %1288 = vmax.xlane.f32.xlu0 %v1287
      %v1289 = vpop.xlane.xlu0 %1288
      %v1290 = vmax.f32 %v1133, %v1135
      %1291 = vmax.xlane.f32.xlu0 %v1290
      %v1292 = vpop.xlane.xlu0 %1291
      %v1293 = vmax.f32 %v1139, %v1141
      %1294 = vmax.xlane.f32.xlu0 %v1293
      %v1295 = vpop.xlane.xlu0 %1294
      %v1296 = vmax.f32 %v1143, %v1145
      %1297 = vmax.xlane.f32.xlu0 %v1296
      %v1298 = vpop.xlane.xlu0 %1297
      %v1299 = vmax.f32 %v1149, %v1151
      %1300 = vmax.xlane.f32.xlu0 %v1299
      %v1301 = vpop.xlane.xlu0 %1300
      %v1302 = vmax.f32 %v1153, %v1155
      %1303 = vmax.xlane.f32.xlu0 %v1302
      %v1304 = vpop.xlane.xlu0 %1303
      %v1305 = vmax.f32 %v1159, %v1161
      %1306 = vmax.xlane.f32.xlu0 %v1305
      %v1307 = vpop.xlane.xlu0 %1306
      %v1308 = vmax.f32 %v1163, %v1165
      %1309 = vmax.xlane.f32.xlu0 %v1308
      %v1310 = vpop.xlane.xlu0 %1309
      %v1311 = vmax.f32 %v1169, %v1171
      %1312 = vmax.xlane.f32.xlu0 %v1311
      %v1313 = vpop.xlane.xlu0 %1312
      %v1314 = vmax.f32 %v1173, %v1175
      %1315 = vmax.xlane.f32.xlu0 %v1314
      %v1316 = vpop.xlane.xlu0 %1315
      %v1317 = vmax.f32 %v1179, %v1181
      %1318 = vmax.xlane.f32.xlu0 %v1317
      %v1319 = vpop.xlane.xlu0 %1318
      %v1320 = vmax.f32 %v1183, %v1185
      %1321 = vmax.xlane.f32.xlu0 %v1320
      %v1322 = vpop.xlane.xlu0 %1321
      %v1323 = vmax.f32 %v1189, %v1191
      %1324 = vmax.xlane.f32.xlu0 %v1323
      %v1325 = vpop.xlane.xlu0 %1324
      %v1326 = vmax.f32 %v1193, %v1195
      %1327 = vmax.xlane.f32.xlu0 %v1326
      %v1328 = vpop.xlane.xlu0 %1327
      %v1329 = vmax.f32 %v1199, %v1201
      %1330 = vmax.xlane.f32.xlu0 %v1329
      %v1331 = vpop.xlane.xlu0 %1330
      %v1332 = vmax.f32 %v1203, %v1205
      %1333 = vmax.xlane.f32.xlu0 %v1332
      %v1334 = vpop.xlane.xlu0 %1333
      %v1335 = vmax.f32 %v1207, %v1241
      %v1336 = vmax.f32 %v1208, %v1244
      %v1337 = vmax.f32 %v1209, %v1247
      %v1338 = vmax.f32 %v1210, %v1250
      %v1339 = vmax.f32 %v1211, %v1253
      %v1340 = vmax.f32 %v1212, %v1256
      %v1341 = vmax.f32 %v1213, %v1259
      %v1342 = vmax.f32 %v1214, %v1262
      %v1343 = vmax.f32 %v1215, %v1265
      %v1344 = vmax.f32 %v1216, %v1268
      %v1345 = vmax.f32 %v1217, %v1271
      %v1346 = vmax.f32 %v1218, %v1274
      %v1347 = vmax.f32 %v1219, %v1277
      %v1348 = vmax.f32 %v1220, %v1280
      %v1349 = vmax.f32 %v1221, %v1283
      %v1350 = vmax.f32 %v1222, %v1286
      %v1351 = vmax.f32 %v1223, %v1289
      %v1352 = vmax.f32 %v1224, %v1292
      %v1353 = vmax.f32 %v1225, %v1295
      %v1354 = vmax.f32 %v1226, %v1298
      %v1355 = vmax.f32 %v1227, %v1301
      %v1356 = vmax.f32 %v1228, %v1304
      %v1357 = vmax.f32 %v1229, %v1307
      %v1358 = vmax.f32 %v1230, %v1310
      %v1359 = vmax.f32 %v1231, %v1313
      %v1360 = vmax.f32 %v1232, %v1316
      %v1361 = vmax.f32 %v1233, %v1319
      %v1362 = vmax.f32 %v1234, %v1322
      %v1363 = vmax.f32 %v1235, %v1325
      %v1364 = vmax.f32 %v1236, %v1328
      %v1365 = vmax.f32 %v1237, %v1331
      %v1366 = vmax.f32 %v1238, %v1334
      %v1367 = vsub.f32 %v1207, %v1335
      %v1368 = vsub.f32 %v1208, %v1336
      %v1369 = vsub.f32 %v1209, %v1337
      %v1370 = vsub.f32 %v1210, %v1338
      %v1371 = vsub.f32 %v1211, %v1339
      %v1372 = vsub.f32 %v1212, %v1340
      %v1373 = vsub.f32 %v1213, %v1341
      %v1374 = vsub.f32 %v1214, %v1342
      %v1375 = vsub.f32 %v1215, %v1343
      %v1376 = vsub.f32 %v1216, %v1344
      %v1377 = vsub.f32 %v1217, %v1345
      %v1378 = vsub.f32 %v1218, %v1346
      %v1379 = vsub.f32 %v1219, %v1347
      %v1380 = vsub.f32 %v1220, %v1348
      %v1381 = vsub.f32 %v1221, %v1349
      %v1382 = vsub.f32 %v1222, %v1350
      %v1383 = vsub.f32 %v1223, %v1351
      %v1384 = vsub.f32 %v1224, %v1352
      %v1385 = vsub.f32 %v1225, %v1353
      %v1386 = vsub.f32 %v1226, %v1354
      %v1387 = vsub.f32 %v1227, %v1355
      %v1388 = vsub.f32 %v1228, %v1356
      %v1389 = vsub.f32 %v1229, %v1357
      %v1390 = vsub.f32 %v1230, %v1358
      %v1391 = vsub.f32 %v1231, %v1359
      %v1392 = vsub.f32 %v1232, %v1360
      %v1393 = vsub.f32 %v1233, %v1361
      %v1394 = vsub.f32 %v1234, %v1362
      %v1395 = vsub.f32 %v1235, %v1363
      %v1396 = vsub.f32 %v1236, %v1364
      %v1397 = vsub.f32 %v1237, %v1365
      %v1398 = vsub.f32 %v1238, %v1366
      %v1399 = vmul.f32 %v1367, 1.442695
      %v1400 = vpow.pop %v1399
      %v1401 = vmul.f32 %v1368, 1.442695
      %v1402 = vpow.pop %v1401
      %v1403 = vmul.f32 %v1369, 1.442695
      %v1404 = vpow.pop %v1403
      %v1405 = vmul.f32 %v1370, 1.442695
      %v1406 = vpow.pop %v1405
      %v1407 = vmul.f32 %v1371, 1.442695
      %v1408 = vpow.pop %v1407
      %v1409 = vmul.f32 %v1372, 1.442695
      %v1410 = vpow.pop %v1409
      %v1411 = vmul.f32 %v1373, 1.442695
      %v1412 = vpow.pop %v1411
      %v1413 = vmul.f32 %v1374, 1.442695
      %v1414 = vpow.pop %v1413
      %v1415 = vmul.f32 %v1375, 1.442695
      %v1416 = vpow.pop %v1415
      %v1417 = vmul.f32 %v1376, 1.442695
      %v1418 = vpow.pop %v1417
      %v1419 = vmul.f32 %v1377, 1.442695
      %v1420 = vpow.pop %v1419
      %v1421 = vmul.f32 %v1378, 1.442695
      %v1422 = vpow.pop %v1421
      %v1423 = vmul.f32 %v1379, 1.442695
      %v1424 = vpow.pop %v1423
      %v1425 = vmul.f32 %v1380, 1.442695
      %v1426 = vpow.pop %v1425
      %v1427 = vmul.f32 %v1381, 1.442695
      %v1428 = vpow.pop %v1427
      %v1429 = vmul.f32 %v1382, 1.442695
      %v1430 = vpow.pop %v1429
      %v1431 = vmul.f32 %v1383, 1.442695
      %v1432 = vpow.pop %v1431
      %v1433 = vmul.f32 %v1384, 1.442695
      %v1434 = vpow.pop %v1433
      %v1435 = vmul.f32 %v1385, 1.442695
      %v1436 = vpow.pop %v1435
      %v1437 = vmul.f32 %v1386, 1.442695
      %v1438 = vpow.pop %v1437
      %v1439 = vmul.f32 %v1387, 1.442695
      %v1440 = vpow.pop %v1439
      %v1441 = vmul.f32 %v1388, 1.442695
      %v1442 = vpow.pop %v1441
      %v1443 = vmul.f32 %v1389, 1.442695
      %v1444 = vpow.pop %v1443
      %v1445 = vmul.f32 %v1390, 1.442695
      %v1446 = vpow.pop %v1445
      %v1447 = vmul.f32 %v1391, 1.442695
      %v1448 = vpow.pop %v1447
      %v1449 = vmul.f32 %v1392, 1.442695
      %v1450 = vpow.pop %v1449
      %v1451 = vmul.f32 %v1393, 1.442695
      %v1452 = vpow.pop %v1451
      %v1453 = vmul.f32 %v1394, 1.442695
      %v1454 = vpow.pop %v1453
      %v1455 = vmul.f32 %v1395, 1.442695
      %v1456 = vpow.pop %v1455
      %v1457 = vmul.f32 %v1396, 1.442695
      %v1458 = vpow.pop %v1457
      %v1459 = vmul.f32 %v1397, 1.442695
      %v1460 = vpow.pop %v1459
      %v1461 = vmul.f32 %v1398, 1.442695
      %v1462 = vpow.pop %v1461
      %1464 = vset.pattern.permute.xlu0 0
      %1465 = vperm.xlu0 %1464, %v1335
      %v1466 = vpop.permute.xlu0 %1465
      %1469 = vset.pattern.permute.xlu0 0
      %1470 = vperm.xlu0 %1469, %v1336
      %v1471 = vpop.permute.xlu0 %1470
      %1474 = vset.pattern.permute.xlu0 0
      %1475 = vperm.xlu0 %1474, %v1337
      %v1476 = vpop.permute.xlu0 %1475
      %1479 = vset.pattern.permute.xlu0 0
      %1480 = vperm.xlu0 %1479, %v1338
      %v1481 = vpop.permute.xlu0 %1480
      %1484 = vset.pattern.permute.xlu0 0
      %1485 = vperm.xlu0 %1484, %v1339
      %v1486 = vpop.permute.xlu0 %1485
      %1489 = vset.pattern.permute.xlu0 0
      %1490 = vperm.xlu0 %1489, %v1340
      %v1491 = vpop.permute.xlu0 %1490
      %1494 = vset.pattern.permute.xlu0 0
      %1495 = vperm.xlu0 %1494, %v1341
      %v1496 = vpop.permute.xlu0 %1495
      %1499 = vset.pattern.permute.xlu0 0
      %1500 = vperm.xlu0 %1499, %v1342
      %v1501 = vpop.permute.xlu0 %1500
      %1504 = vset.pattern.permute.xlu0 0
      %1505 = vperm.xlu0 %1504, %v1343
      %v1506 = vpop.permute.xlu0 %1505
      %1509 = vset.pattern.permute.xlu0 0
      %1510 = vperm.xlu0 %1509, %v1344
      %v1511 = vpop.permute.xlu0 %1510
      %1514 = vset.pattern.permute.xlu0 0
      %1515 = vperm.xlu0 %1514, %v1345
      %v1516 = vpop.permute.xlu0 %1515
      %1519 = vset.pattern.permute.xlu0 0
      %1520 = vperm.xlu0 %1519, %v1346
      %v1521 = vpop.permute.xlu0 %1520
      %1524 = vset.pattern.permute.xlu0 0
      %1525 = vperm.xlu0 %1524, %v1347
      %v1526 = vpop.permute.xlu0 %1525
      %1529 = vset.pattern.permute.xlu0 0
      %1530 = vperm.xlu0 %1529, %v1348
      %v1531 = vpop.permute.xlu0 %1530
      %1534 = vset.pattern.permute.xlu0 0
      %1535 = vperm.xlu0 %1534, %v1349
      %v1536 = vpop.permute.xlu0 %1535
      %1539 = vset.pattern.permute.xlu0 0
      %1540 = vperm.xlu0 %1539, %v1350
      %v1541 = vpop.permute.xlu0 %1540
      %1544 = vset.pattern.permute.xlu0 0
      %1545 = vperm.xlu0 %1544, %v1351
      %v1546 = vpop.permute.xlu0 %1545
      %1549 = vset.pattern.permute.xlu0 0
      %1550 = vperm.xlu0 %1549, %v1352
      %v1551 = vpop.permute.xlu0 %1550
      %1554 = vset.pattern.permute.xlu0 0
      %1555 = vperm.xlu0 %1554, %v1353
      %v1556 = vpop.permute.xlu0 %1555
      %1559 = vset.pattern.permute.xlu0 0
      %1560 = vperm.xlu0 %1559, %v1354
      %v1561 = vpop.permute.xlu0 %1560
      %1564 = vset.pattern.permute.xlu0 0
      %1565 = vperm.xlu0 %1564, %v1355
      %v1566 = vpop.permute.xlu0 %1565
      %1569 = vset.pattern.permute.xlu0 0
      %1570 = vperm.xlu0 %1569, %v1356
      %v1571 = vpop.permute.xlu0 %1570
      %1574 = vset.pattern.permute.xlu0 0
      %1575 = vperm.xlu0 %1574, %v1357
      %v1576 = vpop.permute.xlu0 %1575
      %1579 = vset.pattern.permute.xlu0 0
      %1580 = vperm.xlu0 %1579, %v1358
      %v1581 = vpop.permute.xlu0 %1580
      %1584 = vset.pattern.permute.xlu0 0
      %1585 = vperm.xlu0 %1584, %v1359
      %v1586 = vpop.permute.xlu0 %1585
      %1589 = vset.pattern.permute.xlu0 0
      %1590 = vperm.xlu0 %1589, %v1360
      %v1591 = vpop.permute.xlu0 %1590
      %1594 = vset.pattern.permute.xlu0 0
      %1595 = vperm.xlu0 %1594, %v1361
      %v1596 = vpop.permute.xlu0 %1595
      %1599 = vset.pattern.permute.xlu0 0
      %1600 = vperm.xlu0 %1599, %v1362
      %v1601 = vpop.permute.xlu0 %1600
      %1604 = vset.pattern.permute.xlu0 0
      %1605 = vperm.xlu0 %1604, %v1363
      %v1606 = vpop.permute.xlu0 %1605
      %1609 = vset.pattern.permute.xlu0 0
      %1610 = vperm.xlu0 %1609, %v1364
      %v1611 = vpop.permute.xlu0 %1610
      %1614 = vset.pattern.permute.xlu0 0
      %1615 = vperm.xlu0 %1614, %v1365
      %v1616 = vpop.permute.xlu0 %1615
      %1619 = vset.pattern.permute.xlu0 0
      %1620 = vperm.xlu0 %1619, %v1366
      %v1621 = vpop.permute.xlu0 %1620
      %v1623 = vsub.f32 %v1049, %v1466
      %v1624 = vsub.f32 %v1051, %v1466
      %v1625 = vsub.f32 %v1053, %v1471
      %v1626 = vsub.f32 %v1055, %v1471
      %v1627 = vsub.f32 %v1059, %v1476
      %v1628 = vsub.f32 %v1061, %v1476
      %v1629 = vsub.f32 %v1063, %v1481
      %v1630 = vsub.f32 %v1065, %v1481
      %v1631 = vsub.f32 %v1069, %v1486
      %v1632 = vsub.f32 %v1071, %v1486
      %v1633 = vsub.f32 %v1073, %v1491
      %v1634 = vsub.f32 %v1075, %v1491
      %v1635 = vsub.f32 %v1079, %v1496
      %v1636 = vsub.f32 %v1081, %v1496
      %v1637 = vsub.f32 %v1083, %v1501
      %v1638 = vsub.f32 %v1085, %v1501
      %v1639 = vsub.f32 %v1089, %v1506
      %v1640 = vsub.f32 %v1091, %v1506
      %v1641 = vsub.f32 %v1093, %v1511
      %v1642 = vsub.f32 %v1095, %v1511
      %v1643 = vsub.f32 %v1099, %v1516
      %v1644 = vsub.f32 %v1101, %v1516
      %v1645 = vsub.f32 %v1103, %v1521
      %v1646 = vsub.f32 %v1105, %v1521
      %v1647 = vsub.f32 %v1109, %v1526
      %v1648 = vsub.f32 %v1111, %v1526
      %v1649 = vsub.f32 %v1113, %v1531
      %v1650 = vsub.f32 %v1115, %v1531
      %v1651 = vsub.f32 %v1119, %v1536
      %v1652 = vsub.f32 %v1121, %v1536
      %v1653 = vsub.f32 %v1123, %v1541
      %v1654 = vsub.f32 %v1125, %v1541
      %v1655 = vsub.f32 %v1129, %v1546
      %v1656 = vsub.f32 %v1131, %v1546
      %v1657 = vsub.f32 %v1133, %v1551
      %v1658 = vsub.f32 %v1135, %v1551
      %v1659 = vsub.f32 %v1139, %v1556
      %v1660 = vsub.f32 %v1141, %v1556
      %v1661 = vsub.f32 %v1143, %v1561
      %v1662 = vsub.f32 %v1145, %v1561
      %v1663 = vsub.f32 %v1149, %v1566
      %v1664 = vsub.f32 %v1151, %v1566
      %v1665 = vsub.f32 %v1153, %v1571
      %v1666 = vsub.f32 %v1155, %v1571
      %v1667 = vsub.f32 %v1159, %v1576
      %v1668 = vsub.f32 %v1161, %v1576
      %v1669 = vsub.f32 %v1163, %v1581
      %v1670 = vsub.f32 %v1165, %v1581
      %v1671 = vsub.f32 %v1169, %v1586
      %v1672 = vsub.f32 %v1171, %v1586
      %v1673 = vsub.f32 %v1173, %v1591
      %v1674 = vsub.f32 %v1175, %v1591
      %v1675 = vsub.f32 %v1179, %v1596
      %v1676 = vsub.f32 %v1181, %v1596
      %v1677 = vsub.f32 %v1183, %v1601
      %v1678 = vsub.f32 %v1185, %v1601
      %v1679 = vsub.f32 %v1189, %v1606
      %v1680 = vsub.f32 %v1191, %v1606
      %v1681 = vsub.f32 %v1193, %v1611
      %v1682 = vsub.f32 %v1195, %v1611
      %v1683 = vsub.f32 %v1199, %v1616
      %v1684 = vsub.f32 %v1201, %v1616
      %v1685 = vsub.f32 %v1203, %v1621
      %v1686 = vsub.f32 %v1205, %v1621
      %v1687 = vmul.f32 %v1623, 1.442695
      %v1688 = vpow.pop %v1687
      %v1689 = vmul.f32 %v1624, 1.442695
      %v1690 = vpow.pop %v1689
      %v1691 = vmul.f32 %v1625, 1.442695
      %v1692 = vpow.pop %v1691
      %v1693 = vmul.f32 %v1626, 1.442695
      %v1694 = vpow.pop %v1693
      %v1695 = vmul.f32 %v1627, 1.442695
      %v1696 = vpow.pop %v1695
      %v1697 = vmul.f32 %v1628, 1.442695
      %v1698 = vpow.pop %v1697
      %v1699 = vmul.f32 %v1629, 1.442695
      %v1700 = vpow.pop %v1699
      %v1701 = vmul.f32 %v1630, 1.442695
      %v1702 = vpow.pop %v1701
      %v1703 = vmul.f32 %v1631, 1.442695
      %v1704 = vpow.pop %v1703
      %v1705 = vmul.f32 %v1632, 1.442695
      %v1706 = vpow.pop %v1705
      %v1707 = vmul.f32 %v1633, 1.442695
      %v1708 = vpow.pop %v1707
      %v1709 = vmul.f32 %v1634, 1.442695
      %v1710 = vpow.pop %v1709
      %v1711 = vmul.f32 %v1635, 1.442695
      %v1712 = vpow.pop %v1711
      %v1713 = vmul.f32 %v1636, 1.442695
      %v1714 = vpow.pop %v1713
      %v1715 = vmul.f32 %v1637, 1.442695
      %v1716 = vpow.pop %v1715
      %v1717 = vmul.f32 %v1638, 1.442695
      %v1718 = vpow.pop %v1717
      %v1719 = vmul.f32 %v1639, 1.442695
      %v1720 = vpow.pop %v1719
      %v1721 = vmul.f32 %v1640, 1.442695
      %v1722 = vpow.pop %v1721
      %v1723 = vmul.f32 %v1641, 1.442695
      %v1724 = vpow.pop %v1723
      %v1725 = vmul.f32 %v1642, 1.442695
      %v1726 = vpow.pop %v1725
      %v1727 = vmul.f32 %v1643, 1.442695
      %v1728 = vpow.pop %v1727
      %v1729 = vmul.f32 %v1644, 1.442695
      %v1730 = vpow.pop %v1729
      %v1731 = vmul.f32 %v1645, 1.442695
      %v1732 = vpow.pop %v1731
      %v1733 = vmul.f32 %v1646, 1.442695
      %v1734 = vpow.pop %v1733
      %v1735 = vmul.f32 %v1647, 1.442695
      %v1736 = vpow.pop %v1735
      %v1737 = vmul.f32 %v1648, 1.442695
      %v1738 = vpow.pop %v1737
      %v1739 = vmul.f32 %v1649, 1.442695
      %v1740 = vpow.pop %v1739
      %v1741 = vmul.f32 %v1650, 1.442695
      %v1742 = vpow.pop %v1741
      %v1743 = vmul.f32 %v1651, 1.442695
      %v1744 = vpow.pop %v1743
      %v1745 = vmul.f32 %v1652, 1.442695
      %v1746 = vpow.pop %v1745
      %v1747 = vmul.f32 %v1653, 1.442695
      %v1748 = vpow.pop %v1747
      %v1749 = vmul.f32 %v1654, 1.442695
      %v1750 = vpow.pop %v1749
      %v1751 = vmul.f32 %v1655, 1.442695
      %v1752 = vpow.pop %v1751
      %v1753 = vmul.f32 %v1656, 1.442695
      %v1754 = vpow.pop %v1753
      %v1755 = vmul.f32 %v1657, 1.442695
      %v1756 = vpow.pop %v1755
      %v1757 = vmul.f32 %v1658, 1.442695
      %v1758 = vpow.pop %v1757
      %v1759 = vmul.f32 %v1659, 1.442695
      %v1760 = vpow.pop %v1759
      %v1761 = vmul.f32 %v1660, 1.442695
      %v1762 = vpow.pop %v1761
      %v1763 = vmul.f32 %v1661, 1.442695
      %v1764 = vpow.pop %v1763
      %v1765 = vmul.f32 %v1662, 1.442695
      %v1766 = vpow.pop %v1765
      %v1767 = vmul.f32 %v1663, 1.442695
      %v1768 = vpow.pop %v1767
      %v1769 = vmul.f32 %v1664, 1.442695
      %v1770 = vpow.pop %v1769
      %v1771 = vmul.f32 %v1665, 1.442695
      %v1772 = vpow.pop %v1771
      %v1773 = vmul.f32 %v1666, 1.442695
      %v1774 = vpow.pop %v1773
      %v1775 = vmul.f32 %v1667, 1.442695
      %v1776 = vpow.pop %v1775
      %v1777 = vmul.f32 %v1668, 1.442695
      %v1778 = vpow.pop %v1777
      %v1779 = vmul.f32 %v1669, 1.442695
      %v1780 = vpow.pop %v1779
      %v1781 = vmul.f32 %v1670, 1.442695
      %v1782 = vpow.pop %v1781
      %v1783 = vmul.f32 %v1671, 1.442695
      %v1784 = vpow.pop %v1783
      %v1785 = vmul.f32 %v1672, 1.442695
      %v1786 = vpow.pop %v1785
      %v1787 = vmul.f32 %v1673, 1.442695
      %v1788 = vpow.pop %v1787
      %v1789 = vmul.f32 %v1674, 1.442695
      %v1790 = vpow.pop %v1789
      %v1791 = vmul.f32 %v1675, 1.442695
      %v1792 = vpow.pop %v1791
      %v1793 = vmul.f32 %v1676, 1.442695
      %v1794 = vpow.pop %v1793
      %v1795 = vmul.f32 %v1677, 1.442695
      %v1796 = vpow.pop %v1795
      %v1797 = vmul.f32 %v1678, 1.442695
      %v1798 = vpow.pop %v1797
      %v1799 = vmul.f32 %v1679, 1.442695
      %v1800 = vpow.pop %v1799
      %v1801 = vmul.f32 %v1680, 1.442695
      %v1802 = vpow.pop %v1801
      %v1803 = vmul.f32 %v1681, 1.442695
      %v1804 = vpow.pop %v1803
      %v1805 = vmul.f32 %v1682, 1.442695
      %v1806 = vpow.pop %v1805
      %v1807 = vmul.f32 %v1683, 1.442695
      %v1808 = vpow.pop %v1807
      %v1809 = vmul.f32 %v1684, 1.442695
      %v1810 = vpow.pop %v1809
      %v1811 = vmul.f32 %v1685, 1.442695
      %v1812 = vpow.pop %v1811
      %v1813 = vmul.f32 %v1686, 1.442695
      %v1814 = vpow.pop %v1813
      %v1815 = vld [vmem:[#allocation3] sm:$0xff]
      %v1816 = vld [vmem:[#allocation3 + $0x8] sm:$0xff]
      %v1817 = vld [vmem:[#allocation3 + $0x10] sm:$0xff]
      %v1818 = vld [vmem:[#allocation3 + $0x18] sm:$0xff]
      %v1819 = vld [vmem:[#allocation3 + $0x20] sm:$0xff]
      %v1820 = vld [vmem:[#allocation3 + $0x28] sm:$0xff]
      %v1821 = vld [vmem:[#allocation3 + $0x30] sm:$0xff]
      %v1822 = vld [vmem:[#allocation3 + $0x38] sm:$0xff]
      %v1823 = vld [vmem:[#allocation3 + $0x40] sm:$0xff]
      %v1824 = vld [vmem:[#allocation3 + $0x48] sm:$0xff]
      %v1825 = vld [vmem:[#allocation3 + $0x50] sm:$0xff]
      %v1826 = vld [vmem:[#allocation3 + $0x58] sm:$0xff]
      %v1827 = vld [vmem:[#allocation3 + $0x60] sm:$0xff]
      %v1828 = vld [vmem:[#allocation3 + $0x68] sm:$0xff]
      %v1829 = vld [vmem:[#allocation3 + $0x70] sm:$0xff]
      %v1830 = vld [vmem:[#allocation3 + $0x78] sm:$0xff]
      %v1831 = vld [vmem:[#allocation3 + $0x80] sm:$0xff]
      %v1832 = vld [vmem:[#allocation3 + $0x88] sm:$0xff]
      %v1833 = vld [vmem:[#allocation3 + $0x90] sm:$0xff]
      %v1834 = vld [vmem:[#allocation3 + $0x98] sm:$0xff]
      %v1835 = vld [vmem:[#allocation3 + $0xa0] sm:$0xff]
      %v1836 = vld [vmem:[#allocation3 + $0xa8] sm:$0xff]
      %v1837 = vld [vmem:[#allocation3 + $0xb0] sm:$0xff]
      %v1838 = vld [vmem:[#allocation3 + $0xb8] sm:$0xff]
      %v1839 = vld [vmem:[#allocation3 + $0xc0] sm:$0xff]
      %v1840 = vld [vmem:[#allocation3 + $0xc8] sm:$0xff]
      %v1841 = vld [vmem:[#allocation3 + $0xd0] sm:$0xff]
      %v1842 = vld [vmem:[#allocation3 + $0xd8] sm:$0xff]
      %v1843 = vld [vmem:[#allocation3 + $0xe0] sm:$0xff]
      %v1844 = vld [vmem:[#allocation3 + $0xe8] sm:$0xff]
      %v1845 = vld [vmem:[#allocation3 + $0xf0] sm:$0xff]
      %v1846 = vld [vmem:[#allocation3 + $0xf8] sm:$0xff]
      %v1847 = vmul.f32 %v1400, %v1815
      %v1848 = vmul.f32 %v1402, %v1816
      %v1849 = vmul.f32 %v1404, %v1817
      %v1850 = vmul.f32 %v1406, %v1818
      %v1851 = vmul.f32 %v1408, %v1819
      %v1852 = vmul.f32 %v1410, %v1820
      %v1853 = vmul.f32 %v1412, %v1821
      %v1854 = vmul.f32 %v1414, %v1822
      %v1855 = vmul.f32 %v1416, %v1823
      %v1856 = vmul.f32 %v1418, %v1824
      %v1857 = vmul.f32 %v1420, %v1825
      %v1858 = vmul.f32 %v1422, %v1826
      %v1859 = vmul.f32 %v1424, %v1827
      %v1860 = vmul.f32 %v1426, %v1828
      %v1861 = vmul.f32 %v1428, %v1829
      %v1862 = vmul.f32 %v1430, %v1830
      %v1863 = vmul.f32 %v1432, %v1831
      %v1864 = vmul.f32 %v1434, %v1832
      %v1865 = vmul.f32 %v1436, %v1833
      %v1866 = vmul.f32 %v1438, %v1834
      %v1867 = vmul.f32 %v1440, %v1835
      %v1868 = vmul.f32 %v1442, %v1836
      %v1869 = vmul.f32 %v1444, %v1837
      %v1870 = vmul.f32 %v1446, %v1838
      %v1871 = vmul.f32 %v1448, %v1839
      %v1872 = vmul.f32 %v1450, %v1840
      %v1873 = vmul.f32 %v1452, %v1841
      %v1874 = vmul.f32 %v1454, %v1842
      %v1875 = vmul.f32 %v1456, %v1843
      %v1876 = vmul.f32 %v1458, %v1844
      %v1877 = vmul.f32 %v1460, %v1845
      %v1878 = vmul.f32 %v1462, %v1846
      %v1879 = vadd.f32 %v1688, %v1690
      %1880 = vadd.xlane.f32.xlu0 %v1879
      %v1881 = vpop.xlane.xlu0 %1880
      %v1882 = vadd.f32 %v1692, %v1694
      %1883 = vadd.xlane.f32.xlu0 %v1882
      %v1884 = vpop.xlane.xlu0 %1883
      %v1885 = vadd.f32 %v1696, %v1698
      %1886 = vadd.xlane.f32.xlu0 %v1885
      %v1887 = vpop.xlane.xlu0 %1886
      %v1888 = vadd.f32 %v1700, %v1702
      %1889 = vadd.xlane.f32.xlu0 %v1888
      %v1890 = vpop.xlane.xlu0 %1889
      %v1891 = vadd.f32 %v1704, %v1706
      %1892 = vadd.xlane.f32.xlu0 %v1891
      %v1893 = vpop.xlane.xlu0 %1892
      %v1894 = vadd.f32 %v1708, %v1710
      %1895 = vadd.xlane.f32.xlu0 %v1894
      %v1896 = vpop.xlane.xlu0 %1895
      %v1897 = vadd.f32 %v1712, %v1714
      %1898 = vadd.xlane.f32.xlu0 %v1897
      %v1899 = vpop.xlane.xlu0 %1898
      %v1900 = vadd.f32 %v1716, %v1718
      %1901 = vadd.xlane.f32.xlu0 %v1900
      %v1902 = vpop.xlane.xlu0 %1901
      %v1903 = vadd.f32 %v1720, %v1722
      %1904 = vadd.xlane.f32.xlu0 %v1903
      %v1905 = vpop.xlane.xlu0 %1904
      %v1906 = vadd.f32 %v1724, %v1726
      %1907 = vadd.xlane.f32.xlu0 %v1906
      %v1908 = vpop.xlane.xlu0 %1907
      %v1909 = vadd.f32 %v1728, %v1730
      %1910 = vadd.xlane.f32.xlu0 %v1909
      %v1911 = vpop.xlane.xlu0 %1910
      %v1912 = vadd.f32 %v1732, %v1734
      %1913 = vadd.xlane.f32.xlu0 %v1912
      %v1914 = vpop.xlane.xlu0 %1913
      %v1915 = vadd.f32 %v1736, %v1738
      %1916 = vadd.xlane.f32.xlu0 %v1915
      %v1917 = vpop.xlane.xlu0 %1916
      %v1918 = vadd.f32 %v1740, %v1742
      %1919 = vadd.xlane.f32.xlu0 %v1918
      %v1920 = vpop.xlane.xlu0 %1919
      %v1921 = vadd.f32 %v1744, %v1746
      %1922 = vadd.xlane.f32.xlu0 %v1921
      %v1923 = vpop.xlane.xlu0 %1922
      %v1924 = vadd.f32 %v1748, %v1750
      %1925 = vadd.xlane.f32.xlu0 %v1924
      %v1926 = vpop.xlane.xlu0 %1925
      %v1927 = vadd.f32 %v1752, %v1754
      %1928 = vadd.xlane.f32.xlu0 %v1927
      %v1929 = vpop.xlane.xlu0 %1928
      %v1930 = vadd.f32 %v1756, %v1758
      %1931 = vadd.xlane.f32.xlu0 %v1930
      %v1932 = vpop.xlane.xlu0 %1931
      %v1933 = vadd.f32 %v1760, %v1762
      %1934 = vadd.xlane.f32.xlu0 %v1933
      %v1935 = vpop.xlane.xlu0 %1934
      %v1936 = vadd.f32 %v1764, %v1766
      %1937 = vadd.xlane.f32.xlu0 %v1936
      %v1938 = vpop.xlane.xlu0 %1937
      %v1939 = vadd.f32 %v1768, %v1770
      %1940 = vadd.xlane.f32.xlu0 %v1939
      %v1941 = vpop.xlane.xlu0 %1940
      %v1942 = vadd.f32 %v1772, %v1774
      %1943 = vadd.xlane.f32.xlu0 %v1942
      %v1944 = vpop.xlane.xlu0 %1943
      %v1945 = vadd.f32 %v1776, %v1778
      %1946 = vadd.xlane.f32.xlu0 %v1945
      %v1947 = vpop.xlane.xlu0 %1946
      %v1948 = vadd.f32 %v1780, %v1782
      %1949 = vadd.xlane.f32.xlu0 %v1948
      %v1950 = vpop.xlane.xlu0 %1949
      %v1951 = vadd.f32 %v1784, %v1786
      %1952 = vadd.xlane.f32.xlu0 %v1951
      %v1953 = vpop.xlane.xlu0 %1952
      %v1954 = vadd.f32 %v1788, %v1790
      %1955 = vadd.xlane.f32.xlu0 %v1954
      %v1956 = vpop.xlane.xlu0 %1955
      %v1957 = vadd.f32 %v1792, %v1794
      %1958 = vadd.xlane.f32.xlu0 %v1957
      %v1959 = vpop.xlane.xlu0 %1958
      %v1960 = vadd.f32 %v1796, %v1798
      %1961 = vadd.xlane.f32.xlu0 %v1960
      %v1962 = vpop.xlane.xlu0 %1961
      %v1963 = vadd.f32 %v1800, %v1802
      %1964 = vadd.xlane.f32.xlu0 %v1963
      %v1965 = vpop.xlane.xlu0 %1964
      %v1966 = vadd.f32 %v1804, %v1806
      %1967 = vadd.xlane.f32.xlu0 %v1966
      %v1968 = vpop.xlane.xlu0 %1967
      %v1969 = vadd.f32 %v1808, %v1810
      %1970 = vadd.xlane.f32.xlu0 %v1969
      %v1971 = vpop.xlane.xlu0 %1970
      %v1972 = vadd.f32 %v1812, %v1814
      %1973 = vadd.xlane.f32.xlu0 %v1972
      %v1974 = vpop.xlane.xlu0 %1973
      %v1975 = vadd.f32 %v1847, %v1881
      %v1976 = vadd.f32 %v1848, %v1884
      %v1977 = vadd.f32 %v1849, %v1887
      %v1978 = vadd.f32 %v1850, %v1890
      %v1979 = vadd.f32 %v1851, %v1893
      %v1980 = vadd.f32 %v1852, %v1896
      %v1981 = vadd.f32 %v1853, %v1899
      %v1982 = vadd.f32 %v1854, %v1902
      %v1983 = vadd.f32 %v1855, %v1905
      %v1984 = vadd.f32 %v1856, %v1908
      %v1985 = vadd.f32 %v1857, %v1911
      %v1986 = vadd.f32 %v1858, %v1914
      %v1987 = vadd.f32 %v1859, %v1917
      %v1988 = vadd.f32 %v1860, %v1920
      %v1989 = vadd.f32 %v1861, %v1923
      %v1990 = vadd.f32 %v1862, %v1926
      %v1991 = vadd.f32 %v1863, %v1929
      %v1992 = vadd.f32 %v1864, %v1932
      %v1993 = vadd.f32 %v1865, %v1935
      %v1994 = vadd.f32 %v1866, %v1938
      %v1995 = vadd.f32 %v1867, %v1941
      %v1996 = vadd.f32 %v1868, %v1944
      %v1997 = vadd.f32 %v1869, %v1947
      %v1998 = vadd.f32 %v1870, %v1950
      %v1999 = vadd.f32 %v1871, %v1953
      %v2000 = vadd.f32 %v1872, %v1956
      %v2001 = vadd.f32 %v1873, %v1959
      %v2002 = vadd.f32 %v1874, %v1962
      %v2003 = vadd.f32 %v1875, %v1965
      %v2004 = vadd.f32 %v1876, %v1968
      %v2005 = vadd.f32 %v1877, %v1971
      %v2006 = vadd.f32 %v1878, %v1974
      %vm2007 = vcmask 7168
      %2008 = vst.msk [vmem:[#allocation3] sm:$0xff] %vm2007, %v1975
      %2009 = vst.msk [vmem:[#allocation3 + $0x8] sm:$0xff] %vm2007, %v1976
      %2010 = vst.msk [vmem:[#allocation3 + $0x10] sm:$0xff] %vm2007, %v1977
      %2011 = vst.msk [vmem:[#allocation3 + $0x18] sm:$0xff] %vm2007, %v1978
      %2012 = vst.msk [vmem:[#allocation3 + $0x20] sm:$0xff] %vm2007, %v1979
      %2013 = vst.msk [vmem:[#allocation3 + $0x28] sm:$0xff] %vm2007, %v1980
      %2014 = vst.msk [vmem:[#allocation3 + $0x30] sm:$0xff] %vm2007, %v1981
      %2015 = vst.msk [vmem:[#allocation3 + $0x38] sm:$0xff] %vm2007, %v1982
      %2016 = vst.msk [vmem:[#allocation3 + $0x40] sm:$0xff] %vm2007, %v1983
      %2017 = vst.msk [vmem:[#allocation3 + $0x48] sm:$0xff] %vm2007, %v1984
      %2018 = vst.msk [vmem:[#allocation3 + $0x50] sm:$0xff] %vm2007, %v1985
      %2019 = vst.msk [vmem:[#allocation3 + $0x58] sm:$0xff] %vm2007, %v1986
      %2020 = vst.msk [vmem:[#allocation3 + $0x60] sm:$0xff] %vm2007, %v1987
      %2021 = vst.msk [vmem:[#allocation3 + $0x68] sm:$0xff] %vm2007, %v1988
      %2022 = vst.msk [vmem:[#allocation3 + $0x70] sm:$0xff] %vm2007, %v1989
      %2023 = vst.msk [vmem:[#allocation3 + $0x78] sm:$0xff] %vm2007, %v1990
      %2024 = vst.msk [vmem:[#allocation3 + $0x80] sm:$0xff] %vm2007, %v1991
      %2025 = vst.msk [vmem:[#allocation3 + $0x88] sm:$0xff] %vm2007, %v1992
      %2026 = vst.msk [vmem:[#allocation3 + $0x90] sm:$0xff] %vm2007, %v1993
      %2027 = vst.msk [vmem:[#allocation3 + $0x98] sm:$0xff] %vm2007, %v1994
      %2028 = vst.msk [vmem:[#allocation3 + $0xa0] sm:$0xff] %vm2007, %v1995
      %2029 = vst.msk [vmem:[#allocation3 + $0xa8] sm:$0xff] %vm2007, %v1996
      %2030 = vst.msk [vmem:[#allocation3 + $0xb0] sm:$0xff] %vm2007, %v1997
      %2031 = vst.msk [vmem:[#allocation3 + $0xb8] sm:$0xff] %vm2007, %v1998
      %2032 = vst.msk [vmem:[#allocation3 + $0xc0] sm:$0xff] %vm2007, %v1999
      %2033 = vst.msk [vmem:[#allocation3 + $0xc8] sm:$0xff] %vm2007, %v2000
      %2034 = vst.msk [vmem:[#allocation3 + $0xd0] sm:$0xff] %vm2007, %v2001
      %2035 = vst.msk [vmem:[#allocation3 + $0xd8] sm:$0xff] %vm2007, %v2002
      %2036 = vst.msk [vmem:[#allocation3 + $0xe0] sm:$0xff] %vm2007, %v2003
      %2037 = vst.msk [vmem:[#allocation3 + $0xe8] sm:$0xff] %vm2007, %v2004
      %2038 = vst.msk [vmem:[#allocation3 + $0xf0] sm:$0xff] %vm2007, %v2005
      %2039 = vst.msk [vmem:[#allocation3 + $0xf8] sm:$0xff] %vm2007, %v2006
      %2040 = vst.msk [vmem:[#allocation2] sm:$0xff] %vm2007, %v1335
      %2041 = vst.msk [vmem:[#allocation2 + $0x8] sm:$0xff] %vm2007, %v1336
      %2042 = vst.msk [vmem:[#allocation2 + $0x10] sm:$0xff] %vm2007, %v1337
      %2043 = vst.msk [vmem:[#allocation2 + $0x18] sm:$0xff] %vm2007, %v1338
      %2044 = vst.msk [vmem:[#allocation2 + $0x20] sm:$0xff] %vm2007, %v1339
      %2045 = vst.msk [vmem:[#allocation2 + $0x28] sm:$0xff] %vm2007, %v1340
      %2046 = vst.msk [vmem:[#allocation2 + $0x30] sm:$0xff] %vm2007, %v1341
      %2047 = vst.msk [vmem:[#allocation2 + $0x38] sm:$0xff] %vm2007, %v1342
      %2048 = vst.msk [vmem:[#allocation2 + $0x40] sm:$0xff] %vm2007, %v1343
      %2049 = vst.msk [vmem:[#allocation2 + $0x48] sm:$0xff] %vm2007, %v1344
      %2050 = vst.msk [vmem:[#allocation2 + $0x50] sm:$0xff] %vm2007, %v1345
      %2051 = vst.msk [vmem:[#allocation2 + $0x58] sm:$0xff] %vm2007, %v1346
      %2052 = vst.msk [vmem:[#allocation2 + $0x60] sm:$0xff] %vm2007, %v1347
      %2053 = vst.msk [vmem:[#allocation2 + $0x68] sm:$0xff] %vm2007, %v1348
      %2054 = vst.msk [vmem:[#allocation2 + $0x70] sm:$0xff] %vm2007, %v1349
      %2055 = vst.msk [vmem:[#allocation2 + $0x78] sm:$0xff] %vm2007, %v1350
      %2056 = vst.msk [vmem:[#allocation2 + $0x80] sm:$0xff] %vm2007, %v1351
      %2057 = vst.msk [vmem:[#allocation2 + $0x88] sm:$0xff] %vm2007, %v1352
      %2058 = vst.msk [vmem:[#allocation2 + $0x90] sm:$0xff] %vm2007, %v1353
      %2059 = vst.msk [vmem:[#allocation2 + $0x98] sm:$0xff] %vm2007, %v1354
      %2060 = vst.msk [vmem:[#allocation2 + $0xa0] sm:$0xff] %vm2007, %v1355
      %2061 = vst.msk [vmem:[#allocation2 + $0xa8] sm:$0xff] %vm2007, %v1356
      %2062 = vst.msk [vmem:[#allocation2 + $0xb0] sm:$0xff] %vm2007, %v1357
      %2063 = vst.msk [vmem:[#allocation2 + $0xb8] sm:$0xff] %vm2007, %v1358
      %2064 = vst.msk [vmem:[#allocation2 + $0xc0] sm:$0xff] %vm2007, %v1359
      %2065 = vst.msk [vmem:[#allocation2 + $0xc8] sm:$0xff] %vm2007, %v1360
      %2066 = vst.msk [vmem:[#allocation2 + $0xd0] sm:$0xff] %vm2007, %v1361
      %2067 = vst.msk [vmem:[#allocation2 + $0xd8] sm:$0xff] %vm2007, %v1362
      %2068 = vst.msk [vmem:[#allocation2 + $0xe0] sm:$0xff] %vm2007, %v1363
      %2069 = vst.msk [vmem:[#allocation2 + $0xe8] sm:$0xff] %vm2007, %v1364
      %2070 = vst.msk [vmem:[#allocation2 + $0xf0] sm:$0xff] %vm2007, %v1365
      %2071 = vst.msk [vmem:[#allocation2 + $0xf8] sm:$0xff] %vm2007, %v1366
      %v2072 = vpack.c.bf16 %v1692, %v1688
      %v2073 = vpack.c.bf16 %v1694, %v1690
      %v2074 = vpack.c.bf16 %v1700, %v1696
      %v2075 = vpack.c.bf16 %v1702, %v1698
      %v2076 = vpack.c.bf16 %v1708, %v1704
      %v2077 = vpack.c.bf16 %v1710, %v1706
      %v2078 = vpack.c.bf16 %v1716, %v1712
      %v2079 = vpack.c.bf16 %v1718, %v1714
      %v2080 = vpack.c.bf16 %v1724, %v1720
      %v2081 = vpack.c.bf16 %v1726, %v1722
      %v2082 = vpack.c.bf16 %v1732, %v1728
      %v2083 = vpack.c.bf16 %v1734, %v1730
      %v2084 = vpack.c.bf16 %v1740, %v1736
      %v2085 = vpack.c.bf16 %v1742, %v1738
      %v2086 = vpack.c.bf16 %v1748, %v1744
      %v2087 = vpack.c.bf16 %v1750, %v1746
      %v2088 = vpack.c.bf16 %v1756, %v1752
      %v2089 = vpack.c.bf16 %v1758, %v1754
      %v2090 = vpack.c.bf16 %v1764, %v1760
      %v2091 = vpack.c.bf16 %v1766, %v1762
      %v2092 = vpack.c.bf16 %v1772, %v1768
      %v2093 = vpack.c.bf16 %v1774, %v1770
      %v2094 = vpack.c.bf16 %v1780, %v1776
      %v2095 = vpack.c.bf16 %v1782, %v1778
      %v2096 = vpack.c.bf16 %v1788, %v1784
      %v2097 = vpack.c.bf16 %v1790, %v1786
      %v2098 = vpack.c.bf16 %v1796, %v1792
      %v2099 = vpack.c.bf16 %v1798, %v1794
      %v2100 = vpack.c.bf16 %v1804, %v1800
      %v2101 = vpack.c.bf16 %v1806, %v1802
      %v2102 = vpack.c.bf16 %v1812, %v1808
      %v2103 = vpack.c.bf16 %v1814, %v1810
      %v2136 = vunpack.c.l.b16 %v714
      %v2137 = vunpack.c.l.b16 %v715
      %v2138 = vunpack.c.l.b16 %v716
      %v2139 = vunpack.c.l.b16 %v717
      %v2140 = vunpack.c.l.b16 %v718
      %v2141 = vunpack.c.l.b16 %v719
      %v2142 = vunpack.c.l.b16 %v720
      %v2143 = vunpack.c.l.b16 %v721
      %v2144 = vunpack.c.l.b16 %v722
      %v2145 = vunpack.c.l.b16 %v723
      %v2146 = vunpack.c.l.b16 %v724
      %v2147 = vunpack.c.l.b16 %v725
      %v2148 = vunpack.c.l.b16 %v726
      %v2149 = vunpack.c.l.b16 %v727
      %v2150 = vunpack.c.l.b16 %v728
      %v2151 = vunpack.c.l.b16 %v729
      %v2152 = vunpack.c.l.b16 %v730
      %v2153 = vunpack.c.l.b16 %v731
      %v2154 = vunpack.c.l.b16 %v732
      %v2155 = vunpack.c.l.b16 %v733
      %v2156 = vunpack.c.l.b16 %v734
      %v2157 = vunpack.c.l.b16 %v735
      %v2158 = vunpack.c.l.b16 %v736
      %v2159 = vunpack.c.l.b16 %v737
      %v2160 = vunpack.c.l.b16 %v738
      %v2161 = vunpack.c.l.b16 %v739
      %v2162 = vunpack.c.l.b16 %v740
      %v2163 = vunpack.c.l.b16 %v741
      %v2164 = vunpack.c.l.b16 %v742
      %v2165 = vunpack.c.l.b16 %v743
      %v2166 = vunpack.c.l.b16 %v744
      %v2167 = vunpack.c.l.b16 %v745
      %v2168 = vpack.c.b16 %v2137, %v2136
      %v2169 = vpack.c.b16 %v2139, %v2138
      %v2170 = vpack.c.b16 %v2141, %v2140
      %v2171 = vpack.c.b16 %v2143, %v2142
      %v2172 = vpack.c.b16 %v2145, %v2144
      %v2173 = vpack.c.b16 %v2147, %v2146
      %v2174 = vpack.c.b16 %v2149, %v2148
      %v2175 = vpack.c.b16 %v2151, %v2150
      %v2176 = vpack.c.b16 %v2153, %v2152
      %v2177 = vpack.c.b16 %v2155, %v2154
      %v2178 = vpack.c.b16 %v2157, %v2156
      %v2179 = vpack.c.b16 %v2159, %v2158
      %v2180 = vpack.c.b16 %v2161, %v2160
      %v2181 = vpack.c.b16 %v2163, %v2162
      %v2182 = vpack.c.b16 %v2165, %v2164
      %v2183 = vpack.c.b16 %v2167, %v2166
      %2200 = vmatprep.subr.bf16.mxu0 0
      %2201 = vmatpush1.bf16.msra.mxu0 %v2175
      %2202 = vmatprep.subr.bf16.mxu0 0
      %2203 = vmatpush1.bf16.msra.mxu0 %v2174
      %2204 = vmatprep.subr.bf16.mxu0 0
      %2205 = vmatpush1.bf16.msra.mxu0 %v2173
      %2206 = vmatprep.subr.bf16.mxu0 0
      %2207 = vmatpush1.bf16.msra.mxu0 %v2172
      %2208 = vmatprep.subr.bf16.mxu0 0
      %2209 = vmatpush1.bf16.msra.mxu0 %v2171
      %2210 = vmatprep.subr.bf16.mxu0 0
      %2211 = vmatpush1.bf16.msra.mxu0 %v2170
      %2212 = vmatprep.subr.bf16.mxu0 0
      %2213 = vmatpush1.bf16.msra.mxu0 %v2169
      %2214 = vmatprep.subr.bf16.mxu0 0
      %2215 = vmatpush1.bf16.msra.mxu0 %v2168
      %2216 = vmatprep.subr.bf16.mxu0 0
      %2217 = vmatpush2.bf16.msra.mxu0 %v2183
      %2218 = vmatprep.subr.bf16.mxu0 0
      %2219 = vmatpush2.bf16.msra.mxu0 %v2182
      %2220 = vmatprep.subr.bf16.mxu0 0
      %2221 = vmatpush2.bf16.msra.mxu0 %v2181
      %2222 = vmatprep.subr.bf16.mxu0 0
      %2223 = vmatpush2.bf16.msra.mxu0 %v2180
      %2224 = vmatprep.subr.bf16.mxu0 0
      %2225 = vmatpush2.bf16.msra.mxu0 %v2179
      %2226 = vmatprep.subr.bf16.mxu0 0
      %2227 = vmatpush2.bf16.msra.mxu0 %v2178
      %2228 = vmatprep.subr.bf16.mxu0 0
      %2229 = vmatpush2.bf16.msra.mxu0 %v2177
      %2230 = vmatprep.subr.bf16.mxu0 0
      %2231 = vmatpush2.bf16.msra.mxu0 %v2176
      %2232 = vmatprep.mubr.bf16.mxu0 %v2073
      %2233 = vmatmul.mubr.bf16.gmra.mxu0 %v2072
      %v2234 = vpop.f32.mrf.mxu0
      %v2235 = vadd.f32 0.0, %v2234
      %v2236 = vpop.f32.mrf.mxu0
      %v2237 = vpop.f32.mrf.mxu0
      %v2238 = vadd.f32 0.0, %v2237
      %v2239 = vpop.f32.mrf.mxu0
      %2240 = vmatprep.mubr.bf16.mxu0 %v2075
      %2241 = vmatmul.mubr.bf16.gmra.mxu0 %v2074
      %v2242 = vpop.f32.mrf.mxu0
      %v2243 = vadd.f32 0.0, %v2242
      %v2244 = vpop.f32.mrf.mxu0
      %v2245 = vpop.f32.mrf.mxu0
      %v2246 = vadd.f32 0.0, %v2245
      %v2247 = vpop.f32.mrf.mxu0
      %2248 = vmatprep.mubr.bf16.mxu0 %v2077
      %2249 = vmatmul.mubr.bf16.gmra.mxu0 %v2076
      %v2250 = vpop.f32.mrf.mxu0
      %v2251 = vadd.f32 0.0, %v2250
      %v2252 = vpop.f32.mrf.mxu0
      %v2253 = vpop.f32.mrf.mxu0
      %v2254 = vadd.f32 0.0, %v2253
      %v2255 = vpop.f32.mrf.mxu0
      %2256 = vmatprep.mubr.bf16.mxu0 %v2079
      %2257 = vmatmul.mubr.bf16.gmra.mxu0 %v2078
      %v2258 = vpop.f32.mrf.mxu0
      %v2259 = vadd.f32 0.0, %v2258
      %v2260 = vpop.f32.mrf.mxu0
      %v2261 = vpop.f32.mrf.mxu0
      %v2262 = vadd.f32 0.0, %v2261
      %v2263 = vpop.f32.mrf.mxu0
      %2264 = vmatprep.mubr.bf16.mxu0 %v2081
      %2265 = vmatmul.mubr.bf16.gmra.mxu0 %v2080
      %v2266 = vpop.f32.mrf.mxu0
      %v2267 = vadd.f32 0.0, %v2266
      %v2268 = vpop.f32.mrf.mxu0
      %v2269 = vpop.f32.mrf.mxu0
      %v2270 = vadd.f32 0.0, %v2269
      %v2271 = vpop.f32.mrf.mxu0
      %2272 = vmatprep.mubr.bf16.mxu0 %v2083
      %2273 = vmatmul.mubr.bf16.gmra.mxu0 %v2082
      %v2274 = vpop.f32.mrf.mxu0
      %v2275 = vadd.f32 0.0, %v2274
      %v2276 = vpop.f32.mrf.mxu0
      %v2277 = vpop.f32.mrf.mxu0
      %v2278 = vadd.f32 0.0, %v2277
      %v2279 = vpop.f32.mrf.mxu0
      %2280 = vmatprep.mubr.bf16.mxu0 %v2085
      %2281 = vmatmul.mubr.bf16.gmra.mxu0 %v2084
      %v2282 = vpop.f32.mrf.mxu0
      %v2283 = vadd.f32 0.0, %v2282
      %v2284 = vpop.f32.mrf.mxu0
      %v2285 = vpop.f32.mrf.mxu0
      %v2286 = vadd.f32 0.0, %v2285
      %v2287 = vpop.f32.mrf.mxu0
      %2288 = vmatprep.mubr.bf16.mxu0 %v2087
      %2289 = vmatmul.mubr.bf16.gmra.mxu0 %v2086
      %v2290 = vpop.f32.mrf.mxu0
      %v2291 = vadd.f32 0.0, %v2290
      %v2292 = vpop.f32.mrf.mxu0
      %v2293 = vpop.f32.mrf.mxu0
      %v2294 = vadd.f32 0.0, %v2293
      %v2295 = vpop.f32.mrf.mxu0
      %2296 = vmatprep.mubr.bf16.mxu0 %v2089
      %2297 = vmatmul.mubr.bf16.gmra.mxu0 %v2088
      %v2298 = vpop.f32.mrf.mxu0
      %v2299 = vadd.f32 0.0, %v2298
      %v2300 = vpop.f32.mrf.mxu0
      %v2301 = vpop.f32.mrf.mxu0
      %v2302 = vadd.f32 0.0, %v2301
      %v2303 = vpop.f32.mrf.mxu0
      %2304 = vmatprep.mubr.bf16.mxu0 %v2091
      %2305 = vmatmul.mubr.bf16.gmra.mxu0 %v2090
      %v2306 = vpop.f32.mrf.mxu0
      %v2307 = vadd.f32 0.0, %v2306
      %v2308 = vpop.f32.mrf.mxu0
      %v2309 = vpop.f32.mrf.mxu0
      %v2310 = vadd.f32 0.0, %v2309
      %v2311 = vpop.f32.mrf.mxu0
      %2312 = vmatprep.mubr.bf16.mxu0 %v2093
      %2313 = vmatmul.mubr.bf16.gmra.mxu0 %v2092
      %v2314 = vpop.f32.mrf.mxu0
      %v2315 = vadd.f32 0.0, %v2314
      %v2316 = vpop.f32.mrf.mxu0
      %v2317 = vpop.f32.mrf.mxu0
      %v2318 = vadd.f32 0.0, %v2317
      %v2319 = vpop.f32.mrf.mxu0
      %2320 = vmatprep.mubr.bf16.mxu0 %v2095
      %2321 = vmatmul.mubr.bf16.gmra.mxu0 %v2094
      %v2322 = vpop.f32.mrf.mxu0
      %v2323 = vadd.f32 0.0, %v2322
      %v2324 = vpop.f32.mrf.mxu0
      %v2325 = vpop.f32.mrf.mxu0
      %v2326 = vadd.f32 0.0, %v2325
      %v2327 = vpop.f32.mrf.mxu0
      %2328 = vmatprep.mubr.bf16.mxu0 %v2097
      %2329 = vmatmul.mubr.bf16.gmra.mxu0 %v2096
      %v2330 = vpop.f32.mrf.mxu0
      %v2331 = vadd.f32 0.0, %v2330
      %v2332 = vpop.f32.mrf.mxu0
      %v2333 = vpop.f32.mrf.mxu0
      %v2334 = vadd.f32 0.0, %v2333
      %v2335 = vpop.f32.mrf.mxu0
      %2336 = vmatprep.mubr.bf16.mxu0 %v2099
      %2337 = vmatmul.mubr.bf16.gmra.mxu0 %v2098
      %v2338 = vpop.f32.mrf.mxu0
      %v2339 = vadd.f32 0.0, %v2338
      %v2340 = vpop.f32.mrf.mxu0
      %v2341 = vpop.f32.mrf.mxu0
      %v2342 = vadd.f32 0.0, %v2341
      %v2343 = vpop.f32.mrf.mxu0
      %2344 = vmatprep.mubr.bf16.mxu0 %v2101
      %2345 = vmatmul.mubr.bf16.gmra.mxu0 %v2100
      %v2346 = vpop.f32.mrf.mxu0
      %v2347 = vadd.f32 0.0, %v2346
      %v2348 = vpop.f32.mrf.mxu0
      %v2349 = vpop.f32.mrf.mxu0
      %v2350 = vadd.f32 0.0, %v2349
      %v2351 = vpop.f32.mrf.mxu0
      %2352 = vmatprep.mubr.bf16.mxu0 %v2103
      %2353 = vmatmul.mubr.bf16.gmra.mxu0 %v2102
      %v2354 = vpop.f32.mrf.mxu0
      %v2355 = vadd.f32 0.0, %v2354
      %v2356 = vpop.f32.mrf.mxu0
      %v2357 = vpop.f32.mrf.mxu0
      %v2358 = vadd.f32 0.0, %v2357
      %v2359 = vpop.f32.mrf.mxu0
      %2360 = vdwg.mxu0
      %2362 = vset.pattern.permute.xlu0 0
      %2363 = vperm.xlu0 %2362, %v1400
      %v2364 = vpop.permute.xlu0 %2363
      %2367 = vset.pattern.permute.xlu0 0
      %2368 = vperm.xlu0 %2367, %v1402
      %v2369 = vpop.permute.xlu0 %2368
      %2372 = vset.pattern.permute.xlu0 0
      %2373 = vperm.xlu0 %2372, %v1404
      %v2374 = vpop.permute.xlu0 %2373
      %2377 = vset.pattern.permute.xlu0 0
      %2378 = vperm.xlu0 %2377, %v1406
      %v2379 = vpop.permute.xlu0 %2378
      %2382 = vset.pattern.permute.xlu0 0
      %2383 = vperm.xlu0 %2382, %v1408
      %v2384 = vpop.permute.xlu0 %2383
      %2387 = vset.pattern.permute.xlu0 0
      %2388 = vperm.xlu0 %2387, %v1410
      %v2389 = vpop.permute.xlu0 %2388
      %2392 = vset.pattern.permute.xlu0 0
      %2393 = vperm.xlu0 %2392, %v1412
      %v2394 = vpop.permute.xlu0 %2393
      %2397 = vset.pattern.permute.xlu0 0
      %2398 = vperm.xlu0 %2397, %v1414
      %v2399 = vpop.permute.xlu0 %2398
      %2402 = vset.pattern.permute.xlu0 0
      %2403 = vperm.xlu0 %2402, %v1416
      %v2404 = vpop.permute.xlu0 %2403
      %2407 = vset.pattern.permute.xlu0 0
      %2408 = vperm.xlu0 %2407, %v1418
      %v2409 = vpop.permute.xlu0 %2408
      %2412 = vset.pattern.permute.xlu0 0
      %2413 = vperm.xlu0 %2412, %v1420
      %v2414 = vpop.permute.xlu0 %2413
      %2417 = vset.pattern.permute.xlu0 0
      %2418 = vperm.xlu0 %2417, %v1422
      %v2419 = vpop.permute.xlu0 %2418
      %2422 = vset.pattern.permute.xlu0 0
      %2423 = vperm.xlu0 %2422, %v1424
      %v2424 = vpop.permute.xlu0 %2423
      %2427 = vset.pattern.permute.xlu0 0
      %2428 = vperm.xlu0 %2427, %v1426
      %v2429 = vpop.permute.xlu0 %2428
      %2432 = vset.pattern.permute.xlu0 0
      %2433 = vperm.xlu0 %2432, %v1428
      %v2434 = vpop.permute.xlu0 %2433
      %2437 = vset.pattern.permute.xlu0 0
      %2438 = vperm.xlu0 %2437, %v1430
      %v2439 = vpop.permute.xlu0 %2438
      %2442 = vset.pattern.permute.xlu0 0
      %2443 = vperm.xlu0 %2442, %v1432
      %v2444 = vpop.permute.xlu0 %2443
      %2447 = vset.pattern.permute.xlu0 0
      %2448 = vperm.xlu0 %2447, %v1434
      %v2449 = vpop.permute.xlu0 %2448
      %2452 = vset.pattern.permute.xlu0 0
      %2453 = vperm.xlu0 %2452, %v1436
      %v2454 = vpop.permute.xlu0 %2453
      %2457 = vset.pattern.permute.xlu0 0
      %2458 = vperm.xlu0 %2457, %v1438
      %v2459 = vpop.permute.xlu0 %2458
      %2462 = vset.pattern.permute.xlu0 0
      %2463 = vperm.xlu0 %2462, %v1440
      %v2464 = vpop.permute.xlu0 %2463
      %2467 = vset.pattern.permute.xlu0 0
      %2468 = vperm.xlu0 %2467, %v1442
      %v2469 = vpop.permute.xlu0 %2468
      %2472 = vset.pattern.permute.xlu0 0
      %2473 = vperm.xlu0 %2472, %v1444
      %v2474 = vpop.permute.xlu0 %2473
      %2477 = vset.pattern.permute.xlu0 0
      %2478 = vperm.xlu0 %2477, %v1446
      %v2479 = vpop.permute.xlu0 %2478
      %2482 = vset.pattern.permute.xlu0 0
      %2483 = vperm.xlu0 %2482, %v1448
      %v2484 = vpop.permute.xlu0 %2483
      %2487 = vset.pattern.permute.xlu0 0
      %2488 = vperm.xlu0 %2487, %v1450
      %v2489 = vpop.permute.xlu0 %2488
      %2492 = vset.pattern.permute.xlu0 0
      %2493 = vperm.xlu0 %2492, %v1452
      %v2494 = vpop.permute.xlu0 %2493
      %2497 = vset.pattern.permute.xlu0 0
      %2498 = vperm.xlu0 %2497, %v1454
      %v2499 = vpop.permute.xlu0 %2498
      %2502 = vset.pattern.permute.xlu0 0
      %2503 = vperm.xlu0 %2502, %v1456
      %v2504 = vpop.permute.xlu0 %2503
      %2507 = vset.pattern.permute.xlu0 0
      %2508 = vperm.xlu0 %2507, %v1458
      %v2509 = vpop.permute.xlu0 %2508
      %2512 = vset.pattern.permute.xlu0 0
      %2513 = vperm.xlu0 %2512, %v1460
      %v2514 = vpop.permute.xlu0 %2513
      %2517 = vset.pattern.permute.xlu0 0
      %2518 = vperm.xlu0 %2517, %v1462
      %v2519 = vpop.permute.xlu0 %2518
      %v2521 = vld [vmem:[%s321] sm:$0xf]
      %v2522 = vld [vmem:[%s321 + $0x4] sm:$0xf]
      %v2523 = vld [vmem:[%s321 + $0x8] sm:$0xf]
      %v2524 = vld [vmem:[%s321 + $0xc] sm:$0xf]
      %v2525 = vld [vmem:[%s321 + $0x10] sm:$0xf]
      %v2526 = vld [vmem:[%s321 + $0x14] sm:$0xf]
      %v2527 = vld [vmem:[%s321 + $0x18] sm:$0xf]
      %v2528 = vld [vmem:[%s321 + $0x1c] sm:$0xf]
      %v2529 = vld [vmem:[%s321 + $0x20] sm:$0xf]
      %v2530 = vld [vmem:[%s321 + $0x24] sm:$0xf]
      %v2531 = vld [vmem:[%s321 + $0x28] sm:$0xf]
      %v2532 = vld [vmem:[%s321 + $0x2c] sm:$0xf]
      %v2533 = vld [vmem:[%s321 + $0x30] sm:$0xf]
      %v2534 = vld [vmem:[%s321 + $0x34] sm:$0xf]
      %v2535 = vld [vmem:[%s321 + $0x38] sm:$0xf]
      %v2536 = vld [vmem:[%s321 + $0x3c] sm:$0xf]
      %v2537 = vld [vmem:[%s321 + $0x40] sm:$0xf]
      %v2538 = vld [vmem:[%s321 + $0x44] sm:$0xf]
      %v2539 = vld [vmem:[%s321 + $0x48] sm:$0xf]
      %v2540 = vld [vmem:[%s321 + $0x4c] sm:$0xf]
      %v2541 = vld [vmem:[%s321 + $0x50] sm:$0xf]
      %v2542 = vld [vmem:[%s321 + $0x54] sm:$0xf]
      %v2543 = vld [vmem:[%s321 + $0x58] sm:$0xf]
      %v2544 = vld [vmem:[%s321 + $0x5c] sm:$0xf]
      %v2545 = vld [vmem:[%s321 + $0x60] sm:$0xf]
      %v2546 = vld [vmem:[%s321 + $0x64] sm:$0xf]
      %v2547 = vld [vmem:[%s321 + $0x68] sm:$0xf]
      %v2548 = vld [vmem:[%s321 + $0x6c] sm:$0xf]
      %v2549 = vld [vmem:[%s321 + $0x70] sm:$0xf]
      %v2550 = vld [vmem:[%s321 + $0x74] sm:$0xf]
      %v2551 = vld [vmem:[%s321 + $0x78] sm:$0xf]
      %v2552 = vld [vmem:[%s321 + $0x7c] sm:$0xf]
      %v2553 = vld [vmem:[%s332] sm:$0xf]
      %v2554 = vld [vmem:[%s332 + $0x4] sm:$0xf]
      %v2555 = vld [vmem:[%s332 + $0x8] sm:$0xf]
      %v2556 = vld [vmem:[%s332 + $0xc] sm:$0xf]
      %v2557 = vld [vmem:[%s332 + $0x10] sm:$0xf]
      %v2558 = vld [vmem:[%s332 + $0x14] sm:$0xf]
      %v2559 = vld [vmem:[%s332 + $0x18] sm:$0xf]
      %v2560 = vld [vmem:[%s332 + $0x1c] sm:$0xf]
      %v2561 = vld [vmem:[%s332 + $0x20] sm:$0xf]
      %v2562 = vld [vmem:[%s332 + $0x24] sm:$0xf]
      %v2563 = vld [vmem:[%s332 + $0x28] sm:$0xf]
      %v2564 = vld [vmem:[%s332 + $0x2c] sm:$0xf]
      %v2565 = vld [vmem:[%s332 + $0x30] sm:$0xf]
      %v2566 = vld [vmem:[%s332 + $0x34] sm:$0xf]
      %v2567 = vld [vmem:[%s332 + $0x38] sm:$0xf]
      %v2568 = vld [vmem:[%s332 + $0x3c] sm:$0xf]
      %v2569 = vld [vmem:[%s332 + $0x40] sm:$0xf]
      %v2570 = vld [vmem:[%s332 + $0x44] sm:$0xf]
      %v2571 = vld [vmem:[%s332 + $0x48] sm:$0xf]
      %v2572 = vld [vmem:[%s332 + $0x4c] sm:$0xf]
      %v2573 = vld [vmem:[%s332 + $0x50] sm:$0xf]
      %v2574 = vld [vmem:[%s332 + $0x54] sm:$0xf]
      %v2575 = vld [vmem:[%s332 + $0x58] sm:$0xf]
      %v2576 = vld [vmem:[%s332 + $0x5c] sm:$0xf]
      %v2577 = vld [vmem:[%s332 + $0x60] sm:$0xf]
      %v2578 = vld [vmem:[%s332 + $0x64] sm:$0xf]
      %v2579 = vld [vmem:[%s332 + $0x68] sm:$0xf]
      %v2580 = vld [vmem:[%s332 + $0x6c] sm:$0xf]
      %v2581 = vld [vmem:[%s332 + $0x70] sm:$0xf]
      %v2582 = vld [vmem:[%s332 + $0x74] sm:$0xf]
      %v2583 = vld [vmem:[%s332 + $0x78] sm:$0xf]
      %v2584 = vld [vmem:[%s332 + $0x7c] sm:$0xf]
      %v2585 = vld [vmem:[%s343] sm:$0xf]
      %v2586 = vld [vmem:[%s343 + $0x4] sm:$0xf]
      %v2587 = vld [vmem:[%s343 + $0x8] sm:$0xf]
      %v2588 = vld [vmem:[%s343 + $0xc] sm:$0xf]
      %v2589 = vld [vmem:[%s343 + $0x10] sm:$0xf]
      %v2590 = vld [vmem:[%s343 + $0x14] sm:$0xf]
      %v2591 = vld [vmem:[%s343 + $0x18] sm:$0xf]
      %v2592 = vld [vmem:[%s343 + $0x1c] sm:$0xf]
      %v2593 = vld [vmem:[%s343 + $0x20] sm:$0xf]
      %v2594 = vld [vmem:[%s343 + $0x24] sm:$0xf]
      %v2595 = vld [vmem:[%s343 + $0x28] sm:$0xf]
      %v2596 = vld [vmem:[%s343 + $0x2c] sm:$0xf]
      %v2597 = vld [vmem:[%s343 + $0x30] sm:$0xf]
      %v2598 = vld [vmem:[%s343 + $0x34] sm:$0xf]
      %v2599 = vld [vmem:[%s343 + $0x38] sm:$0xf]
      %v2600 = vld [vmem:[%s343 + $0x3c] sm:$0xf]
      %v2601 = vld [vmem:[%s343 + $0x40] sm:$0xf]
      %v2602 = vld [vmem:[%s343 + $0x44] sm:$0xf]
      %v2603 = vld [vmem:[%s343 + $0x48] sm:$0xf]
      %v2604 = vld [vmem:[%s343 + $0x4c] sm:$0xf]
      %v2605 = vld [vmem:[%s343 + $0x50] sm:$0xf]
      %v2606 = vld [vmem:[%s343 + $0x54] sm:$0xf]
      %v2607 = vld [vmem:[%s343 + $0x58] sm:$0xf]
      %v2608 = vld [vmem:[%s343 + $0x5c] sm:$0xf]
      %v2609 = vld [vmem:[%s343 + $0x60] sm:$0xf]
      %v2610 = vld [vmem:[%s343 + $0x64] sm:$0xf]
      %v2611 = vld [vmem:[%s343 + $0x68] sm:$0xf]
      %v2612 = vld [vmem:[%s343 + $0x6c] sm:$0xf]
      %v2613 = vld [vmem:[%s343 + $0x70] sm:$0xf]
      %v2614 = vld [vmem:[%s343 + $0x74] sm:$0xf]
      %v2615 = vld [vmem:[%s343 + $0x78] sm:$0xf]
      %v2616 = vld [vmem:[%s343 + $0x7c] sm:$0xf]
      %v2649 = vunpack.c.l.b16 %v2521
      %v2650 = vunpack.c.l.b16 %v2522
      %v2651 = vunpack.c.l.b16 %v2523
      %v2652 = vunpack.c.l.b16 %v2524
      %v2653 = vunpack.c.l.b16 %v2525
      %v2654 = vunpack.c.l.b16 %v2526
      %v2655 = vunpack.c.l.b16 %v2527
      %v2656 = vunpack.c.l.b16 %v2528
      %v2657 = vunpack.c.l.b16 %v2529
      %v2658 = vunpack.c.l.b16 %v2530
      %v2659 = vunpack.c.l.b16 %v2531
      %v2660 = vunpack.c.l.b16 %v2532
      %v2661 = vunpack.c.l.b16 %v2533
      %v2662 = vunpack.c.l.b16 %v2534
      %v2663 = vunpack.c.l.b16 %v2535
      %v2664 = vunpack.c.l.b16 %v2536
      %v2665 = vunpack.c.l.b16 %v2537
      %v2666 = vunpack.c.l.b16 %v2538
      %v2667 = vunpack.c.l.b16 %v2539
      %v2668 = vunpack.c.l.b16 %v2540
      %v2669 = vunpack.c.l.b16 %v2541
      %v2670 = vunpack.c.l.b16 %v2542
      %v2671 = vunpack.c.l.b16 %v2543
      %v2672 = vunpack.c.l.b16 %v2544
      %v2673 = vunpack.c.l.b16 %v2545
      %v2674 = vunpack.c.l.b16 %v2546
      %v2675 = vunpack.c.l.b16 %v2547
      %v2676 = vunpack.c.l.b16 %v2548
      %v2677 = vunpack.c.l.b16 %v2549
      %v2678 = vunpack.c.l.b16 %v2550
      %v2679 = vunpack.c.l.b16 %v2551
      %v2680 = vunpack.c.l.b16 %v2552
      %v2681 = vpack.c.b16 %v2650, %v2649
      %v2682 = vpack.c.b16 %v2652, %v2651
      %v2683 = vpack.c.b16 %v2654, %v2653
      %v2684 = vpack.c.b16 %v2656, %v2655
      %v2685 = vpack.c.b16 %v2658, %v2657
      %v2686 = vpack.c.b16 %v2660, %v2659
      %v2687 = vpack.c.b16 %v2662, %v2661
      %v2688 = vpack.c.b16 %v2664, %v2663
      %v2689 = vpack.c.b16 %v2666, %v2665
      %v2690 = vpack.c.b16 %v2668, %v2667
      %v2691 = vpack.c.b16 %v2670, %v2669
      %v2692 = vpack.c.b16 %v2672, %v2671
      %v2693 = vpack.c.b16 %v2674, %v2673
      %v2694 = vpack.c.b16 %v2676, %v2675
      %v2695 = vpack.c.b16 %v2678, %v2677
      %v2696 = vpack.c.b16 %v2680, %v2679
      %2697 = vrot.lane.b32.xlu0 %v2681, 96
      %v2698 = vpop.permute.xlu0 %2697
      %2699 = vrot.lane.b32.xlu0 %v2682, 96
      %v2700 = vpop.permute.xlu0 %2699
      %2701 = vrot.lane.b32.xlu0 %v2683, 96
      %v2702 = vpop.permute.xlu0 %2701
      %2703 = vrot.lane.b32.xlu0 %v2684, 96
      %v2704 = vpop.permute.xlu0 %2703
      %2705 = vrot.lane.b32.xlu0 %v2685, 96
      %v2706 = vpop.permute.xlu0 %2705
      %2707 = vrot.lane.b32.xlu0 %v2686, 96
      %v2708 = vpop.permute.xlu0 %2707
      %2709 = vrot.lane.b32.xlu0 %v2687, 96
      %v2710 = vpop.permute.xlu0 %2709
      %2711 = vrot.lane.b32.xlu0 %v2688, 96
      %v2712 = vpop.permute.xlu0 %2711
      %2713 = vrot.lane.b32.xlu0 %v2689, 96
      %v2714 = vpop.permute.xlu0 %2713
      %2715 = vrot.lane.b32.xlu0 %v2690, 96
      %v2716 = vpop.permute.xlu0 %2715
      %2717 = vrot.lane.b32.xlu0 %v2691, 96
      %v2718 = vpop.permute.xlu0 %2717
      %2719 = vrot.lane.b32.xlu0 %v2692, 96
      %v2720 = vpop.permute.xlu0 %2719
      %2721 = vrot.lane.b32.xlu0 %v2693, 96
      %v2722 = vpop.permute.xlu0 %2721
      %2723 = vrot.lane.b32.xlu0 %v2694, 96
      %v2724 = vpop.permute.xlu0 %2723
      %2725 = vrot.lane.b32.xlu0 %v2695, 96
      %v2726 = vpop.permute.xlu0 %2725
      %2727 = vrot.lane.b32.xlu0 %v2696, 96
      %v2728 = vpop.permute.xlu0 %2727
      %v2761 = vunpack.c.l.b16 %v2553
      %v2762 = vunpack.c.l.b16 %v2554
      %v2763 = vunpack.c.l.b16 %v2555
      %v2764 = vunpack.c.l.b16 %v2556
      %v2765 = vunpack.c.l.b16 %v2557
      %v2766 = vunpack.c.l.b16 %v2558
      %v2767 = vunpack.c.l.b16 %v2559
      %v2768 = vunpack.c.l.b16 %v2560
      %v2769 = vunpack.c.l.b16 %v2561
      %v2770 = vunpack.c.l.b16 %v2562
      %v2771 = vunpack.c.l.b16 %v2563
      %v2772 = vunpack.c.l.b16 %v2564
      %v2773 = vunpack.c.l.b16 %v2565
      %v2774 = vunpack.c.l.b16 %v2566
      %v2775 = vunpack.c.l.b16 %v2567
      %v2776 = vunpack.c.l.b16 %v2568
      %v2777 = vunpack.c.l.b16 %v2569
      %v2778 = vunpack.c.l.b16 %v2570
      %v2779 = vunpack.c.l.b16 %v2571
      %v2780 = vunpack.c.l.b16 %v2572
      %v2781 = vunpack.c.l.b16 %v2573
      %v2782 = vunpack.c.l.b16 %v2574
      %v2783 = vunpack.c.l.b16 %v2575
      %v2784 = vunpack.c.l.b16 %v2576
      %v2785 = vunpack.c.l.b16 %v2577
      %v2786 = vunpack.c.l.b16 %v2578
      %v2787 = vunpack.c.l.b16 %v2579
      %v2788 = vunpack.c.l.b16 %v2580
      %v2789 = vunpack.c.l.b16 %v2581
      %v2790 = vunpack.c.l.b16 %v2582
      %v2791 = vunpack.c.l.b16 %v2583
      %v2792 = vunpack.c.l.b16 %v2584
      %v2793 = vpack.c.b16 %v2762, %v2761
      %v2794 = vpack.c.b16 %v2764, %v2763
      %v2795 = vpack.c.b16 %v2766, %v2765
      %v2796 = vpack.c.b16 %v2768, %v2767
      %v2797 = vpack.c.b16 %v2770, %v2769
      %v2798 = vpack.c.b16 %v2772, %v2771
      %v2799 = vpack.c.b16 %v2774, %v2773
      %v2800 = vpack.c.b16 %v2776, %v2775
      %v2801 = vpack.c.b16 %v2778, %v2777
      %v2802 = vpack.c.b16 %v2780, %v2779
      %v2803 = vpack.c.b16 %v2782, %v2781
      %v2804 = vpack.c.b16 %v2784, %v2783
      %v2805 = vpack.c.b16 %v2786, %v2785
      %v2806 = vpack.c.b16 %v2788, %v2787
      %v2807 = vpack.c.b16 %v2790, %v2789
      %v2808 = vpack.c.b16 %v2792, %v2791
      %2809 = vrot.lane.b32.xlu0 %v2793, 96
      %v2810 = vpop.permute.xlu0 %2809
      %2811 = vrot.lane.b32.xlu0 %v2794, 96
      %v2812 = vpop.permute.xlu0 %2811
      %2813 = vrot.lane.b32.xlu0 %v2795, 96
      %v2814 = vpop.permute.xlu0 %2813
      %2815 = vrot.lane.b32.xlu0 %v2796, 96
      %v2816 = vpop.permute.xlu0 %2815
      %2817 = vrot.lane.b32.xlu0 %v2797, 96
      %v2818 = vpop.permute.xlu0 %2817
      %2819 = vrot.lane.b32.xlu0 %v2798, 96
      %v2820 = vpop.permute.xlu0 %2819
      %2821 = vrot.lane.b32.xlu0 %v2799, 96
      %v2822 = vpop.permute.xlu0 %2821
      %2823 = vrot.lane.b32.xlu0 %v2800, 96
      %v2824 = vpop.permute.xlu0 %2823
      %2825 = vrot.lane.b32.xlu0 %v2801, 96
      %v2826 = vpop.permute.xlu0 %2825
      %2827 = vrot.lane.b32.xlu0 %v2802, 96
      %v2828 = vpop.permute.xlu0 %2827
      %2829 = vrot.lane.b32.xlu0 %v2803, 96
      %v2830 = vpop.permute.xlu0 %2829
      %2831 = vrot.lane.b32.xlu0 %v2804, 96
      %v2832 = vpop.permute.xlu0 %2831
      %2833 = vrot.lane.b32.xlu0 %v2805, 96
      %v2834 = vpop.permute.xlu0 %2833
      %2835 = vrot.lane.b32.xlu0 %v2806, 96
      %v2836 = vpop.permute.xlu0 %2835
      %2837 = vrot.lane.b32.xlu0 %v2807, 96
      %v2838 = vpop.permute.xlu0 %2837
      %2839 = vrot.lane.b32.xlu0 %v2808, 96
      %v2840 = vpop.permute.xlu0 %2839
      %v2842 = vsel %vm917, %v2698, 0
      %v2845 = vsel %vm917, %v2700, 0
      %v2848 = vsel %vm917, %v2702, 0
      %v2851 = vsel %vm917, %v2704, 0
      %v2854 = vsel %vm917, %v2706, 0
      %v2857 = vsel %vm917, %v2708, 0
      %v2860 = vsel %vm917, %v2710, 0
      %v2863 = vsel %vm917, %v2712, 0
      %v2866 = vsel %vm917, %v2714, 0
      %v2869 = vsel %vm917, %v2716, 0
      %v2872 = vsel %vm917, %v2718, 0
      %v2875 = vsel %vm917, %v2720, 0
      %v2878 = vsel %vm917, %v2722, 0
      %v2881 = vsel %vm917, %v2724, 0
      %v2884 = vsel %vm917, %v2726, 0
      %v2887 = vsel %vm917, %v2728, 0
      %v2890 = vsel %vm917, %v2810, 0
      %v2893 = vsel %vm917, %v2812, 0
      %v2896 = vsel %vm917, %v2814, 0
      %v2899 = vsel %vm917, %v2816, 0
      %v2902 = vsel %vm917, %v2818, 0
      %v2905 = vsel %vm917, %v2820, 0
      %v2908 = vsel %vm917, %v2822, 0
      %v2911 = vsel %vm917, %v2824, 0
      %v2914 = vsel %vm917, %v2826, 0
      %v2917 = vsel %vm917, %v2828, 0
      %v2920 = vsel %vm917, %v2830, 0
      %v2923 = vsel %vm917, %v2832, 0
      %v2926 = vsel %vm917, %v2834, 0
      %v2929 = vsel %vm917, %v2836, 0
      %v2932 = vsel %vm917, %v2838, 0
      %v2935 = vsel %vm917, %v2840, 0
      %2937 = vmatprep.subr.bf16.mxu0 0
      %2938 = vmatpush1.bf16.xpose.msra.mxu0 %v2911
      %2939 = vmatprep.subr.bf16.mxu0 0
      %2940 = vmatpush1.bf16.xpose.msra.mxu0 %v2908
      %2941 = vmatprep.subr.bf16.mxu0 0
      %2942 = vmatpush1.bf16.xpose.msra.mxu0 %v2905
      %2943 = vmatprep.subr.bf16.mxu0 0
      %2944 = vmatpush1.bf16.xpose.msra.mxu0 %v2902
      %2945 = vmatprep.subr.bf16.mxu0 0
      %2946 = vmatpush1.bf16.xpose.msra.mxu0 %v2899
      %2947 = vmatprep.subr.bf16.mxu0 0
      %2948 = vmatpush1.bf16.xpose.msra.mxu0 %v2896
      %2949 = vmatprep.subr.bf16.mxu0 0
      %2950 = vmatpush1.bf16.xpose.msra.mxu0 %v2893
      %2951 = vmatprep.subr.bf16.mxu0 0
      %2952 = vmatpush1.bf16.xpose.msra.mxu0 %v2890
      %2953 = vmatprep.subr.bf16.mxu0 0
      %2954 = vmatpush2.bf16.xpose.msra.mxu0 %v2935
      %2955 = vmatprep.subr.bf16.mxu0 0
      %2956 = vmatpush2.bf16.xpose.msra.mxu0 %v2932
      %2957 = vmatprep.subr.bf16.mxu0 0
      %2958 = vmatpush2.bf16.xpose.msra.mxu0 %v2929
      %2959 = vmatprep.subr.bf16.mxu0 0
      %2960 = vmatpush2.bf16.xpose.msra.mxu0 %v2926
      %2961 = vmatprep.subr.bf16.mxu0 0
      %2962 = vmatpush2.bf16.xpose.msra.mxu0 %v2923
      %2963 = vmatprep.subr.bf16.mxu0 0
      %2964 = vmatpush2.bf16.xpose.msra.mxu0 %v2920
      %2965 = vmatprep.subr.bf16.mxu0 0
      %2966 = vmatpush2.bf16.xpose.msra.mxu0 %v2917
      %2967 = vmatprep.subr.bf16.mxu0 0
      %2968 = vmatpush2.bf16.xpose.msra.mxu0 %v2914
      %2969 = vmatprep.mubr.bf16.mxu0 0
      %2970 = vmatmul.mubr.bf16.gmra.mxu0 %v2842
      %v2971 = vpop.f32.mrf.mxu0
      %v2972 = vadd.f32 %v750, %v2971
      %v2973 = vpop.f32.mrf.mxu0
      %v2974 = vadd.f32 %v754, %v2973
      %v2975 = vpop.f32.mrf.mxu0
      %v2976 = vadd.f32 %v750, %v2975
      %v2977 = vpop.f32.mrf.mxu0
      %v2978 = vadd.f32 %v754, %v2977
      %2979 = vmatprep.mubr.bf16.mxu0 0
      %2980 = vmatmul.mubr.bf16.gmra.mxu0 %v2845
      %v2981 = vpop.f32.mrf.mxu0
      %v2982 = vadd.f32 %v750, %v2981
      %v2983 = vpop.f32.mrf.mxu0
      %v2984 = vadd.f32 %v754, %v2983
      %v2985 = vpop.f32.mrf.mxu0
      %v2986 = vadd.f32 %v750, %v2985
      %v2987 = vpop.f32.mrf.mxu0
      %v2988 = vadd.f32 %v754, %v2987
      %2989 = vmatprep.mubr.bf16.mxu0 0
      %2990 = vmatmul.mubr.bf16.gmra.mxu0 %v2848
      %v2991 = vpop.f32.mrf.mxu0
      %v2992 = vadd.f32 %v750, %v2991
      %v2993 = vpop.f32.mrf.mxu0
      %v2994 = vadd.f32 %v754, %v2993
      %v2995 = vpop.f32.mrf.mxu0
      %v2996 = vadd.f32 %v750, %v2995
      %v2997 = vpop.f32.mrf.mxu0
      %v2998 = vadd.f32 %v754, %v2997
      %2999 = vmatprep.mubr.bf16.mxu0 0
      %3000 = vmatmul.mubr.bf16.gmra.mxu0 %v2851
      %v3001 = vpop.f32.mrf.mxu0
      %v3002 = vadd.f32 %v750, %v3001
      %v3003 = vpop.f32.mrf.mxu0
      %v3004 = vadd.f32 %v754, %v3003
      %v3005 = vpop.f32.mrf.mxu0
      %v3006 = vadd.f32 %v750, %v3005
      %v3007 = vpop.f32.mrf.mxu0
      %v3008 = vadd.f32 %v754, %v3007
      %3009 = vmatprep.mubr.bf16.mxu0 0
      %3010 = vmatmul.mubr.bf16.gmra.mxu0 %v2854
      %v3011 = vpop.f32.mrf.mxu0
      %v3012 = vadd.f32 %v750, %v3011
      %v3013 = vpop.f32.mrf.mxu0
      %v3014 = vadd.f32 %v754, %v3013
      %v3015 = vpop.f32.mrf.mxu0
      %v3016 = vadd.f32 %v750, %v3015
      %v3017 = vpop.f32.mrf.mxu0
      %v3018 = vadd.f32 %v754, %v3017
      %3019 = vmatprep.mubr.bf16.mxu0 0
      %3020 = vmatmul.mubr.bf16.gmra.mxu0 %v2857
      %v3021 = vpop.f32.mrf.mxu0
      %v3022 = vadd.f32 %v750, %v3021
      %v3023 = vpop.f32.mrf.mxu0
      %v3024 = vadd.f32 %v754, %v3023
      %v3025 = vpop.f32.mrf.mxu0
      %v3026 = vadd.f32 %v750, %v3025
      %v3027 = vpop.f32.mrf.mxu0
      %v3028 = vadd.f32 %v754, %v3027
      %3029 = vmatprep.mubr.bf16.mxu0 0
      %3030 = vmatmul.mubr.bf16.gmra.mxu0 %v2860
      %v3031 = vpop.f32.mrf.mxu0
      %v3032 = vadd.f32 %v750, %v3031
      %v3033 = vpop.f32.mrf.mxu0
      %v3034 = vadd.f32 %v754, %v3033
      %v3035 = vpop.f32.mrf.mxu0
      %v3036 = vadd.f32 %v750, %v3035
      %v3037 = vpop.f32.mrf.mxu0
      %v3038 = vadd.f32 %v754, %v3037
      %3039 = vmatprep.mubr.bf16.mxu0 0
      %3040 = vmatmul.mubr.bf16.gmra.mxu0 %v2863
      %v3041 = vpop.f32.mrf.mxu0
      %v3042 = vadd.f32 %v750, %v3041
      %v3043 = vpop.f32.mrf.mxu0
      %v3044 = vadd.f32 %v754, %v3043
      %v3045 = vpop.f32.mrf.mxu0
      %v3046 = vadd.f32 %v750, %v3045
      %v3047 = vpop.f32.mrf.mxu0
      %v3048 = vadd.f32 %v754, %v3047
      %3049 = vmatprep.mubr.bf16.mxu0 0
      %3050 = vmatmul.mubr.bf16.gmra.mxu0 %v2866
      %v3051 = vpop.f32.mrf.mxu0
      %v3052 = vadd.f32 %v750, %v3051
      %v3053 = vpop.f32.mrf.mxu0
      %v3054 = vadd.f32 %v754, %v3053
      %v3055 = vpop.f32.mrf.mxu0
      %v3056 = vadd.f32 %v750, %v3055
      %v3057 = vpop.f32.mrf.mxu0
      %v3058 = vadd.f32 %v754, %v3057
      %3059 = vmatprep.mubr.bf16.mxu0 0
      %3060 = vmatmul.mubr.bf16.gmra.mxu0 %v2869
      %v3061 = vpop.f32.mrf.mxu0
      %v3062 = vadd.f32 %v750, %v3061
      %v3063 = vpop.f32.mrf.mxu0
      %v3064 = vadd.f32 %v754, %v3063
      %v3065 = vpop.f32.mrf.mxu0
      %v3066 = vadd.f32 %v750, %v3065
      %v3067 = vpop.f32.mrf.mxu0
      %v3068 = vadd.f32 %v754, %v3067
      %3069 = vmatprep.mubr.bf16.mxu0 0
      %3070 = vmatmul.mubr.bf16.gmra.mxu0 %v2872
      %v3071 = vpop.f32.mrf.mxu0
      %v3072 = vadd.f32 %v750, %v3071
      %v3073 = vpop.f32.mrf.mxu0
      %v3074 = vadd.f32 %v754, %v3073
      %v3075 = vpop.f32.mrf.mxu0
      %v3076 = vadd.f32 %v750, %v3075
      %v3077 = vpop.f32.mrf.mxu0
      %v3078 = vadd.f32 %v754, %v3077
      %3079 = vmatprep.mubr.bf16.mxu0 0
      %3080 = vmatmul.mubr.bf16.gmra.mxu0 %v2875
      %v3081 = vpop.f32.mrf.mxu0
      %v3082 = vadd.f32 %v750, %v3081
      %v3083 = vpop.f32.mrf.mxu0
      %v3084 = vadd.f32 %v754, %v3083
      %v3085 = vpop.f32.mrf.mxu0
      %v3086 = vadd.f32 %v750, %v3085
      %v3087 = vpop.f32.mrf.mxu0
      %v3088 = vadd.f32 %v754, %v3087
      %3089 = vmatprep.mubr.bf16.mxu0 0
      %3090 = vmatmul.mubr.bf16.gmra.mxu0 %v2878
      %v3091 = vpop.f32.mrf.mxu0
      %v3092 = vadd.f32 %v750, %v3091
      %v3093 = vpop.f32.mrf.mxu0
      %v3094 = vadd.f32 %v754, %v3093
      %v3095 = vpop.f32.mrf.mxu0
      %v3096 = vadd.f32 %v750, %v3095
      %v3097 = vpop.f32.mrf.mxu0
      %v3098 = vadd.f32 %v754, %v3097
      %3099 = vmatprep.mubr.bf16.mxu0 0
      %3100 = vmatmul.mubr.bf16.gmra.mxu0 %v2881
      %v3101 = vpop.f32.mrf.mxu0
      %v3102 = vadd.f32 %v750, %v3101
      %v3103 = vpop.f32.mrf.mxu0
      %v3104 = vadd.f32 %v754, %v3103
      %v3105 = vpop.f32.mrf.mxu0
      %v3106 = vadd.f32 %v750, %v3105
      %v3107 = vpop.f32.mrf.mxu0
      %v3108 = vadd.f32 %v754, %v3107
      %3109 = vmatprep.mubr.bf16.mxu0 0
      %3110 = vmatmul.mubr.bf16.gmra.mxu0 %v2884
      %v3111 = vpop.f32.mrf.mxu0
      %v3112 = vadd.f32 %v750, %v3111
      %v3113 = vpop.f32.mrf.mxu0
      %v3114 = vadd.f32 %v754, %v3113
      %v3115 = vpop.f32.mrf.mxu0
      %v3116 = vadd.f32 %v750, %v3115
      %v3117 = vpop.f32.mrf.mxu0
      %v3118 = vadd.f32 %v754, %v3117
      %3119 = vmatprep.mubr.bf16.mxu0 0
      %3120 = vmatmul.mubr.bf16.gmra.mxu0 %v2887
      %v3121 = vpop.f32.mrf.mxu0
      %v3122 = vadd.f32 %v750, %v3121
      %v3123 = vpop.f32.mrf.mxu0
      %v3124 = vadd.f32 %v754, %v3123
      %v3125 = vpop.f32.mrf.mxu0
      %v3126 = vadd.f32 %v750, %v3125
      %v3127 = vpop.f32.mrf.mxu0
      %v3128 = vadd.f32 %v754, %v3127
      %3129 = vdwg.mxu0
      %s3130 = scalar_lea.vmem [#allocation2], 256
      %v3131 = vld [vmem:[%s3130] sm:$0xff]
      %v3132 = vld [vmem:[%s3130 + $0x8] sm:$0xff]
      %v3133 = vld [vmem:[%s3130 + $0x10] sm:$0xff]
      %v3134 = vld [vmem:[%s3130 + $0x18] sm:$0xff]
      %v3135 = vld [vmem:[%s3130 + $0x20] sm:$0xff]
      %v3136 = vld [vmem:[%s3130 + $0x28] sm:$0xff]
      %v3137 = vld [vmem:[%s3130 + $0x30] sm:$0xff]
      %v3138 = vld [vmem:[%s3130 + $0x38] sm:$0xff]
      %v3139 = vld [vmem:[%s3130 + $0x40] sm:$0xff]
      %v3140 = vld [vmem:[%s3130 + $0x48] sm:$0xff]
      %v3141 = vld [vmem:[%s3130 + $0x50] sm:$0xff]
      %v3142 = vld [vmem:[%s3130 + $0x58] sm:$0xff]
      %v3143 = vld [vmem:[%s3130 + $0x60] sm:$0xff]
      %v3144 = vld [vmem:[%s3130 + $0x68] sm:$0xff]
      %v3145 = vld [vmem:[%s3130 + $0x70] sm:$0xff]
      %v3146 = vld [vmem:[%s3130 + $0x78] sm:$0xff]
      %v3147 = vld [vmem:[%s3130 + $0x80] sm:$0xff]
      %v3148 = vld [vmem:[%s3130 + $0x88] sm:$0xff]
      %v3149 = vld [vmem:[%s3130 + $0x90] sm:$0xff]
      %v3150 = vld [vmem:[%s3130 + $0x98] sm:$0xff]
      %v3151 = vld [vmem:[%s3130 + $0xa0] sm:$0xff]
      %v3152 = vld [vmem:[%s3130 + $0xa8] sm:$0xff]
      %v3153 = vld [vmem:[%s3130 + $0xb0] sm:$0xff]
      %v3154 = vld [vmem:[%s3130 + $0xb8] sm:$0xff]
      %v3155 = vld [vmem:[%s3130 + $0xc0] sm:$0xff]
      %v3156 = vld [vmem:[%s3130 + $0xc8] sm:$0xff]
      %v3157 = vld [vmem:[%s3130 + $0xd0] sm:$0xff]
      %v3158 = vld [vmem:[%s3130 + $0xd8] sm:$0xff]
      %v3159 = vld [vmem:[%s3130 + $0xe0] sm:$0xff]
      %v3160 = vld [vmem:[%s3130 + $0xe8] sm:$0xff]
      %v3161 = vld [vmem:[%s3130 + $0xf0] sm:$0xff]
      %v3162 = vld [vmem:[%s3130 + $0xf8] sm:$0xff]
      %v3163 = vmax.f32 %v2972, %v2974
      %3164 = vmax.xlane.f32.xlu0 %v3163
      %v3165 = vpop.xlane.xlu0 %3164
      %v3166 = vmax.f32 %v2976, %v2978
      %3167 = vmax.xlane.f32.xlu0 %v3166
      %v3168 = vpop.xlane.xlu0 %3167
      %v3169 = vmax.f32 %v2982, %v2984
      %3170 = vmax.xlane.f32.xlu0 %v3169
      %v3171 = vpop.xlane.xlu0 %3170
      %v3172 = vmax.f32 %v2986, %v2988
      %3173 = vmax.xlane.f32.xlu0 %v3172
      %v3174 = vpop.xlane.xlu0 %3173
      %v3175 = vmax.f32 %v2992, %v2994
      %3176 = vmax.xlane.f32.xlu0 %v3175
      %v3177 = vpop.xlane.xlu0 %3176
      %v3178 = vmax.f32 %v2996, %v2998
      %3179 = vmax.xlane.f32.xlu0 %v3178
      %v3180 = vpop.xlane.xlu0 %3179
      %v3181 = vmax.f32 %v3002, %v3004
      %3182 = vmax.xlane.f32.xlu0 %v3181
      %v3183 = vpop.xlane.xlu0 %3182
      %v3184 = vmax.f32 %v3006, %v3008
      %3185 = vmax.xlane.f32.xlu0 %v3184
      %v3186 = vpop.xlane.xlu0 %3185
      %v3187 = vmax.f32 %v3012, %v3014
      %3188 = vmax.xlane.f32.xlu0 %v3187
      %v3189 = vpop.xlane.xlu0 %3188
      %v3190 = vmax.f32 %v3016, %v3018
      %3191 = vmax.xlane.f32.xlu0 %v3190
      %v3192 = vpop.xlane.xlu0 %3191
      %v3193 = vmax.f32 %v3022, %v3024
      %3194 = vmax.xlane.f32.xlu0 %v3193
      %v3195 = vpop.xlane.xlu0 %3194
      %v3196 = vmax.f32 %v3026, %v3028
      %3197 = vmax.xlane.f32.xlu0 %v3196
      %v3198 = vpop.xlane.xlu0 %3197
      %v3199 = vmax.f32 %v3032, %v3034
      %3200 = vmax.xlane.f32.xlu0 %v3199
      %v3201 = vpop.xlane.xlu0 %3200
      %v3202 = vmax.f32 %v3036, %v3038
      %3203 = vmax.xlane.f32.xlu0 %v3202
      %v3204 = vpop.xlane.xlu0 %3203
      %v3205 = vmax.f32 %v3042, %v3044
      %3206 = vmax.xlane.f32.xlu0 %v3205
      %v3207 = vpop.xlane.xlu0 %3206
      %v3208 = vmax.f32 %v3046, %v3048
      %3209 = vmax.xlane.f32.xlu0 %v3208
      %v3210 = vpop.xlane.xlu0 %3209
      %v3211 = vmax.f32 %v3052, %v3054
      %3212 = vmax.xlane.f32.xlu0 %v3211
      %v3213 = vpop.xlane.xlu0 %3212
      %v3214 = vmax.f32 %v3056, %v3058
      %3215 = vmax.xlane.f32.xlu0 %v3214
      %v3216 = vpop.xlane.xlu0 %3215
      %v3217 = vmax.f32 %v3062, %v3064
      %3218 = vmax.xlane.f32.xlu0 %v3217
      %v3219 = vpop.xlane.xlu0 %3218
      %v3220 = vmax.f32 %v3066, %v3068
      %3221 = vmax.xlane.f32.xlu0 %v3220
      %v3222 = vpop.xlane.xlu0 %3221
      %v3223 = vmax.f32 %v3072, %v3074
      %3224 = vmax.xlane.f32.xlu0 %v3223
      %v3225 = vpop.xlane.xlu0 %3224
      %v3226 = vmax.f32 %v3076, %v3078
      %3227 = vmax.xlane.f32.xlu0 %v3226
      %v3228 = vpop.xlane.xlu0 %3227
      %v3229 = vmax.f32 %v3082, %v3084
      %3230 = vmax.xlane.f32.xlu0 %v3229
      %v3231 = vpop.xlane.xlu0 %3230
      %v3232 = vmax.f32 %v3086, %v3088
      %3233 = vmax.xlane.f32.xlu0 %v3232
      %v3234 = vpop.xlane.xlu0 %3233
      %v3235 = vmax.f32 %v3092, %v3094
      %3236 = vmax.xlane.f32.xlu0 %v3235
      %v3237 = vpop.xlane.xlu0 %3236
      %v3238 = vmax.f32 %v3096, %v3098
      %3239 = vmax.xlane.f32.xlu0 %v3238
      %v3240 = vpop.xlane.xlu0 %3239
      %v3241 = vmax.f32 %v3102, %v3104
      %3242 = vmax.xlane.f32.xlu0 %v3241
      %v3243 = vpop.xlane.xlu0 %3242
      %v3244 = vmax.f32 %v3106, %v3108
      %3245 = vmax.xlane.f32.xlu0 %v3244
      %v3246 = vpop.xlane.xlu0 %3245
      %v3247 = vmax.f32 %v3112, %v3114
      %3248 = vmax.xlane.f32.xlu0 %v3247
      %v3249 = vpop.xlane.xlu0 %3248
      %v3250 = vmax.f32 %v3116, %v3118
      %3251 = vmax.xlane.f32.xlu0 %v3250
      %v3252 = vpop.xlane.xlu0 %3251
      %v3253 = vmax.f32 %v3122, %v3124
      %3254 = vmax.xlane.f32.xlu0 %v3253
      %v3255 = vpop.xlane.xlu0 %3254
      %v3256 = vmax.f32 %v3126, %v3128
      %3257 = vmax.xlane.f32.xlu0 %v3256
      %v3258 = vpop.xlane.xlu0 %3257
      %v3259 = vmax.f32 %v3131, %v3165
      %v3260 = vmax.f32 %v3132, %v3168
      %v3261 = vmax.f32 %v3133, %v3171
      %v3262 = vmax.f32 %v3134, %v3174
      %v3263 = vmax.f32 %v3135, %v3177
      %v3264 = vmax.f32 %v3136, %v3180
      %v3265 = vmax.f32 %v3137, %v3183
      %v3266 = vmax.f32 %v3138, %v3186
      %v3267 = vmax.f32 %v3139, %v3189
      %v3268 = vmax.f32 %v3140, %v3192
      %v3269 = vmax.f32 %v3141, %v3195
      %v3270 = vmax.f32 %v3142, %v3198
      %v3271 = vmax.f32 %v3143, %v3201
      %v3272 = vmax.f32 %v3144, %v3204
      %v3273 = vmax.f32 %v3145, %v3207
      %v3274 = vmax.f32 %v3146, %v3210
      %v3275 = vmax.f32 %v3147, %v3213
      %v3276 = vmax.f32 %v3148, %v3216
      %v3277 = vmax.f32 %v3149, %v3219
      %v3278 = vmax.f32 %v3150, %v3222
      %v3279 = vmax.f32 %v3151, %v3225
      %v3280 = vmax.f32 %v3152, %v3228
      %v3281 = vmax.f32 %v3153, %v3231
      %v3282 = vmax.f32 %v3154, %v3234
      %v3283 = vmax.f32 %v3155, %v3237
      %v3284 = vmax.f32 %v3156, %v3240
      %v3285 = vmax.f32 %v3157, %v3243
      %v3286 = vmax.f32 %v3158, %v3246
      %v3287 = vmax.f32 %v3159, %v3249
      %v3288 = vmax.f32 %v3160, %v3252
      %v3289 = vmax.f32 %v3161, %v3255
      %v3290 = vmax.f32 %v3162, %v3258
      %v3291 = vsub.f32 %v3131, %v3259
      %v3292 = vsub.f32 %v3132, %v3260
      %v3293 = vsub.f32 %v3133, %v3261
      %v3294 = vsub.f32 %v3134, %v3262
      %v3295 = vsub.f32 %v3135, %v3263
      %v3296 = vsub.f32 %v3136, %v3264
      %v3297 = vsub.f32 %v3137, %v3265
      %v3298 = vsub.f32 %v3138, %v3266
      %v3299 = vsub.f32 %v3139, %v3267
      %v3300 = vsub.f32 %v3140, %v3268
      %v3301 = vsub.f32 %v3141, %v3269
      %v3302 = vsub.f32 %v3142, %v3270
      %v3303 = vsub.f32 %v3143, %v3271
      %v3304 = vsub.f32 %v3144, %v3272
      %v3305 = vsub.f32 %v3145, %v3273
      %v3306 = vsub.f32 %v3146, %v3274
      %v3307 = vsub.f32 %v3147, %v3275
      %v3308 = vsub.f32 %v3148, %v3276
      %v3309 = vsub.f32 %v3149, %v3277
      %v3310 = vsub.f32 %v3150, %v3278
      %v3311 = vsub.f32 %v3151, %v3279
      %v3312 = vsub.f32 %v3152, %v3280
      %v3313 = vsub.f32 %v3153, %v3281
      %v3314 = vsub.f32 %v3154, %v3282
      %v3315 = vsub.f32 %v3155, %v3283
      %v3316 = vsub.f32 %v3156, %v3284
      %v3317 = vsub.f32 %v3157, %v3285
      %v3318 = vsub.f32 %v3158, %v3286
      %v3319 = vsub.f32 %v3159, %v3287
      %v3320 = vsub.f32 %v3160, %v3288
      %v3321 = vsub.f32 %v3161, %v3289
      %v3322 = vsub.f32 %v3162, %v3290
      %v3323 = vmul.f32 %v3291, 1.442695
      %v3324 = vpow.pop %v3323
      %v3325 = vmul.f32 %v3292, 1.442695
      %v3326 = vpow.pop %v3325
      %v3327 = vmul.f32 %v3293, 1.442695
      %v3328 = vpow.pop %v3327
      %v3329 = vmul.f32 %v3294, 1.442695
      %v3330 = vpow.pop %v3329
      %v3331 = vmul.f32 %v3295, 1.442695
      %v3332 = vpow.pop %v3331
      %v3333 = vmul.f32 %v3296, 1.442695
      %v3334 = vpow.pop %v3333
      %v3335 = vmul.f32 %v3297, 1.442695
      %v3336 = vpow.pop %v3335
      %v3337 = vmul.f32 %v3298, 1.442695
      %v3338 = vpow.pop %v3337
      %v3339 = vmul.f32 %v3299, 1.442695
      %v3340 = vpow.pop %v3339
      %v3341 = vmul.f32 %v3300, 1.442695
      %v3342 = vpow.pop %v3341
      %v3343 = vmul.f32 %v3301, 1.442695
      %v3344 = vpow.pop %v3343
      %v3345 = vmul.f32 %v3302, 1.442695
      %v3346 = vpow.pop %v3345
      %v3347 = vmul.f32 %v3303, 1.442695
      %v3348 = vpow.pop %v3347
      %v3349 = vmul.f32 %v3304, 1.442695
      %v3350 = vpow.pop %v3349
      %v3351 = vmul.f32 %v3305, 1.442695
      %v3352 = vpow.pop %v3351
      %v3353 = vmul.f32 %v3306, 1.442695
      %v3354 = vpow.pop %v3353
      %v3355 = vmul.f32 %v3307, 1.442695
      %v3356 = vpow.pop %v3355
      %v3357 = vmul.f32 %v3308, 1.442695
      %v3358 = vpow.pop %v3357
      %v3359 = vmul.f32 %v3309, 1.442695
      %v3360 = vpow.pop %v3359
      %v3361 = vmul.f32 %v3310, 1.442695
      %v3362 = vpow.pop %v3361
      %v3363 = vmul.f32 %v3311, 1.442695
      %v3364 = vpow.pop %v3363
      %v3365 = vmul.f32 %v3312, 1.442695
      %v3366 = vpow.pop %v3365
      %v3367 = vmul.f32 %v3313, 1.442695
      %v3368 = vpow.pop %v3367
      %v3369 = vmul.f32 %v3314, 1.442695
      %v3370 = vpow.pop %v3369
      %v3371 = vmul.f32 %v3315, 1.442695
      %v3372 = vpow.pop %v3371
      %v3373 = vmul.f32 %v3316, 1.442695
      %v3374 = vpow.pop %v3373
      %v3375 = vmul.f32 %v3317, 1.442695
      %v3376 = vpow.pop %v3375
      %v3377 = vmul.f32 %v3318, 1.442695
      %v3378 = vpow.pop %v3377
      %v3379 = vmul.f32 %v3319, 1.442695
      %v3380 = vpow.pop %v3379
      %v3381 = vmul.f32 %v3320, 1.442695
      %v3382 = vpow.pop %v3381
      %v3383 = vmul.f32 %v3321, 1.442695
      %v3384 = vpow.pop %v3383
      %v3385 = vmul.f32 %v3322, 1.442695
      %v3386 = vpow.pop %v3385
      %3388 = vset.pattern.permute.xlu0 0
      %3389 = vperm.xlu0 %3388, %v3259
      %v3390 = vpop.permute.xlu0 %3389
      %3393 = vset.pattern.permute.xlu0 0
      %3394 = vperm.xlu0 %3393, %v3260
      %v3395 = vpop.permute.xlu0 %3394
      %3398 = vset.pattern.permute.xlu0 0
      %3399 = vperm.xlu0 %3398, %v3261
      %v3400 = vpop.permute.xlu0 %3399
      %3403 = vset.pattern.permute.xlu0 0
      %3404 = vperm.xlu0 %3403, %v3262
      %v3405 = vpop.permute.xlu0 %3404
      %3408 = vset.pattern.permute.xlu0 0
      %3409 = vperm.xlu0 %3408, %v3263
      %v3410 = vpop.permute.xlu0 %3409
      %3413 = vset.pattern.permute.xlu0 0
      %3414 = vperm.xlu0 %3413, %v3264
      %v3415 = vpop.permute.xlu0 %3414
      %3418 = vset.pattern.permute.xlu0 0
      %3419 = vperm.xlu0 %3418, %v3265
      %v3420 = vpop.permute.xlu0 %3419
      %3423 = vset.pattern.permute.xlu0 0
      %3424 = vperm.xlu0 %3423, %v3266
      %v3425 = vpop.permute.xlu0 %3424
      %3428 = vset.pattern.permute.xlu0 0
      %3429 = vperm.xlu0 %3428, %v3267
      %v3430 = vpop.permute.xlu0 %3429
      %3433 = vset.pattern.permute.xlu0 0
      %3434 = vperm.xlu0 %3433, %v3268
      %v3435 = vpop.permute.xlu0 %3434
      %3438 = vset.pattern.permute.xlu0 0
      %3439 = vperm.xlu0 %3438, %v3269
      %v3440 = vpop.permute.xlu0 %3439
      %3443 = vset.pattern.permute.xlu0 0
      %3444 = vperm.xlu0 %3443, %v3270
      %v3445 = vpop.permute.xlu0 %3444
      %3448 = vset.pattern.permute.xlu0 0
      %3449 = vperm.xlu0 %3448, %v3271
      %v3450 = vpop.permute.xlu0 %3449
      %3453 = vset.pattern.permute.xlu0 0
      %3454 = vperm.xlu0 %3453, %v3272
      %v3455 = vpop.permute.xlu0 %3454
      %3458 = vset.pattern.permute.xlu0 0
      %3459 = vperm.xlu0 %3458, %v3273
      %v3460 = vpop.permute.xlu0 %3459
      %3463 = vset.pattern.permute.xlu0 0
      %3464 = vperm.xlu0 %3463, %v3274
      %v3465 = vpop.permute.xlu0 %3464
      %3468 = vset.pattern.permute.xlu0 0
      %3469 = vperm.xlu0 %3468, %v3275
      %v3470 = vpop.permute.xlu0 %3469
      %3473 = vset.pattern.permute.xlu0 0
      %3474 = vperm.xlu0 %3473, %v3276
      %v3475 = vpop.permute.xlu0 %3474
      %3478 = vset.pattern.permute.xlu0 0
      %3479 = vperm.xlu0 %3478, %v3277
      %v3480 = vpop.permute.xlu0 %3479
      %3483 = vset.pattern.permute.xlu0 0
      %3484 = vperm.xlu0 %3483, %v3278
      %v3485 = vpop.permute.xlu0 %3484
      %3488 = vset.pattern.permute.xlu0 0
      %3489 = vperm.xlu0 %3488, %v3279
      %v3490 = vpop.permute.xlu0 %3489
      %3493 = vset.pattern.permute.xlu0 0
      %3494 = vperm.xlu0 %3493, %v3280
      %v3495 = vpop.permute.xlu0 %3494
      %3498 = vset.pattern.permute.xlu0 0
      %3499 = vperm.xlu0 %3498, %v3281
      %v3500 = vpop.permute.xlu0 %3499
      %3503 = vset.pattern.permute.xlu0 0
      %3504 = vperm.xlu0 %3503, %v3282
      %v3505 = vpop.permute.xlu0 %3504
      %3508 = vset.pattern.permute.xlu0 0
      %3509 = vperm.xlu0 %3508, %v3283
      %v3510 = vpop.permute.xlu0 %3509
      %3513 = vset.pattern.permute.xlu0 0
      %3514 = vperm.xlu0 %3513, %v3284
      %v3515 = vpop.permute.xlu0 %3514
      %3518 = vset.pattern.permute.xlu0 0
      %3519 = vperm.xlu0 %3518, %v3285
      %v3520 = vpop.permute.xlu0 %3519
      %3523 = vset.pattern.permute.xlu0 0
      %3524 = vperm.xlu0 %3523, %v3286
      %v3525 = vpop.permute.xlu0 %3524
      %3528 = vset.pattern.permute.xlu0 0
      %3529 = vperm.xlu0 %3528, %v3287
      %v3530 = vpop.permute.xlu0 %3529
      %3533 = vset.pattern.permute.xlu0 0
      %3534 = vperm.xlu0 %3533, %v3288
      %v3535 = vpop.permute.xlu0 %3534
      %3538 = vset.pattern.permute.xlu0 0
      %3539 = vperm.xlu0 %3538, %v3289
      %v3540 = vpop.permute.xlu0 %3539
      %3543 = vset.pattern.permute.xlu0 0
      %3544 = vperm.xlu0 %3543, %v3290
      %v3545 = vpop.permute.xlu0 %3544
      %v3547 = vsub.f32 %v2972, %v3390
      %v3548 = vsub.f32 %v2974, %v3390
      %v3549 = vsub.f32 %v2976, %v3395
      %v3550 = vsub.f32 %v2978, %v3395
      %v3551 = vsub.f32 %v2982, %v3400
      %v3552 = vsub.f32 %v2984, %v3400
      %v3553 = vsub.f32 %v2986, %v3405
      %v3554 = vsub.f32 %v2988, %v3405
      %v3555 = vsub.f32 %v2992, %v3410
      %v3556 = vsub.f32 %v2994, %v3410
      %v3557 = vsub.f32 %v2996, %v3415
      %v3558 = vsub.f32 %v2998, %v3415
      %v3559 = vsub.f32 %v3002, %v3420
      %v3560 = vsub.f32 %v3004, %v3420
      %v3561 = vsub.f32 %v3006, %v3425
      %v3562 = vsub.f32 %v3008, %v3425
      %v3563 = vsub.f32 %v3012, %v3430
      %v3564 = vsub.f32 %v3014, %v3430
      %v3565 = vsub.f32 %v3016, %v3435
      %v3566 = vsub.f32 %v3018, %v3435
      %v3567 = vsub.f32 %v3022, %v3440
      %v3568 = vsub.f32 %v3024, %v3440
      %v3569 = vsub.f32 %v3026, %v3445
      %v3570 = vsub.f32 %v3028, %v3445
      %v3571 = vsub.f32 %v3032, %v3450
      %v3572 = vsub.f32 %v3034, %v3450
      %v3573 = vsub.f32 %v3036, %v3455
      %v3574 = vsub.f32 %v3038, %v3455
      %v3575 = vsub.f32 %v3042, %v3460
      %v3576 = vsub.f32 %v3044, %v3460
      %v3577 = vsub.f32 %v3046, %v3465
      %v3578 = vsub.f32 %v3048, %v3465
      %v3579 = vsub.f32 %v3052, %v3470
      %v3580 = vsub.f32 %v3054, %v3470
      %v3581 = vsub.f32 %v3056, %v3475
      %v3582 = vsub.f32 %v3058, %v3475
      %v3583 = vsub.f32 %v3062, %v3480
      %v3584 = vsub.f32 %v3064, %v3480
      %v3585 = vsub.f32 %v3066, %v3485
      %v3586 = vsub.f32 %v3068, %v3485
      %v3587 = vsub.f32 %v3072, %v3490
      %v3588 = vsub.f32 %v3074, %v3490
      %v3589 = vsub.f32 %v3076, %v3495
      %v3590 = vsub.f32 %v3078, %v3495
      %v3591 = vsub.f32 %v3082, %v3500
      %v3592 = vsub.f32 %v3084, %v3500
      %v3593 = vsub.f32 %v3086, %v3505
      %v3594 = vsub.f32 %v3088, %v3505
      %v3595 = vsub.f32 %v3092, %v3510
      %v3596 = vsub.f32 %v3094, %v3510
      %v3597 = vsub.f32 %v3096, %v3515
      %v3598 = vsub.f32 %v3098, %v3515
      %v3599 = vsub.f32 %v3102, %v3520
      %v3600 = vsub.f32 %v3104, %v3520
      %v3601 = vsub.f32 %v3106, %v3525
      %v3602 = vsub.f32 %v3108, %v3525
      %v3603 = vsub.f32 %v3112, %v3530
      %v3604 = vsub.f32 %v3114, %v3530
      %v3605 = vsub.f32 %v3116, %v3535
      %v3606 = vsub.f32 %v3118, %v3535
      %v3607 = vsub.f32 %v3122, %v3540
      %v3608 = vsub.f32 %v3124, %v3540
      %v3609 = vsub.f32 %v3126, %v3545
      %v3610 = vsub.f32 %v3128, %v3545
      %v3611 = vmul.f32 %v3547, 1.442695
      %v3612 = vpow.pop %v3611
      %v3613 = vmul.f32 %v3548, 1.442695
      %v3614 = vpow.pop %v3613
      %v3615 = vmul.f32 %v3549, 1.442695
      %v3616 = vpow.pop %v3615
      %v3617 = vmul.f32 %v3550, 1.442695
      %v3618 = vpow.pop %v3617
      %v3619 = vmul.f32 %v3551, 1.442695
      %v3620 = vpow.pop %v3619
      %v3621 = vmul.f32 %v3552, 1.442695
      %v3622 = vpow.pop %v3621
      %v3623 = vmul.f32 %v3553, 1.442695
      %v3624 = vpow.pop %v3623
      %v3625 = vmul.f32 %v3554, 1.442695
      %v3626 = vpow.pop %v3625
      %v3627 = vmul.f32 %v3555, 1.442695
      %v3628 = vpow.pop %v3627
      %v3629 = vmul.f32 %v3556, 1.442695
      %v3630 = vpow.pop %v3629
      %v3631 = vmul.f32 %v3557, 1.442695
      %v3632 = vpow.pop %v3631
      %v3633 = vmul.f32 %v3558, 1.442695
      %v3634 = vpow.pop %v3633
      %v3635 = vmul.f32 %v3559, 1.442695
      %v3636 = vpow.pop %v3635
      %v3637 = vmul.f32 %v3560, 1.442695
      %v3638 = vpow.pop %v3637
      %v3639 = vmul.f32 %v3561, 1.442695
      %v3640 = vpow.pop %v3639
      %v3641 = vmul.f32 %v3562, 1.442695
      %v3642 = vpow.pop %v3641
      %v3643 = vmul.f32 %v3563, 1.442695
      %v3644 = vpow.pop %v3643
      %v3645 = vmul.f32 %v3564, 1.442695
      %v3646 = vpow.pop %v3645
      %v3647 = vmul.f32 %v3565, 1.442695
      %v3648 = vpow.pop %v3647
      %v3649 = vmul.f32 %v3566, 1.442695
      %v3650 = vpow.pop %v3649
      %v3651 = vmul.f32 %v3567, 1.442695
      %v3652 = vpow.pop %v3651
      %v3653 = vmul.f32 %v3568, 1.442695
      %v3654 = vpow.pop %v3653
      %v3655 = vmul.f32 %v3569, 1.442695
      %v3656 = vpow.pop %v3655
      %v3657 = vmul.f32 %v3570, 1.442695
      %v3658 = vpow.pop %v3657
      %v3659 = vmul.f32 %v3571, 1.442695
      %v3660 = vpow.pop %v3659
      %v3661 = vmul.f32 %v3572, 1.442695
      %v3662 = vpow.pop %v3661
      %v3663 = vmul.f32 %v3573, 1.442695
      %v3664 = vpow.pop %v3663
      %v3665 = vmul.f32 %v3574, 1.442695
      %v3666 = vpow.pop %v3665
      %v3667 = vmul.f32 %v3575, 1.442695
      %v3668 = vpow.pop %v3667
      %v3669 = vmul.f32 %v3576, 1.442695
      %v3670 = vpow.pop %v3669
      %v3671 = vmul.f32 %v3577, 1.442695
      %v3672 = vpow.pop %v3671
      %v3673 = vmul.f32 %v3578, 1.442695
      %v3674 = vpow.pop %v3673
      %v3675 = vmul.f32 %v3579, 1.442695
      %v3676 = vpow.pop %v3675
      %v3677 = vmul.f32 %v3580, 1.442695
      %v3678 = vpow.pop %v3677
      %v3679 = vmul.f32 %v3581, 1.442695
      %v3680 = vpow.pop %v3679
      %v3681 = vmul.f32 %v3582, 1.442695
      %v3682 = vpow.pop %v3681
      %v3683 = vmul.f32 %v3583, 1.442695
      %v3684 = vpow.pop %v3683
      %v3685 = vmul.f32 %v3584, 1.442695
      %v3686 = vpow.pop %v3685
      %v3687 = vmul.f32 %v3585, 1.442695
      %v3688 = vpow.pop %v3687
      %v3689 = vmul.f32 %v3586, 1.442695
      %v3690 = vpow.pop %v3689
      %v3691 = vmul.f32 %v3587, 1.442695
      %v3692 = vpow.pop %v3691
      %v3693 = vmul.f32 %v3588, 1.442695
      %v3694 = vpow.pop %v3693
      %v3695 = vmul.f32 %v3589, 1.442695
      %v3696 = vpow.pop %v3695
      %v3697 = vmul.f32 %v3590, 1.442695
      %v3698 = vpow.pop %v3697
      %v3699 = vmul.f32 %v3591, 1.442695
      %v3700 = vpow.pop %v3699
      %v3701 = vmul.f32 %v3592, 1.442695
      %v3702 = vpow.pop %v3701
      %v3703 = vmul.f32 %v3593, 1.442695
      %v3704 = vpow.pop %v3703
      %v3705 = vmul.f32 %v3594, 1.442695
      %v3706 = vpow.pop %v3705
      %v3707 = vmul.f32 %v3595, 1.442695
      %v3708 = vpow.pop %v3707
      %v3709 = vmul.f32 %v3596, 1.442695
      %v3710 = vpow.pop %v3709
      %v3711 = vmul.f32 %v3597, 1.442695
      %v3712 = vpow.pop %v3711
      %v3713 = vmul.f32 %v3598, 1.442695
      %v3714 = vpow.pop %v3713
      %v3715 = vmul.f32 %v3599, 1.442695
      %v3716 = vpow.pop %v3715
      %v3717 = vmul.f32 %v3600, 1.442695
      %v3718 = vpow.pop %v3717
      %v3719 = vmul.f32 %v3601, 1.442695
      %v3720 = vpow.pop %v3719
      %v3721 = vmul.f32 %v3602, 1.442695
      %v3722 = vpow.pop %v3721
      %v3723 = vmul.f32 %v3603, 1.442695
      %v3724 = vpow.pop %v3723
      %v3725 = vmul.f32 %v3604, 1.442695
      %v3726 = vpow.pop %v3725
      %v3727 = vmul.f32 %v3605, 1.442695
      %v3728 = vpow.pop %v3727
      %v3729 = vmul.f32 %v3606, 1.442695
      %v3730 = vpow.pop %v3729
      %v3731 = vmul.f32 %v3607, 1.442695
      %v3732 = vpow.pop %v3731
      %v3733 = vmul.f32 %v3608, 1.442695
      %v3734 = vpow.pop %v3733
      %v3735 = vmul.f32 %v3609, 1.442695
      %v3736 = vpow.pop %v3735
      %v3737 = vmul.f32 %v3610, 1.442695
      %v3738 = vpow.pop %v3737
      %s3739 = scalar_lea.vmem [#allocation3], 256
      %v3740 = vld [vmem:[%s3739] sm:$0xff]
      %v3741 = vld [vmem:[%s3739 + $0x8] sm:$0xff]
      %v3742 = vld [vmem:[%s3739 + $0x10] sm:$0xff]
      %v3743 = vld [vmem:[%s3739 + $0x18] sm:$0xff]
      %v3744 = vld [vmem:[%s3739 + $0x20] sm:$0xff]
      %v3745 = vld [vmem:[%s3739 + $0x28] sm:$0xff]
      %v3746 = vld [vmem:[%s3739 + $0x30] sm:$0xff]
      %v3747 = vld [vmem:[%s3739 + $0x38] sm:$0xff]
      %v3748 = vld [vmem:[%s3739 + $0x40] sm:$0xff]
      %v3749 = vld [vmem:[%s3739 + $0x48] sm:$0xff]
      %v3750 = vld [vmem:[%s3739 + $0x50] sm:$0xff]
      %v3751 = vld [vmem:[%s3739 + $0x58] sm:$0xff]
      %v3752 = vld [vmem:[%s3739 + $0x60] sm:$0xff]
      %v3753 = vld [vmem:[%s3739 + $0x68] sm:$0xff]
      %v3754 = vld [vmem:[%s3739 + $0x70] sm:$0xff]
      %v3755 = vld [vmem:[%s3739 + $0x78] sm:$0xff]
      %v3756 = vld [vmem:[%s3739 + $0x80] sm:$0xff]
      %v3757 = vld [vmem:[%s3739 + $0x88] sm:$0xff]
      %v3758 = vld [vmem:[%s3739 + $0x90] sm:$0xff]
      %v3759 = vld [vmem:[%s3739 + $0x98] sm:$0xff]
      %v3760 = vld [vmem:[%s3739 + $0xa0] sm:$0xff]
      %v3761 = vld [vmem:[%s3739 + $0xa8] sm:$0xff]
      %v3762 = vld [vmem:[%s3739 + $0xb0] sm:$0xff]
      %v3763 = vld [vmem:[%s3739 + $0xb8] sm:$0xff]
      %v3764 = vld [vmem:[%s3739 + $0xc0] sm:$0xff]
      %v3765 = vld [vmem:[%s3739 + $0xc8] sm:$0xff]
      %v3766 = vld [vmem:[%s3739 + $0xd0] sm:$0xff]
      %v3767 = vld [vmem:[%s3739 + $0xd8] sm:$0xff]
      %v3768 = vld [vmem:[%s3739 + $0xe0] sm:$0xff]
      %v3769 = vld [vmem:[%s3739 + $0xe8] sm:$0xff]
      %v3770 = vld [vmem:[%s3739 + $0xf0] sm:$0xff]
      %v3771 = vld [vmem:[%s3739 + $0xf8] sm:$0xff]
      %v3772 = vmul.f32 %v3324, %v3740
      %v3773 = vmul.f32 %v3326, %v3741
      %v3774 = vmul.f32 %v3328, %v3742
      %v3775 = vmul.f32 %v3330, %v3743
      %v3776 = vmul.f32 %v3332, %v3744
      %v3777 = vmul.f32 %v3334, %v3745
      %v3778 = vmul.f32 %v3336, %v3746
      %v3779 = vmul.f32 %v3338, %v3747
      %v3780 = vmul.f32 %v3340, %v3748
      %v3781 = vmul.f32 %v3342, %v3749
      %v3782 = vmul.f32 %v3344, %v3750
      %v3783 = vmul.f32 %v3346, %v3751
      %v3784 = vmul.f32 %v3348, %v3752
      %v3785 = vmul.f32 %v3350, %v3753
      %v3786 = vmul.f32 %v3352, %v3754
      %v3787 = vmul.f32 %v3354, %v3755
      %v3788 = vmul.f32 %v3356, %v3756
      %v3789 = vmul.f32 %v3358, %v3757
      %v3790 = vmul.f32 %v3360, %v3758
      %v3791 = vmul.f32 %v3362, %v3759
      %v3792 = vmul.f32 %v3364, %v3760
      %v3793 = vmul.f32 %v3366, %v3761
      %v3794 = vmul.f32 %v3368, %v3762
      %v3795 = vmul.f32 %v3370, %v3763
      %v3796 = vmul.f32 %v3372, %v3764
      %v3797 = vmul.f32 %v3374, %v3765
      %v3798 = vmul.f32 %v3376, %v3766
      %v3799 = vmul.f32 %v3378, %v3767
      %v3800 = vmul.f32 %v3380, %v3768
      %v3801 = vmul.f32 %v3382, %v3769
      %v3802 = vmul.f32 %v3384, %v3770
      %v3803 = vmul.f32 %v3386, %v3771
      %v3804 = vadd.f32 %v3612, %v3614
      %3805 = vadd.xlane.f32.xlu0 %v3804
      %v3806 = vpop.xlane.xlu0 %3805
      %v3807 = vadd.f32 %v3616, %v3618
      %3808 = vadd.xlane.f32.xlu0 %v3807
      %v3809 = vpop.xlane.xlu0 %3808
      %v3810 = vadd.f32 %v3620, %v3622
      %3811 = vadd.xlane.f32.xlu0 %v3810
      %v3812 = vpop.xlane.xlu0 %3811
      %v3813 = vadd.f32 %v3624, %v3626
      %3814 = vadd.xlane.f32.xlu0 %v3813
      %v3815 = vpop.xlane.xlu0 %3814
      %v3816 = vadd.f32 %v3628, %v3630
      %3817 = vadd.xlane.f32.xlu0 %v3816
      %v3818 = vpop.xlane.xlu0 %3817
      %v3819 = vadd.f32 %v3632, %v3634
      %3820 = vadd.xlane.f32.xlu0 %v3819
      %v3821 = vpop.xlane.xlu0 %3820
      %v3822 = vadd.f32 %v3636, %v3638
      %3823 = vadd.xlane.f32.xlu0 %v3822
      %v3824 = vpop.xlane.xlu0 %3823
      %v3825 = vadd.f32 %v3640, %v3642
      %3826 = vadd.xlane.f32.xlu0 %v3825
      %v3827 = vpop.xlane.xlu0 %3826
      %v3828 = vadd.f32 %v3644, %v3646
      %3829 = vadd.xlane.f32.xlu0 %v3828
      %v3830 = vpop.xlane.xlu0 %3829
      %v3831 = vadd.f32 %v3648, %v3650
      %3832 = vadd.xlane.f32.xlu0 %v3831
      %v3833 = vpop.xlane.xlu0 %3832
      %v3834 = vadd.f32 %v3652, %v3654
      %3835 = vadd.xlane.f32.xlu0 %v3834
      %v3836 = vpop.xlane.xlu0 %3835
      %v3837 = vadd.f32 %v3656, %v3658
      %3838 = vadd.xlane.f32.xlu0 %v3837
      %v3839 = vpop.xlane.xlu0 %3838
      %v3840 = vadd.f32 %v3660, %v3662
      %3841 = vadd.xlane.f32.xlu0 %v3840
      %v3842 = vpop.xlane.xlu0 %3841
      %v3843 = vadd.f32 %v3664, %v3666
      %3844 = vadd.xlane.f32.xlu0 %v3843
      %v3845 = vpop.xlane.xlu0 %3844
      %v3846 = vadd.f32 %v3668, %v3670
      %3847 = vadd.xlane.f32.xlu0 %v3846
      %v3848 = vpop.xlane.xlu0 %3847
      %v3849 = vadd.f32 %v3672, %v3674
      %3850 = vadd.xlane.f32.xlu0 %v3849
      %v3851 = vpop.xlane.xlu0 %3850
      %v3852 = vadd.f32 %v3676, %v3678
      %3853 = vadd.xlane.f32.xlu0 %v3852
      %v3854 = vpop.xlane.xlu0 %3853
      %v3855 = vadd.f32 %v3680, %v3682
      %3856 = vadd.xlane.f32.xlu0 %v3855
      %v3857 = vpop.xlane.xlu0 %3856
      %v3858 = vadd.f32 %v3684, %v3686
      %3859 = vadd.xlane.f32.xlu0 %v3858
      %v3860 = vpop.xlane.xlu0 %3859
      %v3861 = vadd.f32 %v3688, %v3690
      %3862 = vadd.xlane.f32.xlu0 %v3861
      %v3863 = vpop.xlane.xlu0 %3862
      %v3864 = vadd.f32 %v3692, %v3694
      %3865 = vadd.xlane.f32.xlu0 %v3864
      %v3866 = vpop.xlane.xlu0 %3865
      %v3867 = vadd.f32 %v3696, %v3698
      %3868 = vadd.xlane.f32.xlu0 %v3867
      %v3869 = vpop.xlane.xlu0 %3868
      %v3870 = vadd.f32 %v3700, %v3702
      %3871 = vadd.xlane.f32.xlu0 %v3870
      %v3872 = vpop.xlane.xlu0 %3871
      %v3873 = vadd.f32 %v3704, %v3706
      %3874 = vadd.xlane.f32.xlu0 %v3873
      %v3875 = vpop.xlane.xlu0 %3874
      %v3876 = vadd.f32 %v3708, %v3710
      %3877 = vadd.xlane.f32.xlu0 %v3876
      %v3878 = vpop.xlane.xlu0 %3877
      %v3879 = vadd.f32 %v3712, %v3714
      %3880 = vadd.xlane.f32.xlu0 %v3879
      %v3881 = vpop.xlane.xlu0 %3880
      %v3882 = vadd.f32 %v3716, %v3718
      %3883 = vadd.xlane.f32.xlu0 %v3882
      %v3884 = vpop.xlane.xlu0 %3883
      %v3885 = vadd.f32 %v3720, %v3722
      %3886 = vadd.xlane.f32.xlu0 %v3885
      %v3887 = vpop.xlane.xlu0 %3886
      %v3888 = vadd.f32 %v3724, %v3726
      %3889 = vadd.xlane.f32.xlu0 %v3888
      %v3890 = vpop.xlane.xlu0 %3889
      %v3891 = vadd.f32 %v3728, %v3730
      %3892 = vadd.xlane.f32.xlu0 %v3891
      %v3893 = vpop.xlane.xlu0 %3892
      %v3894 = vadd.f32 %v3732, %v3734
      %3895 = vadd.xlane.f32.xlu0 %v3894
      %v3896 = vpop.xlane.xlu0 %3895
      %v3897 = vadd.f32 %v3736, %v3738
      %3898 = vadd.xlane.f32.xlu0 %v3897
      %v3899 = vpop.xlane.xlu0 %3898
      %v3900 = vadd.f32 %v3772, %v3806
      %v3901 = vadd.f32 %v3773, %v3809
      %v3902 = vadd.f32 %v3774, %v3812
      %v3903 = vadd.f32 %v3775, %v3815
      %v3904 = vadd.f32 %v3776, %v3818
      %v3905 = vadd.f32 %v3777, %v3821
      %v3906 = vadd.f32 %v3778, %v3824
      %v3907 = vadd.f32 %v3779, %v3827
      %v3908 = vadd.f32 %v3780, %v3830
      %v3909 = vadd.f32 %v3781, %v3833
      %v3910 = vadd.f32 %v3782, %v3836
      %v3911 = vadd.f32 %v3783, %v3839
      %v3912 = vadd.f32 %v3784, %v3842
      %v3913 = vadd.f32 %v3785, %v3845
      %v3914 = vadd.f32 %v3786, %v3848
      %v3915 = vadd.f32 %v3787, %v3851
      %v3916 = vadd.f32 %v3788, %v3854
      %v3917 = vadd.f32 %v3789, %v3857
      %v3918 = vadd.f32 %v3790, %v3860
      %v3919 = vadd.f32 %v3791, %v3863
      %v3920 = vadd.f32 %v3792, %v3866
      %v3921 = vadd.f32 %v3793, %v3869
      %v3922 = vadd.f32 %v3794, %v3872
      %v3923 = vadd.f32 %v3795, %v3875
      %v3924 = vadd.f32 %v3796, %v3878
      %v3925 = vadd.f32 %v3797, %v3881
      %v3926 = vadd.f32 %v3798, %v3884
      %v3927 = vadd.f32 %v3799, %v3887
      %v3928 = vadd.f32 %v3800, %v3890
      %v3929 = vadd.f32 %v3801, %v3893
      %v3930 = vadd.f32 %v3802, %v3896
      %v3931 = vadd.f32 %v3803, %v3899
      %3932 = vst.msk [vmem:[%s3739] sm:$0xff] %vm2007, %v3900
      %3933 = vst.msk [vmem:[%s3739 + $0x8] sm:$0xff] %vm2007, %v3901
      %3934 = vst.msk [vmem:[%s3739 + $0x10] sm:$0xff] %vm2007, %v3902
      %3935 = vst.msk [vmem:[%s3739 + $0x18] sm:$0xff] %vm2007, %v3903
      %3936 = vst.msk [vmem:[%s3739 + $0x20] sm:$0xff] %vm2007, %v3904
      %3937 = vst.msk [vmem:[%s3739 + $0x28] sm:$0xff] %vm2007, %v3905
      %3938 = vst.msk [vmem:[%s3739 + $0x30] sm:$0xff] %vm2007, %v3906
      %3939 = vst.msk [vmem:[%s3739 + $0x38] sm:$0xff] %vm2007, %v3907
      %3940 = vst.msk [vmem:[%s3739 + $0x40] sm:$0xff] %vm2007, %v3908
      %3941 = vst.msk [vmem:[%s3739 + $0x48] sm:$0xff] %vm2007, %v3909
      %3942 = vst.msk [vmem:[%s3739 + $0x50] sm:$0xff] %vm2007, %v3910
      %3943 = vst.msk [vmem:[%s3739 + $0x58] sm:$0xff] %vm2007, %v3911
      %3944 = vst.msk [vmem:[%s3739 + $0x60] sm:$0xff] %vm2007, %v3912
      %3945 = vst.msk [vmem:[%s3739 + $0x68] sm:$0xff] %vm2007, %v3913
      %3946 = vst.msk [vmem:[%s3739 + $0x70] sm:$0xff] %vm2007, %v3914
      %3947 = vst.msk [vmem:[%s3739 + $0x78] sm:$0xff] %vm2007, %v3915
      %3948 = vst.msk [vmem:[%s3739 + $0x80] sm:$0xff] %vm2007, %v3916
      %3949 = vst.msk [vmem:[%s3739 + $0x88] sm:$0xff] %vm2007, %v3917
      %3950 = vst.msk [vmem:[%s3739 + $0x90] sm:$0xff] %vm2007, %v3918
      %3951 = vst.msk [vmem:[%s3739 + $0x98] sm:$0xff] %vm2007, %v3919
      %3952 = vst.msk [vmem:[%s3739 + $0xa0] sm:$0xff] %vm2007, %v3920
      %3953 = vst.msk [vmem:[%s3739 + $0xa8] sm:$0xff] %vm2007, %v3921
      %3954 = vst.msk [vmem:[%s3739 + $0xb0] sm:$0xff] %vm2007, %v3922
      %3955 = vst.msk [vmem:[%s3739 + $0xb8] sm:$0xff] %vm2007, %v3923
      %3956 = vst.msk [vmem:[%s3739 + $0xc0] sm:$0xff] %vm2007, %v3924
      %3957 = vst.msk [vmem:[%s3739 + $0xc8] sm:$0xff] %vm2007, %v3925
      %3958 = vst.msk [vmem:[%s3739 + $0xd0] sm:$0xff] %vm2007, %v3926
      %3959 = vst.msk [vmem:[%s3739 + $0xd8] sm:$0xff] %vm2007, %v3927
      %3960 = vst.msk [vmem:[%s3739 + $0xe0] sm:$0xff] %vm2007, %v3928
      %3961 = vst.msk [vmem:[%s3739 + $0xe8] sm:$0xff] %vm2007, %v3929
      %3962 = vst.msk [vmem:[%s3739 + $0xf0] sm:$0xff] %vm2007, %v3930
      %3963 = vst.msk [vmem:[%s3739 + $0xf8] sm:$0xff] %vm2007, %v3931
      %3964 = vst.msk [vmem:[%s3130] sm:$0xff] %vm2007, %v3259
      %3965 = vst.msk [vmem:[%s3130 + $0x8] sm:$0xff] %vm2007, %v3260
      %3966 = vst.msk [vmem:[%s3130 + $0x10] sm:$0xff] %vm2007, %v3261
      %3967 = vst.msk [vmem:[%s3130 + $0x18] sm:$0xff] %vm2007, %v3262
      %3968 = vst.msk [vmem:[%s3130 + $0x20] sm:$0xff] %vm2007, %v3263
      %3969 = vst.msk [vmem:[%s3130 + $0x28] sm:$0xff] %vm2007, %v3264
      %3970 = vst.msk [vmem:[%s3130 + $0x30] sm:$0xff] %vm2007, %v3265
      %3971 = vst.msk [vmem:[%s3130 + $0x38] sm:$0xff] %vm2007, %v3266
      %3972 = vst.msk [vmem:[%s3130 + $0x40] sm:$0xff] %vm2007, %v3267
      %3973 = vst.msk [vmem:[%s3130 + $0x48] sm:$0xff] %vm2007, %v3268
      %3974 = vst.msk [vmem:[%s3130 + $0x50] sm:$0xff] %vm2007, %v3269
      %3975 = vst.msk [vmem:[%s3130 + $0x58] sm:$0xff] %vm2007, %v3270
      %3976 = vst.msk [vmem:[%s3130 + $0x60] sm:$0xff] %vm2007, %v3271
      %3977 = vst.msk [vmem:[%s3130 + $0x68] sm:$0xff] %vm2007, %v3272
      %3978 = vst.msk [vmem:[%s3130 + $0x70] sm:$0xff] %vm2007, %v3273
      %3979 = vst.msk [vmem:[%s3130 + $0x78] sm:$0xff] %vm2007, %v3274
      %3980 = vst.msk [vmem:[%s3130 + $0x80] sm:$0xff] %vm2007, %v3275
      %3981 = vst.msk [vmem:[%s3130 + $0x88] sm:$0xff] %vm2007, %v3276
      %3982 = vst.msk [vmem:[%s3130 + $0x90] sm:$0xff] %vm2007, %v3277
      %3983 = vst.msk [vmem:[%s3130 + $0x98] sm:$0xff] %vm2007, %v3278
      %3984 = vst.msk [vmem:[%s3130 + $0xa0] sm:$0xff] %vm2007, %v3279
      %3985 = vst.msk [vmem:[%s3130 + $0xa8] sm:$0xff] %vm2007, %v3280
      %3986 = vst.msk [vmem:[%s3130 + $0xb0] sm:$0xff] %vm2007, %v3281
      %3987 = vst.msk [vmem:[%s3130 + $0xb8] sm:$0xff] %vm2007, %v3282
      %3988 = vst.msk [vmem:[%s3130 + $0xc0] sm:$0xff] %vm2007, %v3283
      %3989 = vst.msk [vmem:[%s3130 + $0xc8] sm:$0xff] %vm2007, %v3284
      %3990 = vst.msk [vmem:[%s3130 + $0xd0] sm:$0xff] %vm2007, %v3285
      %3991 = vst.msk [vmem:[%s3130 + $0xd8] sm:$0xff] %vm2007, %v3286
      %3992 = vst.msk [vmem:[%s3130 + $0xe0] sm:$0xff] %vm2007, %v3287
      %3993 = vst.msk [vmem:[%s3130 + $0xe8] sm:$0xff] %vm2007, %v3288
      %3994 = vst.msk [vmem:[%s3130 + $0xf0] sm:$0xff] %vm2007, %v3289
      %3995 = vst.msk [vmem:[%s3130 + $0xf8] sm:$0xff] %vm2007, %v3290
      %v3996 = vpack.c.bf16 %v3616, %v3612
      %v3997 = vpack.c.bf16 %v3618, %v3614
      %v3998 = vpack.c.bf16 %v3624, %v3620
      %v3999 = vpack.c.bf16 %v3626, %v3622
      %v4000 = vpack.c.bf16 %v3632, %v3628
      %v4001 = vpack.c.bf16 %v3634, %v3630
      %v4002 = vpack.c.bf16 %v3640, %v3636
      %v4003 = vpack.c.bf16 %v3642, %v3638
      %v4004 = vpack.c.bf16 %v3648, %v3644
      %v4005 = vpack.c.bf16 %v3650, %v3646
      %v4006 = vpack.c.bf16 %v3656, %v3652
      %v4007 = vpack.c.bf16 %v3658, %v3654
      %v4008 = vpack.c.bf16 %v3664, %v3660
      %v4009 = vpack.c.bf16 %v3666, %v3662
      %v4010 = vpack.c.bf16 %v3672, %v3668
      %v4011 = vpack.c.bf16 %v3674, %v3670
      %v4012 = vpack.c.bf16 %v3680, %v3676
      %v4013 = vpack.c.bf16 %v3682, %v3678
      %v4014 = vpack.c.bf16 %v3688, %v3684
      %v4015 = vpack.c.bf16 %v3690, %v3686
      %v4016 = vpack.c.bf16 %v3696, %v3692
      %v4017 = vpack.c.bf16 %v3698, %v3694
      %v4018 = vpack.c.bf16 %v3704, %v3700
      %v4019 = vpack.c.bf16 %v3706, %v3702
      %v4020 = vpack.c.bf16 %v3712, %v3708
      %v4021 = vpack.c.bf16 %v3714, %v3710
      %v4022 = vpack.c.bf16 %v3720, %v3716
      %v4023 = vpack.c.bf16 %v3722, %v3718
      %v4024 = vpack.c.bf16 %v3728, %v3724
      %v4025 = vpack.c.bf16 %v3730, %v3726
      %v4026 = vpack.c.bf16 %v3736, %v3732
      %v4027 = vpack.c.bf16 %v3738, %v3734
      %v4060 = vunpack.c.l.b16 %v2585
      %v4061 = vunpack.c.l.b16 %v2586
      %v4062 = vunpack.c.l.b16 %v2587
      %v4063 = vunpack.c.l.b16 %v2588
      %v4064 = vunpack.c.l.b16 %v2589
      %v4065 = vunpack.c.l.b16 %v2590
      %v4066 = vunpack.c.l.b16 %v2591
      %v4067 = vunpack.c.l.b16 %v2592
      %v4068 = vunpack.c.l.b16 %v2593
      %v4069 = vunpack.c.l.b16 %v2594
      %v4070 = vunpack.c.l.b16 %v2595
      %v4071 = vunpack.c.l.b16 %v2596
      %v4072 = vunpack.c.l.b16 %v2597
      %v4073 = vunpack.c.l.b16 %v2598
      %v4074 = vunpack.c.l.b16 %v2599
      %v4075 = vunpack.c.l.b16 %v2600
      %v4076 = vunpack.c.l.b16 %v2601
      %v4077 = vunpack.c.l.b16 %v2602
      %v4078 = vunpack.c.l.b16 %v2603
      %v4079 = vunpack.c.l.b16 %v2604
      %v4080 = vunpack.c.l.b16 %v2605
      %v4081 = vunpack.c.l.b16 %v2606
      %v4082 = vunpack.c.l.b16 %v2607
      %v4083 = vunpack.c.l.b16 %v2608
      %v4084 = vunpack.c.l.b16 %v2609
      %v4085 = vunpack.c.l.b16 %v2610
      %v4086 = vunpack.c.l.b16 %v2611
      %v4087 = vunpack.c.l.b16 %v2612
      %v4088 = vunpack.c.l.b16 %v2613
      %v4089 = vunpack.c.l.b16 %v2614
      %v4090 = vunpack.c.l.b16 %v2615
      %v4091 = vunpack.c.l.b16 %v2616
      %v4092 = vpack.c.b16 %v4061, %v4060
      %v4093 = vpack.c.b16 %v4063, %v4062
      %v4094 = vpack.c.b16 %v4065, %v4064
      %v4095 = vpack.c.b16 %v4067, %v4066
      %v4096 = vpack.c.b16 %v4069, %v4068
      %v4097 = vpack.c.b16 %v4071, %v4070
      %v4098 = vpack.c.b16 %v4073, %v4072
      %v4099 = vpack.c.b16 %v4075, %v4074
      %v4100 = vpack.c.b16 %v4077, %v4076
      %v4101 = vpack.c.b16 %v4079, %v4078
      %v4102 = vpack.c.b16 %v4081, %v4080
      %v4103 = vpack.c.b16 %v4083, %v4082
      %v4104 = vpack.c.b16 %v4085, %v4084
      %v4105 = vpack.c.b16 %v4087, %v4086
      %v4106 = vpack.c.b16 %v4089, %v4088
      %v4107 = vpack.c.b16 %v4091, %v4090
      %4108 = vrot.lane.b32.xlu0 %v4092, 96
      %v4109 = vpop.permute.xlu0 %4108
      %4110 = vrot.lane.b32.xlu0 %v4093, 96
      %v4111 = vpop.permute.xlu0 %4110
      %4112 = vrot.lane.b32.xlu0 %v4094, 96
      %v4113 = vpop.permute.xlu0 %4112
      %4114 = vrot.lane.b32.xlu0 %v4095, 96
      %v4115 = vpop.permute.xlu0 %4114
      %4116 = vrot.lane.b32.xlu0 %v4096, 96
      %v4117 = vpop.permute.xlu0 %4116
      %4118 = vrot.lane.b32.xlu0 %v4097, 96
      %v4119 = vpop.permute.xlu0 %4118
      %4120 = vrot.lane.b32.xlu0 %v4098, 96
      %v4121 = vpop.permute.xlu0 %4120
      %4122 = vrot.lane.b32.xlu0 %v4099, 96
      %v4123 = vpop.permute.xlu0 %4122
      %4124 = vrot.lane.b32.xlu0 %v4100, 96
      %v4125 = vpop.permute.xlu0 %4124
      %4126 = vrot.lane.b32.xlu0 %v4101, 96
      %v4127 = vpop.permute.xlu0 %4126
      %4128 = vrot.lane.b32.xlu0 %v4102, 96
      %v4129 = vpop.permute.xlu0 %4128
      %4130 = vrot.lane.b32.xlu0 %v4103, 96
      %v4131 = vpop.permute.xlu0 %4130
      %4132 = vrot.lane.b32.xlu0 %v4104, 96
      %v4133 = vpop.permute.xlu0 %4132
      %4134 = vrot.lane.b32.xlu0 %v4105, 96
      %v4135 = vpop.permute.xlu0 %4134
      %4136 = vrot.lane.b32.xlu0 %v4106, 96
      %v4137 = vpop.permute.xlu0 %4136
      %4138 = vrot.lane.b32.xlu0 %v4107, 96
      %v4139 = vpop.permute.xlu0 %4138
      %4156 = vmatprep.subr.bf16.mxu0 0
      %4157 = vmatpush1.bf16.msra.mxu0 %v4123
      %4158 = vmatprep.subr.bf16.mxu0 0
      %4159 = vmatpush1.bf16.msra.mxu0 %v4121
      %4160 = vmatprep.subr.bf16.mxu0 0
      %4161 = vmatpush1.bf16.msra.mxu0 %v4119
      %4162 = vmatprep.subr.bf16.mxu0 0
      %4163 = vmatpush1.bf16.msra.mxu0 %v4117
      %4164 = vmatprep.subr.bf16.mxu0 0
      %4165 = vmatpush1.bf16.msra.mxu0 %v4115
      %4166 = vmatprep.subr.bf16.mxu0 0
      %4167 = vmatpush1.bf16.msra.mxu0 %v4113
      %4168 = vmatprep.subr.bf16.mxu0 0
      %4169 = vmatpush1.bf16.msra.mxu0 %v4111
      %4170 = vmatprep.subr.bf16.mxu0 0
      %4171 = vmatpush1.bf16.msra.mxu0 %v4109
      %4172 = vmatprep.subr.bf16.mxu0 0
      %4173 = vmatpush2.bf16.msra.mxu0 %v4139
      %4174 = vmatprep.subr.bf16.mxu0 0
      %4175 = vmatpush2.bf16.msra.mxu0 %v4137
      %4176 = vmatprep.subr.bf16.mxu0 0
      %4177 = vmatpush2.bf16.msra.mxu0 %v4135
      %4178 = vmatprep.subr.bf16.mxu0 0
      %4179 = vmatpush2.bf16.msra.mxu0 %v4133
      %4180 = vmatprep.subr.bf16.mxu0 0
      %4181 = vmatpush2.bf16.msra.mxu0 %v4131
      %4182 = vmatprep.subr.bf16.mxu0 0
      %4183 = vmatpush2.bf16.msra.mxu0 %v4129
      %4184 = vmatprep.subr.bf16.mxu0 0
      %4185 = vmatpush2.bf16.msra.mxu0 %v4127
      %4186 = vmatprep.subr.bf16.mxu0 0
      %4187 = vmatpush2.bf16.msra.mxu0 %v4125
      %4188 = vmatprep.mubr.bf16.mxu0 %v3997
      %4189 = vmatmul.mubr.bf16.gmra.mxu0 %v3996
      %v4190 = vpop.f32.mrf.mxu0
      %v4191 = vadd.f32 0.0, %v4190
      %v4192 = vpop.f32.mrf.mxu0
      %v4193 = vpop.f32.mrf.mxu0
      %v4194 = vadd.f32 0.0, %v4193
      %v4195 = vpop.f32.mrf.mxu0
      %4196 = vmatprep.mubr.bf16.mxu0 %v3999
      %4197 = vmatmul.mubr.bf16.gmra.mxu0 %v3998
      %v4198 = vpop.f32.mrf.mxu0
      %v4199 = vadd.f32 0.0, %v4198
      %v4200 = vpop.f32.mrf.mxu0
      %v4201 = vpop.f32.mrf.mxu0
      %v4202 = vadd.f32 0.0, %v4201
      %v4203 = vpop.f32.mrf.mxu0
      %4204 = vmatprep.mubr.bf16.mxu0 %v4001
      %4205 = vmatmul.mubr.bf16.gmra.mxu0 %v4000
      %v4206 = vpop.f32.mrf.mxu0
      %v4207 = vadd.f32 0.0, %v4206
      %v4208 = vpop.f32.mrf.mxu0
      %v4209 = vpop.f32.mrf.mxu0
      %v4210 = vadd.f32 0.0, %v4209
      %v4211 = vpop.f32.mrf.mxu0
      %4212 = vmatprep.mubr.bf16.mxu0 %v4003
      %4213 = vmatmul.mubr.bf16.gmra.mxu0 %v4002
      %v4214 = vpop.f32.mrf.mxu0
      %v4215 = vadd.f32 0.0, %v4214
      %v4216 = vpop.f32.mrf.mxu0
      %v4217 = vpop.f32.mrf.mxu0
      %v4218 = vadd.f32 0.0, %v4217
      %v4219 = vpop.f32.mrf.mxu0
      %4220 = vmatprep.mubr.bf16.mxu0 %v4005
      %4221 = vmatmul.mubr.bf16.gmra.mxu0 %v4004
      %v4222 = vpop.f32.mrf.mxu0
      %v4223 = vadd.f32 0.0, %v4222
      %v4224 = vpop.f32.mrf.mxu0
      %v4225 = vpop.f32.mrf.mxu0
      %v4226 = vadd.f32 0.0, %v4225
      %v4227 = vpop.f32.mrf.mxu0
      %4228 = vmatprep.mubr.bf16.mxu0 %v4007
      %4229 = vmatmul.mubr.bf16.gmra.mxu0 %v4006
      %v4230 = vpop.f32.mrf.mxu0
      %v4231 = vadd.f32 0.0, %v4230
      %v4232 = vpop.f32.mrf.mxu0
      %v4233 = vpop.f32.mrf.mxu0
      %v4234 = vadd.f32 0.0, %v4233
      %v4235 = vpop.f32.mrf.mxu0
      %4236 = vmatprep.mubr.bf16.mxu0 %v4009
      %4237 = vmatmul.mubr.bf16.gmra.mxu0 %v4008
      %v4238 = vpop.f32.mrf.mxu0
      %v4239 = vadd.f32 0.0, %v4238
      %v4240 = vpop.f32.mrf.mxu0
      %v4241 = vpop.f32.mrf.mxu0
      %v4242 = vadd.f32 0.0, %v4241
      %v4243 = vpop.f32.mrf.mxu0
      %4244 = vmatprep.mubr.bf16.mxu0 %v4011
      %4245 = vmatmul.mubr.bf16.gmra.mxu0 %v4010
      %v4246 = vpop.f32.mrf.mxu0
      %v4247 = vadd.f32 0.0, %v4246
      %v4248 = vpop.f32.mrf.mxu0
      %v4249 = vpop.f32.mrf.mxu0
      %v4250 = vadd.f32 0.0, %v4249
      %v4251 = vpop.f32.mrf.mxu0
      %4252 = vmatprep.mubr.bf16.mxu0 %v4013
      %4253 = vmatmul.mubr.bf16.gmra.mxu0 %v4012
      %v4254 = vpop.f32.mrf.mxu0
      %v4255 = vadd.f32 0.0, %v4254
      %v4256 = vpop.f32.mrf.mxu0
      %v4257 = vpop.f32.mrf.mxu0
      %v4258 = vadd.f32 0.0, %v4257
      %v4259 = vpop.f32.mrf.mxu0
      %4260 = vmatprep.mubr.bf16.mxu0 %v4015
      %4261 = vmatmul.mubr.bf16.gmra.mxu0 %v4014
      %v4262 = vpop.f32.mrf.mxu0
      %v4263 = vadd.f32 0.0, %v4262
      %v4264 = vpop.f32.mrf.mxu0
      %v4265 = vpop.f32.mrf.mxu0
      %v4266 = vadd.f32 0.0, %v4265
      %v4267 = vpop.f32.mrf.mxu0
      %4268 = vmatprep.mubr.bf16.mxu0 %v4017
      %4269 = vmatmul.mubr.bf16.gmra.mxu0 %v4016
      %v4270 = vpop.f32.mrf.mxu0
      %v4271 = vadd.f32 0.0, %v4270
      %v4272 = vpop.f32.mrf.mxu0
      %v4273 = vpop.f32.mrf.mxu0
      %v4274 = vadd.f32 0.0, %v4273
      %v4275 = vpop.f32.mrf.mxu0
      %4276 = vmatprep.mubr.bf16.mxu0 %v4019
      %4277 = vmatmul.mubr.bf16.gmra.mxu0 %v4018
      %v4278 = vpop.f32.mrf.mxu0
      %v4279 = vadd.f32 0.0, %v4278
      %v4280 = vpop.f32.mrf.mxu0
      %v4281 = vpop.f32.mrf.mxu0
      %v4282 = vadd.f32 0.0, %v4281
      %v4283 = vpop.f32.mrf.mxu0
      %4284 = vmatprep.mubr.bf16.mxu0 %v4021
      %4285 = vmatmul.mubr.bf16.gmra.mxu0 %v4020
      %v4286 = vpop.f32.mrf.mxu0
      %v4287 = vadd.f32 0.0, %v4286
      %v4288 = vpop.f32.mrf.mxu0
      %v4289 = vpop.f32.mrf.mxu0
      %v4290 = vadd.f32 0.0, %v4289
      %v4291 = vpop.f32.mrf.mxu0
      %4292 = vmatprep.mubr.bf16.mxu0 %v4023
      %4293 = vmatmul.mubr.bf16.gmra.mxu0 %v4022
      %v4294 = vpop.f32.mrf.mxu0
      %v4295 = vadd.f32 0.0, %v4294
      %v4296 = vpop.f32.mrf.mxu0
      %v4297 = vpop.f32.mrf.mxu0
      %v4298 = vadd.f32 0.0, %v4297
      %v4299 = vpop.f32.mrf.mxu0
      %4300 = vmatprep.mubr.bf16.mxu0 %v4025
      %4301 = vmatmul.mubr.bf16.gmra.mxu0 %v4024
      %v4302 = vpop.f32.mrf.mxu0
      %v4303 = vadd.f32 0.0, %v4302
      %v4304 = vpop.f32.mrf.mxu0
      %v4305 = vpop.f32.mrf.mxu0
      %v4306 = vadd.f32 0.0, %v4305
      %v4307 = vpop.f32.mrf.mxu0
      %4308 = vmatprep.mubr.bf16.mxu0 %v4027
      %4309 = vmatmul.mubr.bf16.gmra.mxu0 %v4026
      %v4310 = vpop.f32.mrf.mxu0
      %v4311 = vadd.f32 0.0, %v4310
      %v4312 = vpop.f32.mrf.mxu0
      %v4313 = vpop.f32.mrf.mxu0
      %v4314 = vadd.f32 0.0, %v4313
      %v4315 = vpop.f32.mrf.mxu0
      %4316 = vdwg.mxu0
      %4318 = vset.pattern.permute.xlu0 0
      %4319 = vperm.xlu0 %4318, %v3324
      %v4320 = vpop.permute.xlu0 %4319
      %4323 = vset.pattern.permute.xlu0 0
      %4324 = vperm.xlu0 %4323, %v3326
      %v4325 = vpop.permute.xlu0 %4324
      %4328 = vset.pattern.permute.xlu0 0
      %4329 = vperm.xlu0 %4328, %v3328
      %v4330 = vpop.permute.xlu0 %4329
      %4333 = vset.pattern.permute.xlu0 0
      %4334 = vperm.xlu0 %4333, %v3330
      %v4335 = vpop.permute.xlu0 %4334
      %4338 = vset.pattern.permute.xlu0 0
      %4339 = vperm.xlu0 %4338, %v3332
      %v4340 = vpop.permute.xlu0 %4339
      %4343 = vset.pattern.permute.xlu0 0
      %4344 = vperm.xlu0 %4343, %v3334
      %v4345 = vpop.permute.xlu0 %4344
      %4348 = vset.pattern.permute.xlu0 0
      %4349 = vperm.xlu0 %4348, %v3336
      %v4350 = vpop.permute.xlu0 %4349
      %4353 = vset.pattern.permute.xlu0 0
      %4354 = vperm.xlu0 %4353, %v3338
      %v4355 = vpop.permute.xlu0 %4354
      %4358 = vset.pattern.permute.xlu0 0
      %4359 = vperm.xlu0 %4358, %v3340
      %v4360 = vpop.permute.xlu0 %4359
      %4363 = vset.pattern.permute.xlu0 0
      %4364 = vperm.xlu0 %4363, %v3342
      %v4365 = vpop.permute.xlu0 %4364
      %4368 = vset.pattern.permute.xlu0 0
      %4369 = vperm.xlu0 %4368, %v3344
      %v4370 = vpop.permute.xlu0 %4369
      %4373 = vset.pattern.permute.xlu0 0
      %4374 = vperm.xlu0 %4373, %v3346
      %v4375 = vpop.permute.xlu0 %4374
      %4378 = vset.pattern.permute.xlu0 0
      %4379 = vperm.xlu0 %4378, %v3348
      %v4380 = vpop.permute.xlu0 %4379
      %4383 = vset.pattern.permute.xlu0 0
      %4384 = vperm.xlu0 %4383, %v3350
      %v4385 = vpop.permute.xlu0 %4384
      %4388 = vset.pattern.permute.xlu0 0
      %4389 = vperm.xlu0 %4388, %v3352
      %v4390 = vpop.permute.xlu0 %4389
      %4393 = vset.pattern.permute.xlu0 0
      %4394 = vperm.xlu0 %4393, %v3354
      %v4395 = vpop.permute.xlu0 %4394
      %4398 = vset.pattern.permute.xlu0 0
      %4399 = vperm.xlu0 %4398, %v3356
      %v4400 = vpop.permute.xlu0 %4399
      %4403 = vset.pattern.permute.xlu0 0
      %4404 = vperm.xlu0 %4403, %v3358
      %v4405 = vpop.permute.xlu0 %4404
      %4408 = vset.pattern.permute.xlu0 0
      %4409 = vperm.xlu0 %4408, %v3360
      %v4410 = vpop.permute.xlu0 %4409
      %4413 = vset.pattern.permute.xlu0 0
      %4414 = vperm.xlu0 %4413, %v3362
      %v4415 = vpop.permute.xlu0 %4414
      %4418 = vset.pattern.permute.xlu0 0
      %4419 = vperm.xlu0 %4418, %v3364
      %v4420 = vpop.permute.xlu0 %4419
      %4423 = vset.pattern.permute.xlu0 0
      %4424 = vperm.xlu0 %4423, %v3366
      %v4425 = vpop.permute.xlu0 %4424
      %4428 = vset.pattern.permute.xlu0 0
      %4429 = vperm.xlu0 %4428, %v3368
      %v4430 = vpop.permute.xlu0 %4429
      %4433 = vset.pattern.permute.xlu0 0
      %4434 = vperm.xlu0 %4433, %v3370
      %v4435 = vpop.permute.xlu0 %4434
      %4438 = vset.pattern.permute.xlu0 0
      %4439 = vperm.xlu0 %4438, %v3372
      %v4440 = vpop.permute.xlu0 %4439
      %4443 = vset.pattern.permute.xlu0 0
      %4444 = vperm.xlu0 %4443, %v3374
      %v4445 = vpop.permute.xlu0 %4444
      %4448 = vset.pattern.permute.xlu0 0
      %4449 = vperm.xlu0 %4448, %v3376
      %v4450 = vpop.permute.xlu0 %4449
      %4453 = vset.pattern.permute.xlu0 0
      %4454 = vperm.xlu0 %4453, %v3378
      %v4455 = vpop.permute.xlu0 %4454
      %4458 = vset.pattern.permute.xlu0 0
      %4459 = vperm.xlu0 %4458, %v3380
      %v4460 = vpop.permute.xlu0 %4459
      %4463 = vset.pattern.permute.xlu0 0
      %4464 = vperm.xlu0 %4463, %v3382
      %v4465 = vpop.permute.xlu0 %4464
      %4468 = vset.pattern.permute.xlu0 0
      %4469 = vperm.xlu0 %4468, %v3384
      %v4470 = vpop.permute.xlu0 %4469
      %4473 = vset.pattern.permute.xlu0 0
      %4474 = vperm.xlu0 %4473, %v3386
      %v4475 = vpop.permute.xlu0 %4474
      %v4477 = vld [vmem:[%s321] sm:$0xf]
      %v4478 = vld [vmem:[%s321 + $0x4] sm:$0xf]
      %v4479 = vld [vmem:[%s321 + $0x8] sm:$0xf]
      %v4480 = vld [vmem:[%s321 + $0xc] sm:$0xf]
      %v4481 = vld [vmem:[%s321 + $0x10] sm:$0xf]
      %v4482 = vld [vmem:[%s321 + $0x14] sm:$0xf]
      %v4483 = vld [vmem:[%s321 + $0x18] sm:$0xf]
      %v4484 = vld [vmem:[%s321 + $0x1c] sm:$0xf]
      %v4485 = vld [vmem:[%s321 + $0x20] sm:$0xf]
      %v4486 = vld [vmem:[%s321 + $0x24] sm:$0xf]
      %v4487 = vld [vmem:[%s321 + $0x28] sm:$0xf]
      %v4488 = vld [vmem:[%s321 + $0x2c] sm:$0xf]
      %v4489 = vld [vmem:[%s321 + $0x30] sm:$0xf]
      %v4490 = vld [vmem:[%s321 + $0x34] sm:$0xf]
      %v4491 = vld [vmem:[%s321 + $0x38] sm:$0xf]
      %v4492 = vld [vmem:[%s321 + $0x3c] sm:$0xf]
      %v4493 = vld [vmem:[%s321 + $0x40] sm:$0xf]
      %v4494 = vld [vmem:[%s321 + $0x44] sm:$0xf]
      %v4495 = vld [vmem:[%s321 + $0x48] sm:$0xf]
      %v4496 = vld [vmem:[%s321 + $0x4c] sm:$0xf]
      %v4497 = vld [vmem:[%s321 + $0x50] sm:$0xf]
      %v4498 = vld [vmem:[%s321 + $0x54] sm:$0xf]
      %v4499 = vld [vmem:[%s321 + $0x58] sm:$0xf]
      %v4500 = vld [vmem:[%s321 + $0x5c] sm:$0xf]
      %v4501 = vld [vmem:[%s321 + $0x60] sm:$0xf]
      %v4502 = vld [vmem:[%s321 + $0x64] sm:$0xf]
      %v4503 = vld [vmem:[%s321 + $0x68] sm:$0xf]
      %v4504 = vld [vmem:[%s321 + $0x6c] sm:$0xf]
      %v4505 = vld [vmem:[%s321 + $0x70] sm:$0xf]
      %v4506 = vld [vmem:[%s321 + $0x74] sm:$0xf]
      %v4507 = vld [vmem:[%s321 + $0x78] sm:$0xf]
      %v4508 = vld [vmem:[%s321 + $0x7c] sm:$0xf]
      %v4509 = vld [vmem:[%s332] sm:$0xf]
      %v4510 = vld [vmem:[%s332 + $0x4] sm:$0xf]
      %v4511 = vld [vmem:[%s332 + $0x8] sm:$0xf]
      %v4512 = vld [vmem:[%s332 + $0xc] sm:$0xf]
      %v4513 = vld [vmem:[%s332 + $0x10] sm:$0xf]
      %v4514 = vld [vmem:[%s332 + $0x14] sm:$0xf]
      %v4515 = vld [vmem:[%s332 + $0x18] sm:$0xf]
      %v4516 = vld [vmem:[%s332 + $0x1c] sm:$0xf]
      %v4517 = vld [vmem:[%s332 + $0x20] sm:$0xf]
      %v4518 = vld [vmem:[%s332 + $0x24] sm:$0xf]
      %v4519 = vld [vmem:[%s332 + $0x28] sm:$0xf]
      %v4520 = vld [vmem:[%s332 + $0x2c] sm:$0xf]
      %v4521 = vld [vmem:[%s332 + $0x30] sm:$0xf]
      %v4522 = vld [vmem:[%s332 + $0x34] sm:$0xf]
      %v4523 = vld [vmem:[%s332 + $0x38] sm:$0xf]
      %v4524 = vld [vmem:[%s332 + $0x3c] sm:$0xf]
      %v4525 = vld [vmem:[%s332 + $0x40] sm:$0xf]
      %v4526 = vld [vmem:[%s332 + $0x44] sm:$0xf]
      %v4527 = vld [vmem:[%s332 + $0x48] sm:$0xf]
      %v4528 = vld [vmem:[%s332 + $0x4c] sm:$0xf]
      %v4529 = vld [vmem:[%s332 + $0x50] sm:$0xf]
      %v4530 = vld [vmem:[%s332 + $0x54] sm:$0xf]
      %v4531 = vld [vmem:[%s332 + $0x58] sm:$0xf]
      %v4532 = vld [vmem:[%s332 + $0x5c] sm:$0xf]
      %v4533 = vld [vmem:[%s332 + $0x60] sm:$0xf]
      %v4534 = vld [vmem:[%s332 + $0x64] sm:$0xf]
      %v4535 = vld [vmem:[%s332 + $0x68] sm:$0xf]
      %v4536 = vld [vmem:[%s332 + $0x6c] sm:$0xf]
      %v4537 = vld [vmem:[%s332 + $0x70] sm:$0xf]
      %v4538 = vld [vmem:[%s332 + $0x74] sm:$0xf]
      %v4539 = vld [vmem:[%s332 + $0x78] sm:$0xf]
      %v4540 = vld [vmem:[%s332 + $0x7c] sm:$0xf]
      %v4541 = vld [vmem:[%s343] sm:$0xf]
      %v4542 = vld [vmem:[%s343 + $0x4] sm:$0xf]
      %v4543 = vld [vmem:[%s343 + $0x8] sm:$0xf]
      %v4544 = vld [vmem:[%s343 + $0xc] sm:$0xf]
      %v4545 = vld [vmem:[%s343 + $0x10] sm:$0xf]
      %v4546 = vld [vmem:[%s343 + $0x14] sm:$0xf]
      %v4547 = vld [vmem:[%s343 + $0x18] sm:$0xf]
      %v4548 = vld [vmem:[%s343 + $0x1c] sm:$0xf]
      %v4549 = vld [vmem:[%s343 + $0x20] sm:$0xf]
      %v4550 = vld [vmem:[%s343 + $0x24] sm:$0xf]
      %v4551 = vld [vmem:[%s343 + $0x28] sm:$0xf]
      %v4552 = vld [vmem:[%s343 + $0x2c] sm:$0xf]
      %v4553 = vld [vmem:[%s343 + $0x30] sm:$0xf]
      %v4554 = vld [vmem:[%s343 + $0x34] sm:$0xf]
      %v4555 = vld [vmem:[%s343 + $0x38] sm:$0xf]
      %v4556 = vld [vmem:[%s343 + $0x3c] sm:$0xf]
      %v4557 = vld [vmem:[%s343 + $0x40] sm:$0xf]
      %v4558 = vld [vmem:[%s343 + $0x44] sm:$0xf]
      %v4559 = vld [vmem:[%s343 + $0x48] sm:$0xf]
      %v4560 = vld [vmem:[%s343 + $0x4c] sm:$0xf]
      %v4561 = vld [vmem:[%s343 + $0x50] sm:$0xf]
      %v4562 = vld [vmem:[%s343 + $0x54] sm:$0xf]
      %v4563 = vld [vmem:[%s343 + $0x58] sm:$0xf]
      %v4564 = vld [vmem:[%s343 + $0x5c] sm:$0xf]
      %v4565 = vld [vmem:[%s343 + $0x60] sm:$0xf]
      %v4566 = vld [vmem:[%s343 + $0x64] sm:$0xf]
      %v4567 = vld [vmem:[%s343 + $0x68] sm:$0xf]
      %v4568 = vld [vmem:[%s343 + $0x6c] sm:$0xf]
      %v4569 = vld [vmem:[%s343 + $0x70] sm:$0xf]
      %v4570 = vld [vmem:[%s343 + $0x74] sm:$0xf]
      %v4571 = vld [vmem:[%s343 + $0x78] sm:$0xf]
      %v4572 = vld [vmem:[%s343 + $0x7c] sm:$0xf]
      %v4605 = vunpack.c.l.b16 %v4477
      %v4606 = vunpack.c.l.b16 %v4478
      %v4607 = vunpack.c.l.b16 %v4479
      %v4608 = vunpack.c.l.b16 %v4480
      %v4609 = vunpack.c.l.b16 %v4481
      %v4610 = vunpack.c.l.b16 %v4482
      %v4611 = vunpack.c.l.b16 %v4483
      %v4612 = vunpack.c.l.b16 %v4484
      %v4613 = vunpack.c.l.b16 %v4485
      %v4614 = vunpack.c.l.b16 %v4486
      %v4615 = vunpack.c.l.b16 %v4487
      %v4616 = vunpack.c.l.b16 %v4488
      %v4617 = vunpack.c.l.b16 %v4489
      %v4618 = vunpack.c.l.b16 %v4490
      %v4619 = vunpack.c.l.b16 %v4491
      %v4620 = vunpack.c.l.b16 %v4492
      %v4621 = vunpack.c.l.b16 %v4493
      %v4622 = vunpack.c.l.b16 %v4494
      %v4623 = vunpack.c.l.b16 %v4495
      %v4624 = vunpack.c.l.b16 %v4496
      %v4625 = vunpack.c.l.b16 %v4497
      %v4626 = vunpack.c.l.b16 %v4498
      %v4627 = vunpack.c.l.b16 %v4499
      %v4628 = vunpack.c.l.b16 %v4500
      %v4629 = vunpack.c.l.b16 %v4501
      %v4630 = vunpack.c.l.b16 %v4502
      %v4631 = vunpack.c.l.b16 %v4503
      %v4632 = vunpack.c.l.b16 %v4504
      %v4633 = vunpack.c.l.b16 %v4505
      %v4634 = vunpack.c.l.b16 %v4506
      %v4635 = vunpack.c.l.b16 %v4507
      %v4636 = vunpack.c.l.b16 %v4508
      %v4637 = vpack.c.b16 %v4606, %v4605
      %v4638 = vpack.c.b16 %v4608, %v4607
      %v4639 = vpack.c.b16 %v4610, %v4609
      %v4640 = vpack.c.b16 %v4612, %v4611
      %v4641 = vpack.c.b16 %v4614, %v4613
      %v4642 = vpack.c.b16 %v4616, %v4615
      %v4643 = vpack.c.b16 %v4618, %v4617
      %v4644 = vpack.c.b16 %v4620, %v4619
      %v4645 = vpack.c.b16 %v4622, %v4621
      %v4646 = vpack.c.b16 %v4624, %v4623
      %v4647 = vpack.c.b16 %v4626, %v4625
      %v4648 = vpack.c.b16 %v4628, %v4627
      %v4649 = vpack.c.b16 %v4630, %v4629
      %v4650 = vpack.c.b16 %v4632, %v4631
      %v4651 = vpack.c.b16 %v4634, %v4633
      %v4652 = vpack.c.b16 %v4636, %v4635
      %4653 = vrot.lane.b32.xlu0 %v4637, 64
      %v4654 = vpop.permute.xlu0 %4653
      %4655 = vrot.lane.b32.xlu0 %v4638, 64
      %v4656 = vpop.permute.xlu0 %4655
      %4657 = vrot.lane.b32.xlu0 %v4639, 64
      %v4658 = vpop.permute.xlu0 %4657
      %4659 = vrot.lane.b32.xlu0 %v4640, 64
      %v4660 = vpop.permute.xlu0 %4659
      %4661 = vrot.lane.b32.xlu0 %v4641, 64
      %v4662 = vpop.permute.xlu0 %4661
      %4663 = vrot.lane.b32.xlu0 %v4642, 64
      %v4664 = vpop.permute.xlu0 %4663
      %4665 = vrot.lane.b32.xlu0 %v4643, 64
      %v4666 = vpop.permute.xlu0 %4665
      %4667 = vrot.lane.b32.xlu0 %v4644, 64
      %v4668 = vpop.permute.xlu0 %4667
      %4669 = vrot.lane.b32.xlu0 %v4645, 64
      %v4670 = vpop.permute.xlu0 %4669
      %4671 = vrot.lane.b32.xlu0 %v4646, 64
      %v4672 = vpop.permute.xlu0 %4671
      %4673 = vrot.lane.b32.xlu0 %v4647, 64
      %v4674 = vpop.permute.xlu0 %4673
      %4675 = vrot.lane.b32.xlu0 %v4648, 64
      %v4676 = vpop.permute.xlu0 %4675
      %4677 = vrot.lane.b32.xlu0 %v4649, 64
      %v4678 = vpop.permute.xlu0 %4677
      %4679 = vrot.lane.b32.xlu0 %v4650, 64
      %v4680 = vpop.permute.xlu0 %4679
      %4681 = vrot.lane.b32.xlu0 %v4651, 64
      %v4682 = vpop.permute.xlu0 %4681
      %4683 = vrot.lane.b32.xlu0 %v4652, 64
      %v4684 = vpop.permute.xlu0 %4683
      %v4717 = vunpack.c.l.b16 %v4509
      %v4718 = vunpack.c.l.b16 %v4510
      %v4719 = vunpack.c.l.b16 %v4511
      %v4720 = vunpack.c.l.b16 %v4512
      %v4721 = vunpack.c.l.b16 %v4513
      %v4722 = vunpack.c.l.b16 %v4514
      %v4723 = vunpack.c.l.b16 %v4515
      %v4724 = vunpack.c.l.b16 %v4516
      %v4725 = vunpack.c.l.b16 %v4517
      %v4726 = vunpack.c.l.b16 %v4518
      %v4727 = vunpack.c.l.b16 %v4519
      %v4728 = vunpack.c.l.b16 %v4520
      %v4729 = vunpack.c.l.b16 %v4521
      %v4730 = vunpack.c.l.b16 %v4522
      %v4731 = vunpack.c.l.b16 %v4523
      %v4732 = vunpack.c.l.b16 %v4524
      %v4733 = vunpack.c.l.b16 %v4525
      %v4734 = vunpack.c.l.b16 %v4526
      %v4735 = vunpack.c.l.b16 %v4527
      %v4736 = vunpack.c.l.b16 %v4528
      %v4737 = vunpack.c.l.b16 %v4529
      %v4738 = vunpack.c.l.b16 %v4530
      %v4739 = vunpack.c.l.b16 %v4531
      %v4740 = vunpack.c.l.b16 %v4532
      %v4741 = vunpack.c.l.b16 %v4533
      %v4742 = vunpack.c.l.b16 %v4534
      %v4743 = vunpack.c.l.b16 %v4535
      %v4744 = vunpack.c.l.b16 %v4536
      %v4745 = vunpack.c.l.b16 %v4537
      %v4746 = vunpack.c.l.b16 %v4538
      %v4747 = vunpack.c.l.b16 %v4539
      %v4748 = vunpack.c.l.b16 %v4540
      %v4749 = vpack.c.b16 %v4718, %v4717
      %v4750 = vpack.c.b16 %v4720, %v4719
      %v4751 = vpack.c.b16 %v4722, %v4721
      %v4752 = vpack.c.b16 %v4724, %v4723
      %v4753 = vpack.c.b16 %v4726, %v4725
      %v4754 = vpack.c.b16 %v4728, %v4727
      %v4755 = vpack.c.b16 %v4730, %v4729
      %v4756 = vpack.c.b16 %v4732, %v4731
      %v4757 = vpack.c.b16 %v4734, %v4733
      %v4758 = vpack.c.b16 %v4736, %v4735
      %v4759 = vpack.c.b16 %v4738, %v4737
      %v4760 = vpack.c.b16 %v4740, %v4739
      %v4761 = vpack.c.b16 %v4742, %v4741
      %v4762 = vpack.c.b16 %v4744, %v4743
      %v4763 = vpack.c.b16 %v4746, %v4745
      %v4764 = vpack.c.b16 %v4748, %v4747
      %4765 = vrot.lane.b32.xlu0 %v4749, 64
      %v4766 = vpop.permute.xlu0 %4765
      %4767 = vrot.lane.b32.xlu0 %v4750, 64
      %v4768 = vpop.permute.xlu0 %4767
      %4769 = vrot.lane.b32.xlu0 %v4751, 64
      %v4770 = vpop.permute.xlu0 %4769
      %4771 = vrot.lane.b32.xlu0 %v4752, 64
      %v4772 = vpop.permute.xlu0 %4771
      %4773 = vrot.lane.b32.xlu0 %v4753, 64
      %v4774 = vpop.permute.xlu0 %4773
      %4775 = vrot.lane.b32.xlu0 %v4754, 64
      %v4776 = vpop.permute.xlu0 %4775
      %4777 = vrot.lane.b32.xlu0 %v4755, 64
      %v4778 = vpop.permute.xlu0 %4777
      %4779 = vrot.lane.b32.xlu0 %v4756, 64
      %v4780 = vpop.permute.xlu0 %4779
      %4781 = vrot.lane.b32.xlu0 %v4757, 64
      %v4782 = vpop.permute.xlu0 %4781
      %4783 = vrot.lane.b32.xlu0 %v4758, 64
      %v4784 = vpop.permute.xlu0 %4783
      %4785 = vrot.lane.b32.xlu0 %v4759, 64
      %v4786 = vpop.permute.xlu0 %4785
      %4787 = vrot.lane.b32.xlu0 %v4760, 64
      %v4788 = vpop.permute.xlu0 %4787
      %4789 = vrot.lane.b32.xlu0 %v4761, 64
      %v4790 = vpop.permute.xlu0 %4789
      %4791 = vrot.lane.b32.xlu0 %v4762, 64
      %v4792 = vpop.permute.xlu0 %4791
      %4793 = vrot.lane.b32.xlu0 %v4763, 64
      %v4794 = vpop.permute.xlu0 %4793
      %4795 = vrot.lane.b32.xlu0 %v4764, 64
      %v4796 = vpop.permute.xlu0 %4795
      %v4798 = vsel %vm917, %v4654, 0
      %v4801 = vsel %vm917, %v4656, 0
      %v4804 = vsel %vm917, %v4658, 0
      %v4807 = vsel %vm917, %v4660, 0
      %v4810 = vsel %vm917, %v4662, 0
      %v4813 = vsel %vm917, %v4664, 0
      %v4816 = vsel %vm917, %v4666, 0
      %v4819 = vsel %vm917, %v4668, 0
      %v4822 = vsel %vm917, %v4670, 0
      %v4825 = vsel %vm917, %v4672, 0
      %v4828 = vsel %vm917, %v4674, 0
      %v4831 = vsel %vm917, %v4676, 0
      %v4834 = vsel %vm917, %v4678, 0
      %v4837 = vsel %vm917, %v4680, 0
      %v4840 = vsel %vm917, %v4682, 0
      %v4843 = vsel %vm917, %v4684, 0
      %v4846 = vsel %vm917, %v4766, 0
      %v4849 = vsel %vm917, %v4768, 0
      %v4852 = vsel %vm917, %v4770, 0
      %v4855 = vsel %vm917, %v4772, 0
      %v4858 = vsel %vm917, %v4774, 0
      %v4861 = vsel %vm917, %v4776, 0
      %v4864 = vsel %vm917, %v4778, 0
      %v4867 = vsel %vm917, %v4780, 0
      %v4870 = vsel %vm917, %v4782, 0
      %v4873 = vsel %vm917, %v4784, 0
      %v4876 = vsel %vm917, %v4786, 0
      %v4879 = vsel %vm917, %v4788, 0
      %v4882 = vsel %vm917, %v4790, 0
      %v4885 = vsel %vm917, %v4792, 0
      %v4888 = vsel %vm917, %v4794, 0
      %v4891 = vsel %vm917, %v4796, 0
      %4893 = vmatprep.subr.bf16.mxu0 0
      %4894 = vmatpush1.bf16.xpose.msra.mxu0 %v4867
      %4895 = vmatprep.subr.bf16.mxu0 0
      %4896 = vmatpush1.bf16.xpose.msra.mxu0 %v4864
      %4897 = vmatprep.subr.bf16.mxu0 0
      %4898 = vmatpush1.bf16.xpose.msra.mxu0 %v4861
      %4899 = vmatprep.subr.bf16.mxu0 0
      %4900 = vmatpush1.bf16.xpose.msra.mxu0 %v4858
      %4901 = vmatprep.subr.bf16.mxu0 0
      %4902 = vmatpush1.bf16.xpose.msra.mxu0 %v4855
      %4903 = vmatprep.subr.bf16.mxu0 0
      %4904 = vmatpush1.bf16.xpose.msra.mxu0 %v4852
      %4905 = vmatprep.subr.bf16.mxu0 0
      %4906 = vmatpush1.bf16.xpose.msra.mxu0 %v4849
      %4907 = vmatprep.subr.bf16.mxu0 0
      %4908 = vmatpush1.bf16.xpose.msra.mxu0 %v4846
      %4909 = vmatprep.subr.bf16.mxu0 0
      %4910 = vmatpush2.bf16.xpose.msra.mxu0 %v4891
      %4911 = vmatprep.subr.bf16.mxu0 0
      %4912 = vmatpush2.bf16.xpose.msra.mxu0 %v4888
      %4913 = vmatprep.subr.bf16.mxu0 0
      %4914 = vmatpush2.bf16.xpose.msra.mxu0 %v4885
      %4915 = vmatprep.subr.bf16.mxu0 0
      %4916 = vmatpush2.bf16.xpose.msra.mxu0 %v4882
      %4917 = vmatprep.subr.bf16.mxu0 0
      %4918 = vmatpush2.bf16.xpose.msra.mxu0 %v4879
      %4919 = vmatprep.subr.bf16.mxu0 0
      %4920 = vmatpush2.bf16.xpose.msra.mxu0 %v4876
      %4921 = vmatprep.subr.bf16.mxu0 0
      %4922 = vmatpush2.bf16.xpose.msra.mxu0 %v4873
      %4923 = vmatprep.subr.bf16.mxu0 0
      %4924 = vmatpush2.bf16.xpose.msra.mxu0 %v4870
      %4925 = vmatprep.mubr.bf16.mxu0 0
      %4926 = vmatmul.mubr.bf16.gmra.mxu0 %v4798
      %v4927 = vpop.f32.mrf.mxu0
      %v4928 = vadd.f32 %v750, %v4927
      %v4929 = vpop.f32.mrf.mxu0
      %v4930 = vadd.f32 %v754, %v4929
      %v4931 = vpop.f32.mrf.mxu0
      %v4932 = vadd.f32 %v750, %v4931
      %v4933 = vpop.f32.mrf.mxu0
      %v4934 = vadd.f32 %v754, %v4933
      %4935 = vmatprep.mubr.bf16.mxu0 0
      %4936 = vmatmul.mubr.bf16.gmra.mxu0 %v4801
      %v4937 = vpop.f32.mrf.mxu0
      %v4938 = vadd.f32 %v750, %v4937
      %v4939 = vpop.f32.mrf.mxu0
      %v4940 = vadd.f32 %v754, %v4939
      %v4941 = vpop.f32.mrf.mxu0
      %v4942 = vadd.f32 %v750, %v4941
      %v4943 = vpop.f32.mrf.mxu0
      %v4944 = vadd.f32 %v754, %v4943
      %4945 = vmatprep.mubr.bf16.mxu0 0
      %4946 = vmatmul.mubr.bf16.gmra.mxu0 %v4804
      %v4947 = vpop.f32.mrf.mxu0
      %v4948 = vadd.f32 %v750, %v4947
      %v4949 = vpop.f32.mrf.mxu0
      %v4950 = vadd.f32 %v754, %v4949
      %v4951 = vpop.f32.mrf.mxu0
      %v4952 = vadd.f32 %v750, %v4951
      %v4953 = vpop.f32.mrf.mxu0
      %v4954 = vadd.f32 %v754, %v4953
      %4955 = vmatprep.mubr.bf16.mxu0 0
      %4956 = vmatmul.mubr.bf16.gmra.mxu0 %v4807
      %v4957 = vpop.f32.mrf.mxu0
      %v4958 = vadd.f32 %v750, %v4957
      %v4959 = vpop.f32.mrf.mxu0
      %v4960 = vadd.f32 %v754, %v4959
      %v4961 = vpop.f32.mrf.mxu0
      %v4962 = vadd.f32 %v750, %v4961
      %v4963 = vpop.f32.mrf.mxu0
      %v4964 = vadd.f32 %v754, %v4963
      %4965 = vmatprep.mubr.bf16.mxu0 0
      %4966 = vmatmul.mubr.bf16.gmra.mxu0 %v4810
      %v4967 = vpop.f32.mrf.mxu0
      %v4968 = vadd.f32 %v750, %v4967
      %v4969 = vpop.f32.mrf.mxu0
      %v4970 = vadd.f32 %v754, %v4969
      %v4971 = vpop.f32.mrf.mxu0
      %v4972 = vadd.f32 %v750, %v4971
      %v4973 = vpop.f32.mrf.mxu0
      %v4974 = vadd.f32 %v754, %v4973
      %4975 = vmatprep.mubr.bf16.mxu0 0
      %4976 = vmatmul.mubr.bf16.gmra.mxu0 %v4813
      %v4977 = vpop.f32.mrf.mxu0
      %v4978 = vadd.f32 %v750, %v4977
      %v4979 = vpop.f32.mrf.mxu0
      %v4980 = vadd.f32 %v754, %v4979
      %v4981 = vpop.f32.mrf.mxu0
      %v4982 = vadd.f32 %v750, %v4981
      %v4983 = vpop.f32.mrf.mxu0
      %v4984 = vadd.f32 %v754, %v4983
      %4985 = vmatprep.mubr.bf16.mxu0 0
      %4986 = vmatmul.mubr.bf16.gmra.mxu0 %v4816
      %v4987 = vpop.f32.mrf.mxu0
      %v4988 = vadd.f32 %v750, %v4987
      %v4989 = vpop.f32.mrf.mxu0
      %v4990 = vadd.f32 %v754, %v4989
      %v4991 = vpop.f32.mrf.mxu0
      %v4992 = vadd.f32 %v750, %v4991
      %v4993 = vpop.f32.mrf.mxu0
      %v4994 = vadd.f32 %v754, %v4993
      %4995 = vmatprep.mubr.bf16.mxu0 0
      %4996 = vmatmul.mubr.bf16.gmra.mxu0 %v4819
      %v4997 = vpop.f32.mrf.mxu0
      %v4998 = vadd.f32 %v750, %v4997
      %v4999 = vpop.f32.mrf.mxu0
      %v5000 = vadd.f32 %v754, %v4999
      %v5001 = vpop.f32.mrf.mxu0
      %v5002 = vadd.f32 %v750, %v5001
      %v5003 = vpop.f32.mrf.mxu0
      %v5004 = vadd.f32 %v754, %v5003
      %5005 = vmatprep.mubr.bf16.mxu0 0
      %5006 = vmatmul.mubr.bf16.gmra.mxu0 %v4822
      %v5007 = vpop.f32.mrf.mxu0
      %v5008 = vadd.f32 %v750, %v5007
      %v5009 = vpop.f32.mrf.mxu0
      %v5010 = vadd.f32 %v754, %v5009
      %v5011 = vpop.f32.mrf.mxu0
      %v5012 = vadd.f32 %v750, %v5011
      %v5013 = vpop.f32.mrf.mxu0
      %v5014 = vadd.f32 %v754, %v5013
      %5015 = vmatprep.mubr.bf16.mxu0 0
      %5016 = vmatmul.mubr.bf16.gmra.mxu0 %v4825
      %v5017 = vpop.f32.mrf.mxu0
      %v5018 = vadd.f32 %v750, %v5017
      %v5019 = vpop.f32.mrf.mxu0
      %v5020 = vadd.f32 %v754, %v5019
      %v5021 = vpop.f32.mrf.mxu0
      %v5022 = vadd.f32 %v750, %v5021
      %v5023 = vpop.f32.mrf.mxu0
      %v5024 = vadd.f32 %v754, %v5023
      %5025 = vmatprep.mubr.bf16.mxu0 0
      %5026 = vmatmul.mubr.bf16.gmra.mxu0 %v4828
      %v5027 = vpop.f32.mrf.mxu0
      %v5028 = vadd.f32 %v750, %v5027
      %v5029 = vpop.f32.mrf.mxu0
      %v5030 = vadd.f32 %v754, %v5029
      %v5031 = vpop.f32.mrf.mxu0
      %v5032 = vadd.f32 %v750, %v5031
      %v5033 = vpop.f32.mrf.mxu0
      %v5034 = vadd.f32 %v754, %v5033
      %5035 = vmatprep.mubr.bf16.mxu0 0
      %5036 = vmatmul.mubr.bf16.gmra.mxu0 %v4831
      %v5037 = vpop.f32.mrf.mxu0
      %v5038 = vadd.f32 %v750, %v5037
      %v5039 = vpop.f32.mrf.mxu0
      %v5040 = vadd.f32 %v754, %v5039
      %v5041 = vpop.f32.mrf.mxu0
      %v5042 = vadd.f32 %v750, %v5041
      %v5043 = vpop.f32.mrf.mxu0
      %v5044 = vadd.f32 %v754, %v5043
      %5045 = vmatprep.mubr.bf16.mxu0 0
      %5046 = vmatmul.mubr.bf16.gmra.mxu0 %v4834
      %v5047 = vpop.f32.mrf.mxu0
      %v5048 = vadd.f32 %v750, %v5047
      %v5049 = vpop.f32.mrf.mxu0
      %v5050 = vadd.f32 %v754, %v5049
      %v5051 = vpop.f32.mrf.mxu0
      %v5052 = vadd.f32 %v750, %v5051
      %v5053 = vpop.f32.mrf.mxu0
      %v5054 = vadd.f32 %v754, %v5053
      %5055 = vmatprep.mubr.bf16.mxu0 0
      %5056 = vmatmul.mubr.bf16.gmra.mxu0 %v4837
      %v5057 = vpop.f32.mrf.mxu0
      %v5058 = vadd.f32 %v750, %v5057
      %v5059 = vpop.f32.mrf.mxu0
      %v5060 = vadd.f32 %v754, %v5059
      %v5061 = vpop.f32.mrf.mxu0
      %v5062 = vadd.f32 %v750, %v5061
      %v5063 = vpop.f32.mrf.mxu0
      %v5064 = vadd.f32 %v754, %v5063
      %5065 = vmatprep.mubr.bf16.mxu0 0
      %5066 = vmatmul.mubr.bf16.gmra.mxu0 %v4840
      %v5067 = vpop.f32.mrf.mxu0
      %v5068 = vadd.f32 %v750, %v5067
      %v5069 = vpop.f32.mrf.mxu0
      %v5070 = vadd.f32 %v754, %v5069
      %v5071 = vpop.f32.mrf.mxu0
      %v5072 = vadd.f32 %v750, %v5071
      %v5073 = vpop.f32.mrf.mxu0
      %v5074 = vadd.f32 %v754, %v5073
      %5075 = vmatprep.mubr.bf16.mxu0 0
      %5076 = vmatmul.mubr.bf16.gmra.mxu0 %v4843
      %v5077 = vpop.f32.mrf.mxu0
      %v5078 = vadd.f32 %v750, %v5077
      %v5079 = vpop.f32.mrf.mxu0
      %v5080 = vadd.f32 %v754, %v5079
      %v5081 = vpop.f32.mrf.mxu0
      %v5082 = vadd.f32 %v750, %v5081
      %v5083 = vpop.f32.mrf.mxu0
      %v5084 = vadd.f32 %v754, %v5083
      %5085 = vdwg.mxu0
      %s5086 = scalar_lea.vmem [#allocation2], 512
      %v5087 = vld [vmem:[%s5086] sm:$0xff]
      %v5088 = vld [vmem:[%s5086 + $0x8] sm:$0xff]
      %v5089 = vld [vmem:[%s5086 + $0x10] sm:$0xff]
      %v5090 = vld [vmem:[%s5086 + $0x18] sm:$0xff]
      %v5091 = vld [vmem:[%s5086 + $0x20] sm:$0xff]
      %v5092 = vld [vmem:[%s5086 + $0x28] sm:$0xff]
      %v5093 = vld [vmem:[%s5086 + $0x30] sm:$0xff]
      %v5094 = vld [vmem:[%s5086 + $0x38] sm:$0xff]
      %v5095 = vld [vmem:[%s5086 + $0x40] sm:$0xff]
      %v5096 = vld [vmem:[%s5086 + $0x48] sm:$0xff]
      %v5097 = vld [vmem:[%s5086 + $0x50] sm:$0xff]
      %v5098 = vld [vmem:[%s5086 + $0x58] sm:$0xff]
      %v5099 = vld [vmem:[%s5086 + $0x60] sm:$0xff]
      %v5100 = vld [vmem:[%s5086 + $0x68] sm:$0xff]
      %v5101 = vld [vmem:[%s5086 + $0x70] sm:$0xff]
      %v5102 = vld [vmem:[%s5086 + $0x78] sm:$0xff]
      %v5103 = vld [vmem:[%s5086 + $0x80] sm:$0xff]
      %v5104 = vld [vmem:[%s5086 + $0x88] sm:$0xff]
      %v5105 = vld [vmem:[%s5086 + $0x90] sm:$0xff]
      %v5106 = vld [vmem:[%s5086 + $0x98] sm:$0xff]
      %v5107 = vld [vmem:[%s5086 + $0xa0] sm:$0xff]
      %v5108 = vld [vmem:[%s5086 + $0xa8] sm:$0xff]
      %v5109 = vld [vmem:[%s5086 + $0xb0] sm:$0xff]
      %v5110 = vld [vmem:[%s5086 + $0xb8] sm:$0xff]
      %v5111 = vld [vmem:[%s5086 + $0xc0] sm:$0xff]
      %v5112 = vld [vmem:[%s5086 + $0xc8] sm:$0xff]
      %v5113 = vld [vmem:[%s5086 + $0xd0] sm:$0xff]
      %v5114 = vld [vmem:[%s5086 + $0xd8] sm:$0xff]
      %v5115 = vld [vmem:[%s5086 + $0xe0] sm:$0xff]
      %v5116 = vld [vmem:[%s5086 + $0xe8] sm:$0xff]
      %v5117 = vld [vmem:[%s5086 + $0xf0] sm:$0xff]
      %v5118 = vld [vmem:[%s5086 + $0xf8] sm:$0xff]
      %v5119 = vmax.f32 %v4928, %v4930
      %5120 = vmax.xlane.f32.xlu0 %v5119
      %v5121 = vpop.xlane.xlu0 %5120
      %v5122 = vmax.f32 %v4932, %v4934
      %5123 = vmax.xlane.f32.xlu0 %v5122
      %v5124 = vpop.xlane.xlu0 %5123
      %v5125 = vmax.f32 %v4938, %v4940
      %5126 = vmax.xlane.f32.xlu0 %v5125
      %v5127 = vpop.xlane.xlu0 %5126
      %v5128 = vmax.f32 %v4942, %v4944
      %5129 = vmax.xlane.f32.xlu0 %v5128
      %v5130 = vpop.xlane.xlu0 %5129
      %v5131 = vmax.f32 %v4948, %v4950
      %5132 = vmax.xlane.f32.xlu0 %v5131
      %v5133 = vpop.xlane.xlu0 %5132
      %v5134 = vmax.f32 %v4952, %v4954
      %5135 = vmax.xlane.f32.xlu0 %v5134
      %v5136 = vpop.xlane.xlu0 %5135
      %v5137 = vmax.f32 %v4958, %v4960
      %5138 = vmax.xlane.f32.xlu0 %v5137
      %v5139 = vpop.xlane.xlu0 %5138
      %v5140 = vmax.f32 %v4962, %v4964
      %5141 = vmax.xlane.f32.xlu0 %v5140
      %v5142 = vpop.xlane.xlu0 %5141
      %v5143 = vmax.f32 %v4968, %v4970
      %5144 = vmax.xlane.f32.xlu0 %v5143
      %v5145 = vpop.xlane.xlu0 %5144
      %v5146 = vmax.f32 %v4972, %v4974
      %5147 = vmax.xlane.f32.xlu0 %v5146
      %v5148 = vpop.xlane.xlu0 %5147
      %v5149 = vmax.f32 %v4978, %v4980
      %5150 = vmax.xlane.f32.xlu0 %v5149
      %v5151 = vpop.xlane.xlu0 %5150
      %v5152 = vmax.f32 %v4982, %v4984
      %5153 = vmax.xlane.f32.xlu0 %v5152
      %v5154 = vpop.xlane.xlu0 %5153
      %v5155 = vmax.f32 %v4988, %v4990
      %5156 = vmax.xlane.f32.xlu0 %v5155
      %v5157 = vpop.xlane.xlu0 %5156
      %v5158 = vmax.f32 %v4992, %v4994
      %5159 = vmax.xlane.f32.xlu0 %v5158
      %v5160 = vpop.xlane.xlu0 %5159
      %v5161 = vmax.f32 %v4998, %v5000
      %5162 = vmax.xlane.f32.xlu0 %v5161
      %v5163 = vpop.xlane.xlu0 %5162
      %v5164 = vmax.f32 %v5002, %v5004
      %5165 = vmax.xlane.f32.xlu0 %v5164
      %v5166 = vpop.xlane.xlu0 %5165
      %v5167 = vmax.f32 %v5008, %v5010
      %5168 = vmax.xlane.f32.xlu0 %v5167
      %v5169 = vpop.xlane.xlu0 %5168
      %v5170 = vmax.f32 %v5012, %v5014
      %5171 = vmax.xlane.f32.xlu0 %v5170
      %v5172 = vpop.xlane.xlu0 %5171
      %v5173 = vmax.f32 %v5018, %v5020
      %5174 = vmax.xlane.f32.xlu0 %v5173
      %v5175 = vpop.xlane.xlu0 %5174
      %v5176 = vmax.f32 %v5022, %v5024
      %5177 = vmax.xlane.f32.xlu0 %v5176
      %v5178 = vpop.xlane.xlu0 %5177
      %v5179 = vmax.f32 %v5028, %v5030
      %5180 = vmax.xlane.f32.xlu0 %v5179
      %v5181 = vpop.xlane.xlu0 %5180
      %v5182 = vmax.f32 %v5032, %v5034
      %5183 = vmax.xlane.f32.xlu0 %v5182
      %v5184 = vpop.xlane.xlu0 %5183
      %v5185 = vmax.f32 %v5038, %v5040
      %5186 = vmax.xlane.f32.xlu0 %v5185
      %v5187 = vpop.xlane.xlu0 %5186
      %v5188 = vmax.f32 %v5042, %v5044
      %5189 = vmax.xlane.f32.xlu0 %v5188
      %v5190 = vpop.xlane.xlu0 %5189
      %v5191 = vmax.f32 %v5048, %v5050
      %5192 = vmax.xlane.f32.xlu0 %v5191
      %v5193 = vpop.xlane.xlu0 %5192
      %v5194 = vmax.f32 %v5052, %v5054
      %5195 = vmax.xlane.f32.xlu0 %v5194
      %v5196 = vpop.xlane.xlu0 %5195
      %v5197 = vmax.f32 %v5058, %v5060
      %5198 = vmax.xlane.f32.xlu0 %v5197
      %v5199 = vpop.xlane.xlu0 %5198
      %v5200 = vmax.f32 %v5062, %v5064
      %5201 = vmax.xlane.f32.xlu0 %v5200
      %v5202 = vpop.xlane.xlu0 %5201
      %v5203 = vmax.f32 %v5068, %v5070
      %5204 = vmax.xlane.f32.xlu0 %v5203
      %v5205 = vpop.xlane.xlu0 %5204
      %v5206 = vmax.f32 %v5072, %v5074
      %5207 = vmax.xlane.f32.xlu0 %v5206
      %v5208 = vpop.xlane.xlu0 %5207
      %v5209 = vmax.f32 %v5078, %v5080
      %5210 = vmax.xlane.f32.xlu0 %v5209
      %v5211 = vpop.xlane.xlu0 %5210
      %v5212 = vmax.f32 %v5082, %v5084
      %5213 = vmax.xlane.f32.xlu0 %v5212
      %v5214 = vpop.xlane.xlu0 %5213
      %v5215 = vmax.f32 %v5087, %v5121
      %v5216 = vmax.f32 %v5088, %v5124
      %v5217 = vmax.f32 %v5089, %v5127
      %v5218 = vmax.f32 %v5090, %v5130
      %v5219 = vmax.f32 %v5091, %v5133
      %v5220 = vmax.f32 %v5092, %v5136
      %v5221 = vmax.f32 %v5093, %v5139
      %v5222 = vmax.f32 %v5094, %v5142
      %v5223 = vmax.f32 %v5095, %v5145
      %v5224 = vmax.f32 %v5096, %v5148
      %v5225 = vmax.f32 %v5097, %v5151
      %v5226 = vmax.f32 %v5098, %v5154
      %v5227 = vmax.f32 %v5099, %v5157
      %v5228 = vmax.f32 %v5100, %v5160
      %v5229 = vmax.f32 %v5101, %v5163
      %v5230 = vmax.f32 %v5102, %v5166
      %v5231 = vmax.f32 %v5103, %v5169
      %v5232 = vmax.f32 %v5104, %v5172
      %v5233 = vmax.f32 %v5105, %v5175
      %v5234 = vmax.f32 %v5106, %v5178
      %v5235 = vmax.f32 %v5107, %v5181
      %v5236 = vmax.f32 %v5108, %v5184
      %v5237 = vmax.f32 %v5109, %v5187
      %v5238 = vmax.f32 %v5110, %v5190
      %v5239 = vmax.f32 %v5111, %v5193
      %v5240 = vmax.f32 %v5112, %v5196
      %v5241 = vmax.f32 %v5113, %v5199
      %v5242 = vmax.f32 %v5114, %v5202
      %v5243 = vmax.f32 %v5115, %v5205
      %v5244 = vmax.f32 %v5116, %v5208
      %v5245 = vmax.f32 %v5117, %v5211
      %v5246 = vmax.f32 %v5118, %v5214
      %v5247 = vsub.f32 %v5087, %v5215
      %v5248 = vsub.f32 %v5088, %v5216
      %v5249 = vsub.f32 %v5089, %v5217
      %v5250 = vsub.f32 %v5090, %v5218
      %v5251 = vsub.f32 %v5091, %v5219
      %v5252 = vsub.f32 %v5092, %v5220
      %v5253 = vsub.f32 %v5093, %v5221
      %v5254 = vsub.f32 %v5094, %v5222
      %v5255 = vsub.f32 %v5095, %v5223
      %v5256 = vsub.f32 %v5096, %v5224
      %v5257 = vsub.f32 %v5097, %v5225
      %v5258 = vsub.f32 %v5098, %v5226
      %v5259 = vsub.f32 %v5099, %v5227
      %v5260 = vsub.f32 %v5100, %v5228
      %v5261 = vsub.f32 %v5101, %v5229
      %v5262 = vsub.f32 %v5102, %v5230
      %v5263 = vsub.f32 %v5103, %v5231
      %v5264 = vsub.f32 %v5104, %v5232
      %v5265 = vsub.f32 %v5105, %v5233
      %v5266 = vsub.f32 %v5106, %v5234
      %v5267 = vsub.f32 %v5107, %v5235
      %v5268 = vsub.f32 %v5108, %v5236
      %v5269 = vsub.f32 %v5109, %v5237
      %v5270 = vsub.f32 %v5110, %v5238
      %v5271 = vsub.f32 %v5111, %v5239
      %v5272 = vsub.f32 %v5112, %v5240
      %v5273 = vsub.f32 %v5113, %v5241
      %v5274 = vsub.f32 %v5114, %v5242
      %v5275 = vsub.f32 %v5115, %v5243
      %v5276 = vsub.f32 %v5116, %v5244
      %v5277 = vsub.f32 %v5117, %v5245
      %v5278 = vsub.f32 %v5118, %v5246
      %v5279 = vmul.f32 %v5247, 1.442695
      %v5280 = vpow.pop %v5279
      %v5281 = vmul.f32 %v5248, 1.442695
      %v5282 = vpow.pop %v5281
      %v5283 = vmul.f32 %v5249, 1.442695
      %v5284 = vpow.pop %v5283
      %v5285 = vmul.f32 %v5250, 1.442695
      %v5286 = vpow.pop %v5285
      %v5287 = vmul.f32 %v5251, 1.442695
      %v5288 = vpow.pop %v5287
      %v5289 = vmul.f32 %v5252, 1.442695
      %v5290 = vpow.pop %v5289
      %v5291 = vmul.f32 %v5253, 1.442695
      %v5292 = vpow.pop %v5291
      %v5293 = vmul.f32 %v5254, 1.442695
      %v5294 = vpow.pop %v5293
      %v5295 = vmul.f32 %v5255, 1.442695
      %v5296 = vpow.pop %v5295
      %v5297 = vmul.f32 %v5256, 1.442695
      %v5298 = vpow.pop %v5297
      %v5299 = vmul.f32 %v5257, 1.442695
      %v5300 = vpow.pop %v5299
      %v5301 = vmul.f32 %v5258, 1.442695
      %v5302 = vpow.pop %v5301
      %v5303 = vmul.f32 %v5259, 1.442695
      %v5304 = vpow.pop %v5303
      %v5305 = vmul.f32 %v5260, 1.442695
      %v5306 = vpow.pop %v5305
      %v5307 = vmul.f32 %v5261, 1.442695
      %v5308 = vpow.pop %v5307
      %v5309 = vmul.f32 %v5262, 1.442695
      %v5310 = vpow.pop %v5309
      %v5311 = vmul.f32 %v5263, 1.442695
      %v5312 = vpow.pop %v5311
      %v5313 = vmul.f32 %v5264, 1.442695
      %v5314 = vpow.pop %v5313
      %v5315 = vmul.f32 %v5265, 1.442695
      %v5316 = vpow.pop %v5315
      %v5317 = vmul.f32 %v5266, 1.442695
      %v5318 = vpow.pop %v5317
      %v5319 = vmul.f32 %v5267, 1.442695
      %v5320 = vpow.pop %v5319
      %v5321 = vmul.f32 %v5268, 1.442695
      %v5322 = vpow.pop %v5321
      %v5323 = vmul.f32 %v5269, 1.442695
      %v5324 = vpow.pop %v5323
      %v5325 = vmul.f32 %v5270, 1.442695
      %v5326 = vpow.pop %v5325
      %v5327 = vmul.f32 %v5271, 1.442695
      %v5328 = vpow.pop %v5327
      %v5329 = vmul.f32 %v5272, 1.442695
      %v5330 = vpow.pop %v5329
      %v5331 = vmul.f32 %v5273, 1.442695
      %v5332 = vpow.pop %v5331
      %v5333 = vmul.f32 %v5274, 1.442695
      %v5334 = vpow.pop %v5333
      %v5335 = vmul.f32 %v5275, 1.442695
      %v5336 = vpow.pop %v5335
      %v5337 = vmul.f32 %v5276, 1.442695
      %v5338 = vpow.pop %v5337
      %v5339 = vmul.f32 %v5277, 1.442695
      %v5340 = vpow.pop %v5339
      %v5341 = vmul.f32 %v5278, 1.442695
      %v5342 = vpow.pop %v5341
      %5344 = vset.pattern.permute.xlu0 0
      %5345 = vperm.xlu0 %5344, %v5215
      %v5346 = vpop.permute.xlu0 %5345
      %5349 = vset.pattern.permute.xlu0 0
      %5350 = vperm.xlu0 %5349, %v5216
      %v5351 = vpop.permute.xlu0 %5350
      %5354 = vset.pattern.permute.xlu0 0
      %5355 = vperm.xlu0 %5354, %v5217
      %v5356 = vpop.permute.xlu0 %5355
      %5359 = vset.pattern.permute.xlu0 0
      %5360 = vperm.xlu0 %5359, %v5218
      %v5361 = vpop.permute.xlu0 %5360
      %5364 = vset.pattern.permute.xlu0 0
      %5365 = vperm.xlu0 %5364, %v5219
      %v5366 = vpop.permute.xlu0 %5365
      %5369 = vset.pattern.permute.xlu0 0
      %5370 = vperm.xlu0 %5369, %v5220
      %v5371 = vpop.permute.xlu0 %5370
      %5374 = vset.pattern.permute.xlu0 0
      %5375 = vperm.xlu0 %5374, %v5221
      %v5376 = vpop.permute.xlu0 %5375
      %5379 = vset.pattern.permute.xlu0 0
      %5380 = vperm.xlu0 %5379, %v5222
      %v5381 = vpop.permute.xlu0 %5380
      %5384 = vset.pattern.permute.xlu0 0
      %5385 = vperm.xlu0 %5384, %v5223
      %v5386 = vpop.permute.xlu0 %5385
      %5389 = vset.pattern.permute.xlu0 0
      %5390 = vperm.xlu0 %5389, %v5224
      %v5391 = vpop.permute.xlu0 %5390
      %5394 = vset.pattern.permute.xlu0 0
      %5395 = vperm.xlu0 %5394, %v5225
      %v5396 = vpop.permute.xlu0 %5395
      %5399 = vset.pattern.permute.xlu0 0
      %5400 = vperm.xlu0 %5399, %v5226
      %v5401 = vpop.permute.xlu0 %5400
      %5404 = vset.pattern.permute.xlu0 0
      %5405 = vperm.xlu0 %5404, %v5227
      %v5406 = vpop.permute.xlu0 %5405
      %5409 = vset.pattern.permute.xlu0 0
      %5410 = vperm.xlu0 %5409, %v5228
      %v5411 = vpop.permute.xlu0 %5410
      %5414 = vset.pattern.permute.xlu0 0
      %5415 = vperm.xlu0 %5414, %v5229
      %v5416 = vpop.permute.xlu0 %5415
      %5419 = vset.pattern.permute.xlu0 0
      %5420 = vperm.xlu0 %5419, %v5230
      %v5421 = vpop.permute.xlu0 %5420
      %5424 = vset.pattern.permute.xlu0 0
      %5425 = vperm.xlu0 %5424, %v5231
      %v5426 = vpop.permute.xlu0 %5425
      %5429 = vset.pattern.permute.xlu0 0
      %5430 = vperm.xlu0 %5429, %v5232
      %v5431 = vpop.permute.xlu0 %5430
      %5434 = vset.pattern.permute.xlu0 0
      %5435 = vperm.xlu0 %5434, %v5233
      %v5436 = vpop.permute.xlu0 %5435
      %5439 = vset.pattern.permute.xlu0 0
      %5440 = vperm.xlu0 %5439, %v5234
      %v5441 = vpop.permute.xlu0 %5440
      %5444 = vset.pattern.permute.xlu0 0
      %5445 = vperm.xlu0 %5444, %v5235
      %v5446 = vpop.permute.xlu0 %5445
      %5449 = vset.pattern.permute.xlu0 0
      %5450 = vperm.xlu0 %5449, %v5236
      %v5451 = vpop.permute.xlu0 %5450
      %5454 = vset.pattern.permute.xlu0 0
      %5455 = vperm.xlu0 %5454, %v5237
      %v5456 = vpop.permute.xlu0 %5455
      %5459 = vset.pattern.permute.xlu0 0
      %5460 = vperm.xlu0 %5459, %v5238
      %v5461 = vpop.permute.xlu0 %5460
      %5464 = vset.pattern.permute.xlu0 0
      %5465 = vperm.xlu0 %5464, %v5239
      %v5466 = vpop.permute.xlu0 %5465
      %5469 = vset.pattern.permute.xlu0 0
      %5470 = vperm.xlu0 %5469, %v5240
      %v5471 = vpop.permute.xlu0 %5470
      %5474 = vset.pattern.permute.xlu0 0
      %5475 = vperm.xlu0 %5474, %v5241
      %v5476 = vpop.permute.xlu0 %5475
      %5479 = vset.pattern.permute.xlu0 0
      %5480 = vperm.xlu0 %5479, %v5242
      %v5481 = vpop.permute.xlu0 %5480
      %5484 = vset.pattern.permute.xlu0 0
      %5485 = vperm.xlu0 %5484, %v5243
      %v5486 = vpop.permute.xlu0 %5485
      %5489 = vset.pattern.permute.xlu0 0
      %5490 = vperm.xlu0 %5489, %v5244
      %v5491 = vpop.permute.xlu0 %5490
      %5494 = vset.pattern.permute.xlu0 0
      %5495 = vperm.xlu0 %5494, %v5245
      %v5496 = vpop.permute.xlu0 %5495
      %5499 = vset.pattern.permute.xlu0 0
      %5500 = vperm.xlu0 %5499, %v5246
      %v5501 = vpop.permute.xlu0 %5500
      %v5503 = vsub.f32 %v4928, %v5346
      %v5504 = vsub.f32 %v4930, %v5346
      %v5505 = vsub.f32 %v4932, %v5351
      %v5506 = vsub.f32 %v4934, %v5351
      %v5507 = vsub.f32 %v4938, %v5356
      %v5508 = vsub.f32 %v4940, %v5356
      %v5509 = vsub.f32 %v4942, %v5361
      %v5510 = vsub.f32 %v4944, %v5361
      %v5511 = vsub.f32 %v4948, %v5366
      %v5512 = vsub.f32 %v4950, %v5366
      %v5513 = vsub.f32 %v4952, %v5371
      %v5514 = vsub.f32 %v4954, %v5371
      %v5515 = vsub.f32 %v4958, %v5376
      %v5516 = vsub.f32 %v4960, %v5376
      %v5517 = vsub.f32 %v4962, %v5381
      %v5518 = vsub.f32 %v4964, %v5381
      %v5519 = vsub.f32 %v4968, %v5386
      %v5520 = vsub.f32 %v4970, %v5386
      %v5521 = vsub.f32 %v4972, %v5391
      %v5522 = vsub.f32 %v4974, %v5391
      %v5523 = vsub.f32 %v4978, %v5396
      %v5524 = vsub.f32 %v4980, %v5396
      %v5525 = vsub.f32 %v4982, %v5401
      %v5526 = vsub.f32 %v4984, %v5401
      %v5527 = vsub.f32 %v4988, %v5406
      %v5528 = vsub.f32 %v4990, %v5406
      %v5529 = vsub.f32 %v4992, %v5411
      %v5530 = vsub.f32 %v4994, %v5411
      %v5531 = vsub.f32 %v4998, %v5416
      %v5532 = vsub.f32 %v5000, %v5416
      %v5533 = vsub.f32 %v5002, %v5421
      %v5534 = vsub.f32 %v5004, %v5421
      %v5535 = vsub.f32 %v5008, %v5426
      %v5536 = vsub.f32 %v5010, %v5426
      %v5537 = vsub.f32 %v5012, %v5431
      %v5538 = vsub.f32 %v5014, %v5431
      %v5539 = vsub.f32 %v5018, %v5436
      %v5540 = vsub.f32 %v5020, %v5436
      %v5541 = vsub.f32 %v5022, %v5441
      %v5542 = vsub.f32 %v5024, %v5441
      %v5543 = vsub.f32 %v5028, %v5446
      %v5544 = vsub.f32 %v5030, %v5446
      %v5545 = vsub.f32 %v5032, %v5451
      %v5546 = vsub.f32 %v5034, %v5451
      %v5547 = vsub.f32 %v5038, %v5456
      %v5548 = vsub.f32 %v5040, %v5456
      %v5549 = vsub.f32 %v5042, %v5461
      %v5550 = vsub.f32 %v5044, %v5461
      %v5551 = vsub.f32 %v5048, %v5466
      %v5552 = vsub.f32 %v5050, %v5466
      %v5553 = vsub.f32 %v5052, %v5471
      %v5554 = vsub.f32 %v5054, %v5471
      %v5555 = vsub.f32 %v5058, %v5476
      %v5556 = vsub.f32 %v5060, %v5476
      %v5557 = vsub.f32 %v5062, %v5481
      %v5558 = vsub.f32 %v5064, %v5481
      %v5559 = vsub.f32 %v5068, %v5486
      %v5560 = vsub.f32 %v5070, %v5486
      %v5561 = vsub.f32 %v5072, %v5491
      %v5562 = vsub.f32 %v5074, %v5491
      %v5563 = vsub.f32 %v5078, %v5496
      %v5564 = vsub.f32 %v5080, %v5496
      %v5565 = vsub.f32 %v5082, %v5501
      %v5566 = vsub.f32 %v5084, %v5501
      %v5567 = vmul.f32 %v5503, 1.442695
      %v5568 = vpow.pop %v5567
      %v5569 = vmul.f32 %v5504, 1.442695
      %v5570 = vpow.pop %v5569
      %v5571 = vmul.f32 %v5505, 1.442695
      %v5572 = vpow.pop %v5571
      %v5573 = vmul.f32 %v5506, 1.442695
      %v5574 = vpow.pop %v5573
      %v5575 = vmul.f32 %v5507, 1.442695
      %v5576 = vpow.pop %v5575
      %v5577 = vmul.f32 %v5508, 1.442695
      %v5578 = vpow.pop %v5577
      %v5579 = vmul.f32 %v5509, 1.442695
      %v5580 = vpow.pop %v5579
      %v5581 = vmul.f32 %v5510, 1.442695
      %v5582 = vpow.pop %v5581
      %v5583 = vmul.f32 %v5511, 1.442695
      %v5584 = vpow.pop %v5583
      %v5585 = vmul.f32 %v5512, 1.442695
      %v5586 = vpow.pop %v5585
      %v5587 = vmul.f32 %v5513, 1.442695
      %v5588 = vpow.pop %v5587
      %v5589 = vmul.f32 %v5514, 1.442695
      %v5590 = vpow.pop %v5589
      %v5591 = vmul.f32 %v5515, 1.442695
      %v5592 = vpow.pop %v5591
      %v5593 = vmul.f32 %v5516, 1.442695
      %v5594 = vpow.pop %v5593
      %v5595 = vmul.f32 %v5517, 1.442695
      %v5596 = vpow.pop %v5595
      %v5597 = vmul.f32 %v5518, 1.442695
      %v5598 = vpow.pop %v5597
      %v5599 = vmul.f32 %v5519, 1.442695
      %v5600 = vpow.pop %v5599
      %v5601 = vmul.f32 %v5520, 1.442695
      %v5602 = vpow.pop %v5601
      %v5603 = vmul.f32 %v5521, 1.442695
      %v5604 = vpow.pop %v5603
      %v5605 = vmul.f32 %v5522, 1.442695
      %v5606 = vpow.pop %v5605
      %v5607 = vmul.f32 %v5523, 1.442695
      %v5608 = vpow.pop %v5607
      %v5609 = vmul.f32 %v5524, 1.442695
      %v5610 = vpow.pop %v5609
      %v5611 = vmul.f32 %v5525, 1.442695
      %v5612 = vpow.pop %v5611
      %v5613 = vmul.f32 %v5526, 1.442695
      %v5614 = vpow.pop %v5613
      %v5615 = vmul.f32 %v5527, 1.442695
      %v5616 = vpow.pop %v5615
      %v5617 = vmul.f32 %v5528, 1.442695
      %v5618 = vpow.pop %v5617
      %v5619 = vmul.f32 %v5529, 1.442695
      %v5620 = vpow.pop %v5619
      %v5621 = vmul.f32 %v5530, 1.442695
      %v5622 = vpow.pop %v5621
      %v5623 = vmul.f32 %v5531, 1.442695
      %v5624 = vpow.pop %v5623
      %v5625 = vmul.f32 %v5532, 1.442695
      %v5626 = vpow.pop %v5625
      %v5627 = vmul.f32 %v5533, 1.442695
      %v5628 = vpow.pop %v5627
      %v5629 = vmul.f32 %v5534, 1.442695
      %v5630 = vpow.pop %v5629
      %v5631 = vmul.f32 %v5535, 1.442695
      %v5632 = vpow.pop %v5631
      %v5633 = vmul.f32 %v5536, 1.442695
      %v5634 = vpow.pop %v5633
      %v5635 = vmul.f32 %v5537, 1.442695
      %v5636 = vpow.pop %v5635
      %v5637 = vmul.f32 %v5538, 1.442695
      %v5638 = vpow.pop %v5637
      %v5639 = vmul.f32 %v5539, 1.442695
      %v5640 = vpow.pop %v5639
      %v5641 = vmul.f32 %v5540, 1.442695
      %v5642 = vpow.pop %v5641
      %v5643 = vmul.f32 %v5541, 1.442695
      %v5644 = vpow.pop %v5643
      %v5645 = vmul.f32 %v5542, 1.442695
      %v5646 = vpow.pop %v5645
      %v5647 = vmul.f32 %v5543, 1.442695
      %v5648 = vpow.pop %v5647
      %v5649 = vmul.f32 %v5544, 1.442695
      %v5650 = vpow.pop %v5649
      %v5651 = vmul.f32 %v5545, 1.442695
      %v5652 = vpow.pop %v5651
      %v5653 = vmul.f32 %v5546, 1.442695
      %v5654 = vpow.pop %v5653
      %v5655 = vmul.f32 %v5547, 1.442695
      %v5656 = vpow.pop %v5655
      %v5657 = vmul.f32 %v5548, 1.442695
      %v5658 = vpow.pop %v5657
      %v5659 = vmul.f32 %v5549, 1.442695
      %v5660 = vpow.pop %v5659
      %v5661 = vmul.f32 %v5550, 1.442695
      %v5662 = vpow.pop %v5661
      %v5663 = vmul.f32 %v5551, 1.442695
      %v5664 = vpow.pop %v5663
      %v5665 = vmul.f32 %v5552, 1.442695
      %v5666 = vpow.pop %v5665
      %v5667 = vmul.f32 %v5553, 1.442695
      %v5668 = vpow.pop %v5667
      %v5669 = vmul.f32 %v5554, 1.442695
      %v5670 = vpow.pop %v5669
      %v5671 = vmul.f32 %v5555, 1.442695
      %v5672 = vpow.pop %v5671
      %v5673 = vmul.f32 %v5556, 1.442695
      %v5674 = vpow.pop %v5673
      %v5675 = vmul.f32 %v5557, 1.442695
      %v5676 = vpow.pop %v5675
      %v5677 = vmul.f32 %v5558, 1.442695
      %v5678 = vpow.pop %v5677
      %v5679 = vmul.f32 %v5559, 1.442695
      %v5680 = vpow.pop %v5679
      %v5681 = vmul.f32 %v5560, 1.442695
      %v5682 = vpow.pop %v5681
      %v5683 = vmul.f32 %v5561, 1.442695
      %v5684 = vpow.pop %v5683
      %v5685 = vmul.f32 %v5562, 1.442695
      %v5686 = vpow.pop %v5685
      %v5687 = vmul.f32 %v5563, 1.442695
      %v5688 = vpow.pop %v5687
      %v5689 = vmul.f32 %v5564, 1.442695
      %v5690 = vpow.pop %v5689
      %v5691 = vmul.f32 %v5565, 1.442695
      %v5692 = vpow.pop %v5691
      %v5693 = vmul.f32 %v5566, 1.442695
      %v5694 = vpow.pop %v5693
      %s5695 = scalar_lea.vmem [#allocation3], 512
      %v5696 = vld [vmem:[%s5695] sm:$0xff]
      %v5697 = vld [vmem:[%s5695 + $0x8] sm:$0xff]
      %v5698 = vld [vmem:[%s5695 + $0x10] sm:$0xff]
      %v5699 = vld [vmem:[%s5695 + $0x18] sm:$0xff]
      %v5700 = vld [vmem:[%s5695 + $0x20] sm:$0xff]
      %v5701 = vld [vmem:[%s5695 + $0x28] sm:$0xff]
      %v5702 = vld [vmem:[%s5695 + $0x30] sm:$0xff]
      %v5703 = vld [vmem:[%s5695 + $0x38] sm:$0xff]
      %v5704 = vld [vmem:[%s5695 + $0x40] sm:$0xff]
      %v5705 = vld [vmem:[%s5695 + $0x48] sm:$0xff]
      %v5706 = vld [vmem:[%s5695 + $0x50] sm:$0xff]
      %v5707 = vld [vmem:[%s5695 + $0x58] sm:$0xff]
      %v5708 = vld [vmem:[%s5695 + $0x60] sm:$0xff]
      %v5709 = vld [vmem:[%s5695 + $0x68] sm:$0xff]
      %v5710 = vld [vmem:[%s5695 + $0x70] sm:$0xff]
      %v5711 = vld [vmem:[%s5695 + $0x78] sm:$0xff]
      %v5712 = vld [vmem:[%s5695 + $0x80] sm:$0xff]
      %v5713 = vld [vmem:[%s5695 + $0x88] sm:$0xff]
      %v5714 = vld [vmem:[%s5695 + $0x90] sm:$0xff]
      %v5715 = vld [vmem:[%s5695 + $0x98] sm:$0xff]
      %v5716 = vld [vmem:[%s5695 + $0xa0] sm:$0xff]
      %v5717 = vld [vmem:[%s5695 + $0xa8] sm:$0xff]
      %v5718 = vld [vmem:[%s5695 + $0xb0] sm:$0xff]
      %v5719 = vld [vmem:[%s5695 + $0xb8] sm:$0xff]
      %v5720 = vld [vmem:[%s5695 + $0xc0] sm:$0xff]
      %v5721 = vld [vmem:[%s5695 + $0xc8] sm:$0xff]
      %v5722 = vld [vmem:[%s5695 + $0xd0] sm:$0xff]
      %v5723 = vld [vmem:[%s5695 + $0xd8] sm:$0xff]
      %v5724 = vld [vmem:[%s5695 + $0xe0] sm:$0xff]
      %v5725 = vld [vmem:[%s5695 + $0xe8] sm:$0xff]
      %v5726 = vld [vmem:[%s5695 + $0xf0] sm:$0xff]
      %v5727 = vld [vmem:[%s5695 + $0xf8] sm:$0xff]
      %v5728 = vmul.f32 %v5280, %v5696
      %v5729 = vmul.f32 %v5282, %v5697
      %v5730 = vmul.f32 %v5284, %v5698
      %v5731 = vmul.f32 %v5286, %v5699
      %v5732 = vmul.f32 %v5288, %v5700
      %v5733 = vmul.f32 %v5290, %v5701
      %v5734 = vmul.f32 %v5292, %v5702
      %v5735 = vmul.f32 %v5294, %v5703
      %v5736 = vmul.f32 %v5296, %v5704
      %v5737 = vmul.f32 %v5298, %v5705
      %v5738 = vmul.f32 %v5300, %v5706
      %v5739 = vmul.f32 %v5302, %v5707
      %v5740 = vmul.f32 %v5304, %v5708
      %v5741 = vmul.f32 %v5306, %v5709
      %v5742 = vmul.f32 %v5308, %v5710
      %v5743 = vmul.f32 %v5310, %v5711
      %v5744 = vmul.f32 %v5312, %v5712
      %v5745 = vmul.f32 %v5314, %v5713
      %v5746 = vmul.f32 %v5316, %v5714
      %v5747 = vmul.f32 %v5318, %v5715
      %v5748 = vmul.f32 %v5320, %v5716
      %v5749 = vmul.f32 %v5322, %v5717
      %v5750 = vmul.f32 %v5324, %v5718
      %v5751 = vmul.f32 %v5326, %v5719
      %v5752 = vmul.f32 %v5328, %v5720
      %v5753 = vmul.f32 %v5330, %v5721
      %v5754 = vmul.f32 %v5332, %v5722
      %v5755 = vmul.f32 %v5334, %v5723
      %v5756 = vmul.f32 %v5336, %v5724
      %v5757 = vmul.f32 %v5338, %v5725
      %v5758 = vmul.f32 %v5340, %v5726
      %v5759 = vmul.f32 %v5342, %v5727
      %v5760 = vadd.f32 %v5568, %v5570
      %5761 = vadd.xlane.f32.xlu0 %v5760
      %v5762 = vpop.xlane.xlu0 %5761
      %v5763 = vadd.f32 %v5572, %v5574
      %5764 = vadd.xlane.f32.xlu0 %v5763
      %v5765 = vpop.xlane.xlu0 %5764
      %v5766 = vadd.f32 %v5576, %v5578
      %5767 = vadd.xlane.f32.xlu0 %v5766
      %v5768 = vpop.xlane.xlu0 %5767
      %v5769 = vadd.f32 %v5580, %v5582
      %5770 = vadd.xlane.f32.xlu0 %v5769
      %v5771 = vpop.xlane.xlu0 %5770
      %v5772 = vadd.f32 %v5584, %v5586
      %5773 = vadd.xlane.f32.xlu0 %v5772
      %v5774 = vpop.xlane.xlu0 %5773
      %v5775 = vadd.f32 %v5588, %v5590
      %5776 = vadd.xlane.f32.xlu0 %v5775
      %v5777 = vpop.xlane.xlu0 %5776
      %v5778 = vadd.f32 %v5592, %v5594
      %5779 = vadd.xlane.f32.xlu0 %v5778
      %v5780 = vpop.xlane.xlu0 %5779
      %v5781 = vadd.f32 %v5596, %v5598
      %5782 = vadd.xlane.f32.xlu0 %v5781
      %v5783 = vpop.xlane.xlu0 %5782
      %v5784 = vadd.f32 %v5600, %v5602
      %5785 = vadd.xlane.f32.xlu0 %v5784
      %v5786 = vpop.xlane.xlu0 %5785
      %v5787 = vadd.f32 %v5604, %v5606
      %5788 = vadd.xlane.f32.xlu0 %v5787
      %v5789 = vpop.xlane.xlu0 %5788
      %v5790 = vadd.f32 %v5608, %v5610
      %5791 = vadd.xlane.f32.xlu0 %v5790
      %v5792 = vpop.xlane.xlu0 %5791
      %v5793 = vadd.f32 %v5612, %v5614
      %5794 = vadd.xlane.f32.xlu0 %v5793
      %v5795 = vpop.xlane.xlu0 %5794
      %v5796 = vadd.f32 %v5616, %v5618
      %5797 = vadd.xlane.f32.xlu0 %v5796
      %v5798 = vpop.xlane.xlu0 %5797
      %v5799 = vadd.f32 %v5620, %v5622
      %5800 = vadd.xlane.f32.xlu0 %v5799
      %v5801 = vpop.xlane.xlu0 %5800
      %v5802 = vadd.f32 %v5624, %v5626
      %5803 = vadd.xlane.f32.xlu0 %v5802
      %v5804 = vpop.xlane.xlu0 %5803
      %v5805 = vadd.f32 %v5628, %v5630
      %5806 = vadd.xlane.f32.xlu0 %v5805
      %v5807 = vpop.xlane.xlu0 %5806
      %v5808 = vadd.f32 %v5632, %v5634
      %5809 = vadd.xlane.f32.xlu0 %v5808
      %v5810 = vpop.xlane.xlu0 %5809
      %v5811 = vadd.f32 %v5636, %v5638
      %5812 = vadd.xlane.f32.xlu0 %v5811
      %v5813 = vpop.xlane.xlu0 %5812
      %v5814 = vadd.f32 %v5640, %v5642
      %5815 = vadd.xlane.f32.xlu0 %v5814
      %v5816 = vpop.xlane.xlu0 %5815
      %v5817 = vadd.f32 %v5644, %v5646
      %5818 = vadd.xlane.f32.xlu0 %v5817
      %v5819 = vpop.xlane.xlu0 %5818
      %v5820 = vadd.f32 %v5648, %v5650
      %5821 = vadd.xlane.f32.xlu0 %v5820
      %v5822 = vpop.xlane.xlu0 %5821
      %v5823 = vadd.f32 %v5652, %v5654
      %5824 = vadd.xlane.f32.xlu0 %v5823
      %v5825 = vpop.xlane.xlu0 %5824
      %v5826 = vadd.f32 %v5656, %v5658
      %5827 = vadd.xlane.f32.xlu0 %v5826
      %v5828 = vpop.xlane.xlu0 %5827
      %v5829 = vadd.f32 %v5660, %v5662
      %5830 = vadd.xlane.f32.xlu0 %v5829
      %v5831 = vpop.xlane.xlu0 %5830
      %v5832 = vadd.f32 %v5664, %v5666
      %5833 = vadd.xlane.f32.xlu0 %v5832
      %v5834 = vpop.xlane.xlu0 %5833
      %v5835 = vadd.f32 %v5668, %v5670
      %5836 = vadd.xlane.f32.xlu0 %v5835
      %v5837 = vpop.xlane.xlu0 %5836
      %v5838 = vadd.f32 %v5672, %v5674
      %5839 = vadd.xlane.f32.xlu0 %v5838
      %v5840 = vpop.xlane.xlu0 %5839
      %v5841 = vadd.f32 %v5676, %v5678
      %5842 = vadd.xlane.f32.xlu0 %v5841
      %v5843 = vpop.xlane.xlu0 %5842
      %v5844 = vadd.f32 %v5680, %v5682
      %5845 = vadd.xlane.f32.xlu0 %v5844
      %v5846 = vpop.xlane.xlu0 %5845
      %v5847 = vadd.f32 %v5684, %v5686
      %5848 = vadd.xlane.f32.xlu0 %v5847
      %v5849 = vpop.xlane.xlu0 %5848
      %v5850 = vadd.f32 %v5688, %v5690
      %5851 = vadd.xlane.f32.xlu0 %v5850
      %v5852 = vpop.xlane.xlu0 %5851
      %v5853 = vadd.f32 %v5692, %v5694
      %5854 = vadd.xlane.f32.xlu0 %v5853
      %v5855 = vpop.xlane.xlu0 %5854
      %v5856 = vadd.f32 %v5728, %v5762
      %v5857 = vadd.f32 %v5729, %v5765
      %v5858 = vadd.f32 %v5730, %v5768
      %v5859 = vadd.f32 %v5731, %v5771
      %v5860 = vadd.f32 %v5732, %v5774
      %v5861 = vadd.f32 %v5733, %v5777
      %v5862 = vadd.f32 %v5734, %v5780
      %v5863 = vadd.f32 %v5735, %v5783
      %v5864 = vadd.f32 %v5736, %v5786
      %v5865 = vadd.f32 %v5737, %v5789
      %v5866 = vadd.f32 %v5738, %v5792
      %v5867 = vadd.f32 %v5739, %v5795
      %v5868 = vadd.f32 %v5740, %v5798
      %v5869 = vadd.f32 %v5741, %v5801
      %v5870 = vadd.f32 %v5742, %v5804
      %v5871 = vadd.f32 %v5743, %v5807
      %v5872 = vadd.f32 %v5744, %v5810
      %v5873 = vadd.f32 %v5745, %v5813
      %v5874 = vadd.f32 %v5746, %v5816
      %v5875 = vadd.f32 %v5747, %v5819
      %v5876 = vadd.f32 %v5748, %v5822
      %v5877 = vadd.f32 %v5749, %v5825
      %v5878 = vadd.f32 %v5750, %v5828
      %v5879 = vadd.f32 %v5751, %v5831
      %v5880 = vadd.f32 %v5752, %v5834
      %v5881 = vadd.f32 %v5753, %v5837
      %v5882 = vadd.f32 %v5754, %v5840
      %v5883 = vadd.f32 %v5755, %v5843
      %v5884 = vadd.f32 %v5756, %v5846
      %v5885 = vadd.f32 %v5757, %v5849
      %v5886 = vadd.f32 %v5758, %v5852
      %v5887 = vadd.f32 %v5759, %v5855
      %5888 = vst.msk [vmem:[%s5695] sm:$0xff] %vm2007, %v5856
      %5889 = vst.msk [vmem:[%s5695 + $0x8] sm:$0xff] %vm2007, %v5857
      %5890 = vst.msk [vmem:[%s5695 + $0x10] sm:$0xff] %vm2007, %v5858
      %5891 = vst.msk [vmem:[%s5695 + $0x18] sm:$0xff] %vm2007, %v5859
      %5892 = vst.msk [vmem:[%s5695 + $0x20] sm:$0xff] %vm2007, %v5860
      %5893 = vst.msk [vmem:[%s5695 + $0x28] sm:$0xff] %vm2007, %v5861
      %5894 = vst.msk [vmem:[%s5695 + $0x30] sm:$0xff] %vm2007, %v5862
      %5895 = vst.msk [vmem:[%s5695 + $0x38] sm:$0xff] %vm2007, %v5863
      %5896 = vst.msk [vmem:[%s5695 + $0x40] sm:$0xff] %vm2007, %v5864
      %5897 = vst.msk [vmem:[%s5695 + $0x48] sm:$0xff] %vm2007, %v5865
      %5898 = vst.msk [vmem:[%s5695 + $0x50] sm:$0xff] %vm2007, %v5866
      %5899 = vst.msk [vmem:[%s5695 + $0x58] sm:$0xff] %vm2007, %v5867
      %5900 = vst.msk [vmem:[%s5695 + $0x60] sm:$0xff] %vm2007, %v5868
      %5901 = vst.msk [vmem:[%s5695 + $0x68] sm:$0xff] %vm2007, %v5869
      %5902 = vst.msk [vmem:[%s5695 + $0x70] sm:$0xff] %vm2007, %v5870
      %5903 = vst.msk [vmem:[%s5695 + $0x78] sm:$0xff] %vm2007, %v5871
      %5904 = vst.msk [vmem:[%s5695 + $0x80] sm:$0xff] %vm2007, %v5872
      %5905 = vst.msk [vmem:[%s5695 + $0x88] sm:$0xff] %vm2007, %v5873
      %5906 = vst.msk [vmem:[%s5695 + $0x90] sm:$0xff] %vm2007, %v5874
      %5907 = vst.msk [vmem:[%s5695 + $0x98] sm:$0xff] %vm2007, %v5875
      %5908 = vst.msk [vmem:[%s5695 + $0xa0] sm:$0xff] %vm2007, %v5876
      %5909 = vst.msk [vmem:[%s5695 + $0xa8] sm:$0xff] %vm2007, %v5877
      %5910 = vst.msk [vmem:[%s5695 + $0xb0] sm:$0xff] %vm2007, %v5878
      %5911 = vst.msk [vmem:[%s5695 + $0xb8] sm:$0xff] %vm2007, %v5879
      %5912 = vst.msk [vmem:[%s5695 + $0xc0] sm:$0xff] %vm2007, %v5880
      %5913 = vst.msk [vmem:[%s5695 + $0xc8] sm:$0xff] %vm2007, %v5881
      %5914 = vst.msk [vmem:[%s5695 + $0xd0] sm:$0xff] %vm2007, %v5882
      %5915 = vst.msk [vmem:[%s5695 + $0xd8] sm:$0xff] %vm2007, %v5883
      %5916 = vst.msk [vmem:[%s5695 + $0xe0] sm:$0xff] %vm2007, %v5884
      %5917 = vst.msk [vmem:[%s5695 + $0xe8] sm:$0xff] %vm2007, %v5885
      %5918 = vst.msk [vmem:[%s5695 + $0xf0] sm:$0xff] %vm2007, %v5886
      %5919 = vst.msk [vmem:[%s5695 + $0xf8] sm:$0xff] %vm2007, %v5887
      %5920 = vst.msk [vmem:[%s5086] sm:$0xff] %vm2007, %v5215
      %5921 = vst.msk [vmem:[%s5086 + $0x8] sm:$0xff] %vm2007, %v5216
      %5922 = vst.msk [vmem:[%s5086 + $0x10] sm:$0xff] %vm2007, %v5217
      %5923 = vst.msk [vmem:[%s5086 + $0x18] sm:$0xff] %vm2007, %v5218
      %5924 = vst.msk [vmem:[%s5086 + $0x20] sm:$0xff] %vm2007, %v5219
      %5925 = vst.msk [vmem:[%s5086 + $0x28] sm:$0xff] %vm2007, %v5220
      %5926 = vst.msk [vmem:[%s5086 + $0x30] sm:$0xff] %vm2007, %v5221
      %5927 = vst.msk [vmem:[%s5086 + $0x38] sm:$0xff] %vm2007, %v5222
      %5928 = vst.msk [vmem:[%s5086 + $0x40] sm:$0xff] %vm2007, %v5223
      %5929 = vst.msk [vmem:[%s5086 + $0x48] sm:$0xff] %vm2007, %v5224
      %5930 = vst.msk [vmem:[%s5086 + $0x50] sm:$0xff] %vm2007, %v5225
      %5931 = vst.msk [vmem:[%s5086 + $0x58] sm:$0xff] %vm2007, %v5226
      %5932 = vst.msk [vmem:[%s5086 + $0x60] sm:$0xff] %vm2007, %v5227
      %5933 = vst.msk [vmem:[%s5086 + $0x68] sm:$0xff] %vm2007, %v5228
      %5934 = vst.msk [vmem:[%s5086 + $0x70] sm:$0xff] %vm2007, %v5229
      %5935 = vst.msk [vmem:[%s5086 + $0x78] sm:$0xff] %vm2007, %v5230
      %5936 = vst.msk [vmem:[%s5086 + $0x80] sm:$0xff] %vm2007, %v5231
      %5937 = vst.msk [vmem:[%s5086 + $0x88] sm:$0xff] %vm2007, %v5232
      %5938 = vst.msk [vmem:[%s5086 + $0x90] sm:$0xff] %vm2007, %v5233
      %5939 = vst.msk [vmem:[%s5086 + $0x98] sm:$0xff] %vm2007, %v5234
      %5940 = vst.msk [vmem:[%s5086 + $0xa0] sm:$0xff] %vm2007, %v5235
      %5941 = vst.msk [vmem:[%s5086 + $0xa8] sm:$0xff] %vm2007, %v5236
      %5942 = vst.msk [vmem:[%s5086 + $0xb0] sm:$0xff] %vm2007, %v5237
      %5943 = vst.msk [vmem:[%s5086 + $0xb8] sm:$0xff] %vm2007, %v5238
      %5944 = vst.msk [vmem:[%s5086 + $0xc0] sm:$0xff] %vm2007, %v5239
      %5945 = vst.msk [vmem:[%s5086 + $0xc8] sm:$0xff] %vm2007, %v5240
      %5946 = vst.msk [vmem:[%s5086 + $0xd0] sm:$0xff] %vm2007, %v5241
      %5947 = vst.msk [vmem:[%s5086 + $0xd8] sm:$0xff] %vm2007, %v5242
      %5948 = vst.msk [vmem:[%s5086 + $0xe0] sm:$0xff] %vm2007, %v5243
      %5949 = vst.msk [vmem:[%s5086 + $0xe8] sm:$0xff] %vm2007, %v5244
      %5950 = vst.msk [vmem:[%s5086 + $0xf0] sm:$0xff] %vm2007, %v5245
      %5951 = vst.msk [vmem:[%s5086 + $0xf8] sm:$0xff] %vm2007, %v5246
      %v5952 = vpack.c.bf16 %v5572, %v5568
      %v5953 = vpack.c.bf16 %v5574, %v5570
      %v5954 = vpack.c.bf16 %v5580, %v5576
      %v5955 = vpack.c.bf16 %v5582, %v5578
      %v5956 = vpack.c.bf16 %v5588, %v5584
      %v5957 = vpack.c.bf16 %v5590, %v5586
      %v5958 = vpack.c.bf16 %v5596, %v5592
      %v5959 = vpack.c.bf16 %v5598, %v5594
      %v5960 = vpack.c.bf16 %v5604, %v5600
      %v5961 = vpack.c.bf16 %v5606, %v5602
      %v5962 = vpack.c.bf16 %v5612, %v5608
      %v5963 = vpack.c.bf16 %v5614, %v5610
      %v5964 = vpack.c.bf16 %v5620, %v5616
      %v5965 = vpack.c.bf16 %v5622, %v5618
      %v5966 = vpack.c.bf16 %v5628, %v5624
      %v5967 = vpack.c.bf16 %v5630, %v5626
      %v5968 = vpack.c.bf16 %v5636, %v5632
      %v5969 = vpack.c.bf16 %v5638, %v5634
      %v5970 = vpack.c.bf16 %v5644, %v5640
      %v5971 = vpack.c.bf16 %v5646, %v5642
      %v5972 = vpack.c.bf16 %v5652, %v5648
      %v5973 = vpack.c.bf16 %v5654, %v5650
      %v5974 = vpack.c.bf16 %v5660, %v5656
      %v5975 = vpack.c.bf16 %v5662, %v5658
      %v5976 = vpack.c.bf16 %v5668, %v5664
      %v5977 = vpack.c.bf16 %v5670, %v5666
      %v5978 = vpack.c.bf16 %v5676, %v5672
      %v5979 = vpack.c.bf16 %v5678, %v5674
      %v5980 = vpack.c.bf16 %v5684, %v5680
      %v5981 = vpack.c.bf16 %v5686, %v5682
      %v5982 = vpack.c.bf16 %v5692, %v5688
      %v5983 = vpack.c.bf16 %v5694, %v5690
      %v6016 = vunpack.c.l.b16 %v4541
      %v6017 = vunpack.c.l.b16 %v4542
      %v6018 = vunpack.c.l.b16 %v4543
      %v6019 = vunpack.c.l.b16 %v4544
      %v6020 = vunpack.c.l.b16 %v4545
      %v6021 = vunpack.c.l.b16 %v4546
      %v6022 = vunpack.c.l.b16 %v4547
      %v6023 = vunpack.c.l.b16 %v4548
      %v6024 = vunpack.c.l.b16 %v4549
      %v6025 = vunpack.c.l.b16 %v4550
      %v6026 = vunpack.c.l.b16 %v4551
      %v6027 = vunpack.c.l.b16 %v4552
      %v6028 = vunpack.c.l.b16 %v4553
      %v6029 = vunpack.c.l.b16 %v4554
      %v6030 = vunpack.c.l.b16 %v4555
      %v6031 = vunpack.c.l.b16 %v4556
      %v6032 = vunpack.c.l.b16 %v4557
      %v6033 = vunpack.c.l.b16 %v4558
      %v6034 = vunpack.c.l.b16 %v4559
      %v6035 = vunpack.c.l.b16 %v4560
      %v6036 = vunpack.c.l.b16 %v4561
      %v6037 = vunpack.c.l.b16 %v4562
      %v6038 = vunpack.c.l.b16 %v4563
      %v6039 = vunpack.c.l.b16 %v4564
      %v6040 = vunpack.c.l.b16 %v4565
      %v6041 = vunpack.c.l.b16 %v4566
      %v6042 = vunpack.c.l.b16 %v4567
      %v6043 = vunpack.c.l.b16 %v4568
      %v6044 = vunpack.c.l.b16 %v4569
      %v6045 = vunpack.c.l.b16 %v4570
      %v6046 = vunpack.c.l.b16 %v4571
      %v6047 = vunpack.c.l.b16 %v4572
      %v6048 = vpack.c.b16 %v6017, %v6016
      %v6049 = vpack.c.b16 %v6019, %v6018
      %v6050 = vpack.c.b16 %v6021, %v6020
      %v6051 = vpack.c.b16 %v6023, %v6022
      %v6052 = vpack.c.b16 %v6025, %v6024
      %v6053 = vpack.c.b16 %v6027, %v6026
      %v6054 = vpack.c.b16 %v6029, %v6028
      %v6055 = vpack.c.b16 %v6031, %v6030
      %v6056 = vpack.c.b16 %v6033, %v6032
      %v6057 = vpack.c.b16 %v6035, %v6034
      %v6058 = vpack.c.b16 %v6037, %v6036
      %v6059 = vpack.c.b16 %v6039, %v6038
      %v6060 = vpack.c.b16 %v6041, %v6040
      %v6061 = vpack.c.b16 %v6043, %v6042
      %v6062 = vpack.c.b16 %v6045, %v6044
      %v6063 = vpack.c.b16 %v6047, %v6046
      %6064 = vrot.lane.b32.xlu0 %v6048, 64
      %v6065 = vpop.permute.xlu0 %6064
      %6066 = vrot.lane.b32.xlu0 %v6049, 64
      %v6067 = vpop.permute.xlu0 %6066
      %6068 = vrot.lane.b32.xlu0 %v6050, 64
      %v6069 = vpop.permute.xlu0 %6068
      %6070 = vrot.lane.b32.xlu0 %v6051, 64
      %v6071 = vpop.permute.xlu0 %6070
      %6072 = vrot.lane.b32.xlu0 %v6052, 64
      %v6073 = vpop.permute.xlu0 %6072
      %6074 = vrot.lane.b32.xlu0 %v6053, 64
      %v6075 = vpop.permute.xlu0 %6074
      %6076 = vrot.lane.b32.xlu0 %v6054, 64
      %v6077 = vpop.permute.xlu0 %6076
      %6078 = vrot.lane.b32.xlu0 %v6055, 64
      %v6079 = vpop.permute.xlu0 %6078
      %6080 = vrot.lane.b32.xlu0 %v6056, 64
      %v6081 = vpop.permute.xlu0 %6080
      %6082 = vrot.lane.b32.xlu0 %v6057, 64
      %v6083 = vpop.permute.xlu0 %6082
      %6084 = vrot.lane.b32.xlu0 %v6058, 64
      %v6085 = vpop.permute.xlu0 %6084
      %6086 = vrot.lane.b32.xlu0 %v6059, 64
      %v6087 = vpop.permute.xlu0 %6086
      %6088 = vrot.lane.b32.xlu0 %v6060, 64
      %v6089 = vpop.permute.xlu0 %6088
      %6090 = vrot.lane.b32.xlu0 %v6061, 64
      %v6091 = vpop.permute.xlu0 %6090
      %6092 = vrot.lane.b32.xlu0 %v6062, 64
      %v6093 = vpop.permute.xlu0 %6092
      %6094 = vrot.lane.b32.xlu0 %v6063, 64
      %v6095 = vpop.permute.xlu0 %6094
      %6112 = vmatprep.subr.bf16.mxu0 0
      %6113 = vmatpush1.bf16.msra.mxu0 %v6079
      %6114 = vmatprep.subr.bf16.mxu0 0
      %6115 = vmatpush1.bf16.msra.mxu0 %v6077
      %6116 = vmatprep.subr.bf16.mxu0 0
      %6117 = vmatpush1.bf16.msra.mxu0 %v6075
      %6118 = vmatprep.subr.bf16.mxu0 0
      %6119 = vmatpush1.bf16.msra.mxu0 %v6073
      %6120 = vmatprep.subr.bf16.mxu0 0
      %6121 = vmatpush1.bf16.msra.mxu0 %v6071
      %6122 = vmatprep.subr.bf16.mxu0 0
      %6123 = vmatpush1.bf16.msra.mxu0 %v6069
      %6124 = vmatprep.subr.bf16.mxu0 0
      %6125 = vmatpush1.bf16.msra.mxu0 %v6067
      %6126 = vmatprep.subr.bf16.mxu0 0
      %6127 = vmatpush1.bf16.msra.mxu0 %v6065
      %6128 = vmatprep.subr.bf16.mxu0 0
      %6129 = vmatpush2.bf16.msra.mxu0 %v6095
      %6130 = vmatprep.subr.bf16.mxu0 0
      %6131 = vmatpush2.bf16.msra.mxu0 %v6093
      %6132 = vmatprep.subr.bf16.mxu0 0
      %6133 = vmatpush2.bf16.msra.mxu0 %v6091
      %6134 = vmatprep.subr.bf16.mxu0 0
      %6135 = vmatpush2.bf16.msra.mxu0 %v6089
      %6136 = vmatprep.subr.bf16.mxu0 0
      %6137 = vmatpush2.bf16.msra.mxu0 %v6087
      %6138 = vmatprep.subr.bf16.mxu0 0
      %6139 = vmatpush2.bf16.msra.mxu0 %v6085
      %6140 = vmatprep.subr.bf16.mxu0 0
      %6141 = vmatpush2.bf16.msra.mxu0 %v6083
      %6142 = vmatprep.subr.bf16.mxu0 0
      %6143 = vmatpush2.bf16.msra.mxu0 %v6081
      %6144 = vmatprep.mubr.bf16.mxu0 %v5953
      %6145 = vmatmul.mubr.bf16.gmra.mxu0 %v5952
      %v6146 = vpop.f32.mrf.mxu0
      %v6147 = vadd.f32 0.0, %v6146
      %v6148 = vpop.f32.mrf.mxu0
      %v6149 = vpop.f32.mrf.mxu0
      %v6150 = vadd.f32 0.0, %v6149
      %v6151 = vpop.f32.mrf.mxu0
      %6152 = vmatprep.mubr.bf16.mxu0 %v5955
      %6153 = vmatmul.mubr.bf16.gmra.mxu0 %v5954
      %v6154 = vpop.f32.mrf.mxu0
      %v6155 = vadd.f32 0.0, %v6154
      %v6156 = vpop.f32.mrf.mxu0
      %v6157 = vpop.f32.mrf.mxu0
      %v6158 = vadd.f32 0.0, %v6157
      %v6159 = vpop.f32.mrf.mxu0
      %6160 = vmatprep.mubr.bf16.mxu0 %v5957
      %6161 = vmatmul.mubr.bf16.gmra.mxu0 %v5956
      %v6162 = vpop.f32.mrf.mxu0
      %v6163 = vadd.f32 0.0, %v6162
      %v6164 = vpop.f32.mrf.mxu0
      %v6165 = vpop.f32.mrf.mxu0
      %v6166 = vadd.f32 0.0, %v6165
      %v6167 = vpop.f32.mrf.mxu0
      %6168 = vmatprep.mubr.bf16.mxu0 %v5959
      %6169 = vmatmul.mubr.bf16.gmra.mxu0 %v5958
      %v6170 = vpop.f32.mrf.mxu0
      %v6171 = vadd.f32 0.0, %v6170
      %v6172 = vpop.f32.mrf.mxu0
      %v6173 = vpop.f32.mrf.mxu0
      %v6174 = vadd.f32 0.0, %v6173
      %v6175 = vpop.f32.mrf.mxu0
      %6176 = vmatprep.mubr.bf16.mxu0 %v5961
      %6177 = vmatmul.mubr.bf16.gmra.mxu0 %v5960
      %v6178 = vpop.f32.mrf.mxu0
      %v6179 = vadd.f32 0.0, %v6178
      %v6180 = vpop.f32.mrf.mxu0
      %v6181 = vpop.f32.mrf.mxu0
      %v6182 = vadd.f32 0.0, %v6181
      %v6183 = vpop.f32.mrf.mxu0
      %6184 = vmatprep.mubr.bf16.mxu0 %v5963
      %6185 = vmatmul.mubr.bf16.gmra.mxu0 %v5962
      %v6186 = vpop.f32.mrf.mxu0
      %v6187 = vadd.f32 0.0, %v6186
      %v6188 = vpop.f32.mrf.mxu0
      %v6189 = vpop.f32.mrf.mxu0
      %v6190 = vadd.f32 0.0, %v6189
      %v6191 = vpop.f32.mrf.mxu0
      %6192 = vmatprep.mubr.bf16.mxu0 %v5965
      %6193 = vmatmul.mubr.bf16.gmra.mxu0 %v5964
      %v6194 = vpop.f32.mrf.mxu0
      %v6195 = vadd.f32 0.0, %v6194
      %v6196 = vpop.f32.mrf.mxu0
      %v6197 = vpop.f32.mrf.mxu0
      %v6198 = vadd.f32 0.0, %v6197
      %v6199 = vpop.f32.mrf.mxu0
      %6200 = vmatprep.mubr.bf16.mxu0 %v5967
      %6201 = vmatmul.mubr.bf16.gmra.mxu0 %v5966
      %v6202 = vpop.f32.mrf.mxu0
      %v6203 = vadd.f32 0.0, %v6202
      %v6204 = vpop.f32.mrf.mxu0
      %v6205 = vpop.f32.mrf.mxu0
      %v6206 = vadd.f32 0.0, %v6205
      %v6207 = vpop.f32.mrf.mxu0
      %6208 = vmatprep.mubr.bf16.mxu0 %v5969
      %6209 = vmatmul.mubr.bf16.gmra.mxu0 %v5968
      %v6210 = vpop.f32.mrf.mxu0
      %v6211 = vadd.f32 0.0, %v6210
      %v6212 = vpop.f32.mrf.mxu0
      %v6213 = vpop.f32.mrf.mxu0
      %v6214 = vadd.f32 0.0, %v6213
      %v6215 = vpop.f32.mrf.mxu0
      %6216 = vmatprep.mubr.bf16.mxu0 %v5971
      %6217 = vmatmul.mubr.bf16.gmra.mxu0 %v5970
      %v6218 = vpop.f32.mrf.mxu0
      %v6219 = vadd.f32 0.0, %v6218
      %v6220 = vpop.f32.mrf.mxu0
      %v6221 = vpop.f32.mrf.mxu0
      %v6222 = vadd.f32 0.0, %v6221
      %v6223 = vpop.f32.mrf.mxu0
      %6224 = vmatprep.mubr.bf16.mxu0 %v5973
      %6225 = vmatmul.mubr.bf16.gmra.mxu0 %v5972
      %v6226 = vpop.f32.mrf.mxu0
      %v6227 = vadd.f32 0.0, %v6226
      %v6228 = vpop.f32.mrf.mxu0
      %v6229 = vpop.f32.mrf.mxu0
      %v6230 = vadd.f32 0.0, %v6229
      %v6231 = vpop.f32.mrf.mxu0
      %6232 = vmatprep.mubr.bf16.mxu0 %v5975
      %6233 = vmatmul.mubr.bf16.gmra.mxu0 %v5974
      %v6234 = vpop.f32.mrf.mxu0
      %v6235 = vadd.f32 0.0, %v6234
      %v6236 = vpop.f32.mrf.mxu0
      %v6237 = vpop.f32.mrf.mxu0
      %v6238 = vadd.f32 0.0, %v6237
      %v6239 = vpop.f32.mrf.mxu0
      %6240 = vmatprep.mubr.bf16.mxu0 %v5977
      %6241 = vmatmul.mubr.bf16.gmra.mxu0 %v5976
      %v6242 = vpop.f32.mrf.mxu0
      %v6243 = vadd.f32 0.0, %v6242
      %v6244 = vpop.f32.mrf.mxu0
      %v6245 = vpop.f32.mrf.mxu0
      %v6246 = vadd.f32 0.0, %v6245
      %v6247 = vpop.f32.mrf.mxu0
      %6248 = vmatprep.mubr.bf16.mxu0 %v5979
      %6249 = vmatmul.mubr.bf16.gmra.mxu0 %v5978
      %v6250 = vpop.f32.mrf.mxu0
      %v6251 = vadd.f32 0.0, %v6250
      %v6252 = vpop.f32.mrf.mxu0
      %v6253 = vpop.f32.mrf.mxu0
      %v6254 = vadd.f32 0.0, %v6253
      %v6255 = vpop.f32.mrf.mxu0
      %6256 = vmatprep.mubr.bf16.mxu0 %v5981
      %6257 = vmatmul.mubr.bf16.gmra.mxu0 %v5980
      %v6258 = vpop.f32.mrf.mxu0
      %v6259 = vadd.f32 0.0, %v6258
      %v6260 = vpop.f32.mrf.mxu0
      %v6261 = vpop.f32.mrf.mxu0
      %v6262 = vadd.f32 0.0, %v6261
      %v6263 = vpop.f32.mrf.mxu0
      %6264 = vmatprep.mubr.bf16.mxu0 %v5983
      %6265 = vmatmul.mubr.bf16.gmra.mxu0 %v5982
      %v6266 = vpop.f32.mrf.mxu0
      %v6267 = vadd.f32 0.0, %v6266
      %v6268 = vpop.f32.mrf.mxu0
      %v6269 = vpop.f32.mrf.mxu0
      %v6270 = vadd.f32 0.0, %v6269
      %v6271 = vpop.f32.mrf.mxu0
      %6272 = vdwg.mxu0
      %6274 = vset.pattern.permute.xlu0 0
      %6275 = vperm.xlu0 %6274, %v5280
      %v6276 = vpop.permute.xlu0 %6275
      %6279 = vset.pattern.permute.xlu0 0
      %6280 = vperm.xlu0 %6279, %v5282
      %v6281 = vpop.permute.xlu0 %6280
      %6284 = vset.pattern.permute.xlu0 0
      %6285 = vperm.xlu0 %6284, %v5284
      %v6286 = vpop.permute.xlu0 %6285
      %6289 = vset.pattern.permute.xlu0 0
      %6290 = vperm.xlu0 %6289, %v5286
      %v6291 = vpop.permute.xlu0 %6290
      %6294 = vset.pattern.permute.xlu0 0
      %6295 = vperm.xlu0 %6294, %v5288
      %v6296 = vpop.permute.xlu0 %6295
      %6299 = vset.pattern.permute.xlu0 0
      %6300 = vperm.xlu0 %6299, %v5290
      %v6301 = vpop.permute.xlu0 %6300
      %6304 = vset.pattern.permute.xlu0 0
      %6305 = vperm.xlu0 %6304, %v5292
      %v6306 = vpop.permute.xlu0 %6305
      %6309 = vset.pattern.permute.xlu0 0
      %6310 = vperm.xlu0 %6309, %v5294
      %v6311 = vpop.permute.xlu0 %6310
      %6314 = vset.pattern.permute.xlu0 0
      %6315 = vperm.xlu0 %6314, %v5296
      %v6316 = vpop.permute.xlu0 %6315
      %6319 = vset.pattern.permute.xlu0 0
      %6320 = vperm.xlu0 %6319, %v5298
      %v6321 = vpop.permute.xlu0 %6320
      %6324 = vset.pattern.permute.xlu0 0
      %6325 = vperm.xlu0 %6324, %v5300
      %v6326 = vpop.permute.xlu0 %6325
      %6329 = vset.pattern.permute.xlu0 0
      %6330 = vperm.xlu0 %6329, %v5302
      %v6331 = vpop.permute.xlu0 %6330
      %6334 = vset.pattern.permute.xlu0 0
      %6335 = vperm.xlu0 %6334, %v5304
      %v6336 = vpop.permute.xlu0 %6335
      %6339 = vset.pattern.permute.xlu0 0
      %6340 = vperm.xlu0 %6339, %v5306
      %v6341 = vpop.permute.xlu0 %6340
      %6344 = vset.pattern.permute.xlu0 0
      %6345 = vperm.xlu0 %6344, %v5308
      %v6346 = vpop.permute.xlu0 %6345
      %6349 = vset.pattern.permute.xlu0 0
      %6350 = vperm.xlu0 %6349, %v5310
      %v6351 = vpop.permute.xlu0 %6350
      %6354 = vset.pattern.permute.xlu0 0
      %6355 = vperm.xlu0 %6354, %v5312
      %v6356 = vpop.permute.xlu0 %6355
      %6359 = vset.pattern.permute.xlu0 0
      %6360 = vperm.xlu0 %6359, %v5314
      %v6361 = vpop.permute.xlu0 %6360
      %6364 = vset.pattern.permute.xlu0 0
      %6365 = vperm.xlu0 %6364, %v5316
      %v6366 = vpop.permute.xlu0 %6365
      %6369 = vset.pattern.permute.xlu0 0
      %6370 = vperm.xlu0 %6369, %v5318
      %v6371 = vpop.permute.xlu0 %6370
      %6374 = vset.pattern.permute.xlu0 0
      %6375 = vperm.xlu0 %6374, %v5320
      %v6376 = vpop.permute.xlu0 %6375
      %6379 = vset.pattern.permute.xlu0 0
      %6380 = vperm.xlu0 %6379, %v5322
      %v6381 = vpop.permute.xlu0 %6380
      %6384 = vset.pattern.permute.xlu0 0
      %6385 = vperm.xlu0 %6384, %v5324
      %v6386 = vpop.permute.xlu0 %6385
      %6389 = vset.pattern.permute.xlu0 0
      %6390 = vperm.xlu0 %6389, %v5326
      %v6391 = vpop.permute.xlu0 %6390
      %6394 = vset.pattern.permute.xlu0 0
      %6395 = vperm.xlu0 %6394, %v5328
      %v6396 = vpop.permute.xlu0 %6395
      %6399 = vset.pattern.permute.xlu0 0
      %6400 = vperm.xlu0 %6399, %v5330
      %v6401 = vpop.permute.xlu0 %6400
      %6404 = vset.pattern.permute.xlu0 0
      %6405 = vperm.xlu0 %6404, %v5332
      %v6406 = vpop.permute.xlu0 %6405
      %6409 = vset.pattern.permute.xlu0 0
      %6410 = vperm.xlu0 %6409, %v5334
      %v6411 = vpop.permute.xlu0 %6410
      %6414 = vset.pattern.permute.xlu0 0
      %6415 = vperm.xlu0 %6414, %v5336
      %v6416 = vpop.permute.xlu0 %6415
      %6419 = vset.pattern.permute.xlu0 0
      %6420 = vperm.xlu0 %6419, %v5338
      %v6421 = vpop.permute.xlu0 %6420
      %6424 = vset.pattern.permute.xlu0 0
      %6425 = vperm.xlu0 %6424, %v5340
      %v6426 = vpop.permute.xlu0 %6425
      %6429 = vset.pattern.permute.xlu0 0
      %6430 = vperm.xlu0 %6429, %v5342
      %v6431 = vpop.permute.xlu0 %6430
      %v6433 = vld [vmem:[%s321] sm:$0xf]
      %v6434 = vld [vmem:[%s321 + $0x4] sm:$0xf]
      %v6435 = vld [vmem:[%s321 + $0x8] sm:$0xf]
      %v6436 = vld [vmem:[%s321 + $0xc] sm:$0xf]
      %v6437 = vld [vmem:[%s321 + $0x10] sm:$0xf]
      %v6438 = vld [vmem:[%s321 + $0x14] sm:$0xf]
      %v6439 = vld [vmem:[%s321 + $0x18] sm:$0xf]
      %v6440 = vld [vmem:[%s321 + $0x1c] sm:$0xf]
      %v6441 = vld [vmem:[%s321 + $0x20] sm:$0xf]
      %v6442 = vld [vmem:[%s321 + $0x24] sm:$0xf]
      %v6443 = vld [vmem:[%s321 + $0x28] sm:$0xf]
      %v6444 = vld [vmem:[%s321 + $0x2c] sm:$0xf]
      %v6445 = vld [vmem:[%s321 + $0x30] sm:$0xf]
      %v6446 = vld [vmem:[%s321 + $0x34] sm:$0xf]
      %v6447 = vld [vmem:[%s321 + $0x38] sm:$0xf]
      %v6448 = vld [vmem:[%s321 + $0x3c] sm:$0xf]
      %v6449 = vld [vmem:[%s321 + $0x40] sm:$0xf]
      %v6450 = vld [vmem:[%s321 + $0x44] sm:$0xf]
      %v6451 = vld [vmem:[%s321 + $0x48] sm:$0xf]
      %v6452 = vld [vmem:[%s321 + $0x4c] sm:$0xf]
      %v6453 = vld [vmem:[%s321 + $0x50] sm:$0xf]
      %v6454 = vld [vmem:[%s321 + $0x54] sm:$0xf]
      %v6455 = vld [vmem:[%s321 + $0x58] sm:$0xf]
      %v6456 = vld [vmem:[%s321 + $0x5c] sm:$0xf]
      %v6457 = vld [vmem:[%s321 + $0x60] sm:$0xf]
      %v6458 = vld [vmem:[%s321 + $0x64] sm:$0xf]
      %v6459 = vld [vmem:[%s321 + $0x68] sm:$0xf]
      %v6460 = vld [vmem:[%s321 + $0x6c] sm:$0xf]
      %v6461 = vld [vmem:[%s321 + $0x70] sm:$0xf]
      %v6462 = vld [vmem:[%s321 + $0x74] sm:$0xf]
      %v6463 = vld [vmem:[%s321 + $0x78] sm:$0xf]
      %v6464 = vld [vmem:[%s321 + $0x7c] sm:$0xf]
      %v6465 = vld [vmem:[%s332] sm:$0xf]
      %v6466 = vld [vmem:[%s332 + $0x4] sm:$0xf]
      %v6467 = vld [vmem:[%s332 + $0x8] sm:$0xf]
      %v6468 = vld [vmem:[%s332 + $0xc] sm:$0xf]
      %v6469 = vld [vmem:[%s332 + $0x10] sm:$0xf]
      %v6470 = vld [vmem:[%s332 + $0x14] sm:$0xf]
      %v6471 = vld [vmem:[%s332 + $0x18] sm:$0xf]
      %v6472 = vld [vmem:[%s332 + $0x1c] sm:$0xf]
      %v6473 = vld [vmem:[%s332 + $0x20] sm:$0xf]
      %v6474 = vld [vmem:[%s332 + $0x24] sm:$0xf]
      %v6475 = vld [vmem:[%s332 + $0x28] sm:$0xf]
      %v6476 = vld [vmem:[%s332 + $0x2c] sm:$0xf]
      %v6477 = vld [vmem:[%s332 + $0x30] sm:$0xf]
      %v6478 = vld [vmem:[%s332 + $0x34] sm:$0xf]
      %v6479 = vld [vmem:[%s332 + $0x38] sm:$0xf]
      %v6480 = vld [vmem:[%s332 + $0x3c] sm:$0xf]
      %v6481 = vld [vmem:[%s332 + $0x40] sm:$0xf]
      %v6482 = vld [vmem:[%s332 + $0x44] sm:$0xf]
      %v6483 = vld [vmem:[%s332 + $0x48] sm:$0xf]
      %v6484 = vld [vmem:[%s332 + $0x4c] sm:$0xf]
      %v6485 = vld [vmem:[%s332 + $0x50] sm:$0xf]
      %v6486 = vld [vmem:[%s332 + $0x54] sm:$0xf]
      %v6487 = vld [vmem:[%s332 + $0x58] sm:$0xf]
      %v6488 = vld [vmem:[%s332 + $0x5c] sm:$0xf]
      %v6489 = vld [vmem:[%s332 + $0x60] sm:$0xf]
      %v6490 = vld [vmem:[%s332 + $0x64] sm:$0xf]
      %v6491 = vld [vmem:[%s332 + $0x68] sm:$0xf]
      %v6492 = vld [vmem:[%s332 + $0x6c] sm:$0xf]
      %v6493 = vld [vmem:[%s332 + $0x70] sm:$0xf]
      %v6494 = vld [vmem:[%s332 + $0x74] sm:$0xf]
      %v6495 = vld [vmem:[%s332 + $0x78] sm:$0xf]
      %v6496 = vld [vmem:[%s332 + $0x7c] sm:$0xf]
      %v6497 = vld [vmem:[%s343] sm:$0xf]
      %v6498 = vld [vmem:[%s343 + $0x4] sm:$0xf]
      %v6499 = vld [vmem:[%s343 + $0x8] sm:$0xf]
      %v6500 = vld [vmem:[%s343 + $0xc] sm:$0xf]
      %v6501 = vld [vmem:[%s343 + $0x10] sm:$0xf]
      %v6502 = vld [vmem:[%s343 + $0x14] sm:$0xf]
      %v6503 = vld [vmem:[%s343 + $0x18] sm:$0xf]
      %v6504 = vld [vmem:[%s343 + $0x1c] sm:$0xf]
      %v6505 = vld [vmem:[%s343 + $0x20] sm:$0xf]
      %v6506 = vld [vmem:[%s343 + $0x24] sm:$0xf]
      %v6507 = vld [vmem:[%s343 + $0x28] sm:$0xf]
      %v6508 = vld [vmem:[%s343 + $0x2c] sm:$0xf]
      %v6509 = vld [vmem:[%s343 + $0x30] sm:$0xf]
      %v6510 = vld [vmem:[%s343 + $0x34] sm:$0xf]
      %v6511 = vld [vmem:[%s343 + $0x38] sm:$0xf]
      %v6512 = vld [vmem:[%s343 + $0x3c] sm:$0xf]
      %v6513 = vld [vmem:[%s343 + $0x40] sm:$0xf]
      %v6514 = vld [vmem:[%s343 + $0x44] sm:$0xf]
      %v6515 = vld [vmem:[%s343 + $0x48] sm:$0xf]
      %v6516 = vld [vmem:[%s343 + $0x4c] sm:$0xf]
      %v6517 = vld [vmem:[%s343 + $0x50] sm:$0xf]
      %v6518 = vld [vmem:[%s343 + $0x54] sm:$0xf]
      %v6519 = vld [vmem:[%s343 + $0x58] sm:$0xf]
      %v6520 = vld [vmem:[%s343 + $0x5c] sm:$0xf]
      %v6521 = vld [vmem:[%s343 + $0x60] sm:$0xf]
      %v6522 = vld [vmem:[%s343 + $0x64] sm:$0xf]
      %v6523 = vld [vmem:[%s343 + $0x68] sm:$0xf]
      %v6524 = vld [vmem:[%s343 + $0x6c] sm:$0xf]
      %v6525 = vld [vmem:[%s343 + $0x70] sm:$0xf]
      %v6526 = vld [vmem:[%s343 + $0x74] sm:$0xf]
      %v6527 = vld [vmem:[%s343 + $0x78] sm:$0xf]
      %v6528 = vld [vmem:[%s343 + $0x7c] sm:$0xf]
      %v6561 = vunpack.c.l.b16 %v6433
      %v6562 = vunpack.c.l.b16 %v6434
      %v6563 = vunpack.c.l.b16 %v6435
      %v6564 = vunpack.c.l.b16 %v6436
      %v6565 = vunpack.c.l.b16 %v6437
      %v6566 = vunpack.c.l.b16 %v6438
      %v6567 = vunpack.c.l.b16 %v6439
      %v6568 = vunpack.c.l.b16 %v6440
      %v6569 = vunpack.c.l.b16 %v6441
      %v6570 = vunpack.c.l.b16 %v6442
      %v6571 = vunpack.c.l.b16 %v6443
      %v6572 = vunpack.c.l.b16 %v6444
      %v6573 = vunpack.c.l.b16 %v6445
      %v6574 = vunpack.c.l.b16 %v6446
      %v6575 = vunpack.c.l.b16 %v6447
      %v6576 = vunpack.c.l.b16 %v6448
      %v6577 = vunpack.c.l.b16 %v6449
      %v6578 = vunpack.c.l.b16 %v6450
      %v6579 = vunpack.c.l.b16 %v6451
      %v6580 = vunpack.c.l.b16 %v6452
      %v6581 = vunpack.c.l.b16 %v6453
      %v6582 = vunpack.c.l.b16 %v6454
      %v6583 = vunpack.c.l.b16 %v6455
      %v6584 = vunpack.c.l.b16 %v6456
      %v6585 = vunpack.c.l.b16 %v6457
      %v6586 = vunpack.c.l.b16 %v6458
      %v6587 = vunpack.c.l.b16 %v6459
      %v6588 = vunpack.c.l.b16 %v6460
      %v6589 = vunpack.c.l.b16 %v6461
      %v6590 = vunpack.c.l.b16 %v6462
      %v6591 = vunpack.c.l.b16 %v6463
      %v6592 = vunpack.c.l.b16 %v6464
      %v6593 = vpack.c.b16 %v6562, %v6561
      %v6594 = vpack.c.b16 %v6564, %v6563
      %v6595 = vpack.c.b16 %v6566, %v6565
      %v6596 = vpack.c.b16 %v6568, %v6567
      %v6597 = vpack.c.b16 %v6570, %v6569
      %v6598 = vpack.c.b16 %v6572, %v6571
      %v6599 = vpack.c.b16 %v6574, %v6573
      %v6600 = vpack.c.b16 %v6576, %v6575
      %v6601 = vpack.c.b16 %v6578, %v6577
      %v6602 = vpack.c.b16 %v6580, %v6579
      %v6603 = vpack.c.b16 %v6582, %v6581
      %v6604 = vpack.c.b16 %v6584, %v6583
      %v6605 = vpack.c.b16 %v6586, %v6585
      %v6606 = vpack.c.b16 %v6588, %v6587
      %v6607 = vpack.c.b16 %v6590, %v6589
      %v6608 = vpack.c.b16 %v6592, %v6591
      %6609 = vrot.lane.b32.xlu0 %v6593, 32
      %v6610 = vpop.permute.xlu0 %6609
      %6611 = vrot.lane.b32.xlu0 %v6594, 32
      %v6612 = vpop.permute.xlu0 %6611
      %6613 = vrot.lane.b32.xlu0 %v6595, 32
      %v6614 = vpop.permute.xlu0 %6613
      %6615 = vrot.lane.b32.xlu0 %v6596, 32
      %v6616 = vpop.permute.xlu0 %6615
      %6617 = vrot.lane.b32.xlu0 %v6597, 32
      %v6618 = vpop.permute.xlu0 %6617
      %6619 = vrot.lane.b32.xlu0 %v6598, 32
      %v6620 = vpop.permute.xlu0 %6619
      %6621 = vrot.lane.b32.xlu0 %v6599, 32
      %v6622 = vpop.permute.xlu0 %6621
      %6623 = vrot.lane.b32.xlu0 %v6600, 32
      %v6624 = vpop.permute.xlu0 %6623
      %6625 = vrot.lane.b32.xlu0 %v6601, 32
      %v6626 = vpop.permute.xlu0 %6625
      %6627 = vrot.lane.b32.xlu0 %v6602, 32
      %v6628 = vpop.permute.xlu0 %6627
      %6629 = vrot.lane.b32.xlu0 %v6603, 32
      %v6630 = vpop.permute.xlu0 %6629
      %6631 = vrot.lane.b32.xlu0 %v6604, 32
      %v6632 = vpop.permute.xlu0 %6631
      %6633 = vrot.lane.b32.xlu0 %v6605, 32
      %v6634 = vpop.permute.xlu0 %6633
      %6635 = vrot.lane.b32.xlu0 %v6606, 32
      %v6636 = vpop.permute.xlu0 %6635
      %6637 = vrot.lane.b32.xlu0 %v6607, 32
      %v6638 = vpop.permute.xlu0 %6637
      %6639 = vrot.lane.b32.xlu0 %v6608, 32
      %v6640 = vpop.permute.xlu0 %6639
      %v6673 = vunpack.c.l.b16 %v6465
      %v6674 = vunpack.c.l.b16 %v6466
      %v6675 = vunpack.c.l.b16 %v6467
      %v6676 = vunpack.c.l.b16 %v6468
      %v6677 = vunpack.c.l.b16 %v6469
      %v6678 = vunpack.c.l.b16 %v6470
      %v6679 = vunpack.c.l.b16 %v6471
      %v6680 = vunpack.c.l.b16 %v6472
      %v6681 = vunpack.c.l.b16 %v6473
      %v6682 = vunpack.c.l.b16 %v6474
      %v6683 = vunpack.c.l.b16 %v6475
      %v6684 = vunpack.c.l.b16 %v6476
      %v6685 = vunpack.c.l.b16 %v6477
      %v6686 = vunpack.c.l.b16 %v6478
      %v6687 = vunpack.c.l.b16 %v6479
      %v6688 = vunpack.c.l.b16 %v6480
      %v6689 = vunpack.c.l.b16 %v6481
      %v6690 = vunpack.c.l.b16 %v6482
      %v6691 = vunpack.c.l.b16 %v6483
      %v6692 = vunpack.c.l.b16 %v6484
      %v6693 = vunpack.c.l.b16 %v6485
      %v6694 = vunpack.c.l.b16 %v6486
      %v6695 = vunpack.c.l.b16 %v6487
      %v6696 = vunpack.c.l.b16 %v6488
      %v6697 = vunpack.c.l.b16 %v6489
      %v6698 = vunpack.c.l.b16 %v6490
      %v6699 = vunpack.c.l.b16 %v6491
      %v6700 = vunpack.c.l.b16 %v6492
      %v6701 = vunpack.c.l.b16 %v6493
      %v6702 = vunpack.c.l.b16 %v6494
      %v6703 = vunpack.c.l.b16 %v6495
      %v6704 = vunpack.c.l.b16 %v6496
      %v6705 = vpack.c.b16 %v6674, %v6673
      %v6706 = vpack.c.b16 %v6676, %v6675
      %v6707 = vpack.c.b16 %v6678, %v6677
      %v6708 = vpack.c.b16 %v6680, %v6679
      %v6709 = vpack.c.b16 %v6682, %v6681
      %v6710 = vpack.c.b16 %v6684, %v6683
      %v6711 = vpack.c.b16 %v6686, %v6685
      %v6712 = vpack.c.b16 %v6688, %v6687
      %v6713 = vpack.c.b16 %v6690, %v6689
      %v6714 = vpack.c.b16 %v6692, %v6691
      %v6715 = vpack.c.b16 %v6694, %v6693
      %v6716 = vpack.c.b16 %v6696, %v6695
      %v6717 = vpack.c.b16 %v6698, %v6697
      %v6718 = vpack.c.b16 %v6700, %v6699
      %v6719 = vpack.c.b16 %v6702, %v6701
      %v6720 = vpack.c.b16 %v6704, %v6703
      %6721 = vrot.lane.b32.xlu0 %v6705, 32
      %v6722 = vpop.permute.xlu0 %6721
      %6723 = vrot.lane.b32.xlu0 %v6706, 32
      %v6724 = vpop.permute.xlu0 %6723
      %6725 = vrot.lane.b32.xlu0 %v6707, 32
      %v6726 = vpop.permute.xlu0 %6725
      %6727 = vrot.lane.b32.xlu0 %v6708, 32
      %v6728 = vpop.permute.xlu0 %6727
      %6729 = vrot.lane.b32.xlu0 %v6709, 32
      %v6730 = vpop.permute.xlu0 %6729
      %6731 = vrot.lane.b32.xlu0 %v6710, 32
      %v6732 = vpop.permute.xlu0 %6731
      %6733 = vrot.lane.b32.xlu0 %v6711, 32
      %v6734 = vpop.permute.xlu0 %6733
      %6735 = vrot.lane.b32.xlu0 %v6712, 32
      %v6736 = vpop.permute.xlu0 %6735
      %6737 = vrot.lane.b32.xlu0 %v6713, 32
      %v6738 = vpop.permute.xlu0 %6737
      %6739 = vrot.lane.b32.xlu0 %v6714, 32
      %v6740 = vpop.permute.xlu0 %6739
      %6741 = vrot.lane.b32.xlu0 %v6715, 32
      %v6742 = vpop.permute.xlu0 %6741
      %6743 = vrot.lane.b32.xlu0 %v6716, 32
      %v6744 = vpop.permute.xlu0 %6743
      %6745 = vrot.lane.b32.xlu0 %v6717, 32
      %v6746 = vpop.permute.xlu0 %6745
      %6747 = vrot.lane.b32.xlu0 %v6718, 32
      %v6748 = vpop.permute.xlu0 %6747
      %6749 = vrot.lane.b32.xlu0 %v6719, 32
      %v6750 = vpop.permute.xlu0 %6749
      %6751 = vrot.lane.b32.xlu0 %v6720, 32
      %v6752 = vpop.permute.xlu0 %6751
      %v6754 = vsel %vm917, %v6610, 0
      %v6757 = vsel %vm917, %v6612, 0
      %v6760 = vsel %vm917, %v6614, 0
      %v6763 = vsel %vm917, %v6616, 0
      %v6766 = vsel %vm917, %v6618, 0
      %v6769 = vsel %vm917, %v6620, 0
      %v6772 = vsel %vm917, %v6622, 0
      %v6775 = vsel %vm917, %v6624, 0
      %v6778 = vsel %vm917, %v6626, 0
      %v6781 = vsel %vm917, %v6628, 0
      %v6784 = vsel %vm917, %v6630, 0
      %v6787 = vsel %vm917, %v6632, 0
      %v6790 = vsel %vm917, %v6634, 0
      %v6793 = vsel %vm917, %v6636, 0
      %v6796 = vsel %vm917, %v6638, 0
      %v6799 = vsel %vm917, %v6640, 0
      %v6802 = vsel %vm917, %v6722, 0
      %v6805 = vsel %vm917, %v6724, 0
      %v6808 = vsel %vm917, %v6726, 0
      %v6811 = vsel %vm917, %v6728, 0
      %v6814 = vsel %vm917, %v6730, 0
      %v6817 = vsel %vm917, %v6732, 0
      %v6820 = vsel %vm917, %v6734, 0
      %v6823 = vsel %vm917, %v6736, 0
      %v6826 = vsel %vm917, %v6738, 0
      %v6829 = vsel %vm917, %v6740, 0
      %v6832 = vsel %vm917, %v6742, 0
      %v6835 = vsel %vm917, %v6744, 0
      %v6838 = vsel %vm917, %v6746, 0
      %v6841 = vsel %vm917, %v6748, 0
      %v6844 = vsel %vm917, %v6750, 0
      %v6847 = vsel %vm917, %v6752, 0
      %6849 = vmatprep.subr.bf16.mxu0 0
      %6850 = vmatpush1.bf16.xpose.msra.mxu0 %v6823
      %6851 = vmatprep.subr.bf16.mxu0 0
      %6852 = vmatpush1.bf16.xpose.msra.mxu0 %v6820
      %6853 = vmatprep.subr.bf16.mxu0 0
      %6854 = vmatpush1.bf16.xpose.msra.mxu0 %v6817
      %6855 = vmatprep.subr.bf16.mxu0 0
      %6856 = vmatpush1.bf16.xpose.msra.mxu0 %v6814
      %6857 = vmatprep.subr.bf16.mxu0 0
      %6858 = vmatpush1.bf16.xpose.msra.mxu0 %v6811
      %6859 = vmatprep.subr.bf16.mxu0 0
      %6860 = vmatpush1.bf16.xpose.msra.mxu0 %v6808
      %6861 = vmatprep.subr.bf16.mxu0 0
      %6862 = vmatpush1.bf16.xpose.msra.mxu0 %v6805
      %6863 = vmatprep.subr.bf16.mxu0 0
      %6864 = vmatpush1.bf16.xpose.msra.mxu0 %v6802
      %6865 = vmatprep.subr.bf16.mxu0 0
      %6866 = vmatpush2.bf16.xpose.msra.mxu0 %v6847
      %6867 = vmatprep.subr.bf16.mxu0 0
      %6868 = vmatpush2.bf16.xpose.msra.mxu0 %v6844
      %6869 = vmatprep.subr.bf16.mxu0 0
      %6870 = vmatpush2.bf16.xpose.msra.mxu0 %v6841
      %6871 = vmatprep.subr.bf16.mxu0 0
      %6872 = vmatpush2.bf16.xpose.msra.mxu0 %v6838
      %6873 = vmatprep.subr.bf16.mxu0 0
      %6874 = vmatpush2.bf16.xpose.msra.mxu0 %v6835
      %6875 = vmatprep.subr.bf16.mxu0 0
      %6876 = vmatpush2.bf16.xpose.msra.mxu0 %v6832
      %6877 = vmatprep.subr.bf16.mxu0 0
      %6878 = vmatpush2.bf16.xpose.msra.mxu0 %v6829
      %6879 = vmatprep.subr.bf16.mxu0 0
      %6880 = vmatpush2.bf16.xpose.msra.mxu0 %v6826
      %6881 = vmatprep.mubr.bf16.mxu0 0
      %6882 = vmatmul.mubr.bf16.gmra.mxu0 %v6754
      %v6883 = vpop.f32.mrf.mxu0
      %v6884 = vadd.f32 %v750, %v6883
      %v6885 = vpop.f32.mrf.mxu0
      %v6886 = vadd.f32 %v754, %v6885
      %v6887 = vpop.f32.mrf.mxu0
      %v6888 = vadd.f32 %v750, %v6887
      %v6889 = vpop.f32.mrf.mxu0
      %v6890 = vadd.f32 %v754, %v6889
      %6891 = vmatprep.mubr.bf16.mxu0 0
      %6892 = vmatmul.mubr.bf16.gmra.mxu0 %v6757
      %v6893 = vpop.f32.mrf.mxu0
      %v6894 = vadd.f32 %v750, %v6893
      %v6895 = vpop.f32.mrf.mxu0
      %v6896 = vadd.f32 %v754, %v6895
      %v6897 = vpop.f32.mrf.mxu0
      %v6898 = vadd.f32 %v750, %v6897
      %v6899 = vpop.f32.mrf.mxu0
      %v6900 = vadd.f32 %v754, %v6899
      %6901 = vmatprep.mubr.bf16.mxu0 0
      %6902 = vmatmul.mubr.bf16.gmra.mxu0 %v6760
      %v6903 = vpop.f32.mrf.mxu0
      %v6904 = vadd.f32 %v750, %v6903
      %v6905 = vpop.f32.mrf.mxu0
      %v6906 = vadd.f32 %v754, %v6905
      %v6907 = vpop.f32.mrf.mxu0
      %v6908 = vadd.f32 %v750, %v6907
      %v6909 = vpop.f32.mrf.mxu0
      %v6910 = vadd.f32 %v754, %v6909
      %6911 = vmatprep.mubr.bf16.mxu0 0
      %6912 = vmatmul.mubr.bf16.gmra.mxu0 %v6763
      %v6913 = vpop.f32.mrf.mxu0
      %v6914 = vadd.f32 %v750, %v6913
      %v6915 = vpop.f32.mrf.mxu0
      %v6916 = vadd.f32 %v754, %v6915
      %v6917 = vpop.f32.mrf.mxu0
      %v6918 = vadd.f32 %v750, %v6917
      %v6919 = vpop.f32.mrf.mxu0
      %v6920 = vadd.f32 %v754, %v6919
      %6921 = vmatprep.mubr.bf16.mxu0 0
      %6922 = vmatmul.mubr.bf16.gmra.mxu0 %v6766
      %v6923 = vpop.f32.mrf.mxu0
      %v6924 = vadd.f32 %v750, %v6923
      %v6925 = vpop.f32.mrf.mxu0
      %v6926 = vadd.f32 %v754, %v6925
      %v6927 = vpop.f32.mrf.mxu0
      %v6928 = vadd.f32 %v750, %v6927
      %v6929 = vpop.f32.mrf.mxu0
      %v6930 = vadd.f32 %v754, %v6929
      %6931 = vmatprep.mubr.bf16.mxu0 0
      %6932 = vmatmul.mubr.bf16.gmra.mxu0 %v6769
      %v6933 = vpop.f32.mrf.mxu0
      %v6934 = vadd.f32 %v750, %v6933
      %v6935 = vpop.f32.mrf.mxu0
      %v6936 = vadd.f32 %v754, %v6935
      %v6937 = vpop.f32.mrf.mxu0
      %v6938 = vadd.f32 %v750, %v6937
      %v6939 = vpop.f32.mrf.mxu0
      %v6940 = vadd.f32 %v754, %v6939
      %6941 = vmatprep.mubr.bf16.mxu0 0
      %6942 = vmatmul.mubr.bf16.gmra.mxu0 %v6772
      %v6943 = vpop.f32.mrf.mxu0
      %v6944 = vadd.f32 %v750, %v6943
      %v6945 = vpop.f32.mrf.mxu0
      %v6946 = vadd.f32 %v754, %v6945
      %v6947 = vpop.f32.mrf.mxu0
      %v6948 = vadd.f32 %v750, %v6947
      %v6949 = vpop.f32.mrf.mxu0
      %v6950 = vadd.f32 %v754, %v6949
      %6951 = vmatprep.mubr.bf16.mxu0 0
      %6952 = vmatmul.mubr.bf16.gmra.mxu0 %v6775
      %v6953 = vpop.f32.mrf.mxu0
      %v6954 = vadd.f32 %v750, %v6953
      %v6955 = vpop.f32.mrf.mxu0
      %v6956 = vadd.f32 %v754, %v6955
      %v6957 = vpop.f32.mrf.mxu0
      %v6958 = vadd.f32 %v750, %v6957
      %v6959 = vpop.f32.mrf.mxu0
      %v6960 = vadd.f32 %v754, %v6959
      %6961 = vmatprep.mubr.bf16.mxu0 0
      %6962 = vmatmul.mubr.bf16.gmra.mxu0 %v6778
      %v6963 = vpop.f32.mrf.mxu0
      %v6964 = vadd.f32 %v750, %v6963
      %v6965 = vpop.f32.mrf.mxu0
      %v6966 = vadd.f32 %v754, %v6965
      %v6967 = vpop.f32.mrf.mxu0
      %v6968 = vadd.f32 %v750, %v6967
      %v6969 = vpop.f32.mrf.mxu0
      %v6970 = vadd.f32 %v754, %v6969
      %6971 = vmatprep.mubr.bf16.mxu0 0
      %6972 = vmatmul.mubr.bf16.gmra.mxu0 %v6781
      %v6973 = vpop.f32.mrf.mxu0
      %v6974 = vadd.f32 %v750, %v6973
      %v6975 = vpop.f32.mrf.mxu0
      %v6976 = vadd.f32 %v754, %v6975
      %v6977 = vpop.f32.mrf.mxu0
      %v6978 = vadd.f32 %v750, %v6977
      %v6979 = vpop.f32.mrf.mxu0
      %v6980 = vadd.f32 %v754, %v6979
      %6981 = vmatprep.mubr.bf16.mxu0 0
      %6982 = vmatmul.mubr.bf16.gmra.mxu0 %v6784
      %v6983 = vpop.f32.mrf.mxu0
      %v6984 = vadd.f32 %v750, %v6983
      %v6985 = vpop.f32.mrf.mxu0
      %v6986 = vadd.f32 %v754, %v6985
      %v6987 = vpop.f32.mrf.mxu0
      %v6988 = vadd.f32 %v750, %v6987
      %v6989 = vpop.f32.mrf.mxu0
      %v6990 = vadd.f32 %v754, %v6989
      %6991 = vmatprep.mubr.bf16.mxu0 0
      %6992 = vmatmul.mubr.bf16.gmra.mxu0 %v6787
      %v6993 = vpop.f32.mrf.mxu0
      %v6994 = vadd.f32 %v750, %v6993
      %v6995 = vpop.f32.mrf.mxu0
      %v6996 = vadd.f32 %v754, %v6995
      %v6997 = vpop.f32.mrf.mxu0
      %v6998 = vadd.f32 %v750, %v6997
      %v6999 = vpop.f32.mrf.mxu0
      %v7000 = vadd.f32 %v754, %v6999
      %7001 = vmatprep.mubr.bf16.mxu0 0
      %7002 = vmatmul.mubr.bf16.gmra.mxu0 %v6790
      %v7003 = vpop.f32.mrf.mxu0
      %v7004 = vadd.f32 %v750, %v7003
      %v7005 = vpop.f32.mrf.mxu0
      %v7006 = vadd.f32 %v754, %v7005
      %v7007 = vpop.f32.mrf.mxu0
      %v7008 = vadd.f32 %v750, %v7007
      %v7009 = vpop.f32.mrf.mxu0
      %v7010 = vadd.f32 %v754, %v7009
      %7011 = vmatprep.mubr.bf16.mxu0 0
      %7012 = vmatmul.mubr.bf16.gmra.mxu0 %v6793
      %v7013 = vpop.f32.mrf.mxu0
      %v7014 = vadd.f32 %v750, %v7013
      %v7015 = vpop.f32.mrf.mxu0
      %v7016 = vadd.f32 %v754, %v7015
      %v7017 = vpop.f32.mrf.mxu0
      %v7018 = vadd.f32 %v750, %v7017
      %v7019 = vpop.f32.mrf.mxu0
      %v7020 = vadd.f32 %v754, %v7019
      %7021 = vmatprep.mubr.bf16.mxu0 0
      %7022 = vmatmul.mubr.bf16.gmra.mxu0 %v6796
      %v7023 = vpop.f32.mrf.mxu0
      %v7024 = vadd.f32 %v750, %v7023
      %v7025 = vpop.f32.mrf.mxu0
      %v7026 = vadd.f32 %v754, %v7025
      %v7027 = vpop.f32.mrf.mxu0
      %v7028 = vadd.f32 %v750, %v7027
      %v7029 = vpop.f32.mrf.mxu0
      %v7030 = vadd.f32 %v754, %v7029
      %7031 = vmatprep.mubr.bf16.mxu0 0
      %7032 = vmatmul.mubr.bf16.gmra.mxu0 %v6799
      %v7033 = vpop.f32.mrf.mxu0
      %v7034 = vadd.f32 %v750, %v7033
      %v7035 = vpop.f32.mrf.mxu0
      %v7036 = vadd.f32 %v754, %v7035
      %v7037 = vpop.f32.mrf.mxu0
      %v7038 = vadd.f32 %v750, %v7037
      %v7039 = vpop.f32.mrf.mxu0
      %v7040 = vadd.f32 %v754, %v7039
      %7041 = vdwg.mxu0
      %s7042 = scalar_lea.vmem [#allocation2], 768
      %v7043 = vld [vmem:[%s7042] sm:$0xff]
      %v7044 = vld [vmem:[%s7042 + $0x8] sm:$0xff]
      %v7045 = vld [vmem:[%s7042 + $0x10] sm:$0xff]
      %v7046 = vld [vmem:[%s7042 + $0x18] sm:$0xff]
      %v7047 = vld [vmem:[%s7042 + $0x20] sm:$0xff]
      %v7048 = vld [vmem:[%s7042 + $0x28] sm:$0xff]
      %v7049 = vld [vmem:[%s7042 + $0x30] sm:$0xff]
      %v7050 = vld [vmem:[%s7042 + $0x38] sm:$0xff]
      %v7051 = vld [vmem:[%s7042 + $0x40] sm:$0xff]
      %v7052 = vld [vmem:[%s7042 + $0x48] sm:$0xff]
      %v7053 = vld [vmem:[%s7042 + $0x50] sm:$0xff]
      %v7054 = vld [vmem:[%s7042 + $0x58] sm:$0xff]
      %v7055 = vld [vmem:[%s7042 + $0x60] sm:$0xff]
      %v7056 = vld [vmem:[%s7042 + $0x68] sm:$0xff]
      %v7057 = vld [vmem:[%s7042 + $0x70] sm:$0xff]
      %v7058 = vld [vmem:[%s7042 + $0x78] sm:$0xff]
      %v7059 = vld [vmem:[%s7042 + $0x80] sm:$0xff]
      %v7060 = vld [vmem:[%s7042 + $0x88] sm:$0xff]
      %v7061 = vld [vmem:[%s7042 + $0x90] sm:$0xff]
      %v7062 = vld [vmem:[%s7042 + $0x98] sm:$0xff]
      %v7063 = vld [vmem:[%s7042 + $0xa0] sm:$0xff]
      %v7064 = vld [vmem:[%s7042 + $0xa8] sm:$0xff]
      %v7065 = vld [vmem:[%s7042 + $0xb0] sm:$0xff]
      %v7066 = vld [vmem:[%s7042 + $0xb8] sm:$0xff]
      %v7067 = vld [vmem:[%s7042 + $0xc0] sm:$0xff]
      %v7068 = vld [vmem:[%s7042 + $0xc8] sm:$0xff]
      %v7069 = vld [vmem:[%s7042 + $0xd0] sm:$0xff]
      %v7070 = vld [vmem:[%s7042 + $0xd8] sm:$0xff]
      %v7071 = vld [vmem:[%s7042 + $0xe0] sm:$0xff]
      %v7072 = vld [vmem:[%s7042 + $0xe8] sm:$0xff]
      %v7073 = vld [vmem:[%s7042 + $0xf0] sm:$0xff]
      %v7074 = vld [vmem:[%s7042 + $0xf8] sm:$0xff]
      %v7075 = vmax.f32 %v6884, %v6886
      %7076 = vmax.xlane.f32.xlu0 %v7075
      %v7077 = vpop.xlane.xlu0 %7076
      %v7078 = vmax.f32 %v6888, %v6890
      %7079 = vmax.xlane.f32.xlu0 %v7078
      %v7080 = vpop.xlane.xlu0 %7079
      %v7081 = vmax.f32 %v6894, %v6896
      %7082 = vmax.xlane.f32.xlu0 %v7081
      %v7083 = vpop.xlane.xlu0 %7082
      %v7084 = vmax.f32 %v6898, %v6900
      %7085 = vmax.xlane.f32.xlu0 %v7084
      %v7086 = vpop.xlane.xlu0 %7085
      %v7087 = vmax.f32 %v6904, %v6906
      %7088 = vmax.xlane.f32.xlu0 %v7087
      %v7089 = vpop.xlane.xlu0 %7088
      %v7090 = vmax.f32 %v6908, %v6910
      %7091 = vmax.xlane.f32.xlu0 %v7090
      %v7092 = vpop.xlane.xlu0 %7091
      %v7093 = vmax.f32 %v6914, %v6916
      %7094 = vmax.xlane.f32.xlu0 %v7093
      %v7095 = vpop.xlane.xlu0 %7094
      %v7096 = vmax.f32 %v6918, %v6920
      %7097 = vmax.xlane.f32.xlu0 %v7096
      %v7098 = vpop.xlane.xlu0 %7097
      %v7099 = vmax.f32 %v6924, %v6926
      %7100 = vmax.xlane.f32.xlu0 %v7099
      %v7101 = vpop.xlane.xlu0 %7100
      %v7102 = vmax.f32 %v6928, %v6930
      %7103 = vmax.xlane.f32.xlu0 %v7102
      %v7104 = vpop.xlane.xlu0 %7103
      %v7105 = vmax.f32 %v6934, %v6936
      %7106 = vmax.xlane.f32.xlu0 %v7105
      %v7107 = vpop.xlane.xlu0 %7106
      %v7108 = vmax.f32 %v6938, %v6940
      %7109 = vmax.xlane.f32.xlu0 %v7108
      %v7110 = vpop.xlane.xlu0 %7109
      %v7111 = vmax.f32 %v6944, %v6946
      %7112 = vmax.xlane.f32.xlu0 %v7111
      %v7113 = vpop.xlane.xlu0 %7112
      %v7114 = vmax.f32 %v6948, %v6950
      %7115 = vmax.xlane.f32.xlu0 %v7114
      %v7116 = vpop.xlane.xlu0 %7115
      %v7117 = vmax.f32 %v6954, %v6956
      %7118 = vmax.xlane.f32.xlu0 %v7117
      %v7119 = vpop.xlane.xlu0 %7118
      %v7120 = vmax.f32 %v6958, %v6960
      %7121 = vmax.xlane.f32.xlu0 %v7120
      %v7122 = vpop.xlane.xlu0 %7121
      %v7123 = vmax.f32 %v6964, %v6966
      %7124 = vmax.xlane.f32.xlu0 %v7123
      %v7125 = vpop.xlane.xlu0 %7124
      %v7126 = vmax.f32 %v6968, %v6970
      %7127 = vmax.xlane.f32.xlu0 %v7126
      %v7128 = vpop.xlane.xlu0 %7127
      %v7129 = vmax.f32 %v6974, %v6976
      %7130 = vmax.xlane.f32.xlu0 %v7129
      %v7131 = vpop.xlane.xlu0 %7130
      %v7132 = vmax.f32 %v6978, %v6980
      %7133 = vmax.xlane.f32.xlu0 %v7132
      %v7134 = vpop.xlane.xlu0 %7133
      %v7135 = vmax.f32 %v6984, %v6986
      %7136 = vmax.xlane.f32.xlu0 %v7135
      %v7137 = vpop.xlane.xlu0 %7136
      %v7138 = vmax.f32 %v6988, %v6990
      %7139 = vmax.xlane.f32.xlu0 %v7138
      %v7140 = vpop.xlane.xlu0 %7139
      %v7141 = vmax.f32 %v6994, %v6996
      %7142 = vmax.xlane.f32.xlu0 %v7141
      %v7143 = vpop.xlane.xlu0 %7142
      %v7144 = vmax.f32 %v6998, %v7000
      %7145 = vmax.xlane.f32.xlu0 %v7144
      %v7146 = vpop.xlane.xlu0 %7145
      %v7147 = vmax.f32 %v7004, %v7006
      %7148 = vmax.xlane.f32.xlu0 %v7147
      %v7149 = vpop.xlane.xlu0 %7148
      %v7150 = vmax.f32 %v7008, %v7010
      %7151 = vmax.xlane.f32.xlu0 %v7150
      %v7152 = vpop.xlane.xlu0 %7151
      %v7153 = vmax.f32 %v7014, %v7016
      %7154 = vmax.xlane.f32.xlu0 %v7153
      %v7155 = vpop.xlane.xlu0 %7154
      %v7156 = vmax.f32 %v7018, %v7020
      %7157 = vmax.xlane.f32.xlu0 %v7156
      %v7158 = vpop.xlane.xlu0 %7157
      %v7159 = vmax.f32 %v7024, %v7026
      %7160 = vmax.xlane.f32.xlu0 %v7159
      %v7161 = vpop.xlane.xlu0 %7160
      %v7162 = vmax.f32 %v7028, %v7030
      %7163 = vmax.xlane.f32.xlu0 %v7162
      %v7164 = vpop.xlane.xlu0 %7163
      %v7165 = vmax.f32 %v7034, %v7036
      %7166 = vmax.xlane.f32.xlu0 %v7165
      %v7167 = vpop.xlane.xlu0 %7166
      %v7168 = vmax.f32 %v7038, %v7040
      %7169 = vmax.xlane.f32.xlu0 %v7168
      %v7170 = vpop.xlane.xlu0 %7169
      %v7171 = vmax.f32 %v7043, %v7077
      %v7172 = vmax.f32 %v7044, %v7080
      %v7173 = vmax.f32 %v7045, %v7083
      %v7174 = vmax.f32 %v7046, %v7086
      %v7175 = vmax.f32 %v7047, %v7089
      %v7176 = vmax.f32 %v7048, %v7092
      %v7177 = vmax.f32 %v7049, %v7095
      %v7178 = vmax.f32 %v7050, %v7098
      %v7179 = vmax.f32 %v7051, %v7101
      %v7180 = vmax.f32 %v7052, %v7104
      %v7181 = vmax.f32 %v7053, %v7107
      %v7182 = vmax.f32 %v7054, %v7110
      %v7183 = vmax.f32 %v7055, %v7113
      %v7184 = vmax.f32 %v7056, %v7116
      %v7185 = vmax.f32 %v7057, %v7119
      %v7186 = vmax.f32 %v7058, %v7122
      %v7187 = vmax.f32 %v7059, %v7125
      %v7188 = vmax.f32 %v7060, %v7128
      %v7189 = vmax.f32 %v7061, %v7131
      %v7190 = vmax.f32 %v7062, %v7134
      %v7191 = vmax.f32 %v7063, %v7137
      %v7192 = vmax.f32 %v7064, %v7140
      %v7193 = vmax.f32 %v7065, %v7143
      %v7194 = vmax.f32 %v7066, %v7146
      %v7195 = vmax.f32 %v7067, %v7149
      %v7196 = vmax.f32 %v7068, %v7152
      %v7197 = vmax.f32 %v7069, %v7155
      %v7198 = vmax.f32 %v7070, %v7158
      %v7199 = vmax.f32 %v7071, %v7161
      %v7200 = vmax.f32 %v7072, %v7164
      %v7201 = vmax.f32 %v7073, %v7167
      %v7202 = vmax.f32 %v7074, %v7170
      %v7203 = vsub.f32 %v7043, %v7171
      %v7204 = vsub.f32 %v7044, %v7172
      %v7205 = vsub.f32 %v7045, %v7173
      %v7206 = vsub.f32 %v7046, %v7174
      %v7207 = vsub.f32 %v7047, %v7175
      %v7208 = vsub.f32 %v7048, %v7176
      %v7209 = vsub.f32 %v7049, %v7177
      %v7210 = vsub.f32 %v7050, %v7178
      %v7211 = vsub.f32 %v7051, %v7179
      %v7212 = vsub.f32 %v7052, %v7180
      %v7213 = vsub.f32 %v7053, %v7181
      %v7214 = vsub.f32 %v7054, %v7182
      %v7215 = vsub.f32 %v7055, %v7183
      %v7216 = vsub.f32 %v7056, %v7184
      %v7217 = vsub.f32 %v7057, %v7185
      %v7218 = vsub.f32 %v7058, %v7186
      %v7219 = vsub.f32 %v7059, %v7187
      %v7220 = vsub.f32 %v7060, %v7188
      %v7221 = vsub.f32 %v7061, %v7189
      %v7222 = vsub.f32 %v7062, %v7190
      %v7223 = vsub.f32 %v7063, %v7191
      %v7224 = vsub.f32 %v7064, %v7192
      %v7225 = vsub.f32 %v7065, %v7193
      %v7226 = vsub.f32 %v7066, %v7194
      %v7227 = vsub.f32 %v7067, %v7195
      %v7228 = vsub.f32 %v7068, %v7196
      %v7229 = vsub.f32 %v7069, %v7197
      %v7230 = vsub.f32 %v7070, %v7198
      %v7231 = vsub.f32 %v7071, %v7199
      %v7232 = vsub.f32 %v7072, %v7200
      %v7233 = vsub.f32 %v7073, %v7201
      %v7234 = vsub.f32 %v7074, %v7202
      %v7235 = vmul.f32 %v7203, 1.442695
      %v7236 = vpow.pop %v7235
      %v7237 = vmul.f32 %v7204, 1.442695
      %v7238 = vpow.pop %v7237
      %v7239 = vmul.f32 %v7205, 1.442695
      %v7240 = vpow.pop %v7239
      %v7241 = vmul.f32 %v7206, 1.442695
      %v7242 = vpow.pop %v7241
      %v7243 = vmul.f32 %v7207, 1.442695
      %v7244 = vpow.pop %v7243
      %v7245 = vmul.f32 %v7208, 1.442695
      %v7246 = vpow.pop %v7245
      %v7247 = vmul.f32 %v7209, 1.442695
      %v7248 = vpow.pop %v7247
      %v7249 = vmul.f32 %v7210, 1.442695
      %v7250 = vpow.pop %v7249
      %v7251 = vmul.f32 %v7211, 1.442695
      %v7252 = vpow.pop %v7251
      %v7253 = vmul.f32 %v7212, 1.442695
      %v7254 = vpow.pop %v7253
      %v7255 = vmul.f32 %v7213, 1.442695
      %v7256 = vpow.pop %v7255
      %v7257 = vmul.f32 %v7214, 1.442695
      %v7258 = vpow.pop %v7257
      %v7259 = vmul.f32 %v7215, 1.442695
      %v7260 = vpow.pop %v7259
      %v7261 = vmul.f32 %v7216, 1.442695
      %v7262 = vpow.pop %v7261
      %v7263 = vmul.f32 %v7217, 1.442695
      %v7264 = vpow.pop %v7263
      %v7265 = vmul.f32 %v7218, 1.442695
      %v7266 = vpow.pop %v7265
      %v7267 = vmul.f32 %v7219, 1.442695
      %v7268 = vpow.pop %v7267
      %v7269 = vmul.f32 %v7220, 1.442695
      %v7270 = vpow.pop %v7269
      %v7271 = vmul.f32 %v7221, 1.442695
      %v7272 = vpow.pop %v7271
      %v7273 = vmul.f32 %v7222, 1.442695
      %v7274 = vpow.pop %v7273
      %v7275 = vmul.f32 %v7223, 1.442695
      %v7276 = vpow.pop %v7275
      %v7277 = vmul.f32 %v7224, 1.442695
      %v7278 = vpow.pop %v7277
      %v7279 = vmul.f32 %v7225, 1.442695
      %v7280 = vpow.pop %v7279
      %v7281 = vmul.f32 %v7226, 1.442695
      %v7282 = vpow.pop %v7281
      %v7283 = vmul.f32 %v7227, 1.442695
      %v7284 = vpow.pop %v7283
      %v7285 = vmul.f32 %v7228, 1.442695
      %v7286 = vpow.pop %v7285
      %v7287 = vmul.f32 %v7229, 1.442695
      %v7288 = vpow.pop %v7287
      %v7289 = vmul.f32 %v7230, 1.442695
      %v7290 = vpow.pop %v7289
      %v7291 = vmul.f32 %v7231, 1.442695
      %v7292 = vpow.pop %v7291
      %v7293 = vmul.f32 %v7232, 1.442695
      %v7294 = vpow.pop %v7293
      %v7295 = vmul.f32 %v7233, 1.442695
      %v7296 = vpow.pop %v7295
      %v7297 = vmul.f32 %v7234, 1.442695
      %v7298 = vpow.pop %v7297
      %7300 = vset.pattern.permute.xlu0 0
      %7301 = vperm.xlu0 %7300, %v7171
      %v7302 = vpop.permute.xlu0 %7301
      %7305 = vset.pattern.permute.xlu0 0
      %7306 = vperm.xlu0 %7305, %v7172
      %v7307 = vpop.permute.xlu0 %7306
      %7310 = vset.pattern.permute.xlu0 0
      %7311 = vperm.xlu0 %7310, %v7173
      %v7312 = vpop.permute.xlu0 %7311
      %7315 = vset.pattern.permute.xlu0 0
      %7316 = vperm.xlu0 %7315, %v7174
      %v7317 = vpop.permute.xlu0 %7316
      %7320 = vset.pattern.permute.xlu0 0
      %7321 = vperm.xlu0 %7320, %v7175
      %v7322 = vpop.permute.xlu0 %7321
      %7325 = vset.pattern.permute.xlu0 0
      %7326 = vperm.xlu0 %7325, %v7176
      %v7327 = vpop.permute.xlu0 %7326
      %7330 = vset.pattern.permute.xlu0 0
      %7331 = vperm.xlu0 %7330, %v7177
      %v7332 = vpop.permute.xlu0 %7331
      %7335 = vset.pattern.permute.xlu0 0
      %7336 = vperm.xlu0 %7335, %v7178
      %v7337 = vpop.permute.xlu0 %7336
      %7340 = vset.pattern.permute.xlu0 0
      %7341 = vperm.xlu0 %7340, %v7179
      %v7342 = vpop.permute.xlu0 %7341
      %7345 = vset.pattern.permute.xlu0 0
      %7346 = vperm.xlu0 %7345, %v7180
      %v7347 = vpop.permute.xlu0 %7346
      %7350 = vset.pattern.permute.xlu0 0
      %7351 = vperm.xlu0 %7350, %v7181
      %v7352 = vpop.permute.xlu0 %7351
      %7355 = vset.pattern.permute.xlu0 0
      %7356 = vperm.xlu0 %7355, %v7182
      %v7357 = vpop.permute.xlu0 %7356
      %7360 = vset.pattern.permute.xlu0 0
      %7361 = vperm.xlu0 %7360, %v7183
      %v7362 = vpop.permute.xlu0 %7361
      %7365 = vset.pattern.permute.xlu0 0
      %7366 = vperm.xlu0 %7365, %v7184
      %v7367 = vpop.permute.xlu0 %7366
      %7370 = vset.pattern.permute.xlu0 0
      %7371 = vperm.xlu0 %7370, %v7185
      %v7372 = vpop.permute.xlu0 %7371
      %7375 = vset.pattern.permute.xlu0 0
      %7376 = vperm.xlu0 %7375, %v7186
      %v7377 = vpop.permute.xlu0 %7376
      %7380 = vset.pattern.permute.xlu0 0
      %7381 = vperm.xlu0 %7380, %v7187
      %v7382 = vpop.permute.xlu0 %7381
      %7385 = vset.pattern.permute.xlu0 0
      %7386 = vperm.xlu0 %7385, %v7188
      %v7387 = vpop.permute.xlu0 %7386
      %7390 = vset.pattern.permute.xlu0 0
      %7391 = vperm.xlu0 %7390, %v7189
      %v7392 = vpop.permute.xlu0 %7391
      %7395 = vset.pattern.permute.xlu0 0
      %7396 = vperm.xlu0 %7395, %v7190
      %v7397 = vpop.permute.xlu0 %7396
      %7400 = vset.pattern.permute.xlu0 0
      %7401 = vperm.xlu0 %7400, %v7191
      %v7402 = vpop.permute.xlu0 %7401
      %7405 = vset.pattern.permute.xlu0 0
      %7406 = vperm.xlu0 %7405, %v7192
      %v7407 = vpop.permute.xlu0 %7406
      %7410 = vset.pattern.permute.xlu0 0
      %7411 = vperm.xlu0 %7410, %v7193
      %v7412 = vpop.permute.xlu0 %7411
      %7415 = vset.pattern.permute.xlu0 0
      %7416 = vperm.xlu0 %7415, %v7194
      %v7417 = vpop.permute.xlu0 %7416
      %7420 = vset.pattern.permute.xlu0 0
      %7421 = vperm.xlu0 %7420, %v7195
      %v7422 = vpop.permute.xlu0 %7421
      %7425 = vset.pattern.permute.xlu0 0
      %7426 = vperm.xlu0 %7425, %v7196
      %v7427 = vpop.permute.xlu0 %7426
      %7430 = vset.pattern.permute.xlu0 0
      %7431 = vperm.xlu0 %7430, %v7197
      %v7432 = vpop.permute.xlu0 %7431
      %7435 = vset.pattern.permute.xlu0 0
      %7436 = vperm.xlu0 %7435, %v7198
      %v7437 = vpop.permute.xlu0 %7436
      %7440 = vset.pattern.permute.xlu0 0
      %7441 = vperm.xlu0 %7440, %v7199
      %v7442 = vpop.permute.xlu0 %7441
      %7445 = vset.pattern.permute.xlu0 0
      %7446 = vperm.xlu0 %7445, %v7200
      %v7447 = vpop.permute.xlu0 %7446
      %7450 = vset.pattern.permute.xlu0 0
      %7451 = vperm.xlu0 %7450, %v7201
      %v7452 = vpop.permute.xlu0 %7451
      %7455 = vset.pattern.permute.xlu0 0
      %7456 = vperm.xlu0 %7455, %v7202
      %v7457 = vpop.permute.xlu0 %7456
      %v7459 = vsub.f32 %v6884, %v7302
      %v7460 = vsub.f32 %v6886, %v7302
      %v7461 = vsub.f32 %v6888, %v7307
      %v7462 = vsub.f32 %v6890, %v7307
      %v7463 = vsub.f32 %v6894, %v7312
      %v7464 = vsub.f32 %v6896, %v7312
      %v7465 = vsub.f32 %v6898, %v7317
      %v7466 = vsub.f32 %v6900, %v7317
      %v7467 = vsub.f32 %v6904, %v7322
      %v7468 = vsub.f32 %v6906, %v7322
      %v7469 = vsub.f32 %v6908, %v7327
      %v7470 = vsub.f32 %v6910, %v7327
      %v7471 = vsub.f32 %v6914, %v7332
      %v7472 = vsub.f32 %v6916, %v7332
      %v7473 = vsub.f32 %v6918, %v7337
      %v7474 = vsub.f32 %v6920, %v7337
      %v7475 = vsub.f32 %v6924, %v7342
      %v7476 = vsub.f32 %v6926, %v7342
      %v7477 = vsub.f32 %v6928, %v7347
      %v7478 = vsub.f32 %v6930, %v7347
      %v7479 = vsub.f32 %v6934, %v7352
      %v7480 = vsub.f32 %v6936, %v7352
      %v7481 = vsub.f32 %v6938, %v7357
      %v7482 = vsub.f32 %v6940, %v7357
      %v7483 = vsub.f32 %v6944, %v7362
      %v7484 = vsub.f32 %v6946, %v7362
      %v7485 = vsub.f32 %v6948, %v7367
      %v7486 = vsub.f32 %v6950, %v7367
      %v7487 = vsub.f32 %v6954, %v7372
      %v7488 = vsub.f32 %v6956, %v7372
      %v7489 = vsub.f32 %v6958, %v7377
      %v7490 = vsub.f32 %v6960, %v7377
      %v7491 = vsub.f32 %v6964, %v7382
      %v7492 = vsub.f32 %v6966, %v7382
      %v7493 = vsub.f32 %v6968, %v7387
      %v7494 = vsub.f32 %v6970, %v7387
      %v7495 = vsub.f32 %v6974, %v7392
      %v7496 = vsub.f32 %v6976, %v7392
      %v7497 = vsub.f32 %v6978, %v7397
      %v7498 = vsub.f32 %v6980, %v7397
      %v7499 = vsub.f32 %v6984, %v7402
      %v7500 = vsub.f32 %v6986, %v7402
      %v7501 = vsub.f32 %v6988, %v7407
      %v7502 = vsub.f32 %v6990, %v7407
      %v7503 = vsub.f32 %v6994, %v7412
      %v7504 = vsub.f32 %v6996, %v7412
      %v7505 = vsub.f32 %v6998, %v7417
      %v7506 = vsub.f32 %v7000, %v7417
      %v7507 = vsub.f32 %v7004, %v7422
      %v7508 = vsub.f32 %v7006, %v7422
      %v7509 = vsub.f32 %v7008, %v7427
      %v7510 = vsub.f32 %v7010, %v7427
      %v7511 = vsub.f32 %v7014, %v7432
      %v7512 = vsub.f32 %v7016, %v7432
      %v7513 = vsub.f32 %v7018, %v7437
      %v7514 = vsub.f32 %v7020, %v7437
      %v7515 = vsub.f32 %v7024, %v7442
      %v7516 = vsub.f32 %v7026, %v7442
      %v7517 = vsub.f32 %v7028, %v7447
      %v7518 = vsub.f32 %v7030, %v7447
      %v7519 = vsub.f32 %v7034, %v7452
      %v7520 = vsub.f32 %v7036, %v7452
      %v7521 = vsub.f32 %v7038, %v7457
      %v7522 = vsub.f32 %v7040, %v7457
      %v7523 = vmul.f32 %v7459, 1.442695
      %v7524 = vpow.pop %v7523
      %v7525 = vmul.f32 %v7460, 1.442695
      %v7526 = vpow.pop %v7525
      %v7527 = vmul.f32 %v7461, 1.442695
      %v7528 = vpow.pop %v7527
      %v7529 = vmul.f32 %v7462, 1.442695
      %v7530 = vpow.pop %v7529
      %v7531 = vmul.f32 %v7463, 1.442695
      %v7532 = vpow.pop %v7531
      %v7533 = vmul.f32 %v7464, 1.442695
      %v7534 = vpow.pop %v7533
      %v7535 = vmul.f32 %v7465, 1.442695
      %v7536 = vpow.pop %v7535
      %v7537 = vmul.f32 %v7466, 1.442695
      %v7538 = vpow.pop %v7537
      %v7539 = vmul.f32 %v7467, 1.442695
      %v7540 = vpow.pop %v7539
      %v7541 = vmul.f32 %v7468, 1.442695
      %v7542 = vpow.pop %v7541
      %v7543 = vmul.f32 %v7469, 1.442695
      %v7544 = vpow.pop %v7543
      %v7545 = vmul.f32 %v7470, 1.442695
      %v7546 = vpow.pop %v7545
      %v7547 = vmul.f32 %v7471, 1.442695
      %v7548 = vpow.pop %v7547
      %v7549 = vmul.f32 %v7472, 1.442695
      %v7550 = vpow.pop %v7549
      %v7551 = vmul.f32 %v7473, 1.442695
      %v7552 = vpow.pop %v7551
      %v7553 = vmul.f32 %v7474, 1.442695
      %v7554 = vpow.pop %v7553
      %v7555 = vmul.f32 %v7475, 1.442695
      %v7556 = vpow.pop %v7555
      %v7557 = vmul.f32 %v7476, 1.442695
      %v7558 = vpow.pop %v7557
      %v7559 = vmul.f32 %v7477, 1.442695
      %v7560 = vpow.pop %v7559
      %v7561 = vmul.f32 %v7478, 1.442695
      %v7562 = vpow.pop %v7561
      %v7563 = vmul.f32 %v7479, 1.442695
      %v7564 = vpow.pop %v7563
      %v7565 = vmul.f32 %v7480, 1.442695
      %v7566 = vpow.pop %v7565
      %v7567 = vmul.f32 %v7481, 1.442695
      %v7568 = vpow.pop %v7567
      %v7569 = vmul.f32 %v7482, 1.442695
      %v7570 = vpow.pop %v7569
      %v7571 = vmul.f32 %v7483, 1.442695
      %v7572 = vpow.pop %v7571
      %v7573 = vmul.f32 %v7484, 1.442695
      %v7574 = vpow.pop %v7573
      %v7575 = vmul.f32 %v7485, 1.442695
      %v7576 = vpow.pop %v7575
      %v7577 = vmul.f32 %v7486, 1.442695
      %v7578 = vpow.pop %v7577
      %v7579 = vmul.f32 %v7487, 1.442695
      %v7580 = vpow.pop %v7579
      %v7581 = vmul.f32 %v7488, 1.442695
      %v7582 = vpow.pop %v7581
      %v7583 = vmul.f32 %v7489, 1.442695
      %v7584 = vpow.pop %v7583
      %v7585 = vmul.f32 %v7490, 1.442695
      %v7586 = vpow.pop %v7585
      %v7587 = vmul.f32 %v7491, 1.442695
      %v7588 = vpow.pop %v7587
      %v7589 = vmul.f32 %v7492, 1.442695
      %v7590 = vpow.pop %v7589
      %v7591 = vmul.f32 %v7493, 1.442695
      %v7592 = vpow.pop %v7591
      %v7593 = vmul.f32 %v7494, 1.442695
      %v7594 = vpow.pop %v7593
      %v7595 = vmul.f32 %v7495, 1.442695
      %v7596 = vpow.pop %v7595
      %v7597 = vmul.f32 %v7496, 1.442695
      %v7598 = vpow.pop %v7597
      %v7599 = vmul.f32 %v7497, 1.442695
      %v7600 = vpow.pop %v7599
      %v7601 = vmul.f32 %v7498, 1.442695
      %v7602 = vpow.pop %v7601
      %v7603 = vmul.f32 %v7499, 1.442695
      %v7604 = vpow.pop %v7603
      %v7605 = vmul.f32 %v7500, 1.442695
      %v7606 = vpow.pop %v7605
      %v7607 = vmul.f32 %v7501, 1.442695
      %v7608 = vpow.pop %v7607
      %v7609 = vmul.f32 %v7502, 1.442695
      %v7610 = vpow.pop %v7609
      %v7611 = vmul.f32 %v7503, 1.442695
      %v7612 = vpow.pop %v7611
      %v7613 = vmul.f32 %v7504, 1.442695
      %v7614 = vpow.pop %v7613
      %v7615 = vmul.f32 %v7505, 1.442695
      %v7616 = vpow.pop %v7615
      %v7617 = vmul.f32 %v7506, 1.442695
      %v7618 = vpow.pop %v7617
      %v7619 = vmul.f32 %v7507, 1.442695
      %v7620 = vpow.pop %v7619
      %v7621 = vmul.f32 %v7508, 1.442695
      %v7622 = vpow.pop %v7621
      %v7623 = vmul.f32 %v7509, 1.442695
      %v7624 = vpow.pop %v7623
      %v7625 = vmul.f32 %v7510, 1.442695
      %v7626 = vpow.pop %v7625
      %v7627 = vmul.f32 %v7511, 1.442695
      %v7628 = vpow.pop %v7627
      %v7629 = vmul.f32 %v7512, 1.442695
      %v7630 = vpow.pop %v7629
      %v7631 = vmul.f32 %v7513, 1.442695
      %v7632 = vpow.pop %v7631
      %v7633 = vmul.f32 %v7514, 1.442695
      %v7634 = vpow.pop %v7633
      %v7635 = vmul.f32 %v7515, 1.442695
      %v7636 = vpow.pop %v7635
      %v7637 = vmul.f32 %v7516, 1.442695
      %v7638 = vpow.pop %v7637
      %v7639 = vmul.f32 %v7517, 1.442695
      %v7640 = vpow.pop %v7639
      %v7641 = vmul.f32 %v7518, 1.442695
      %v7642 = vpow.pop %v7641
      %v7643 = vmul.f32 %v7519, 1.442695
      %v7644 = vpow.pop %v7643
      %v7645 = vmul.f32 %v7520, 1.442695
      %v7646 = vpow.pop %v7645
      %v7647 = vmul.f32 %v7521, 1.442695
      %v7648 = vpow.pop %v7647
      %v7649 = vmul.f32 %v7522, 1.442695
      %v7650 = vpow.pop %v7649
      %s7651 = scalar_lea.vmem [#allocation3], 768
      %v7652 = vld [vmem:[%s7651] sm:$0xff]
      %v7653 = vld [vmem:[%s7651 + $0x8] sm:$0xff]
      %v7654 = vld [vmem:[%s7651 + $0x10] sm:$0xff]
      %v7655 = vld [vmem:[%s7651 + $0x18] sm:$0xff]
      %v7656 = vld [vmem:[%s7651 + $0x20] sm:$0xff]
      %v7657 = vld [vmem:[%s7651 + $0x28] sm:$0xff]
      %v7658 = vld [vmem:[%s7651 + $0x30] sm:$0xff]
      %v7659 = vld [vmem:[%s7651 + $0x38] sm:$0xff]
      %v7660 = vld [vmem:[%s7651 + $0x40] sm:$0xff]
      %v7661 = vld [vmem:[%s7651 + $0x48] sm:$0xff]
      %v7662 = vld [vmem:[%s7651 + $0x50] sm:$0xff]
      %v7663 = vld [vmem:[%s7651 + $0x58] sm:$0xff]
      %v7664 = vld [vmem:[%s7651 + $0x60] sm:$0xff]
      %v7665 = vld [vmem:[%s7651 + $0x68] sm:$0xff]
      %v7666 = vld [vmem:[%s7651 + $0x70] sm:$0xff]
      %v7667 = vld [vmem:[%s7651 + $0x78] sm:$0xff]
      %v7668 = vld [vmem:[%s7651 + $0x80] sm:$0xff]
      %v7669 = vld [vmem:[%s7651 + $0x88] sm:$0xff]
      %v7670 = vld [vmem:[%s7651 + $0x90] sm:$0xff]
      %v7671 = vld [vmem:[%s7651 + $0x98] sm:$0xff]
      %v7672 = vld [vmem:[%s7651 + $0xa0] sm:$0xff]
      %v7673 = vld [vmem:[%s7651 + $0xa8] sm:$0xff]
      %v7674 = vld [vmem:[%s7651 + $0xb0] sm:$0xff]
      %v7675 = vld [vmem:[%s7651 + $0xb8] sm:$0xff]
      %v7676 = vld [vmem:[%s7651 + $0xc0] sm:$0xff]
      %v7677 = vld [vmem:[%s7651 + $0xc8] sm:$0xff]
      %v7678 = vld [vmem:[%s7651 + $0xd0] sm:$0xff]
      %v7679 = vld [vmem:[%s7651 + $0xd8] sm:$0xff]
      %v7680 = vld [vmem:[%s7651 + $0xe0] sm:$0xff]
      %v7681 = vld [vmem:[%s7651 + $0xe8] sm:$0xff]
      %v7682 = vld [vmem:[%s7651 + $0xf0] sm:$0xff]
      %v7683 = vld [vmem:[%s7651 + $0xf8] sm:$0xff]
      %v7684 = vmul.f32 %v7236, %v7652
      %v7685 = vmul.f32 %v7238, %v7653
      %v7686 = vmul.f32 %v7240, %v7654
      %v7687 = vmul.f32 %v7242, %v7655
      %v7688 = vmul.f32 %v7244, %v7656
      %v7689 = vmul.f32 %v7246, %v7657
      %v7690 = vmul.f32 %v7248, %v7658
      %v7691 = vmul.f32 %v7250, %v7659
      %v7692 = vmul.f32 %v7252, %v7660
      %v7693 = vmul.f32 %v7254, %v7661
      %v7694 = vmul.f32 %v7256, %v7662
      %v7695 = vmul.f32 %v7258, %v7663
      %v7696 = vmul.f32 %v7260, %v7664
      %v7697 = vmul.f32 %v7262, %v7665
      %v7698 = vmul.f32 %v7264, %v7666
      %v7699 = vmul.f32 %v7266, %v7667
      %v7700 = vmul.f32 %v7268, %v7668
      %v7701 = vmul.f32 %v7270, %v7669
      %v7702 = vmul.f32 %v7272, %v7670
      %v7703 = vmul.f32 %v7274, %v7671
      %v7704 = vmul.f32 %v7276, %v7672
      %v7705 = vmul.f32 %v7278, %v7673
      %v7706 = vmul.f32 %v7280, %v7674
      %v7707 = vmul.f32 %v7282, %v7675
      %v7708 = vmul.f32 %v7284, %v7676
      %v7709 = vmul.f32 %v7286, %v7677
      %v7710 = vmul.f32 %v7288, %v7678
      %v7711 = vmul.f32 %v7290, %v7679
      %v7712 = vmul.f32 %v7292, %v7680
      %v7713 = vmul.f32 %v7294, %v7681
      %v7714 = vmul.f32 %v7296, %v7682
      %v7715 = vmul.f32 %v7298, %v7683
      %v7716 = vadd.f32 %v7524, %v7526
      %7717 = vadd.xlane.f32.xlu0 %v7716
      %v7718 = vpop.xlane.xlu0 %7717
      %v7719 = vadd.f32 %v7528, %v7530
      %7720 = vadd.xlane.f32.xlu0 %v7719
      %v7721 = vpop.xlane.xlu0 %7720
      %v7722 = vadd.f32 %v7532, %v7534
      %7723 = vadd.xlane.f32.xlu0 %v7722
      %v7724 = vpop.xlane.xlu0 %7723
      %v7725 = vadd.f32 %v7536, %v7538
      %7726 = vadd.xlane.f32.xlu0 %v7725
      %v7727 = vpop.xlane.xlu0 %7726
      %v7728 = vadd.f32 %v7540, %v7542
      %7729 = vadd.xlane.f32.xlu0 %v7728
      %v7730 = vpop.xlane.xlu0 %7729
      %v7731 = vadd.f32 %v7544, %v7546
      %7732 = vadd.xlane.f32.xlu0 %v7731
      %v7733 = vpop.xlane.xlu0 %7732
      %v7734 = vadd.f32 %v7548, %v7550
      %7735 = vadd.xlane.f32.xlu0 %v7734
      %v7736 = vpop.xlane.xlu0 %7735
      %v7737 = vadd.f32 %v7552, %v7554
      %7738 = vadd.xlane.f32.xlu0 %v7737
      %v7739 = vpop.xlane.xlu0 %7738
      %v7740 = vadd.f32 %v7556, %v7558
      %7741 = vadd.xlane.f32.xlu0 %v7740
      %v7742 = vpop.xlane.xlu0 %7741
      %v7743 = vadd.f32 %v7560, %v7562
      %7744 = vadd.xlane.f32.xlu0 %v7743
      %v7745 = vpop.xlane.xlu0 %7744
      %v7746 = vadd.f32 %v7564, %v7566
      %7747 = vadd.xlane.f32.xlu0 %v7746
      %v7748 = vpop.xlane.xlu0 %7747
      %v7749 = vadd.f32 %v7568, %v7570
      %7750 = vadd.xlane.f32.xlu0 %v7749
      %v7751 = vpop.xlane.xlu0 %7750
      %v7752 = vadd.f32 %v7572, %v7574
      %7753 = vadd.xlane.f32.xlu0 %v7752
      %v7754 = vpop.xlane.xlu0 %7753
      %v7755 = vadd.f32 %v7576, %v7578
      %7756 = vadd.xlane.f32.xlu0 %v7755
      %v7757 = vpop.xlane.xlu0 %7756
      %v7758 = vadd.f32 %v7580, %v7582
      %7759 = vadd.xlane.f32.xlu0 %v7758
      %v7760 = vpop.xlane.xlu0 %7759
      %v7761 = vadd.f32 %v7584, %v7586
      %7762 = vadd.xlane.f32.xlu0 %v7761
      %v7763 = vpop.xlane.xlu0 %7762
      %v7764 = vadd.f32 %v7588, %v7590
      %7765 = vadd.xlane.f32.xlu0 %v7764
      %v7766 = vpop.xlane.xlu0 %7765
      %v7767 = vadd.f32 %v7592, %v7594
      %7768 = vadd.xlane.f32.xlu0 %v7767
      %v7769 = vpop.xlane.xlu0 %7768
      %v7770 = vadd.f32 %v7596, %v7598
      %7771 = vadd.xlane.f32.xlu0 %v7770
      %v7772 = vpop.xlane.xlu0 %7771
      %v7773 = vadd.f32 %v7600, %v7602
      %7774 = vadd.xlane.f32.xlu0 %v7773
      %v7775 = vpop.xlane.xlu0 %7774
      %v7776 = vadd.f32 %v7604, %v7606
      %7777 = vadd.xlane.f32.xlu0 %v7776
      %v7778 = vpop.xlane.xlu0 %7777
      %v7779 = vadd.f32 %v7608, %v7610
      %7780 = vadd.xlane.f32.xlu0 %v7779
      %v7781 = vpop.xlane.xlu0 %7780
      %v7782 = vadd.f32 %v7612, %v7614
      %7783 = vadd.xlane.f32.xlu0 %v7782
      %v7784 = vpop.xlane.xlu0 %7783
      %v7785 = vadd.f32 %v7616, %v7618
      %7786 = vadd.xlane.f32.xlu0 %v7785
      %v7787 = vpop.xlane.xlu0 %7786
      %v7788 = vadd.f32 %v7620, %v7622
      %7789 = vadd.xlane.f32.xlu0 %v7788
      %v7790 = vpop.xlane.xlu0 %7789
      %v7791 = vadd.f32 %v7624, %v7626
      %7792 = vadd.xlane.f32.xlu0 %v7791
      %v7793 = vpop.xlane.xlu0 %7792
      %v7794 = vadd.f32 %v7628, %v7630
      %7795 = vadd.xlane.f32.xlu0 %v7794
      %v7796 = vpop.xlane.xlu0 %7795
      %v7797 = vadd.f32 %v7632, %v7634
      %7798 = vadd.xlane.f32.xlu0 %v7797
      %v7799 = vpop.xlane.xlu0 %7798
      %v7800 = vadd.f32 %v7636, %v7638
      %7801 = vadd.xlane.f32.xlu0 %v7800
      %v7802 = vpop.xlane.xlu0 %7801
      %v7803 = vadd.f32 %v7640, %v7642
      %7804 = vadd.xlane.f32.xlu0 %v7803
      %v7805 = vpop.xlane.xlu0 %7804
      %v7806 = vadd.f32 %v7644, %v7646
      %7807 = vadd.xlane.f32.xlu0 %v7806
      %v7808 = vpop.xlane.xlu0 %7807
      %v7809 = vadd.f32 %v7648, %v7650
      %7810 = vadd.xlane.f32.xlu0 %v7809
      %v7811 = vpop.xlane.xlu0 %7810
      %v7812 = vadd.f32 %v7684, %v7718
      %v7813 = vadd.f32 %v7685, %v7721
      %v7814 = vadd.f32 %v7686, %v7724
      %v7815 = vadd.f32 %v7687, %v7727
      %v7816 = vadd.f32 %v7688, %v7730
      %v7817 = vadd.f32 %v7689, %v7733
      %v7818 = vadd.f32 %v7690, %v7736
      %v7819 = vadd.f32 %v7691, %v7739
      %v7820 = vadd.f32 %v7692, %v7742
      %v7821 = vadd.f32 %v7693, %v7745
      %v7822 = vadd.f32 %v7694, %v7748
      %v7823 = vadd.f32 %v7695, %v7751
      %v7824 = vadd.f32 %v7696, %v7754
      %v7825 = vadd.f32 %v7697, %v7757
      %v7826 = vadd.f32 %v7698, %v7760
      %v7827 = vadd.f32 %v7699, %v7763
      %v7828 = vadd.f32 %v7700, %v7766
      %v7829 = vadd.f32 %v7701, %v7769
      %v7830 = vadd.f32 %v7702, %v7772
      %v7831 = vadd.f32 %v7703, %v7775
      %v7832 = vadd.f32 %v7704, %v7778
      %v7833 = vadd.f32 %v7705, %v7781
      %v7834 = vadd.f32 %v7706, %v7784
      %v7835 = vadd.f32 %v7707, %v7787
      %v7836 = vadd.f32 %v7708, %v7790
      %v7837 = vadd.f32 %v7709, %v7793
      %v7838 = vadd.f32 %v7710, %v7796
      %v7839 = vadd.f32 %v7711, %v7799
      %v7840 = vadd.f32 %v7712, %v7802
      %v7841 = vadd.f32 %v7713, %v7805
      %v7842 = vadd.f32 %v7714, %v7808
      %v7843 = vadd.f32 %v7715, %v7811
      %7844 = vst.msk [vmem:[%s7651] sm:$0xff] %vm2007, %v7812
      %7845 = vst.msk [vmem:[%s7651 + $0x8] sm:$0xff] %vm2007, %v7813
      %7846 = vst.msk [vmem:[%s7651 + $0x10] sm:$0xff] %vm2007, %v7814
      %7847 = vst.msk [vmem:[%s7651 + $0x18] sm:$0xff] %vm2007, %v7815
      %7848 = vst.msk [vmem:[%s7651 + $0x20] sm:$0xff] %vm2007, %v7816
      %7849 = vst.msk [vmem:[%s7651 + $0x28] sm:$0xff] %vm2007, %v7817
      %7850 = vst.msk [vmem:[%s7651 + $0x30] sm:$0xff] %vm2007, %v7818
      %7851 = vst.msk [vmem:[%s7651 + $0x38] sm:$0xff] %vm2007, %v7819
      %7852 = vst.msk [vmem:[%s7651 + $0x40] sm:$0xff] %vm2007, %v7820
      %7853 = vst.msk [vmem:[%s7651 + $0x48] sm:$0xff] %vm2007, %v7821
      %7854 = vst.msk [vmem:[%s7651 + $0x50] sm:$0xff] %vm2007, %v7822
      %7855 = vst.msk [vmem:[%s7651 + $0x58] sm:$0xff] %vm2007, %v7823
      %7856 = vst.msk [vmem:[%s7651 + $0x60] sm:$0xff] %vm2007, %v7824
      %7857 = vst.msk [vmem:[%s7651 + $0x68] sm:$0xff] %vm2007, %v7825
      %7858 = vst.msk [vmem:[%s7651 + $0x70] sm:$0xff] %vm2007, %v7826
      %7859 = vst.msk [vmem:[%s7651 + $0x78] sm:$0xff] %vm2007, %v7827
      %7860 = vst.msk [vmem:[%s7651 + $0x80] sm:$0xff] %vm2007, %v7828
      %7861 = vst.msk [vmem:[%s7651 + $0x88] sm:$0xff] %vm2007, %v7829
      %7862 = vst.msk [vmem:[%s7651 + $0x90] sm:$0xff] %vm2007, %v7830
      %7863 = vst.msk [vmem:[%s7651 + $0x98] sm:$0xff] %vm2007, %v7831
      %7864 = vst.msk [vmem:[%s7651 + $0xa0] sm:$0xff] %vm2007, %v7832
      %7865 = vst.msk [vmem:[%s7651 + $0xa8] sm:$0xff] %vm2007, %v7833
      %7866 = vst.msk [vmem:[%s7651 + $0xb0] sm:$0xff] %vm2007, %v7834
      %7867 = vst.msk [vmem:[%s7651 + $0xb8] sm:$0xff] %vm2007, %v7835
      %7868 = vst.msk [vmem:[%s7651 + $0xc0] sm:$0xff] %vm2007, %v7836
      %7869 = vst.msk [vmem:[%s7651 + $0xc8] sm:$0xff] %vm2007, %v7837
      %7870 = vst.msk [vmem:[%s7651 + $0xd0] sm:$0xff] %vm2007, %v7838
      %7871 = vst.msk [vmem:[%s7651 + $0xd8] sm:$0xff] %vm2007, %v7839
      %7872 = vst.msk [vmem:[%s7651 + $0xe0] sm:$0xff] %vm2007, %v7840
      %7873 = vst.msk [vmem:[%s7651 + $0xe8] sm:$0xff] %vm2007, %v7841
      %7874 = vst.msk [vmem:[%s7651 + $0xf0] sm:$0xff] %vm2007, %v7842
      %7875 = vst.msk [vmem:[%s7651 + $0xf8] sm:$0xff] %vm2007, %v7843
      %7876 = vst.msk [vmem:[%s7042] sm:$0xff] %vm2007, %v7171
      %7877 = vst.msk [vmem:[%s7042 + $0x8] sm:$0xff] %vm2007, %v7172
      %7878 = vst.msk [vmem:[%s7042 + $0x10] sm:$0xff] %vm2007, %v7173
      %7879 = vst.msk [vmem:[%s7042 + $0x18] sm:$0xff] %vm2007, %v7174
      %7880 = vst.msk [vmem:[%s7042 + $0x20] sm:$0xff] %vm2007, %v7175
      %7881 = vst.msk [vmem:[%s7042 + $0x28] sm:$0xff] %vm2007, %v7176
      %7882 = vst.msk [vmem:[%s7042 + $0x30] sm:$0xff] %vm2007, %v7177
      %7883 = vst.msk [vmem:[%s7042 + $0x38] sm:$0xff] %vm2007, %v7178
      %7884 = vst.msk [vmem:[%s7042 + $0x40] sm:$0xff] %vm2007, %v7179
      %7885 = vst.msk [vmem:[%s7042 + $0x48] sm:$0xff] %vm2007, %v7180
      %7886 = vst.msk [vmem:[%s7042 + $0x50] sm:$0xff] %vm2007, %v7181
      %7887 = vst.msk [vmem:[%s7042 + $0x58] sm:$0xff] %vm2007, %v7182
      %7888 = vst.msk [vmem:[%s7042 + $0x60] sm:$0xff] %vm2007, %v7183
      %7889 = vst.msk [vmem:[%s7042 + $0x68] sm:$0xff] %vm2007, %v7184
      %7890 = vst.msk [vmem:[%s7042 + $0x70] sm:$0xff] %vm2007, %v7185
      %7891 = vst.msk [vmem:[%s7042 + $0x78] sm:$0xff] %vm2007, %v7186
      %7892 = vst.msk [vmem:[%s7042 + $0x80] sm:$0xff] %vm2007, %v7187
      %7893 = vst.msk [vmem:[%s7042 + $0x88] sm:$0xff] %vm2007, %v7188
      %7894 = vst.msk [vmem:[%s7042 + $0x90] sm:$0xff] %vm2007, %v7189
      %7895 = vst.msk [vmem:[%s7042 + $0x98] sm:$0xff] %vm2007, %v7190
      %7896 = vst.msk [vmem:[%s7042 + $0xa0] sm:$0xff] %vm2007, %v7191
      %7897 = vst.msk [vmem:[%s7042 + $0xa8] sm:$0xff] %vm2007, %v7192
      %7898 = vst.msk [vmem:[%s7042 + $0xb0] sm:$0xff] %vm2007, %v7193
      %7899 = vst.msk [vmem:[%s7042 + $0xb8] sm:$0xff] %vm2007, %v7194
      %7900 = vst.msk [vmem:[%s7042 + $0xc0] sm:$0xff] %vm2007, %v7195
      %7901 = vst.msk [vmem:[%s7042 + $0xc8] sm:$0xff] %vm2007, %v7196
      %7902 = vst.msk [vmem:[%s7042 + $0xd0] sm:$0xff] %vm2007, %v7197
      %7903 = vst.msk [vmem:[%s7042 + $0xd8] sm:$0xff] %vm2007, %v7198
      %7904 = vst.msk [vmem:[%s7042 + $0xe0] sm:$0xff] %vm2007, %v7199
      %7905 = vst.msk [vmem:[%s7042 + $0xe8] sm:$0xff] %vm2007, %v7200
      %7906 = vst.msk [vmem:[%s7042 + $0xf0] sm:$0xff] %vm2007, %v7201
      %7907 = vst.msk [vmem:[%s7042 + $0xf8] sm:$0xff] %vm2007, %v7202
      %v7908 = vpack.c.bf16 %v7528, %v7524
      %v7909 = vpack.c.bf16 %v7530, %v7526
      %v7910 = vpack.c.bf16 %v7536, %v7532
      %v7911 = vpack.c.bf16 %v7538, %v7534
      %v7912 = vpack.c.bf16 %v7544, %v7540
      %v7913 = vpack.c.bf16 %v7546, %v7542
      %v7914 = vpack.c.bf16 %v7552, %v7548
      %v7915 = vpack.c.bf16 %v7554, %v7550
      %v7916 = vpack.c.bf16 %v7560, %v7556
      %v7917 = vpack.c.bf16 %v7562, %v7558
      %v7918 = vpack.c.bf16 %v7568, %v7564
      %v7919 = vpack.c.bf16 %v7570, %v7566
      %v7920 = vpack.c.bf16 %v7576, %v7572
      %v7921 = vpack.c.bf16 %v7578, %v7574
      %v7922 = vpack.c.bf16 %v7584, %v7580
      %v7923 = vpack.c.bf16 %v7586, %v7582
      %v7924 = vpack.c.bf16 %v7592, %v7588
      %v7925 = vpack.c.bf16 %v7594, %v7590
      %v7926 = vpack.c.bf16 %v7600, %v7596
      %v7927 = vpack.c.bf16 %v7602, %v7598
      %v7928 = vpack.c.bf16 %v7608, %v7604
      %v7929 = vpack.c.bf16 %v7610, %v7606
      %v7930 = vpack.c.bf16 %v7616, %v7612
      %v7931 = vpack.c.bf16 %v7618, %v7614
      %v7932 = vpack.c.bf16 %v7624, %v7620
      %v7933 = vpack.c.bf16 %v7626, %v7622
      %v7934 = vpack.c.bf16 %v7632, %v7628
      %v7935 = vpack.c.bf16 %v7634, %v7630
      %v7936 = vpack.c.bf16 %v7640, %v7636
      %v7937 = vpack.c.bf16 %v7642, %v7638
      %v7938 = vpack.c.bf16 %v7648, %v7644
      %v7939 = vpack.c.bf16 %v7650, %v7646
      %v7972 = vunpack.c.l.b16 %v6497
      %v7973 = vunpack.c.l.b16 %v6498
      %v7974 = vunpack.c.l.b16 %v6499
      %v7975 = vunpack.c.l.b16 %v6500
      %v7976 = vunpack.c.l.b16 %v6501
      %v7977 = vunpack.c.l.b16 %v6502
      %v7978 = vunpack.c.l.b16 %v6503
      %v7979 = vunpack.c.l.b16 %v6504
      %v7980 = vunpack.c.l.b16 %v6505
      %v7981 = vunpack.c.l.b16 %v6506
      %v7982 = vunpack.c.l.b16 %v6507
      %v7983 = vunpack.c.l.b16 %v6508
      %v7984 = vunpack.c.l.b16 %v6509
      %v7985 = vunpack.c.l.b16 %v6510
      %v7986 = vunpack.c.l.b16 %v6511
      %v7987 = vunpack.c.l.b16 %v6512
      %v7988 = vunpack.c.l.b16 %v6513
      %v7989 = vunpack.c.l.b16 %v6514
      %v7990 = vunpack.c.l.b16 %v6515
      %v7991 = vunpack.c.l.b16 %v6516
      %v7992 = vunpack.c.l.b16 %v6517
      %v7993 = vunpack.c.l.b16 %v6518
      %v7994 = vunpack.c.l.b16 %v6519
      %v7995 = vunpack.c.l.b16 %v6520
      %v7996 = vunpack.c.l.b16 %v6521
      %v7997 = vunpack.c.l.b16 %v6522
      %v7998 = vunpack.c.l.b16 %v6523
      %v7999 = vunpack.c.l.b16 %v6524
      %v8000 = vunpack.c.l.b16 %v6525
      %v8001 = vunpack.c.l.b16 %v6526
      %v8002 = vunpack.c.l.b16 %v6527
      %v8003 = vunpack.c.l.b16 %v6528
      %v8004 = vpack.c.b16 %v7973, %v7972
      %v8005 = vpack.c.b16 %v7975, %v7974
      %v8006 = vpack.c.b16 %v7977, %v7976
      %v8007 = vpack.c.b16 %v7979, %v7978
      %v8008 = vpack.c.b16 %v7981, %v7980
      %v8009 = vpack.c.b16 %v7983, %v7982
      %v8010 = vpack.c.b16 %v7985, %v7984
      %v8011 = vpack.c.b16 %v7987, %v7986
      %v8012 = vpack.c.b16 %v7989, %v7988
      %v8013 = vpack.c.b16 %v7991, %v7990
      %v8014 = vpack.c.b16 %v7993, %v7992
      %v8015 = vpack.c.b16 %v7995, %v7994
      %v8016 = vpack.c.b16 %v7997, %v7996
      %v8017 = vpack.c.b16 %v7999, %v7998
      %v8018 = vpack.c.b16 %v8001, %v8000
      %v8019 = vpack.c.b16 %v8003, %v8002
      %8020 = vrot.lane.b32.xlu0 %v8004, 32
      %v8021 = vpop.permute.xlu0 %8020
      %8022 = vrot.lane.b32.xlu0 %v8005, 32
      %v8023 = vpop.permute.xlu0 %8022
      %8024 = vrot.lane.b32.xlu0 %v8006, 32
      %v8025 = vpop.permute.xlu0 %8024
      %8026 = vrot.lane.b32.xlu0 %v8007, 32
      %v8027 = vpop.permute.xlu0 %8026
      %8028 = vrot.lane.b32.xlu0 %v8008, 32
      %v8029 = vpop.permute.xlu0 %8028
      %8030 = vrot.lane.b32.xlu0 %v8009, 32
      %v8031 = vpop.permute.xlu0 %8030
      %8032 = vrot.lane.b32.xlu0 %v8010, 32
      %v8033 = vpop.permute.xlu0 %8032
      %8034 = vrot.lane.b32.xlu0 %v8011, 32
      %v8035 = vpop.permute.xlu0 %8034
      %8036 = vrot.lane.b32.xlu0 %v8012, 32
      %v8037 = vpop.permute.xlu0 %8036
      %8038 = vrot.lane.b32.xlu0 %v8013, 32
      %v8039 = vpop.permute.xlu0 %8038
      %8040 = vrot.lane.b32.xlu0 %v8014, 32
      %v8041 = vpop.permute.xlu0 %8040
      %8042 = vrot.lane.b32.xlu0 %v8015, 32
      %v8043 = vpop.permute.xlu0 %8042
      %8044 = vrot.lane.b32.xlu0 %v8016, 32
      %v8045 = vpop.permute.xlu0 %8044
      %8046 = vrot.lane.b32.xlu0 %v8017, 32
      %v8047 = vpop.permute.xlu0 %8046
      %8048 = vrot.lane.b32.xlu0 %v8018, 32
      %v8049 = vpop.permute.xlu0 %8048
      %8050 = vrot.lane.b32.xlu0 %v8019, 32
      %v8051 = vpop.permute.xlu0 %8050
      %8068 = vmatprep.subr.bf16.mxu0 0
      %8069 = vmatpush1.bf16.msra.mxu0 %v8035
      %8070 = vmatprep.subr.bf16.mxu0 0
      %8071 = vmatpush1.bf16.msra.mxu0 %v8033
      %8072 = vmatprep.subr.bf16.mxu0 0
      %8073 = vmatpush1.bf16.msra.mxu0 %v8031
      %8074 = vmatprep.subr.bf16.mxu0 0
      %8075 = vmatpush1.bf16.msra.mxu0 %v8029
      %8076 = vmatprep.subr.bf16.mxu0 0
      %8077 = vmatpush1.bf16.msra.mxu0 %v8027
      %8078 = vmatprep.subr.bf16.mxu0 0
      %8079 = vmatpush1.bf16.msra.mxu0 %v8025
      %8080 = vmatprep.subr.bf16.mxu0 0
      %8081 = vmatpush1.bf16.msra.mxu0 %v8023
      %8082 = vmatprep.subr.bf16.mxu0 0
      %8083 = vmatpush1.bf16.msra.mxu0 %v8021
      %8084 = vmatprep.subr.bf16.mxu0 0
      %8085 = vmatpush2.bf16.msra.mxu0 %v8051
      %8086 = vmatprep.subr.bf16.mxu0 0
      %8087 = vmatpush2.bf16.msra.mxu0 %v8049
      %8088 = vmatprep.subr.bf16.mxu0 0
      %8089 = vmatpush2.bf16.msra.mxu0 %v8047
      %8090 = vmatprep.subr.bf16.mxu0 0
      %8091 = vmatpush2.bf16.msra.mxu0 %v8045
      %8092 = vmatprep.subr.bf16.mxu0 0
      %8093 = vmatpush2.bf16.msra.mxu0 %v8043
      %8094 = vmatprep.subr.bf16.mxu0 0
      %8095 = vmatpush2.bf16.msra.mxu0 %v8041
      %8096 = vmatprep.subr.bf16.mxu0 0
      %8097 = vmatpush2.bf16.msra.mxu0 %v8039
      %8098 = vmatprep.subr.bf16.mxu0 0
      %8099 = vmatpush2.bf16.msra.mxu0 %v8037
      %8100 = vmatprep.mubr.bf16.mxu0 %v7909
      %8101 = vmatmul.mubr.bf16.gmra.mxu0 %v7908
      %v8102 = vpop.f32.mrf.mxu0
      %v8103 = vadd.f32 0.0, %v8102
      %v8104 = vpop.f32.mrf.mxu0
      %v8105 = vpop.f32.mrf.mxu0
      %v8106 = vadd.f32 0.0, %v8105
      %v8107 = vpop.f32.mrf.mxu0
      %8108 = vmatprep.mubr.bf16.mxu0 %v7911
      %8109 = vmatmul.mubr.bf16.gmra.mxu0 %v7910
      %v8110 = vpop.f32.mrf.mxu0
      %v8111 = vadd.f32 0.0, %v8110
      %v8112 = vpop.f32.mrf.mxu0
      %v8113 = vpop.f32.mrf.mxu0
      %v8114 = vadd.f32 0.0, %v8113
      %v8115 = vpop.f32.mrf.mxu0
      %8116 = vmatprep.mubr.bf16.mxu0 %v7913
      %8117 = vmatmul.mubr.bf16.gmra.mxu0 %v7912
      %v8118 = vpop.f32.mrf.mxu0
      %v8119 = vadd.f32 0.0, %v8118
      %v8120 = vpop.f32.mrf.mxu0
      %v8121 = vpop.f32.mrf.mxu0
      %v8122 = vadd.f32 0.0, %v8121
      %v8123 = vpop.f32.mrf.mxu0
      %8124 = vmatprep.mubr.bf16.mxu0 %v7915
      %8125 = vmatmul.mubr.bf16.gmra.mxu0 %v7914
      %v8126 = vpop.f32.mrf.mxu0
      %v8127 = vadd.f32 0.0, %v8126
      %v8128 = vpop.f32.mrf.mxu0
      %v8129 = vpop.f32.mrf.mxu0
      %v8130 = vadd.f32 0.0, %v8129
      %v8131 = vpop.f32.mrf.mxu0
      %8132 = vmatprep.mubr.bf16.mxu0 %v7917
      %8133 = vmatmul.mubr.bf16.gmra.mxu0 %v7916
      %v8134 = vpop.f32.mrf.mxu0
      %v8135 = vadd.f32 0.0, %v8134
      %v8136 = vpop.f32.mrf.mxu0
      %v8137 = vpop.f32.mrf.mxu0
      %v8138 = vadd.f32 0.0, %v8137
      %v8139 = vpop.f32.mrf.mxu0
      %8140 = vmatprep.mubr.bf16.mxu0 %v7919
      %8141 = vmatmul.mubr.bf16.gmra.mxu0 %v7918
      %v8142 = vpop.f32.mrf.mxu0
      %v8143 = vadd.f32 0.0, %v8142
      %v8144 = vpop.f32.mrf.mxu0
      %v8145 = vpop.f32.mrf.mxu0
      %v8146 = vadd.f32 0.0, %v8145
      %v8147 = vpop.f32.mrf.mxu0
      %8148 = vmatprep.mubr.bf16.mxu0 %v7921
      %8149 = vmatmul.mubr.bf16.gmra.mxu0 %v7920
      %v8150 = vpop.f32.mrf.mxu0
      %v8151 = vadd.f32 0.0, %v8150
      %v8152 = vpop.f32.mrf.mxu0
      %v8153 = vpop.f32.mrf.mxu0
      %v8154 = vadd.f32 0.0, %v8153
      %v8155 = vpop.f32.mrf.mxu0
      %8156 = vmatprep.mubr.bf16.mxu0 %v7923
      %8157 = vmatmul.mubr.bf16.gmra.mxu0 %v7922
      %v8158 = vpop.f32.mrf.mxu0
      %v8159 = vadd.f32 0.0, %v8158
      %v8160 = vpop.f32.mrf.mxu0
      %v8161 = vpop.f32.mrf.mxu0
      %v8162 = vadd.f32 0.0, %v8161
      %v8163 = vpop.f32.mrf.mxu0
      %8164 = vmatprep.mubr.bf16.mxu0 %v7925
      %8165 = vmatmul.mubr.bf16.gmra.mxu0 %v7924
      %v8166 = vpop.f32.mrf.mxu0
      %v8167 = vadd.f32 0.0, %v8166
      %v8168 = vpop.f32.mrf.mxu0
      %v8169 = vpop.f32.mrf.mxu0
      %v8170 = vadd.f32 0.0, %v8169
      %v8171 = vpop.f32.mrf.mxu0
      %8172 = vmatprep.mubr.bf16.mxu0 %v7927
      %8173 = vmatmul.mubr.bf16.gmra.mxu0 %v7926
      %v8174 = vpop.f32.mrf.mxu0
      %v8175 = vadd.f32 0.0, %v8174
      %v8176 = vpop.f32.mrf.mxu0
      %v8177 = vpop.f32.mrf.mxu0
      %v8178 = vadd.f32 0.0, %v8177
      %v8179 = vpop.f32.mrf.mxu0
      %8180 = vmatprep.mubr.bf16.mxu0 %v7929
      %8181 = vmatmul.mubr.bf16.gmra.mxu0 %v7928
      %v8182 = vpop.f32.mrf.mxu0
      %v8183 = vadd.f32 0.0, %v8182
      %v8184 = vpop.f32.mrf.mxu0
      %v8185 = vpop.f32.mrf.mxu0
      %v8186 = vadd.f32 0.0, %v8185
      %v8187 = vpop.f32.mrf.mxu0
      %8188 = vmatprep.mubr.bf16.mxu0 %v7931
      %8189 = vmatmul.mubr.bf16.gmra.mxu0 %v7930
      %v8190 = vpop.f32.mrf.mxu0
      %v8191 = vadd.f32 0.0, %v8190
      %v8192 = vpop.f32.mrf.mxu0
      %v8193 = vpop.f32.mrf.mxu0
      %v8194 = vadd.f32 0.0, %v8193
      %v8195 = vpop.f32.mrf.mxu0
      %8196 = vmatprep.mubr.bf16.mxu0 %v7933
      %8197 = vmatmul.mubr.bf16.gmra.mxu0 %v7932
      %v8198 = vpop.f32.mrf.mxu0
      %v8199 = vadd.f32 0.0, %v8198
      %v8200 = vpop.f32.mrf.mxu0
      %v8201 = vpop.f32.mrf.mxu0
      %v8202 = vadd.f32 0.0, %v8201
      %v8203 = vpop.f32.mrf.mxu0
      %8204 = vmatprep.mubr.bf16.mxu0 %v7935
      %8205 = vmatmul.mubr.bf16.gmra.mxu0 %v7934
      %v8206 = vpop.f32.mrf.mxu0
      %v8207 = vadd.f32 0.0, %v8206
      %v8208 = vpop.f32.mrf.mxu0
      %v8209 = vpop.f32.mrf.mxu0
      %v8210 = vadd.f32 0.0, %v8209
      %v8211 = vpop.f32.mrf.mxu0
      %8212 = vmatprep.mubr.bf16.mxu0 %v7937
      %8213 = vmatmul.mubr.bf16.gmra.mxu0 %v7936
      %v8214 = vpop.f32.mrf.mxu0
      %v8215 = vadd.f32 0.0, %v8214
      %v8216 = vpop.f32.mrf.mxu0
      %v8217 = vpop.f32.mrf.mxu0
      %v8218 = vadd.f32 0.0, %v8217
      %v8219 = vpop.f32.mrf.mxu0
      %8220 = vmatprep.mubr.bf16.mxu0 %v7939
      %8221 = vmatmul.mubr.bf16.gmra.mxu0 %v7938
      %v8222 = vpop.f32.mrf.mxu0
      %v8223 = vadd.f32 0.0, %v8222
      %v8224 = vpop.f32.mrf.mxu0
      %v8225 = vpop.f32.mrf.mxu0
      %v8226 = vadd.f32 0.0, %v8225
      %v8227 = vpop.f32.mrf.mxu0
      %8228 = vdwg.mxu0
      %8230 = vset.pattern.permute.xlu0 0
      %8231 = vperm.xlu0 %8230, %v7236
      %v8232 = vpop.permute.xlu0 %8231
      %8235 = vset.pattern.permute.xlu0 0
      %8236 = vperm.xlu0 %8235, %v7238
      %v8237 = vpop.permute.xlu0 %8236
      %8240 = vset.pattern.permute.xlu0 0
      %8241 = vperm.xlu0 %8240, %v7240
      %v8242 = vpop.permute.xlu0 %8241
      %8245 = vset.pattern.permute.xlu0 0
      %8246 = vperm.xlu0 %8245, %v7242
      %v8247 = vpop.permute.xlu0 %8246
      %8250 = vset.pattern.permute.xlu0 0
      %8251 = vperm.xlu0 %8250, %v7244
      %v8252 = vpop.permute.xlu0 %8251
      %8255 = vset.pattern.permute.xlu0 0
      %8256 = vperm.xlu0 %8255, %v7246
      %v8257 = vpop.permute.xlu0 %8256
      %8260 = vset.pattern.permute.xlu0 0
      %8261 = vperm.xlu0 %8260, %v7248
      %v8262 = vpop.permute.xlu0 %8261
      %8265 = vset.pattern.permute.xlu0 0
      %8266 = vperm.xlu0 %8265, %v7250
      %v8267 = vpop.permute.xlu0 %8266
      %8270 = vset.pattern.permute.xlu0 0
      %8271 = vperm.xlu0 %8270, %v7252
      %v8272 = vpop.permute.xlu0 %8271
      %8275 = vset.pattern.permute.xlu0 0
      %8276 = vperm.xlu0 %8275, %v7254
      %v8277 = vpop.permute.xlu0 %8276
      %8280 = vset.pattern.permute.xlu0 0
      %8281 = vperm.xlu0 %8280, %v7256
      %v8282 = vpop.permute.xlu0 %8281
      %8285 = vset.pattern.permute.xlu0 0
      %8286 = vperm.xlu0 %8285, %v7258
      %v8287 = vpop.permute.xlu0 %8286
      %8290 = vset.pattern.permute.xlu0 0
      %8291 = vperm.xlu0 %8290, %v7260
      %v8292 = vpop.permute.xlu0 %8291
      %8295 = vset.pattern.permute.xlu0 0
      %8296 = vperm.xlu0 %8295, %v7262
      %v8297 = vpop.permute.xlu0 %8296
      %8300 = vset.pattern.permute.xlu0 0
      %8301 = vperm.xlu0 %8300, %v7264
      %v8302 = vpop.permute.xlu0 %8301
      %8305 = vset.pattern.permute.xlu0 0
      %8306 = vperm.xlu0 %8305, %v7266
      %v8307 = vpop.permute.xlu0 %8306
      %8310 = vset.pattern.permute.xlu0 0
      %8311 = vperm.xlu0 %8310, %v7268
      %v8312 = vpop.permute.xlu0 %8311
      %8315 = vset.pattern.permute.xlu0 0
      %8316 = vperm.xlu0 %8315, %v7270
      %v8317 = vpop.permute.xlu0 %8316
      %8320 = vset.pattern.permute.xlu0 0
      %8321 = vperm.xlu0 %8320, %v7272
      %v8322 = vpop.permute.xlu0 %8321
      %8325 = vset.pattern.permute.xlu0 0
      %8326 = vperm.xlu0 %8325, %v7274
      %v8327 = vpop.permute.xlu0 %8326
      %8330 = vset.pattern.permute.xlu0 0
      %8331 = vperm.xlu0 %8330, %v7276
      %v8332 = vpop.permute.xlu0 %8331
      %8335 = vset.pattern.permute.xlu0 0
      %8336 = vperm.xlu0 %8335, %v7278
      %v8337 = vpop.permute.xlu0 %8336
      %8340 = vset.pattern.permute.xlu0 0
      %8341 = vperm.xlu0 %8340, %v7280
      %v8342 = vpop.permute.xlu0 %8341
      %8345 = vset.pattern.permute.xlu0 0
      %8346 = vperm.xlu0 %8345, %v7282
      %v8347 = vpop.permute.xlu0 %8346
      %8350 = vset.pattern.permute.xlu0 0
      %8351 = vperm.xlu0 %8350, %v7284
      %v8352 = vpop.permute.xlu0 %8351
      %8355 = vset.pattern.permute.xlu0 0
      %8356 = vperm.xlu0 %8355, %v7286
      %v8357 = vpop.permute.xlu0 %8356
      %8360 = vset.pattern.permute.xlu0 0
      %8361 = vperm.xlu0 %8360, %v7288
      %v8362 = vpop.permute.xlu0 %8361
      %8365 = vset.pattern.permute.xlu0 0
      %8366 = vperm.xlu0 %8365, %v7290
      %v8367 = vpop.permute.xlu0 %8366
      %8370 = vset.pattern.permute.xlu0 0
      %8371 = vperm.xlu0 %8370, %v7292
      %v8372 = vpop.permute.xlu0 %8371
      %8375 = vset.pattern.permute.xlu0 0
      %8376 = vperm.xlu0 %8375, %v7294
      %v8377 = vpop.permute.xlu0 %8376
      %8380 = vset.pattern.permute.xlu0 0
      %8381 = vperm.xlu0 %8380, %v7296
      %v8382 = vpop.permute.xlu0 %8381
      %8385 = vset.pattern.permute.xlu0 0
      %8386 = vperm.xlu0 %8385, %v7298
      %v8387 = vpop.permute.xlu0 %8386
      %v8389 = vsel %vm917, %v2364, %v4320
      %v8390 = vsel %vm917, %v2369, %v4325
      %v8391 = vsel %vm917, %v2374, %v4330
      %v8392 = vsel %vm917, %v2379, %v4335
      %v8393 = vsel %vm917, %v2384, %v4340
      %v8394 = vsel %vm917, %v2389, %v4345
      %v8395 = vsel %vm917, %v2394, %v4350
      %v8396 = vsel %vm917, %v2399, %v4355
      %v8397 = vsel %vm917, %v2404, %v4360
      %v8398 = vsel %vm917, %v2409, %v4365
      %v8399 = vsel %vm917, %v2414, %v4370
      %v8400 = vsel %vm917, %v2419, %v4375
      %v8401 = vsel %vm917, %v2424, %v4380
      %v8402 = vsel %vm917, %v2429, %v4385
      %v8403 = vsel %vm917, %v2434, %v4390
      %v8404 = vsel %vm917, %v2439, %v4395
      %v8405 = vsel %vm917, %v2444, %v4400
      %v8406 = vsel %vm917, %v2449, %v4405
      %v8407 = vsel %vm917, %v2454, %v4410
      %v8408 = vsel %vm917, %v2459, %v4415
      %v8409 = vsel %vm917, %v2464, %v4420
      %v8410 = vsel %vm917, %v2469, %v4425
      %v8411 = vsel %vm917, %v2474, %v4430
      %v8412 = vsel %vm917, %v2479, %v4435
      %v8413 = vsel %vm917, %v2484, %v4440
      %v8414 = vsel %vm917, %v2489, %v4445
      %v8415 = vsel %vm917, %v2494, %v4450
      %v8416 = vsel %vm917, %v2499, %v4455
      %v8417 = vsel %vm917, %v2504, %v4460
      %v8418 = vsel %vm917, %v2509, %v4465
      %v8419 = vsel %vm917, %v2514, %v4470
      %v8420 = vsel %vm917, %v2519, %v4475
      %vm8421 = vcmask 523264
      %v8422 = vsel %vm8421, %v8389, %v6276
      %v8423 = vsel %vm8421, %v8390, %v6281
      %v8424 = vsel %vm8421, %v8391, %v6286
      %v8425 = vsel %vm8421, %v8392, %v6291
      %v8426 = vsel %vm8421, %v8393, %v6296
      %v8427 = vsel %vm8421, %v8394, %v6301
      %v8428 = vsel %vm8421, %v8395, %v6306
      %v8429 = vsel %vm8421, %v8396, %v6311
      %v8430 = vsel %vm8421, %v8397, %v6316
      %v8431 = vsel %vm8421, %v8398, %v6321
      %v8432 = vsel %vm8421, %v8399, %v6326
      %v8433 = vsel %vm8421, %v8400, %v6331
      %v8434 = vsel %vm8421, %v8401, %v6336
      %v8435 = vsel %vm8421, %v8402, %v6341
      %v8436 = vsel %vm8421, %v8403, %v6346
      %v8437 = vsel %vm8421, %v8404, %v6351
      %v8438 = vsel %vm8421, %v8405, %v6356
      %v8439 = vsel %vm8421, %v8406, %v6361
      %v8440 = vsel %vm8421, %v8407, %v6366
      %v8441 = vsel %vm8421, %v8408, %v6371
      %v8442 = vsel %vm8421, %v8409, %v6376
      %v8443 = vsel %vm8421, %v8410, %v6381
      %v8444 = vsel %vm8421, %v8411, %v6386
      %v8445 = vsel %vm8421, %v8412, %v6391
      %v8446 = vsel %vm8421, %v8413, %v6396
      %v8447 = vsel %vm8421, %v8414, %v6401
      %v8448 = vsel %vm8421, %v8415, %v6406
      %v8449 = vsel %vm8421, %v8416, %v6411
      %v8450 = vsel %vm8421, %v8417, %v6416
      %v8451 = vsel %vm8421, %v8418, %v6421
      %v8452 = vsel %vm8421, %v8419, %v6426
      %v8453 = vsel %vm8421, %v8420, %v6431
      %vm8454 = vcmask 785408
      %v8455 = vsel %vm8454, %v8422, %v8232
      %v8456 = vsel %vm8454, %v8423, %v8237
      %v8457 = vsel %vm8454, %v8424, %v8242
      %v8458 = vsel %vm8454, %v8425, %v8247
      %v8459 = vsel %vm8454, %v8426, %v8252
      %v8460 = vsel %vm8454, %v8427, %v8257
      %v8461 = vsel %vm8454, %v8428, %v8262
      %v8462 = vsel %vm8454, %v8429, %v8267
      %v8463 = vsel %vm8454, %v8430, %v8272
      %v8464 = vsel %vm8454, %v8431, %v8277
      %v8465 = vsel %vm8454, %v8432, %v8282
      %v8466 = vsel %vm8454, %v8433, %v8287
      %v8467 = vsel %vm8454, %v8434, %v8292
      %v8468 = vsel %vm8454, %v8435, %v8297
      %v8469 = vsel %vm8454, %v8436, %v8302
      %v8470 = vsel %vm8454, %v8437, %v8307
      %v8471 = vsel %vm8454, %v8438, %v8312
      %v8472 = vsel %vm8454, %v8439, %v8317
      %v8473 = vsel %vm8454, %v8440, %v8322
      %v8474 = vsel %vm8454, %v8441, %v8327
      %v8475 = vsel %vm8454, %v8442, %v8332
      %v8476 = vsel %vm8454, %v8443, %v8337
      %v8477 = vsel %vm8454, %v8444, %v8342
      %v8478 = vsel %vm8454, %v8445, %v8347
      %v8479 = vsel %vm8454, %v8446, %v8352
      %v8480 = vsel %vm8454, %v8447, %v8357
      %v8481 = vsel %vm8454, %v8448, %v8362
      %v8482 = vsel %vm8454, %v8449, %v8367
      %v8483 = vsel %vm8454, %v8450, %v8372
      %v8484 = vsel %vm8454, %v8451, %v8377
      %v8485 = vsel %vm8454, %v8452, %v8382
      %v8486 = vsel %vm8454, %v8453, %v8387
      %v8487 = vld [vmem:[#allocation4] sm:$0xff]
      %v8488 = vld [vmem:[#allocation4 + $0x8] sm:$0xff]
      %v8489 = vld [vmem:[#allocation4 + $0x10] sm:$0xff]
      %v8490 = vld [vmem:[#allocation4 + $0x18] sm:$0xff]
      %v8491 = vld [vmem:[#allocation4 + $0x20] sm:$0xff]
      %v8492 = vld [vmem:[#allocation4 + $0x28] sm:$0xff]
      %v8493 = vld [vmem:[#allocation4 + $0x30] sm:$0xff]
      %v8494 = vld [vmem:[#allocation4 + $0x38] sm:$0xff]
      %v8495 = vld [vmem:[#allocation4 + $0x40] sm:$0xff]
      %v8496 = vld [vmem:[#allocation4 + $0x48] sm:$0xff]
      %v8497 = vld [vmem:[#allocation4 + $0x50] sm:$0xff]
      %v8498 = vld [vmem:[#allocation4 + $0x58] sm:$0xff]
      %v8499 = vld [vmem:[#allocation4 + $0x60] sm:$0xff]
      %v8500 = vld [vmem:[#allocation4 + $0x68] sm:$0xff]
      %v8501 = vld [vmem:[#allocation4 + $0x70] sm:$0xff]
      %v8502 = vld [vmem:[#allocation4 + $0x78] sm:$0xff]
      %v8503 = vld [vmem:[#allocation4 + $0x80] sm:$0xff]
      %v8504 = vld [vmem:[#allocation4 + $0x88] sm:$0xff]
      %v8505 = vld [vmem:[#allocation4 + $0x90] sm:$0xff]
      %v8506 = vld [vmem:[#allocation4 + $0x98] sm:$0xff]
      %v8507 = vld [vmem:[#allocation4 + $0xa0] sm:$0xff]
      %v8508 = vld [vmem:[#allocation4 + $0xa8] sm:$0xff]
      %v8509 = vld [vmem:[#allocation4 + $0xb0] sm:$0xff]
      %v8510 = vld [vmem:[#allocation4 + $0xb8] sm:$0xff]
      %v8511 = vld [vmem:[#allocation4 + $0xc0] sm:$0xff]
      %v8512 = vld [vmem:[#allocation4 + $0xc8] sm:$0xff]
      %v8513 = vld [vmem:[#allocation4 + $0xd0] sm:$0xff]
      %v8514 = vld [vmem:[#allocation4 + $0xd8] sm:$0xff]
      %v8515 = vld [vmem:[#allocation4 + $0xe0] sm:$0xff]
      %v8516 = vld [vmem:[#allocation4 + $0xe8] sm:$0xff]
      %v8517 = vld [vmem:[#allocation4 + $0xf0] sm:$0xff]
      %v8518 = vld [vmem:[#allocation4 + $0xf8] sm:$0xff]
      %v8519 = vmul.f32 %v8455, %v8487
      %v8520 = vmul.f32 %v8456, %v8488
      %v8521 = vmul.f32 %v8457, %v8489
      %v8522 = vmul.f32 %v8458, %v8490
      %v8523 = vmul.f32 %v8459, %v8491
      %v8524 = vmul.f32 %v8460, %v8492
      %v8525 = vmul.f32 %v8461, %v8493
      %v8526 = vmul.f32 %v8462, %v8494
      %v8527 = vmul.f32 %v8463, %v8495
      %v8528 = vmul.f32 %v8464, %v8496
      %v8529 = vmul.f32 %v8465, %v8497
      %v8530 = vmul.f32 %v8466, %v8498
      %v8531 = vmul.f32 %v8467, %v8499
      %v8532 = vmul.f32 %v8468, %v8500
      %v8533 = vmul.f32 %v8469, %v8501
      %v8534 = vmul.f32 %v8470, %v8502
      %v8535 = vmul.f32 %v8471, %v8503
      %v8536 = vmul.f32 %v8472, %v8504
      %v8537 = vmul.f32 %v8473, %v8505
      %v8538 = vmul.f32 %v8474, %v8506
      %v8539 = vmul.f32 %v8475, %v8507
      %v8540 = vmul.f32 %v8476, %v8508
      %v8541 = vmul.f32 %v8477, %v8509
      %v8542 = vmul.f32 %v8478, %v8510
      %v8543 = vmul.f32 %v8479, %v8511
      %v8544 = vmul.f32 %v8480, %v8512
      %v8545 = vmul.f32 %v8481, %v8513
      %v8546 = vmul.f32 %v8482, %v8514
      %v8547 = vmul.f32 %v8483, %v8515
      %v8548 = vmul.f32 %v8484, %v8516
      %v8549 = vmul.f32 %v8485, %v8517
      %v8550 = vmul.f32 %v8486, %v8518
      %8583 = vrot.lane.b32.xlu0 %v4191, 32
      %v8584 = vpop.permute.xlu0 %8583
      %8585 = vrot.lane.b32.xlu0 %v4194, 32
      %v8586 = vpop.permute.xlu0 %8585
      %8587 = vrot.lane.b32.xlu0 %v4199, 32
      %v8588 = vpop.permute.xlu0 %8587
      %8589 = vrot.lane.b32.xlu0 %v4202, 32
      %v8590 = vpop.permute.xlu0 %8589
      %8591 = vrot.lane.b32.xlu0 %v4207, 32
      %v8592 = vpop.permute.xlu0 %8591
      %8593 = vrot.lane.b32.xlu0 %v4210, 32
      %v8594 = vpop.permute.xlu0 %8593
      %8595 = vrot.lane.b32.xlu0 %v4215, 32
      %v8596 = vpop.permute.xlu0 %8595
      %8597 = vrot.lane.b32.xlu0 %v4218, 32
      %v8598 = vpop.permute.xlu0 %8597
      %8599 = vrot.lane.b32.xlu0 %v4223, 32
      %v8600 = vpop.permute.xlu0 %8599
      %8601 = vrot.lane.b32.xlu0 %v4226, 32
      %v8602 = vpop.permute.xlu0 %8601
      %8603 = vrot.lane.b32.xlu0 %v4231, 32
      %v8604 = vpop.permute.xlu0 %8603
      %8605 = vrot.lane.b32.xlu0 %v4234, 32
      %v8606 = vpop.permute.xlu0 %8605
      %8607 = vrot.lane.b32.xlu0 %v4239, 32
      %v8608 = vpop.permute.xlu0 %8607
      %8609 = vrot.lane.b32.xlu0 %v4242, 32
      %v8610 = vpop.permute.xlu0 %8609
      %8611 = vrot.lane.b32.xlu0 %v4247, 32
      %v8612 = vpop.permute.xlu0 %8611
      %8613 = vrot.lane.b32.xlu0 %v4250, 32
      %v8614 = vpop.permute.xlu0 %8613
      %8615 = vrot.lane.b32.xlu0 %v4255, 32
      %v8616 = vpop.permute.xlu0 %8615
      %8617 = vrot.lane.b32.xlu0 %v4258, 32
      %v8618 = vpop.permute.xlu0 %8617
      %8619 = vrot.lane.b32.xlu0 %v4263, 32
      %v8620 = vpop.permute.xlu0 %8619
      %8621 = vrot.lane.b32.xlu0 %v4266, 32
      %v8622 = vpop.permute.xlu0 %8621
      %8623 = vrot.lane.b32.xlu0 %v4271, 32
      %v8624 = vpop.permute.xlu0 %8623
      %8625 = vrot.lane.b32.xlu0 %v4274, 32
      %v8626 = vpop.permute.xlu0 %8625
      %8627 = vrot.lane.b32.xlu0 %v4279, 32
      %v8628 = vpop.permute.xlu0 %8627
      %8629 = vrot.lane.b32.xlu0 %v4282, 32
      %v8630 = vpop.permute.xlu0 %8629
      %8631 = vrot.lane.b32.xlu0 %v4287, 32
      %v8632 = vpop.permute.xlu0 %8631
      %8633 = vrot.lane.b32.xlu0 %v4290, 32
      %v8634 = vpop.permute.xlu0 %8633
      %8635 = vrot.lane.b32.xlu0 %v4295, 32
      %v8636 = vpop.permute.xlu0 %8635
      %8637 = vrot.lane.b32.xlu0 %v4298, 32
      %v8638 = vpop.permute.xlu0 %8637
      %8639 = vrot.lane.b32.xlu0 %v4303, 32
      %v8640 = vpop.permute.xlu0 %8639
      %8641 = vrot.lane.b32.xlu0 %v4306, 32
      %v8642 = vpop.permute.xlu0 %8641
      %8643 = vrot.lane.b32.xlu0 %v4311, 32
      %v8644 = vpop.permute.xlu0 %8643
      %8645 = vrot.lane.b32.xlu0 %v4314, 32
      %v8646 = vpop.permute.xlu0 %8645
      %8711 = vrot.lane.b32.xlu0 %v6147, 64
      %v8712 = vpop.permute.xlu0 %8711
      %8713 = vrot.lane.b32.xlu0 %v6150, 64
      %v8714 = vpop.permute.xlu0 %8713
      %8715 = vrot.lane.b32.xlu0 %v6155, 64
      %v8716 = vpop.permute.xlu0 %8715
      %8717 = vrot.lane.b32.xlu0 %v6158, 64
      %v8718 = vpop.permute.xlu0 %8717
      %8719 = vrot.lane.b32.xlu0 %v6163, 64
      %v8720 = vpop.permute.xlu0 %8719
      %8721 = vrot.lane.b32.xlu0 %v6166, 64
      %v8722 = vpop.permute.xlu0 %8721
      %8723 = vrot.lane.b32.xlu0 %v6171, 64
      %v8724 = vpop.permute.xlu0 %8723
      %8725 = vrot.lane.b32.xlu0 %v6174, 64
      %v8726 = vpop.permute.xlu0 %8725
      %8727 = vrot.lane.b32.xlu0 %v6179, 64
      %v8728 = vpop.permute.xlu0 %8727
      %8729 = vrot.lane.b32.xlu0 %v6182, 64
      %v8730 = vpop.permute.xlu0 %8729
      %8731 = vrot.lane.b32.xlu0 %v6187, 64
      %v8732 = vpop.permute.xlu0 %8731
      %8733 = vrot.lane.b32.xlu0 %v6190, 64
      %v8734 = vpop.permute.xlu0 %8733
      %8735 = vrot.lane.b32.xlu0 %v6195, 64
      %v8736 = vpop.permute.xlu0 %8735
      %8737 = vrot.lane.b32.xlu0 %v6198, 64
      %v8738 = vpop.permute.xlu0 %8737
      %8739 = vrot.lane.b32.xlu0 %v6203, 64
      %v8740 = vpop.permute.xlu0 %8739
      %8741 = vrot.lane.b32.xlu0 %v6206, 64
      %v8742 = vpop.permute.xlu0 %8741
      %8743 = vrot.lane.b32.xlu0 %v6211, 64
      %v8744 = vpop.permute.xlu0 %8743
      %8745 = vrot.lane.b32.xlu0 %v6214, 64
      %v8746 = vpop.permute.xlu0 %8745
      %8747 = vrot.lane.b32.xlu0 %v6219, 64
      %v8748 = vpop.permute.xlu0 %8747
      %8749 = vrot.lane.b32.xlu0 %v6222, 64
      %v8750 = vpop.permute.xlu0 %8749
      %8751 = vrot.lane.b32.xlu0 %v6227, 64
      %v8752 = vpop.permute.xlu0 %8751
      %8753 = vrot.lane.b32.xlu0 %v6230, 64
      %v8754 = vpop.permute.xlu0 %8753
      %8755 = vrot.lane.b32.xlu0 %v6235, 64
      %v8756 = vpop.permute.xlu0 %8755
      %8757 = vrot.lane.b32.xlu0 %v6238, 64
      %v8758 = vpop.permute.xlu0 %8757
      %8759 = vrot.lane.b32.xlu0 %v6243, 64
      %v8760 = vpop.permute.xlu0 %8759
      %8761 = vrot.lane.b32.xlu0 %v6246, 64
      %v8762 = vpop.permute.xlu0 %8761
      %8763 = vrot.lane.b32.xlu0 %v6251, 64
      %v8764 = vpop.permute.xlu0 %8763
      %8765 = vrot.lane.b32.xlu0 %v6254, 64
      %v8766 = vpop.permute.xlu0 %8765
      %8767 = vrot.lane.b32.xlu0 %v6259, 64
      %v8768 = vpop.permute.xlu0 %8767
      %8769 = vrot.lane.b32.xlu0 %v6262, 64
      %v8770 = vpop.permute.xlu0 %8769
      %8771 = vrot.lane.b32.xlu0 %v6267, 64
      %v8772 = vpop.permute.xlu0 %8771
      %8773 = vrot.lane.b32.xlu0 %v6270, 64
      %v8774 = vpop.permute.xlu0 %8773
      %8839 = vrot.lane.b32.xlu0 %v8103, 96
      %v8840 = vpop.permute.xlu0 %8839
      %8841 = vrot.lane.b32.xlu0 %v8106, 96
      %v8842 = vpop.permute.xlu0 %8841
      %8843 = vrot.lane.b32.xlu0 %v8111, 96
      %v8844 = vpop.permute.xlu0 %8843
      %8845 = vrot.lane.b32.xlu0 %v8114, 96
      %v8846 = vpop.permute.xlu0 %8845
      %8847 = vrot.lane.b32.xlu0 %v8119, 96
      %v8848 = vpop.permute.xlu0 %8847
      %8849 = vrot.lane.b32.xlu0 %v8122, 96
      %v8850 = vpop.permute.xlu0 %8849
      %8851 = vrot.lane.b32.xlu0 %v8127, 96
      %v8852 = vpop.permute.xlu0 %8851
      %8853 = vrot.lane.b32.xlu0 %v8130, 96
      %v8854 = vpop.permute.xlu0 %8853
      %8855 = vrot.lane.b32.xlu0 %v8135, 96
      %v8856 = vpop.permute.xlu0 %8855
      %8857 = vrot.lane.b32.xlu0 %v8138, 96
      %v8858 = vpop.permute.xlu0 %8857
      %8859 = vrot.lane.b32.xlu0 %v8143, 96
      %v8860 = vpop.permute.xlu0 %8859
      %8861 = vrot.lane.b32.xlu0 %v8146, 96
      %v8862 = vpop.permute.xlu0 %8861
      %8863 = vrot.lane.b32.xlu0 %v8151, 96
      %v8864 = vpop.permute.xlu0 %8863
      %8865 = vrot.lane.b32.xlu0 %v8154, 96
      %v8866 = vpop.permute.xlu0 %8865
      %8867 = vrot.lane.b32.xlu0 %v8159, 96
      %v8868 = vpop.permute.xlu0 %8867
      %8869 = vrot.lane.b32.xlu0 %v8162, 96
      %v8870 = vpop.permute.xlu0 %8869
      %8871 = vrot.lane.b32.xlu0 %v8167, 96
      %v8872 = vpop.permute.xlu0 %8871
      %8873 = vrot.lane.b32.xlu0 %v8170, 96
      %v8874 = vpop.permute.xlu0 %8873
      %8875 = vrot.lane.b32.xlu0 %v8175, 96
      %v8876 = vpop.permute.xlu0 %8875
      %8877 = vrot.lane.b32.xlu0 %v8178, 96
      %v8878 = vpop.permute.xlu0 %8877
      %8879 = vrot.lane.b32.xlu0 %v8183, 96
      %v8880 = vpop.permute.xlu0 %8879
      %8881 = vrot.lane.b32.xlu0 %v8186, 96
      %v8882 = vpop.permute.xlu0 %8881
      %8883 = vrot.lane.b32.xlu0 %v8191, 96
      %v8884 = vpop.permute.xlu0 %8883
      %8885 = vrot.lane.b32.xlu0 %v8194, 96
      %v8886 = vpop.permute.xlu0 %8885
      %8887 = vrot.lane.b32.xlu0 %v8199, 96
      %v8888 = vpop.permute.xlu0 %8887
      %8889 = vrot.lane.b32.xlu0 %v8202, 96
      %v8890 = vpop.permute.xlu0 %8889
      %8891 = vrot.lane.b32.xlu0 %v8207, 96
      %v8892 = vpop.permute.xlu0 %8891
      %8893 = vrot.lane.b32.xlu0 %v8210, 96
      %v8894 = vpop.permute.xlu0 %8893
      %8895 = vrot.lane.b32.xlu0 %v8215, 96
      %v8896 = vpop.permute.xlu0 %8895
      %8897 = vrot.lane.b32.xlu0 %v8218, 96
      %v8898 = vpop.permute.xlu0 %8897
      %8899 = vrot.lane.b32.xlu0 %v8223, 96
      %v8900 = vpop.permute.xlu0 %8899
      %8901 = vrot.lane.b32.xlu0 %v8226, 96
      %v8902 = vpop.permute.xlu0 %8901
      %v8935 = vsel %vm917, %v2235, %v8584
      %v8936 = vsel %vm917, %v2238, %v8586
      %v8937 = vsel %vm917, %v2243, %v8588
      %v8938 = vsel %vm917, %v2246, %v8590
      %v8939 = vsel %vm917, %v2251, %v8592
      %v8940 = vsel %vm917, %v2254, %v8594
      %v8941 = vsel %vm917, %v2259, %v8596
      %v8942 = vsel %vm917, %v2262, %v8598
      %v8943 = vsel %vm917, %v2267, %v8600
      %v8944 = vsel %vm917, %v2270, %v8602
      %v8945 = vsel %vm917, %v2275, %v8604
      %v8946 = vsel %vm917, %v2278, %v8606
      %v8947 = vsel %vm917, %v2283, %v8608
      %v8948 = vsel %vm917, %v2286, %v8610
      %v8949 = vsel %vm917, %v2291, %v8612
      %v8950 = vsel %vm917, %v2294, %v8614
      %v8951 = vsel %vm917, %v2299, %v8616
      %v8952 = vsel %vm917, %v2302, %v8618
      %v8953 = vsel %vm917, %v2307, %v8620
      %v8954 = vsel %vm917, %v2310, %v8622
      %v8955 = vsel %vm917, %v2315, %v8624
      %v8956 = vsel %vm917, %v2318, %v8626
      %v8957 = vsel %vm917, %v2323, %v8628
      %v8958 = vsel %vm917, %v2326, %v8630
      %v8959 = vsel %vm917, %v2331, %v8632
      %v8960 = vsel %vm917, %v2334, %v8634
      %v8961 = vsel %vm917, %v2339, %v8636
      %v8962 = vsel %vm917, %v2342, %v8638
      %v8963 = vsel %vm917, %v2347, %v8640
      %v8964 = vsel %vm917, %v2350, %v8642
      %v8965 = vsel %vm917, %v2355, %v8644
      %v8966 = vsel %vm917, %v2358, %v8646
      %v8967 = vsel %vm8421, %v8935, %v8712
      %v8968 = vsel %vm8421, %v8936, %v8714
      %v8969 = vsel %vm8421, %v8937, %v8716
      %v8970 = vsel %vm8421, %v8938, %v8718
      %v8971 = vsel %vm8421, %v8939, %v8720
      %v8972 = vsel %vm8421, %v8940, %v8722
      %v8973 = vsel %vm8421, %v8941, %v8724
      %v8974 = vsel %vm8421, %v8942, %v8726
      %v8975 = vsel %vm8421, %v8943, %v8728
      %v8976 = vsel %vm8421, %v8944, %v8730
      %v8977 = vsel %vm8421, %v8945, %v8732
      %v8978 = vsel %vm8421, %v8946, %v8734
      %v8979 = vsel %vm8421, %v8947, %v8736
      %v8980 = vsel %vm8421, %v8948, %v8738
      %v8981 = vsel %vm8421, %v8949, %v8740
      %v8982 = vsel %vm8421, %v8950, %v8742
      %v8983 = vsel %vm8421, %v8951, %v8744
      %v8984 = vsel %vm8421, %v8952, %v8746
      %v8985 = vsel %vm8421, %v8953, %v8748
      %v8986 = vsel %vm8421, %v8954, %v8750
      %v8987 = vsel %vm8421, %v8955, %v8752
      %v8988 = vsel %vm8421, %v8956, %v8754
      %v8989 = vsel %vm8421, %v8957, %v8756
      %v8990 = vsel %vm8421, %v8958, %v8758
      %v8991 = vsel %vm8421, %v8959, %v8760
      %v8992 = vsel %vm8421, %v8960, %v8762
      %v8993 = vsel %vm8421, %v8961, %v8764
      %v8994 = vsel %vm8421, %v8962, %v8766
      %v8995 = vsel %vm8421, %v8963, %v8768
      %v8996 = vsel %vm8421, %v8964, %v8770
      %v8997 = vsel %vm8421, %v8965, %v8772
      %v8998 = vsel %vm8421, %v8966, %v8774
      %v8999 = vsel %vm8454, %v8967, %v8840
      %v9000 = vsel %vm8454, %v8968, %v8842
      %v9001 = vsel %vm8454, %v8969, %v8844
      %v9002 = vsel %vm8454, %v8970, %v8846
      %v9003 = vsel %vm8454, %v8971, %v8848
      %v9004 = vsel %vm8454, %v8972, %v8850
      %v9005 = vsel %vm8454, %v8973, %v8852
      %v9006 = vsel %vm8454, %v8974, %v8854
      %v9007 = vsel %vm8454, %v8975, %v8856
      %v9008 = vsel %vm8454, %v8976, %v8858
      %v9009 = vsel %vm8454, %v8977, %v8860
      %v9010 = vsel %vm8454, %v8978, %v8862
      %v9011 = vsel %vm8454, %v8979, %v8864
      %v9012 = vsel %vm8454, %v8980, %v8866
      %v9013 = vsel %vm8454, %v8981, %v8868
      %v9014 = vsel %vm8454, %v8982, %v8870
      %v9015 = vsel %vm8454, %v8983, %v8872
      %v9016 = vsel %vm8454, %v8984, %v8874
      %v9017 = vsel %vm8454, %v8985, %v8876
      %v9018 = vsel %vm8454, %v8986, %v8878
      %v9019 = vsel %vm8454, %v8987, %v8880
      %v9020 = vsel %vm8454, %v8988, %v8882
      %v9021 = vsel %vm8454, %v8989, %v8884
      %v9022 = vsel %vm8454, %v8990, %v8886
      %v9023 = vsel %vm8454, %v8991, %v8888
      %v9024 = vsel %vm8454, %v8992, %v8890
      %v9025 = vsel %vm8454, %v8993, %v8892
      %v9026 = vsel %vm8454, %v8994, %v8894
      %v9027 = vsel %vm8454, %v8995, %v8896
      %v9028 = vsel %vm8454, %v8996, %v8898
      %v9029 = vsel %vm8454, %v8997, %v8900
      %v9030 = vsel %vm8454, %v8998, %v8902
      %v9031 = vadd.f32 %v8519, %v8999
      %v9032 = vadd.f32 %v8520, %v9000
      %v9033 = vadd.f32 %v8521, %v9001
      %v9034 = vadd.f32 %v8522, %v9002
      %v9035 = vadd.f32 %v8523, %v9003
      %v9036 = vadd.f32 %v8524, %v9004
      %v9037 = vadd.f32 %v8525, %v9005
      %v9038 = vadd.f32 %v8526, %v9006
      %v9039 = vadd.f32 %v8527, %v9007
      %v9040 = vadd.f32 %v8528, %v9008
      %v9041 = vadd.f32 %v8529, %v9009
      %v9042 = vadd.f32 %v8530, %v9010
      %v9043 = vadd.f32 %v8531, %v9011
      %v9044 = vadd.f32 %v8532, %v9012
      %v9045 = vadd.f32 %v8533, %v9013
      %v9046 = vadd.f32 %v8534, %v9014
      %v9047 = vadd.f32 %v8535, %v9015
      %v9048 = vadd.f32 %v8536, %v9016
      %v9049 = vadd.f32 %v8537, %v9017
      %v9050 = vadd.f32 %v8538, %v9018
      %v9051 = vadd.f32 %v8539, %v9019
      %v9052 = vadd.f32 %v8540, %v9020
      %v9053 = vadd.f32 %v8541, %v9021
      %v9054 = vadd.f32 %v8542, %v9022
      %v9055 = vadd.f32 %v8543, %v9023
      %v9056 = vadd.f32 %v8544, %v9024
      %v9057 = vadd.f32 %v8545, %v9025
      %v9058 = vadd.f32 %v8546, %v9026
      %v9059 = vadd.f32 %v8547, %v9027
      %v9060 = vadd.f32 %v8548, %v9028
      %v9061 = vadd.f32 %v8549, %v9029
      %v9062 = vadd.f32 %v8550, %v9030
      %9063 = vst [vmem:[#allocation4] sm:$0xff] %v9031
      %9064 = vst [vmem:[#allocation4 + $0x8] sm:$0xff] %v9032
      %9065 = vst [vmem:[#allocation4 + $0x10] sm:$0xff] %v9033
      %9066 = vst [vmem:[#allocation4 + $0x18] sm:$0xff] %v9034
      %9067 = vst [vmem:[#allocation4 + $0x20] sm:$0xff] %v9035
      %9068 = vst [vmem:[#allocation4 + $0x28] sm:$0xff] %v9036
      %9069 = vst [vmem:[#allocation4 + $0x30] sm:$0xff] %v9037
      %9070 = vst [vmem:[#allocation4 + $0x38] sm:$0xff] %v9038
      %9071 = vst [vmem:[#allocation4 + $0x40] sm:$0xff] %v9039
      %9072 = vst [vmem:[#allocation4 + $0x48] sm:$0xff] %v9040
      %9073 = vst [vmem:[#allocation4 + $0x50] sm:$0xff] %v9041
      %9074 = vst [vmem:[#allocation4 + $0x58] sm:$0xff] %v9042
      %9075 = vst [vmem:[#allocation4 + $0x60] sm:$0xff] %v9043
      %9076 = vst [vmem:[#allocation4 + $0x68] sm:$0xff] %v9044
      %9077 = vst [vmem:[#allocation4 + $0x70] sm:$0xff] %v9045
      %9078 = vst [vmem:[#allocation4 + $0x78] sm:$0xff] %v9046
      %9079 = vst [vmem:[#allocation4 + $0x80] sm:$0xff] %v9047
      %9080 = vst [vmem:[#allocation4 + $0x88] sm:$0xff] %v9048
      %9081 = vst [vmem:[#allocation4 + $0x90] sm:$0xff] %v9049
      %9082 = vst [vmem:[#allocation4 + $0x98] sm:$0xff] %v9050
      %9083 = vst [vmem:[#allocation4 + $0xa0] sm:$0xff] %v9051
      %9084 = vst [vmem:[#allocation4 + $0xa8] sm:$0xff] %v9052
      %9085 = vst [vmem:[#allocation4 + $0xb0] sm:$0xff] %v9053
      %9086 = vst [vmem:[#allocation4 + $0xb8] sm:$0xff] %v9054
      %9087 = vst [vmem:[#allocation4 + $0xc0] sm:$0xff] %v9055
      %9088 = vst [vmem:[#allocation4 + $0xc8] sm:$0xff] %v9056
      %9089 = vst [vmem:[#allocation4 + $0xd0] sm:$0xff] %v9057
      %9090 = vst [vmem:[#allocation4 + $0xd8] sm:$0xff] %v9058
      %9091 = vst [vmem:[#allocation4 + $0xe0] sm:$0xff] %v9059
      %9092 = vst [vmem:[#allocation4 + $0xe8] sm:$0xff] %v9060
      %9093 = vst [vmem:[#allocation4 + $0xf0] sm:$0xff] %v9061
      %9094 = vst [vmem:[#allocation4 + $0xf8] sm:$0xff] %v9062
      // Predicated region
      $region41: #{attention_forward.4} parent=35 // pred_check
        %p9095 = pneg %p356
      $region42: #{attention_forward.4} parent=35 // pred_check_branch
        %9097 = sbr.rel (%p9095) target = $region44
      $region43: #{attention_forward.4} parent=35 // pred_region
        %v9098 = vld [vmem:[#allocation3] sm:$0xff]
        %v9099 = vld [vmem:[#allocation3 + $0x8] sm:$0xff]
        %v9100 = vld [vmem:[#allocation3 + $0x10] sm:$0xff]
        %v9101 = vld [vmem:[#allocation3 + $0x18] sm:$0xff]
        %v9102 = vld [vmem:[#allocation3 + $0x20] sm:$0xff]
        %v9103 = vld [vmem:[#allocation3 + $0x28] sm:$0xff]
        %v9104 = vld [vmem:[#allocation3 + $0x30] sm:$0xff]
        %v9105 = vld [vmem:[#allocation3 + $0x38] sm:$0xff]
        %v9106 = vld [vmem:[#allocation3 + $0x40] sm:$0xff]
        %v9107 = vld [vmem:[#allocation3 + $0x48] sm:$0xff]
        %v9108 = vld [vmem:[#allocation3 + $0x50] sm:$0xff]
        %v9109 = vld [vmem:[#allocation3 + $0x58] sm:$0xff]
        %v9110 = vld [vmem:[#allocation3 + $0x60] sm:$0xff]
        %v9111 = vld [vmem:[#allocation3 + $0x68] sm:$0xff]
        %v9112 = vld [vmem:[#allocation3 + $0x70] sm:$0xff]
        %v9113 = vld [vmem:[#allocation3 + $0x78] sm:$0xff]
        %v9114 = vld [vmem:[#allocation3 + $0x80] sm:$0xff]
        %v9115 = vld [vmem:[#allocation3 + $0x88] sm:$0xff]
        %v9116 = vld [vmem:[#allocation3 + $0x90] sm:$0xff]
        %v9117 = vld [vmem:[#allocation3 + $0x98] sm:$0xff]
        %v9118 = vld [vmem:[#allocation3 + $0xa0] sm:$0xff]
        %v9119 = vld [vmem:[#allocation3 + $0xa8] sm:$0xff]
        %v9120 = vld [vmem:[#allocation3 + $0xb0] sm:$0xff]
        %v9121 = vld [vmem:[#allocation3 + $0xb8] sm:$0xff]
        %v9122 = vld [vmem:[#allocation3 + $0xc0] sm:$0xff]
        %v9123 = vld [vmem:[#allocation3 + $0xc8] sm:$0xff]
        %v9124 = vld [vmem:[#allocation3 + $0xd0] sm:$0xff]
        %v9125 = vld [vmem:[#allocation3 + $0xd8] sm:$0xff]
        %v9126 = vld [vmem:[#allocation3 + $0xe0] sm:$0xff]
        %v9127 = vld [vmem:[#allocation3 + $0xe8] sm:$0xff]
        %v9128 = vld [vmem:[#allocation3 + $0xf0] sm:$0xff]
        %v9129 = vld [vmem:[#allocation3 + $0xf8] sm:$0xff]
        %v9130 = vrcp.pop %v9098
        %v9131 = vrcp.pop %v9099
        %v9132 = vrcp.pop %v9100
        %v9133 = vrcp.pop %v9101
        %v9134 = vrcp.pop %v9102
        %v9135 = vrcp.pop %v9103
        %v9136 = vrcp.pop %v9104
        %v9137 = vrcp.pop %v9105
        %v9138 = vrcp.pop %v9106
        %v9139 = vrcp.pop %v9107
        %v9140 = vrcp.pop %v9108
        %v9141 = vrcp.pop %v9109
        %v9142 = vrcp.pop %v9110
        %v9143 = vrcp.pop %v9111
        %v9144 = vrcp.pop %v9112
        %v9145 = vrcp.pop %v9113
        %v9146 = vrcp.pop %v9114
        %v9147 = vrcp.pop %v9115
        %v9148 = vrcp.pop %v9116
        %v9149 = vrcp.pop %v9117
        %v9150 = vrcp.pop %v9118
        %v9151 = vrcp.pop %v9119
        %v9152 = vrcp.pop %v9120
        %v9153 = vrcp.pop %v9121
        %v9154 = vrcp.pop %v9122
        %v9155 = vrcp.pop %v9123
        %v9156 = vrcp.pop %v9124
        %v9157 = vrcp.pop %v9125
        %v9158 = vrcp.pop %v9126
        %v9159 = vrcp.pop %v9127
        %v9160 = vrcp.pop %v9128
        %v9161 = vrcp.pop %v9129
        %9163 = vset.pattern.permute.xlu0 0
        %9164 = vperm.xlu0 %9163, %v9130
        %v9165 = vpop.permute.xlu0 %9164
        %9168 = vset.pattern.permute.xlu0 0
        %9169 = vperm.xlu0 %9168, %v9131
        %v9170 = vpop.permute.xlu0 %9169
        %9173 = vset.pattern.permute.xlu0 0
        %9174 = vperm.xlu0 %9173, %v9132
        %v9175 = vpop.permute.xlu0 %9174
        %9178 = vset.pattern.permute.xlu0 0
        %9179 = vperm.xlu0 %9178, %v9133
        %v9180 = vpop.permute.xlu0 %9179
        %9183 = vset.pattern.permute.xlu0 0
        %9184 = vperm.xlu0 %9183, %v9134
        %v9185 = vpop.permute.xlu0 %9184
        %9188 = vset.pattern.permute.xlu0 0
        %9189 = vperm.xlu0 %9188, %v9135
        %v9190 = vpop.permute.xlu0 %9189
        %9193 = vset.pattern.permute.xlu0 0
        %9194 = vperm.xlu0 %9193, %v9136
        %v9195 = vpop.permute.xlu0 %9194
        %9198 = vset.pattern.permute.xlu0 0
        %9199 = vperm.xlu0 %9198, %v9137
        %v9200 = vpop.permute.xlu0 %9199
        %9203 = vset.pattern.permute.xlu0 0
        %9204 = vperm.xlu0 %9203, %v9138
        %v9205 = vpop.permute.xlu0 %9204
        %9208 = vset.pattern.permute.xlu0 0
        %9209 = vperm.xlu0 %9208, %v9139
        %v9210 = vpop.permute.xlu0 %9209
        %9213 = vset.pattern.permute.xlu0 0
        %9214 = vperm.xlu0 %9213, %v9140
        %v9215 = vpop.permute.xlu0 %9214
        %9218 = vset.pattern.permute.xlu0 0
        %9219 = vperm.xlu0 %9218, %v9141
        %v9220 = vpop.permute.xlu0 %9219
        %9223 = vset.pattern.permute.xlu0 0
        %9224 = vperm.xlu0 %9223, %v9142
        %v9225 = vpop.permute.xlu0 %9224
        %9228 = vset.pattern.permute.xlu0 0
        %9229 = vperm.xlu0 %9228, %v9143
        %v9230 = vpop.permute.xlu0 %9229
        %9233 = vset.pattern.permute.xlu0 0
        %9234 = vperm.xlu0 %9233, %v9144
        %v9235 = vpop.permute.xlu0 %9234
        %9238 = vset.pattern.permute.xlu0 0
        %9239 = vperm.xlu0 %9238, %v9145
        %v9240 = vpop.permute.xlu0 %9239
        %9243 = vset.pattern.permute.xlu0 0
        %9244 = vperm.xlu0 %9243, %v9146
        %v9245 = vpop.permute.xlu0 %9244
        %9248 = vset.pattern.permute.xlu0 0
        %9249 = vperm.xlu0 %9248, %v9147
        %v9250 = vpop.permute.xlu0 %9249
        %9253 = vset.pattern.permute.xlu0 0
        %9254 = vperm.xlu0 %9253, %v9148
        %v9255 = vpop.permute.xlu0 %9254
        %9258 = vset.pattern.permute.xlu0 0
        %9259 = vperm.xlu0 %9258, %v9149
        %v9260 = vpop.permute.xlu0 %9259
        %9263 = vset.pattern.permute.xlu0 0
        %9264 = vperm.xlu0 %9263, %v9150
        %v9265 = vpop.permute.xlu0 %9264
        %9268 = vset.pattern.permute.xlu0 0
        %9269 = vperm.xlu0 %9268, %v9151
        %v9270 = vpop.permute.xlu0 %9269
        %9273 = vset.pattern.permute.xlu0 0
        %9274 = vperm.xlu0 %9273, %v9152
        %v9275 = vpop.permute.xlu0 %9274
        %9278 = vset.pattern.permute.xlu0 0
        %9279 = vperm.xlu0 %9278, %v9153
        %v9280 = vpop.permute.xlu0 %9279
        %9283 = vset.pattern.permute.xlu0 0
        %9284 = vperm.xlu0 %9283, %v9154
        %v9285 = vpop.permute.xlu0 %9284
        %9288 = vset.pattern.permute.xlu0 0
        %9289 = vperm.xlu0 %9288, %v9155
        %v9290 = vpop.permute.xlu0 %9289
        %9293 = vset.pattern.permute.xlu0 0
        %9294 = vperm.xlu0 %9293, %v9156
        %v9295 = vpop.permute.xlu0 %9294
        %9298 = vset.pattern.permute.xlu0 0
        %9299 = vperm.xlu0 %9298, %v9157
        %v9300 = vpop.permute.xlu0 %9299
        %9303 = vset.pattern.permute.xlu0 0
        %9304 = vperm.xlu0 %9303, %v9158
        %v9305 = vpop.permute.xlu0 %9304
        %9308 = vset.pattern.permute.xlu0 0
        %9309 = vperm.xlu0 %9308, %v9159
        %v9310 = vpop.permute.xlu0 %9309
        %9313 = vset.pattern.permute.xlu0 0
        %9314 = vperm.xlu0 %9313, %v9160
        %v9315 = vpop.permute.xlu0 %9314
        %9318 = vset.pattern.permute.xlu0 0
        %9319 = vperm.xlu0 %9318, %v9161
        %v9320 = vpop.permute.xlu0 %9319
        %v9322 = vld [vmem:[%s3739] sm:$0xff]
        %v9323 = vld [vmem:[%s3739 + $0x8] sm:$0xff]
        %v9324 = vld [vmem:[%s3739 + $0x10] sm:$0xff]
        %v9325 = vld [vmem:[%s3739 + $0x18] sm:$0xff]
        %v9326 = vld [vmem:[%s3739 + $0x20] sm:$0xff]
        %v9327 = vld [vmem:[%s3739 + $0x28] sm:$0xff]
        %v9328 = vld [vmem:[%s3739 + $0x30] sm:$0xff]
        %v9329 = vld [vmem:[%s3739 + $0x38] sm:$0xff]
        %v9330 = vld [vmem:[%s3739 + $0x40] sm:$0xff]
        %v9331 = vld [vmem:[%s3739 + $0x48] sm:$0xff]
        %v9332 = vld [vmem:[%s3739 + $0x50] sm:$0xff]
        %v9333 = vld [vmem:[%s3739 + $0x58] sm:$0xff]
        %v9334 = vld [vmem:[%s3739 + $0x60] sm:$0xff]
        %v9335 = vld [vmem:[%s3739 + $0x68] sm:$0xff]
        %v9336 = vld [vmem:[%s3739 + $0x70] sm:$0xff]
        %v9337 = vld [vmem:[%s3739 + $0x78] sm:$0xff]
        %v9338 = vld [vmem:[%s3739 + $0x80] sm:$0xff]
        %v9339 = vld [vmem:[%s3739 + $0x88] sm:$0xff]
        %v9340 = vld [vmem:[%s3739 + $0x90] sm:$0xff]
        %v9341 = vld [vmem:[%s3739 + $0x98] sm:$0xff]
        %v9342 = vld [vmem:[%s3739 + $0xa0] sm:$0xff]
        %v9343 = vld [vmem:[%s3739 + $0xa8] sm:$0xff]
        %v9344 = vld [vmem:[%s3739 + $0xb0] sm:$0xff]
        %v9345 = vld [vmem:[%s3739 + $0xb8] sm:$0xff]
        %v9346 = vld [vmem:[%s3739 + $0xc0] sm:$0xff]
        %v9347 = vld [vmem:[%s3739 + $0xc8] sm:$0xff]
        %v9348 = vld [vmem:[%s3739 + $0xd0] sm:$0xff]
        %v9349 = vld [vmem:[%s3739 + $0xd8] sm:$0xff]
        %v9350 = vld [vmem:[%s3739 + $0xe0] sm:$0xff]
        %v9351 = vld [vmem:[%s3739 + $0xe8] sm:$0xff]
        %v9352 = vld [vmem:[%s3739 + $0xf0] sm:$0xff]
        %v9353 = vld [vmem:[%s3739 + $0xf8] sm:$0xff]
        %v9354 = vrcp.pop %v9322
        %v9355 = vrcp.pop %v9323
        %v9356 = vrcp.pop %v9324
        %v9357 = vrcp.pop %v9325
        %v9358 = vrcp.pop %v9326
        %v9359 = vrcp.pop %v9327
        %v9360 = vrcp.pop %v9328
        %v9361 = vrcp.pop %v9329
        %v9362 = vrcp.pop %v9330
        %v9363 = vrcp.pop %v9331
        %v9364 = vrcp.pop %v9332
        %v9365 = vrcp.pop %v9333
        %v9366 = vrcp.pop %v9334
        %v9367 = vrcp.pop %v9335
        %v9368 = vrcp.pop %v9336
        %v9369 = vrcp.pop %v9337
        %v9370 = vrcp.pop %v9338
        %v9371 = vrcp.pop %v9339
        %v9372 = vrcp.pop %v9340
        %v9373 = vrcp.pop %v9341
        %v9374 = vrcp.pop %v9342
        %v9375 = vrcp.pop %v9343
        %v9376 = vrcp.pop %v9344
        %v9377 = vrcp.pop %v9345
        %v9378 = vrcp.pop %v9346
        %v9379 = vrcp.pop %v9347
        %v9380 = vrcp.pop %v9348
        %v9381 = vrcp.pop %v9349
        %v9382 = vrcp.pop %v9350
        %v9383 = vrcp.pop %v9351
        %v9384 = vrcp.pop %v9352
        %v9385 = vrcp.pop %v9353
        %9387 = vset.pattern.permute.xlu0 0
        %9388 = vperm.xlu0 %9387, %v9354
        %v9389 = vpop.permute.xlu0 %9388
        %9392 = vset.pattern.permute.xlu0 0
        %9393 = vperm.xlu0 %9392, %v9355
        %v9394 = vpop.permute.xlu0 %9393
        %9397 = vset.pattern.permute.xlu0 0
        %9398 = vperm.xlu0 %9397, %v9356
        %v9399 = vpop.permute.xlu0 %9398
        %9402 = vset.pattern.permute.xlu0 0
        %9403 = vperm.xlu0 %9402, %v9357
        %v9404 = vpop.permute.xlu0 %9403
        %9407 = vset.pattern.permute.xlu0 0
        %9408 = vperm.xlu0 %9407, %v9358
        %v9409 = vpop.permute.xlu0 %9408
        %9412 = vset.pattern.permute.xlu0 0
        %9413 = vperm.xlu0 %9412, %v9359
        %v9414 = vpop.permute.xlu0 %9413
        %9417 = vset.pattern.permute.xlu0 0
        %9418 = vperm.xlu0 %9417, %v9360
        %v9419 = vpop.permute.xlu0 %9418
        %9422 = vset.pattern.permute.xlu0 0
        %9423 = vperm.xlu0 %9422, %v9361
        %v9424 = vpop.permute.xlu0 %9423
        %9427 = vset.pattern.permute.xlu0 0
        %9428 = vperm.xlu0 %9427, %v9362
        %v9429 = vpop.permute.xlu0 %9428
        %9432 = vset.pattern.permute.xlu0 0
        %9433 = vperm.xlu0 %9432, %v9363
        %v9434 = vpop.permute.xlu0 %9433
        %9437 = vset.pattern.permute.xlu0 0
        %9438 = vperm.xlu0 %9437, %v9364
        %v9439 = vpop.permute.xlu0 %9438
        %9442 = vset.pattern.permute.xlu0 0
        %9443 = vperm.xlu0 %9442, %v9365
        %v9444 = vpop.permute.xlu0 %9443
        %9447 = vset.pattern.permute.xlu0 0
        %9448 = vperm.xlu0 %9447, %v9366
        %v9449 = vpop.permute.xlu0 %9448
        %9452 = vset.pattern.permute.xlu0 0
        %9453 = vperm.xlu0 %9452, %v9367
        %v9454 = vpop.permute.xlu0 %9453
        %9457 = vset.pattern.permute.xlu0 0
        %9458 = vperm.xlu0 %9457, %v9368
        %v9459 = vpop.permute.xlu0 %9458
        %9462 = vset.pattern.permute.xlu0 0
        %9463 = vperm.xlu0 %9462, %v9369
        %v9464 = vpop.permute.xlu0 %9463
        %9467 = vset.pattern.permute.xlu0 0
        %9468 = vperm.xlu0 %9467, %v9370
        %v9469 = vpop.permute.xlu0 %9468
        %9472 = vset.pattern.permute.xlu0 0
        %9473 = vperm.xlu0 %9472, %v9371
        %v9474 = vpop.permute.xlu0 %9473
        %9477 = vset.pattern.permute.xlu0 0
        %9478 = vperm.xlu0 %9477, %v9372
        %v9479 = vpop.permute.xlu0 %9478
        %9482 = vset.pattern.permute.xlu0 0
        %9483 = vperm.xlu0 %9482, %v9373
        %v9484 = vpop.permute.xlu0 %9483
        %9487 = vset.pattern.permute.xlu0 0
        %9488 = vperm.xlu0 %9487, %v9374
        %v9489 = vpop.permute.xlu0 %9488
        %9492 = vset.pattern.permute.xlu0 0
        %9493 = vperm.xlu0 %9492, %v9375
        %v9494 = vpop.permute.xlu0 %9493
        %9497 = vset.pattern.permute.xlu0 0
        %9498 = vperm.xlu0 %9497, %v9376
        %v9499 = vpop.permute.xlu0 %9498
        %9502 = vset.pattern.permute.xlu0 0
        %9503 = vperm.xlu0 %9502, %v9377
        %v9504 = vpop.permute.xlu0 %9503
        %9507 = vset.pattern.permute.xlu0 0
        %9508 = vperm.xlu0 %9507, %v9378
        %v9509 = vpop.permute.xlu0 %9508
        %9512 = vset.pattern.permute.xlu0 0
        %9513 = vperm.xlu0 %9512, %v9379
        %v9514 = vpop.permute.xlu0 %9513
        %9517 = vset.pattern.permute.xlu0 0
        %9518 = vperm.xlu0 %9517, %v9380
        %v9519 = vpop.permute.xlu0 %9518
        %9522 = vset.pattern.permute.xlu0 0
        %9523 = vperm.xlu0 %9522, %v9381
        %v9524 = vpop.permute.xlu0 %9523
        %9527 = vset.pattern.permute.xlu0 0
        %9528 = vperm.xlu0 %9527, %v9382
        %v9529 = vpop.permute.xlu0 %9528
        %9532 = vset.pattern.permute.xlu0 0
        %9533 = vperm.xlu0 %9532, %v9383
        %v9534 = vpop.permute.xlu0 %9533
        %9537 = vset.pattern.permute.xlu0 0
        %9538 = vperm.xlu0 %9537, %v9384
        %v9539 = vpop.permute.xlu0 %9538
        %9542 = vset.pattern.permute.xlu0 0
        %9543 = vperm.xlu0 %9542, %v9385
        %v9544 = vpop.permute.xlu0 %9543
        %v9546 = vld [vmem:[%s5695] sm:$0xff]
        %v9547 = vld [vmem:[%s5695 + $0x8] sm:$0xff]
        %v9548 = vld [vmem:[%s5695 + $0x10] sm:$0xff]
        %v9549 = vld [vmem:[%s5695 + $0x18] sm:$0xff]
        %v9550 = vld [vmem:[%s5695 + $0x20] sm:$0xff]
        %v9551 = vld [vmem:[%s5695 + $0x28] sm:$0xff]
        %v9552 = vld [vmem:[%s5695 + $0x30] sm:$0xff]
        %v9553 = vld [vmem:[%s5695 + $0x38] sm:$0xff]
        %v9554 = vld [vmem:[%s5695 + $0x40] sm:$0xff]
        %v9555 = vld [vmem:[%s5695 + $0x48] sm:$0xff]
        %v9556 = vld [vmem:[%s5695 + $0x50] sm:$0xff]
        %v9557 = vld [vmem:[%s5695 + $0x58] sm:$0xff]
        %v9558 = vld [vmem:[%s5695 + $0x60] sm:$0xff]
        %v9559 = vld [vmem:[%s5695 + $0x68] sm:$0xff]
        %v9560 = vld [vmem:[%s5695 + $0x70] sm:$0xff]
        %v9561 = vld [vmem:[%s5695 + $0x78] sm:$0xff]
        %v9562 = vld [vmem:[%s5695 + $0x80] sm:$0xff]
        %v9563 = vld [vmem:[%s5695 + $0x88] sm:$0xff]
        %v9564 = vld [vmem:[%s5695 + $0x90] sm:$0xff]
        %v9565 = vld [vmem:[%s5695 + $0x98] sm:$0xff]
        %v9566 = vld [vmem:[%s5695 + $0xa0] sm:$0xff]
        %v9567 = vld [vmem:[%s5695 + $0xa8] sm:$0xff]
        %v9568 = vld [vmem:[%s5695 + $0xb0] sm:$0xff]
        %v9569 = vld [vmem:[%s5695 + $0xb8] sm:$0xff]
        %v9570 = vld [vmem:[%s5695 + $0xc0] sm:$0xff]
        %v9571 = vld [vmem:[%s5695 + $0xc8] sm:$0xff]
        %v9572 = vld [vmem:[%s5695 + $0xd0] sm:$0xff]
        %v9573 = vld [vmem:[%s5695 + $0xd8] sm:$0xff]
        %v9574 = vld [vmem:[%s5695 + $0xe0] sm:$0xff]
        %v9575 = vld [vmem:[%s5695 + $0xe8] sm:$0xff]
        %v9576 = vld [vmem:[%s5695 + $0xf0] sm:$0xff]
        %v9577 = vld [vmem:[%s5695 + $0xf8] sm:$0xff]
        %v9578 = vrcp.pop %v9546
        %v9579 = vrcp.pop %v9547
        %v9580 = vrcp.pop %v9548
        %v9581 = vrcp.pop %v9549
        %v9582 = vrcp.pop %v9550
        %v9583 = vrcp.pop %v9551
        %v9584 = vrcp.pop %v9552
        %v9585 = vrcp.pop %v9553
        %v9586 = vrcp.pop %v9554
        %v9587 = vrcp.pop %v9555
        %v9588 = vrcp.pop %v9556
        %v9589 = vrcp.pop %v9557
        %v9590 = vrcp.pop %v9558
        %v9591 = vrcp.pop %v9559
        %v9592 = vrcp.pop %v9560
        %v9593 = vrcp.pop %v9561
        %v9594 = vrcp.pop %v9562
        %v9595 = vrcp.pop %v9563
        %v9596 = vrcp.pop %v9564
        %v9597 = vrcp.pop %v9565
        %v9598 = vrcp.pop %v9566
        %v9599 = vrcp.pop %v9567
        %v9600 = vrcp.pop %v9568
        %v9601 = vrcp.pop %v9569
        %v9602 = vrcp.pop %v9570
        %v9603 = vrcp.pop %v9571
        %v9604 = vrcp.pop %v9572
        %v9605 = vrcp.pop %v9573
        %v9606 = vrcp.pop %v9574
        %v9607 = vrcp.pop %v9575
        %v9608 = vrcp.pop %v9576
        %v9609 = vrcp.pop %v9577
        %9611 = vset.pattern.permute.xlu0 0
        %9612 = vperm.xlu0 %9611, %v9578
        %v9613 = vpop.permute.xlu0 %9612
        %9616 = vset.pattern.permute.xlu0 0
        %9617 = vperm.xlu0 %9616, %v9579
        %v9618 = vpop.permute.xlu0 %9617
        %9621 = vset.pattern.permute.xlu0 0
        %9622 = vperm.xlu0 %9621, %v9580
        %v9623 = vpop.permute.xlu0 %9622
        %9626 = vset.pattern.permute.xlu0 0
        %9627 = vperm.xlu0 %9626, %v9581
        %v9628 = vpop.permute.xlu0 %9627
        %9631 = vset.pattern.permute.xlu0 0
        %9632 = vperm.xlu0 %9631, %v9582
        %v9633 = vpop.permute.xlu0 %9632
        %9636 = vset.pattern.permute.xlu0 0
        %9637 = vperm.xlu0 %9636, %v9583
        %v9638 = vpop.permute.xlu0 %9637
        %9641 = vset.pattern.permute.xlu0 0
        %9642 = vperm.xlu0 %9641, %v9584
        %v9643 = vpop.permute.xlu0 %9642
        %9646 = vset.pattern.permute.xlu0 0
        %9647 = vperm.xlu0 %9646, %v9585
        %v9648 = vpop.permute.xlu0 %9647
        %9651 = vset.pattern.permute.xlu0 0
        %9652 = vperm.xlu0 %9651, %v9586
        %v9653 = vpop.permute.xlu0 %9652
        %9656 = vset.pattern.permute.xlu0 0
        %9657 = vperm.xlu0 %9656, %v9587
        %v9658 = vpop.permute.xlu0 %9657
        %9661 = vset.pattern.permute.xlu0 0
        %9662 = vperm.xlu0 %9661, %v9588
        %v9663 = vpop.permute.xlu0 %9662
        %9666 = vset.pattern.permute.xlu0 0
        %9667 = vperm.xlu0 %9666, %v9589
        %v9668 = vpop.permute.xlu0 %9667
        %9671 = vset.pattern.permute.xlu0 0
        %9672 = vperm.xlu0 %9671, %v9590
        %v9673 = vpop.permute.xlu0 %9672
        %9676 = vset.pattern.permute.xlu0 0
        %9677 = vperm.xlu0 %9676, %v9591
        %v9678 = vpop.permute.xlu0 %9677
        %9681 = vset.pattern.permute.xlu0 0
        %9682 = vperm.xlu0 %9681, %v9592
        %v9683 = vpop.permute.xlu0 %9682
        %9686 = vset.pattern.permute.xlu0 0
        %9687 = vperm.xlu0 %9686, %v9593
        %v9688 = vpop.permute.xlu0 %9687
        %9691 = vset.pattern.permute.xlu0 0
        %9692 = vperm.xlu0 %9691, %v9594
        %v9693 = vpop.permute.xlu0 %9692
        %9696 = vset.pattern.permute.xlu0 0
        %9697 = vperm.xlu0 %9696, %v9595
        %v9698 = vpop.permute.xlu0 %9697
        %9701 = vset.pattern.permute.xlu0 0
        %9702 = vperm.xlu0 %9701, %v9596
        %v9703 = vpop.permute.xlu0 %9702
        %9706 = vset.pattern.permute.xlu0 0
        %9707 = vperm.xlu0 %9706, %v9597
        %v9708 = vpop.permute.xlu0 %9707
        %9711 = vset.pattern.permute.xlu0 0
        %9712 = vperm.xlu0 %9711, %v9598
        %v9713 = vpop.permute.xlu0 %9712
        %9716 = vset.pattern.permute.xlu0 0
        %9717 = vperm.xlu0 %9716, %v9599
        %v9718 = vpop.permute.xlu0 %9717
        %9721 = vset.pattern.permute.xlu0 0
        %9722 = vperm.xlu0 %9721, %v9600
        %v9723 = vpop.permute.xlu0 %9722
        %9726 = vset.pattern.permute.xlu0 0
        %9727 = vperm.xlu0 %9726, %v9601
        %v9728 = vpop.permute.xlu0 %9727
        %9731 = vset.pattern.permute.xlu0 0
        %9732 = vperm.xlu0 %9731, %v9602
        %v9733 = vpop.permute.xlu0 %9732
        %9736 = vset.pattern.permute.xlu0 0
        %9737 = vperm.xlu0 %9736, %v9603
        %v9738 = vpop.permute.xlu0 %9737
        %9741 = vset.pattern.permute.xlu0 0
        %9742 = vperm.xlu0 %9741, %v9604
        %v9743 = vpop.permute.xlu0 %9742
        %9746 = vset.pattern.permute.xlu0 0
        %9747 = vperm.xlu0 %9746, %v9605
        %v9748 = vpop.permute.xlu0 %9747
        %9751 = vset.pattern.permute.xlu0 0
        %9752 = vperm.xlu0 %9751, %v9606
        %v9753 = vpop.permute.xlu0 %9752
        %9756 = vset.pattern.permute.xlu0 0
        %9757 = vperm.xlu0 %9756, %v9607
        %v9758 = vpop.permute.xlu0 %9757
        %9761 = vset.pattern.permute.xlu0 0
        %9762 = vperm.xlu0 %9761, %v9608
        %v9763 = vpop.permute.xlu0 %9762
        %9766 = vset.pattern.permute.xlu0 0
        %9767 = vperm.xlu0 %9766, %v9609
        %v9768 = vpop.permute.xlu0 %9767
        %v9770 = vld [vmem:[%s7651] sm:$0xff]
        %v9771 = vld [vmem:[%s7651 + $0x8] sm:$0xff]
        %v9772 = vld [vmem:[%s7651 + $0x10] sm:$0xff]
        %v9773 = vld [vmem:[%s7651 + $0x18] sm:$0xff]
        %v9774 = vld [vmem:[%s7651 + $0x20] sm:$0xff]
        %v9775 = vld [vmem:[%s7651 + $0x28] sm:$0xff]
        %v9776 = vld [vmem:[%s7651 + $0x30] sm:$0xff]
        %v9777 = vld [vmem:[%s7651 + $0x38] sm:$0xff]
        %v9778 = vld [vmem:[%s7651 + $0x40] sm:$0xff]
        %v9779 = vld [vmem:[%s7651 + $0x48] sm:$0xff]
        %v9780 = vld [vmem:[%s7651 + $0x50] sm:$0xff]
        %v9781 = vld [vmem:[%s7651 + $0x58] sm:$0xff]
        %v9782 = vld [vmem:[%s7651 + $0x60] sm:$0xff]
        %v9783 = vld [vmem:[%s7651 + $0x68] sm:$0xff]
        %v9784 = vld [vmem:[%s7651 + $0x70] sm:$0xff]
        %v9785 = vld [vmem:[%s7651 + $0x78] sm:$0xff]
        %v9786 = vld [vmem:[%s7651 + $0x80] sm:$0xff]
        %v9787 = vld [vmem:[%s7651 + $0x88] sm:$0xff]
        %v9788 = vld [vmem:[%s7651 + $0x90] sm:$0xff]
        %v9789 = vld [vmem:[%s7651 + $0x98] sm:$0xff]
        %v9790 = vld [vmem:[%s7651 + $0xa0] sm:$0xff]
        %v9791 = vld [vmem:[%s7651 + $0xa8] sm:$0xff]
        %v9792 = vld [vmem:[%s7651 + $0xb0] sm:$0xff]
        %v9793 = vld [vmem:[%s7651 + $0xb8] sm:$0xff]
        %v9794 = vld [vmem:[%s7651 + $0xc0] sm:$0xff]
        %v9795 = vld [vmem:[%s7651 + $0xc8] sm:$0xff]
        %v9796 = vld [vmem:[%s7651 + $0xd0] sm:$0xff]
        %v9797 = vld [vmem:[%s7651 + $0xd8] sm:$0xff]
        %v9798 = vld [vmem:[%s7651 + $0xe0] sm:$0xff]
        %v9799 = vld [vmem:[%s7651 + $0xe8] sm:$0xff]
        %v9800 = vld [vmem:[%s7651 + $0xf0] sm:$0xff]
        %v9801 = vld [vmem:[%s7651 + $0xf8] sm:$0xff]
        %v9802 = vrcp.pop %v9770
        %v9803 = vrcp.pop %v9771
        %v9804 = vrcp.pop %v9772
        %v9805 = vrcp.pop %v9773
        %v9806 = vrcp.pop %v9774
        %v9807 = vrcp.pop %v9775
        %v9808 = vrcp.pop %v9776
        %v9809 = vrcp.pop %v9777
        %v9810 = vrcp.pop %v9778
        %v9811 = vrcp.pop %v9779
        %v9812 = vrcp.pop %v9780
        %v9813 = vrcp.pop %v9781
        %v9814 = vrcp.pop %v9782
        %v9815 = vrcp.pop %v9783
        %v9816 = vrcp.pop %v9784
        %v9817 = vrcp.pop %v9785
        %v9818 = vrcp.pop %v9786
        %v9819 = vrcp.pop %v9787
        %v9820 = vrcp.pop %v9788
        %v9821 = vrcp.pop %v9789
        %v9822 = vrcp.pop %v9790
        %v9823 = vrcp.pop %v9791
        %v9824 = vrcp.pop %v9792
        %v9825 = vrcp.pop %v9793
        %v9826 = vrcp.pop %v9794
        %v9827 = vrcp.pop %v9795
        %v9828 = vrcp.pop %v9796
        %v9829 = vrcp.pop %v9797
        %v9830 = vrcp.pop %v9798
        %v9831 = vrcp.pop %v9799
        %v9832 = vrcp.pop %v9800
        %v9833 = vrcp.pop %v9801
        %9835 = vset.pattern.permute.xlu0 0
        %9836 = vperm.xlu0 %9835, %v9802
        %v9837 = vpop.permute.xlu0 %9836
        %9840 = vset.pattern.permute.xlu0 0
        %9841 = vperm.xlu0 %9840, %v9803
        %v9842 = vpop.permute.xlu0 %9841
        %9845 = vset.pattern.permute.xlu0 0
        %9846 = vperm.xlu0 %9845, %v9804
        %v9847 = vpop.permute.xlu0 %9846
        %9850 = vset.pattern.permute.xlu0 0
        %9851 = vperm.xlu0 %9850, %v9805
        %v9852 = vpop.permute.xlu0 %9851
        %9855 = vset.pattern.permute.xlu0 0
        %9856 = vperm.xlu0 %9855, %v9806
        %v9857 = vpop.permute.xlu0 %9856
        %9860 = vset.pattern.permute.xlu0 0
        %9861 = vperm.xlu0 %9860, %v9807
        %v9862 = vpop.permute.xlu0 %9861
        %9865 = vset.pattern.permute.xlu0 0
        %9866 = vperm.xlu0 %9865, %v9808
        %v9867 = vpop.permute.xlu0 %9866
        %9870 = vset.pattern.permute.xlu0 0
        %9871 = vperm.xlu0 %9870, %v9809
        %v9872 = vpop.permute.xlu0 %9871
        %9875 = vset.pattern.permute.xlu0 0
        %9876 = vperm.xlu0 %9875, %v9810
        %v9877 = vpop.permute.xlu0 %9876
        %9880 = vset.pattern.permute.xlu0 0
        %9881 = vperm.xlu0 %9880, %v9811
        %v9882 = vpop.permute.xlu0 %9881
        %9885 = vset.pattern.permute.xlu0 0
        %9886 = vperm.xlu0 %9885, %v9812
        %v9887 = vpop.permute.xlu0 %9886
        %9890 = vset.pattern.permute.xlu0 0
        %9891 = vperm.xlu0 %9890, %v9813
        %v9892 = vpop.permute.xlu0 %9891
        %9895 = vset.pattern.permute.xlu0 0
        %9896 = vperm.xlu0 %9895, %v9814
        %v9897 = vpop.permute.xlu0 %9896
        %9900 = vset.pattern.permute.xlu0 0
        %9901 = vperm.xlu0 %9900, %v9815
        %v9902 = vpop.permute.xlu0 %9901
        %9905 = vset.pattern.permute.xlu0 0
        %9906 = vperm.xlu0 %9905, %v9816
        %v9907 = vpop.permute.xlu0 %9906
        %9910 = vset.pattern.permute.xlu0 0
        %9911 = vperm.xlu0 %9910, %v9817
        %v9912 = vpop.permute.xlu0 %9911
        %9915 = vset.pattern.permute.xlu0 0
        %9916 = vperm.xlu0 %9915, %v9818
        %v9917 = vpop.permute.xlu0 %9916
        %9920 = vset.pattern.permute.xlu0 0
        %9921 = vperm.xlu0 %9920, %v9819
        %v9922 = vpop.permute.xlu0 %9921
        %9925 = vset.pattern.permute.xlu0 0
        %9926 = vperm.xlu0 %9925, %v9820
        %v9927 = vpop.permute.xlu0 %9926
        %9930 = vset.pattern.permute.xlu0 0
        %9931 = vperm.xlu0 %9930, %v9821
        %v9932 = vpop.permute.xlu0 %9931
        %9935 = vset.pattern.permute.xlu0 0
        %9936 = vperm.xlu0 %9935, %v9822
        %v9937 = vpop.permute.xlu0 %9936
        %9940 = vset.pattern.permute.xlu0 0
        %9941 = vperm.xlu0 %9940, %v9823
        %v9942 = vpop.permute.xlu0 %9941
        %9945 = vset.pattern.permute.xlu0 0
        %9946 = vperm.xlu0 %9945, %v9824
        %v9947 = vpop.permute.xlu0 %9946
        %9950 = vset.pattern.permute.xlu0 0
        %9951 = vperm.xlu0 %9950, %v9825
        %v9952 = vpop.permute.xlu0 %9951
        %9955 = vset.pattern.permute.xlu0 0
        %9956 = vperm.xlu0 %9955, %v9826
        %v9957 = vpop.permute.xlu0 %9956
        %9960 = vset.pattern.permute.xlu0 0
        %9961 = vperm.xlu0 %9960, %v9827
        %v9962 = vpop.permute.xlu0 %9961
        %9965 = vset.pattern.permute.xlu0 0
        %9966 = vperm.xlu0 %9965, %v9828
        %v9967 = vpop.permute.xlu0 %9966
        %9970 = vset.pattern.permute.xlu0 0
        %9971 = vperm.xlu0 %9970, %v9829
        %v9972 = vpop.permute.xlu0 %9971
        %9975 = vset.pattern.permute.xlu0 0
        %9976 = vperm.xlu0 %9975, %v9830
        %v9977 = vpop.permute.xlu0 %9976
        %9980 = vset.pattern.permute.xlu0 0
        %9981 = vperm.xlu0 %9980, %v9831
        %v9982 = vpop.permute.xlu0 %9981
        %9985 = vset.pattern.permute.xlu0 0
        %9986 = vperm.xlu0 %9985, %v9832
        %v9987 = vpop.permute.xlu0 %9986
        %9990 = vset.pattern.permute.xlu0 0
        %9991 = vperm.xlu0 %9990, %v9833
        %v9992 = vpop.permute.xlu0 %9991
        %v9994 = vsel %vm917, %v9165, %v9389
        %v9995 = vsel %vm917, %v9170, %v9394
        %v9996 = vsel %vm917, %v9175, %v9399
        %v9997 = vsel %vm917, %v9180, %v9404
        %v9998 = vsel %vm917, %v9185, %v9409
        %v9999 = vsel %vm917, %v9190, %v9414
        %v10000 = vsel %vm917, %v9195, %v9419
        %v10001 = vsel %vm917, %v9200, %v9424
        %v10002 = vsel %vm917, %v9205, %v9429
        %v10003 = vsel %vm917, %v9210, %v9434
        %v10004 = vsel %vm917, %v9215, %v9439
        %v10005 = vsel %vm917, %v9220, %v9444
        %v10006 = vsel %vm917, %v9225, %v9449
        %v10007 = vsel %vm917, %v9230, %v9454
        %v10008 = vsel %vm917, %v9235, %v9459
        %v10009 = vsel %vm917, %v9240, %v9464
        %v10010 = vsel %vm917, %v9245, %v9469
        %v10011 = vsel %vm917, %v9250, %v9474
        %v10012 = vsel %vm917, %v9255, %v9479
        %v10013 = vsel %vm917, %v9260, %v9484
        %v10014 = vsel %vm917, %v9265, %v9489
        %v10015 = vsel %vm917, %v9270, %v9494
        %v10016 = vsel %vm917, %v9275, %v9499
        %v10017 = vsel %vm917, %v9280, %v9504
        %v10018 = vsel %vm917, %v9285, %v9509
        %v10019 = vsel %vm917, %v9290, %v9514
        %v10020 = vsel %vm917, %v9295, %v9519
        %v10021 = vsel %vm917, %v9300, %v9524
        %v10022 = vsel %vm917, %v9305, %v9529
        %v10023 = vsel %vm917, %v9310, %v9534
        %v10024 = vsel %vm917, %v9315, %v9539
        %v10025 = vsel %vm917, %v9320, %v9544
        %v10026 = vsel %vm8421, %v9994, %v9613
        %v10027 = vsel %vm8421, %v9995, %v9618
        %v10028 = vsel %vm8421, %v9996, %v9623
        %v10029 = vsel %vm8421, %v9997, %v9628
        %v10030 = vsel %vm8421, %v9998, %v9633
        %v10031 = vsel %vm8421, %v9999, %v9638
        %v10032 = vsel %vm8421, %v10000, %v9643
        %v10033 = vsel %vm8421, %v10001, %v9648
        %v10034 = vsel %vm8421, %v10002, %v9653
        %v10035 = vsel %vm8421, %v10003, %v9658
        %v10036 = vsel %vm8421, %v10004, %v9663
        %v10037 = vsel %vm8421, %v10005, %v9668
        %v10038 = vsel %vm8421, %v10006, %v9673
        %v10039 = vsel %vm8421, %v10007, %v9678
        %v10040 = vsel %vm8421, %v10008, %v9683
        %v10041 = vsel %vm8421, %v10009, %v9688
        %v10042 = vsel %vm8421, %v10010, %v9693
        %v10043 = vsel %vm8421, %v10011, %v9698
        %v10044 = vsel %vm8421, %v10012, %v9703
        %v10045 = vsel %vm8421, %v10013, %v9708
        %v10046 = vsel %vm8421, %v10014, %v9713
        %v10047 = vsel %vm8421, %v10015, %v9718
        %v10048 = vsel %vm8421, %v10016, %v9723
        %v10049 = vsel %vm8421, %v10017, %v9728
        %v10050 = vsel %vm8421, %v10018, %v9733
        %v10051 = vsel %vm8421, %v10019, %v9738
        %v10052 = vsel %vm8421, %v10020, %v9743
        %v10053 = vsel %vm8421, %v10021, %v9748
        %v10054 = vsel %vm8421, %v10022, %v9753
        %v10055 = vsel %vm8421, %v10023, %v9758
        %v10056 = vsel %vm8421, %v10024, %v9763
        %v10057 = vsel %vm8421, %v10025, %v9768
        %v10058 = vsel %vm8454, %v10026, %v9837
        %v10059 = vsel %vm8454, %v10027, %v9842
        %v10060 = vsel %vm8454, %v10028, %v9847
        %v10061 = vsel %vm8454, %v10029, %v9852
        %v10062 = vsel %vm8454, %v10030, %v9857
        %v10063 = vsel %vm8454, %v10031, %v9862
        %v10064 = vsel %vm8454, %v10032, %v9867
        %v10065 = vsel %vm8454, %v10033, %v9872
        %v10066 = vsel %vm8454, %v10034, %v9877
        %v10067 = vsel %vm8454, %v10035, %v9882
        %v10068 = vsel %vm8454, %v10036, %v9887
        %v10069 = vsel %vm8454, %v10037, %v9892
        %v10070 = vsel %vm8454, %v10038, %v9897
        %v10071 = vsel %vm8454, %v10039, %v9902
        %v10072 = vsel %vm8454, %v10040, %v9907
        %v10073 = vsel %vm8454, %v10041, %v9912
        %v10074 = vsel %vm8454, %v10042, %v9917
        %v10075 = vsel %vm8454, %v10043, %v9922
        %v10076 = vsel %vm8454, %v10044, %v9927
        %v10077 = vsel %vm8454, %v10045, %v9932
        %v10078 = vsel %vm8454, %v10046, %v9937
        %v10079 = vsel %vm8454, %v10047, %v9942
        %v10080 = vsel %vm8454, %v10048, %v9947
        %v10081 = vsel %vm8454, %v10049, %v9952
        %v10082 = vsel %vm8454, %v10050, %v9957
        %v10083 = vsel %vm8454, %v10051, %v9962
        %v10084 = vsel %vm8454, %v10052, %v9967
        %v10085 = vsel %vm8454, %v10053, %v9972
        %v10086 = vsel %vm8454, %v10054, %v9977
        %v10087 = vsel %vm8454, %v10055, %v9982
        %v10088 = vsel %vm8454, %v10056, %v9987
        %v10089 = vsel %vm8454, %v10057, %v9992
        %v10090 = vld [vmem:[#allocation4] sm:$0xff]
        %v10091 = vld [vmem:[#allocation4 + $0x8] sm:$0xff]
        %v10092 = vld [vmem:[#allocation4 + $0x10] sm:$0xff]
        %v10093 = vld [vmem:[#allocation4 + $0x18] sm:$0xff]
        %v10094 = vld [vmem:[#allocation4 + $0x20] sm:$0xff]
        %v10095 = vld [vmem:[#allocation4 + $0x28] sm:$0xff]
        %v10096 = vld [vmem:[#allocation4 + $0x30] sm:$0xff]
        %v10097 = vld [vmem:[#allocation4 + $0x38] sm:$0xff]
        %v10098 = vld [vmem:[#allocation4 + $0x40] sm:$0xff]
        %v10099 = vld [vmem:[#allocation4 + $0x48] sm:$0xff]
        %v10100 = vld [vmem:[#allocation4 + $0x50] sm:$0xff]
        %v10101 = vld [vmem:[#allocation4 + $0x58] sm:$0xff]
        %v10102 = vld [vmem:[#allocation4 + $0x60] sm:$0xff]
        %v10103 = vld [vmem:[#allocation4 + $0x68] sm:$0xff]
        %v10104 = vld [vmem:[#allocation4 + $0x70] sm:$0xff]
        %v10105 = vld [vmem:[#allocation4 + $0x78] sm:$0xff]
        %v10106 = vld [vmem:[#allocation4 + $0x80] sm:$0xff]
        %v10107 = vld [vmem:[#allocation4 + $0x88] sm:$0xff]
        %v10108 = vld [vmem:[#allocation4 + $0x90] sm:$0xff]
        %v10109 = vld [vmem:[#allocation4 + $0x98] sm:$0xff]
        %v10110 = vld [vmem:[#allocation4 + $0xa0] sm:$0xff]
        %v10111 = vld [vmem:[#allocation4 + $0xa8] sm:$0xff]
        %v10112 = vld [vmem:[#allocation4 + $0xb0] sm:$0xff]
        %v10113 = vld [vmem:[#allocation4 + $0xb8] sm:$0xff]
        %v10114 = vld [vmem:[#allocation4 + $0xc0] sm:$0xff]
        %v10115 = vld [vmem:[#allocation4 + $0xc8] sm:$0xff]
        %v10116 = vld [vmem:[#allocation4 + $0xd0] sm:$0xff]
        %v10117 = vld [vmem:[#allocation4 + $0xd8] sm:$0xff]
        %v10118 = vld [vmem:[#allocation4 + $0xe0] sm:$0xff]
        %v10119 = vld [vmem:[#allocation4 + $0xe8] sm:$0xff]
        %v10120 = vld [vmem:[#allocation4 + $0xf0] sm:$0xff]
        %v10121 = vld [vmem:[#allocation4 + $0xf8] sm:$0xff]
        %v10122 = vmul.f32 %v10090, %v10058
        %v10123 = vmul.f32 %v10091, %v10059
        %v10124 = vmul.f32 %v10092, %v10060
        %v10125 = vmul.f32 %v10093, %v10061
        %v10126 = vmul.f32 %v10094, %v10062
        %v10127 = vmul.f32 %v10095, %v10063
        %v10128 = vmul.f32 %v10096, %v10064
        %v10129 = vmul.f32 %v10097, %v10065
        %v10130 = vmul.f32 %v10098, %v10066
        %v10131 = vmul.f32 %v10099, %v10067
        %v10132 = vmul.f32 %v10100, %v10068
        %v10133 = vmul.f32 %v10101, %v10069
        %v10134 = vmul.f32 %v10102, %v10070
        %v10135 = vmul.f32 %v10103, %v10071
        %v10136 = vmul.f32 %v10104, %v10072
        %v10137 = vmul.f32 %v10105, %v10073
        %v10138 = vmul.f32 %v10106, %v10074
        %v10139 = vmul.f32 %v10107, %v10075
        %v10140 = vmul.f32 %v10108, %v10076
        %v10141 = vmul.f32 %v10109, %v10077
        %v10142 = vmul.f32 %v10110, %v10078
        %v10143 = vmul.f32 %v10111, %v10079
        %v10144 = vmul.f32 %v10112, %v10080
        %v10145 = vmul.f32 %v10113, %v10081
        %v10146 = vmul.f32 %v10114, %v10082
        %v10147 = vmul.f32 %v10115, %v10083
        %v10148 = vmul.f32 %v10116, %v10084
        %v10149 = vmul.f32 %v10117, %v10085
        %v10150 = vmul.f32 %v10118, %v10086
        %v10151 = vmul.f32 %v10119, %v10087
        %v10152 = vmul.f32 %v10120, %v10088
        %v10153 = vmul.f32 %v10121, %v10089
        %v10154 = vpack.c.bf16 %v10123, %v10122
        %v10155 = vpack.c.bf16 %v10125, %v10124
        %v10156 = vpack.c.bf16 %v10127, %v10126
        %v10157 = vpack.c.bf16 %v10129, %v10128
        %v10158 = vpack.c.bf16 %v10131, %v10130
        %v10159 = vpack.c.bf16 %v10133, %v10132
        %v10160 = vpack.c.bf16 %v10135, %v10134
        %v10161 = vpack.c.bf16 %v10137, %v10136
        %v10162 = vpack.c.bf16 %v10139, %v10138
        %v10163 = vpack.c.bf16 %v10141, %v10140
        %v10164 = vpack.c.bf16 %v10143, %v10142
        %v10165 = vpack.c.bf16 %v10145, %v10144
        %v10166 = vpack.c.bf16 %v10147, %v10146
        %v10167 = vpack.c.bf16 %v10149, %v10148
        %v10168 = vpack.c.bf16 %v10151, %v10150
        %v10169 = vpack.c.bf16 %v10153, %v10152
        %v10186 = vunpack.c.l.b16 %v10154
        %v10187 = vunpack.c.h.b16 %v10154
        %v10188 = vunpack.c.l.b16 %v10155
        %v10189 = vunpack.c.h.b16 %v10155
        %v10190 = vunpack.c.l.b16 %v10156
        %v10191 = vunpack.c.h.b16 %v10156
        %v10192 = vunpack.c.l.b16 %v10157
        %v10193 = vunpack.c.h.b16 %v10157
        %v10194 = vunpack.c.l.b16 %v10158
        %v10195 = vunpack.c.h.b16 %v10158
        %v10196 = vunpack.c.l.b16 %v10159
        %v10197 = vunpack.c.h.b16 %v10159
        %v10198 = vunpack.c.l.b16 %v10160
        %v10199 = vunpack.c.h.b16 %v10160
        %v10200 = vunpack.c.l.b16 %v10161
        %v10201 = vunpack.c.h.b16 %v10161
        %v10202 = vunpack.c.l.b16 %v10162
        %v10203 = vunpack.c.h.b16 %v10162
        %v10204 = vunpack.c.l.b16 %v10163
        %v10205 = vunpack.c.h.b16 %v10163
        %v10206 = vunpack.c.l.b16 %v10164
        %v10207 = vunpack.c.h.b16 %v10164
        %v10208 = vunpack.c.l.b16 %v10165
        %v10209 = vunpack.c.h.b16 %v10165
        %v10210 = vunpack.c.l.b16 %v10166
        %v10211 = vunpack.c.h.b16 %v10166
        %v10212 = vunpack.c.l.b16 %v10167
        %v10213 = vunpack.c.h.b16 %v10167
        %v10214 = vunpack.c.l.b16 %v10168
        %v10215 = vunpack.c.h.b16 %v10168
        %v10216 = vunpack.c.l.b16 %v10169
        %v10217 = vunpack.c.h.b16 %v10169
        %v10218 = vpack.c.b16 %v10186, %v10186
        %v10219 = vpack.c.b16 %v10187, %v10187
        %v10220 = vpack.c.b16 %v10188, %v10188
        %v10221 = vpack.c.b16 %v10189, %v10189
        %v10222 = vpack.c.b16 %v10190, %v10190
        %v10223 = vpack.c.b16 %v10191, %v10191
        %v10224 = vpack.c.b16 %v10192, %v10192
        %v10225 = vpack.c.b16 %v10193, %v10193
        %v10226 = vpack.c.b16 %v10194, %v10194
        %v10227 = vpack.c.b16 %v10195, %v10195
        %v10228 = vpack.c.b16 %v10196, %v10196
        %v10229 = vpack.c.b16 %v10197, %v10197
        %v10230 = vpack.c.b16 %v10198, %v10198
        %v10231 = vpack.c.b16 %v10199, %v10199
        %v10232 = vpack.c.b16 %v10200, %v10200
        %v10233 = vpack.c.b16 %v10201, %v10201
        %v10234 = vpack.c.b16 %v10202, %v10202
        %v10235 = vpack.c.b16 %v10203, %v10203
        %v10236 = vpack.c.b16 %v10204, %v10204
        %v10237 = vpack.c.b16 %v10205, %v10205
        %v10238 = vpack.c.b16 %v10206, %v10206
        %v10239 = vpack.c.b16 %v10207, %v10207
        %v10240 = vpack.c.b16 %v10208, %v10208
        %v10241 = vpack.c.b16 %v10209, %v10209
        %v10242 = vpack.c.b16 %v10210, %v10210
        %v10243 = vpack.c.b16 %v10211, %v10211
        %v10244 = vpack.c.b16 %v10212, %v10212
        %v10245 = vpack.c.b16 %v10213, %v10213
        %v10246 = vpack.c.b16 %v10214, %v10214
        %v10247 = vpack.c.b16 %v10215, %v10215
        %v10248 = vpack.c.b16 %v10216, %v10216
        %v10249 = vpack.c.b16 %v10217, %v10217
        %10282 = vst [vmem:[%s353] sm:$0xf] %v10218
        %10283 = vst [vmem:[%s353 + $0x4] sm:$0xf] %v10219
        %10284 = vst [vmem:[%s353 + $0x8] sm:$0xf] %v10220
        %10285 = vst [vmem:[%s353 + $0xc] sm:$0xf] %v10221
        %10286 = vst [vmem:[%s353 + $0x10] sm:$0xf] %v10222
        %10287 = vst [vmem:[%s353 + $0x14] sm:$0xf] %v10223
        %10288 = vst [vmem:[%s353 + $0x18] sm:$0xf] %v10224
        %10289 = vst [vmem:[%s353 + $0x1c] sm:$0xf] %v10225
        %10290 = vst [vmem:[%s353 + $0x20] sm:$0xf] %v10226
        %10291 = vst [vmem:[%s353 + $0x24] sm:$0xf] %v10227
        %10292 = vst [vmem:[%s353 + $0x28] sm:$0xf] %v10228
        %10293 = vst [vmem:[%s353 + $0x2c] sm:$0xf] %v10229
        %10294 = vst [vmem:[%s353 + $0x30] sm:$0xf] %v10230
        %10295 = vst [vmem:[%s353 + $0x34] sm:$0xf] %v10231
        %10296 = vst [vmem:[%s353 + $0x38] sm:$0xf] %v10232
        %10297 = vst [vmem:[%s353 + $0x3c] sm:$0xf] %v10233
        %10298 = vst [vmem:[%s353 + $0x40] sm:$0xf] %v10234
        %10299 = vst [vmem:[%s353 + $0x44] sm:$0xf] %v10235
        %10300 = vst [vmem:[%s353 + $0x48] sm:$0xf] %v10236
        %10301 = vst [vmem:[%s353 + $0x4c] sm:$0xf] %v10237
        %10302 = vst [vmem:[%s353 + $0x50] sm:$0xf] %v10238
        %10303 = vst [vmem:[%s353 + $0x54] sm:$0xf] %v10239
        %10304 = vst [vmem:[%s353 + $0x58] sm:$0xf] %v10240
        %10305 = vst [vmem:[%s353 + $0x5c] sm:$0xf] %v10241
        %10306 = vst [vmem:[%s353 + $0x60] sm:$0xf] %v10242
        %10307 = vst [vmem:[%s353 + $0x64] sm:$0xf] %v10243
        %10308 = vst [vmem:[%s353 + $0x68] sm:$0xf] %v10244
        %10309 = vst [vmem:[%s353 + $0x6c] sm:$0xf] %v10245
        %10310 = vst [vmem:[%s353 + $0x70] sm:$0xf] %v10246
        %10311 = vst [vmem:[%s353 + $0x74] sm:$0xf] %v10247
        %10312 = vst [vmem:[%s353 + $0x78] sm:$0xf] %v10248
        %10313 = vst [vmem:[%s353 + $0x7c] sm:$0xf] %v10249
      $region44: #{attention_forward.4} parent=35 // pred_fallthru
        _
      %s10314 = smul.u32 32, %s21
      %p10315 = scmp.lt.s32.totalorder %s20, 1
      %s10316 = scalar_select %p10315, %s20, 1
      %p10317 = scmp.lt.s32.totalorder %s10314, 31
      %s10318 = scalar_select %p10317, %s10314, 31
      %s10319 = smul.addr %s10316, 32
      %s10320 = sadd.s32 %s10318, %s10319
      %s10321 = smul.addr %s10320, 4
      %s10322 = scalar_lea.vmem %s4, %s10321
      // Predicated region
      $region45: #{attention_forward.4} parent=35 // pred_check
        %p10323 = pneg %p166
      $region46: #{attention_forward.4} parent=35 // pred_check_branch
        %10325 = sbr.rel (%p10323) target = $region48
      $region47: #{attention_forward.4} parent=35 // pred_region
        %s10326 = smul.u32 32, %s21
      $region48: #{attention_forward.4} parent=35 // pred_fallthru
        _
    $region36: #{attention_forward.4} parent=5 // pred_fallthru
      _
    %p10327 = scmp.le.s32.totalorder 2, %s10
    // Predicated region
    $region49: #{attention_forward.4} parent=5 // pred_check
      %p10328 = pneg %p10327
    $region50: #{attention_forward.4} parent=5 // pred_check_branch
      %10330 = sbr.rel (%p10328) target = $region52
    $region51: #{attention_forward.4} parent=5 // pred_region
      %s10331 = ssub.s32 %s10, 2
      // Predicated region
      $region53: #{attention_forward.4} parent=51 // pred_check
        %p10332 = pneg %p172
      $region54: #{attention_forward.4} parent=51 // pred_check_branch
        %10334 = sbr.rel (%p10332) target = $region56
      $region55: #{attention_forward.4} parent=51 // pred_region
        %s10335 = smul.u32 32, %s24
        %p10336 = scmp.lt.s32.totalorder %s23, 1
        %s10337 = scalar_select %p10336, %s23, 1
        %p10338 = scmp.lt.s32.totalorder %s10335, 31
        %s10339 = scalar_select %p10338, %s10335, 31
        %s10340 = smul.addr %s10337, 32
        %s10341 = sadd.s32 %s10339, %s10340
        %s10342 = smul.addr %s10341, 4
        %s10343 = scalar_lea.vmem %s4, %s10342
      $region56: #{attention_forward.4} parent=51 // pred_fallthru
        _
    $region52: #{attention_forward.4} parent=5 // pred_fallthru
      _
  $region6: #{attention_forward.4} parent=0 // loop_footer
    %s14 = sadd.s32 1, %s10
  $region7: #{attention_forward.4} parent=0 // loop_footer_branch
    %9 = sbr.rel target = $region3
  $region8: #{attention_forward.4} parent=0 // loop_exit
    _

</llo_original>
